<compile_context>
chip_gen: v7x
topology: tpu7x:2x2x1
jax: 0.10.0
libtpu: 0.0.40
codegen_flags: <defaults>
</compile_context>

<pallas_src>
import jax
import jax.numpy as jnp
from jax import lax
from jax.experimental import pallas as pl
from jax.experimental.pallas import tpu as pltpu


def dab_kernel(x_ref, w1_ref, b1_ref, w2_ref, b2_ref, wsa_ref,
               wca1_ref, bca1_ref, wca2_ref, bca2_ref,
               w11sa_ref, w11ca_ref, b11_ref,
               o_ref,
               pad_ref, sapad_ref):
    Bblk, Hp, Wp, C = pad_ref.shape
    H, W = Hp - 2, Wp - 2
    M = Bblk * H * W
    bf16 = jnp.bfloat16

    # --- zero only the 1-px borders of the padded scratches; interiors are ---
    # --- fully overwritten each step.  Runs every grid step (cheap edge     ---
    # --- strips) so it stays correct when the "parallel" axis is split      ---
    # --- across TensorCores (per-core scratch).                             ---
    zrow = jnp.zeros((Bblk, 1, Wp, C), jnp.float32)
    zcol = jnp.zeros((Bblk, Hp, 1, C), jnp.float32)
    pad_ref[:, 0:1, :, :] = zrow
    pad_ref[:, H + 1:H + 2, :, :] = zrow
    pad_ref[:, :, 0:1, :] = zcol
    pad_ref[:, :, W + 1:W + 2, :] = zcol
    sapad_ref[...] = jnp.zeros(sapad_ref.shape, jnp.float32)   # tiny 2-ch buffer

    x4 = x_ref[...]                                            # (Bblk,H,W,C) f32

    def conv3x3(src4, w9_ref, b_ref):
        """SAME 3x3 conv: 9 shifted (M,C)x(C,C) bf16 dots, f32 accumulation."""
        pad_ref[:, 1:H + 1, 1:W + 1, :] = src4
        acc = jnp.zeros((M, C), jnp.float32)
        for k in range(9):                                     # static taps
            dy, dx = divmod(k, 3)
            tap = pad_ref[:, dy:dy + H, dx:dx + W, :].reshape(M, C)
            acc = acc + jnp.dot(tap.astype(bf16), w9_ref[k],
                                preferred_element_type=jnp.float32)
        return acc + b_ref[...]

    # ---- body: conv3x3 -> ReLU -> conv3x3 ----------------------------------
    r = jnp.maximum(conv3x3(x4, w1_ref, b1_ref), 0.0)
    res = conv3x3(r.reshape(Bblk, H, W, C), w2_ref, b2_ref)    # (M, C) f32
    res4 = res.reshape(Bblk, H, W, C)

    # ---- spatial attention: ChannelPool + 3x3 stencil on the VPU -----------
    mx = jnp.max(res4, axis=-1, keepdims=True)                 # (Bblk,H,W,1)
    mn = jnp.mean(res4, axis=-1, keepdims=True)                # (Bblk,H,W,1)
    sapad_ref[:, 1:H + 1, 1:W + 1, :] = jnp.concatenate([mx, mn], axis=-1)
    sa_logit = jnp.zeros((Bblk, H, W, 1), jnp.float32)
    for k in range(9):
        dy, dx = divmod(k, 3)
        pair = sapad_ref[:, dy:dy + H, dx:dx + W, :]           # (Bblk,H,W,2)
        sa_logit = (sa_logit
                    + pair[..., 0:1] * wsa_ref[2 * k]
                    + pair[..., 1:2] * wsa_ref[2 * k + 1])
    sa = (res4 * jax.nn.sigmoid(sa_logit)).reshape(M, C)

    # ---- channel attention: GAP + 1x1 + ReLU + 1x1 + sigmoid ----------------
    gap = jnp.mean(res.reshape(Bblk, H * W, C), axis=1)        # (Bblk, C)
    h = jnp.dot(gap.astype(bf16), wca1_ref[...],
                preferred_element_type=jnp.float32) + bca1_ref[...]
    h = jnp.maximum(h, 0.0)
    yca = jax.nn.sigmoid(
        jnp.dot(h.astype(bf16), wca2_ref[...],
                preferred_element_type=jnp.float32) + bca2_ref[...])  # (Bblk,C)
    ca = (res4 * yca[:, None, None, :]).reshape(M, C)

    # ---- concat([sa, ca]) + conv1x1 (split into two dots) + residual --------
    out = (jnp.dot(sa.astype(bf16), w11sa_ref[...],
                   preferred_element_type=jnp.float32)
           + jnp.dot(ca.astype(bf16), w11ca_ref[...],
                     preferred_element_type=jnp.float32)
           + b11_ref[...])                                     # (M, C)
    o_ref[...] = (out.reshape(Bblk, H, W, C) + x4).astype(o_ref.dtype)


def dab_forward(x, params, *, bblk=None):
    """x: (B, H, W, C) float32 NHWC. Returns (B, H, W, C) float32."""
    B, H, W, C = x.shape
    if bblk is None:
        bblk = 1                      # >=2 grid steps when B>=2: pipelining + 2nd TC
    assert B % bblk == 0
    bf16, f32 = jnp.bfloat16, jnp.float32

    # 3x3 weights pre-split per tap (k = dy*3 + dx): (3,3,C,C) -> (9, C, C)
    w1_9 = params['w1'].reshape(9, C, C).astype(bf16)
    w2_9 = params['w2'].reshape(9, C, C).astype(bf16)
    wsa_flat = params['wsa'].reshape(18).astype(f32)           # (3,3,2,1) -> (18,)
    wca1 = params['wca1'].astype(bf16)
    wca2 = params['wca2'].astype(bf16)
    w11 = params['w11'].astype(bf16)
    w11_sa, w11_ca = w11[:C], w11[C:]
    b1 = params['b1'].astype(f32)
    b2 = params['b2'].astype(f32)
    bca1 = params['bca1'].astype(f32)
    bca2 = params['bca2'].astype(f32)
    b11 = params['b11'].astype(f32)

    plist = [w1_9, b1, w2_9, b2, wsa_flat, wca1, bca1, wca2, bca2,
             w11_sa, w11_ca, b11]

    in_specs = [pl.BlockSpec((bblk, H, W, C), lambda g: (g, 0, 0, 0))]
    for p in plist:
        if p.ndim == 1:   # flattened SA stencil weights -> SMEM scalar reads
            in_specs.append(pl.BlockSpec(memory_space=pltpu.MemorySpace.SMEM))
        else:
            in_specs.append(pl.BlockSpec(p.shape, lambda g, n=p.ndim: (0,) * n))

    return pl.pallas_call(
        dab_kernel,
        out_shape=jax.ShapeDtypeStruct((B, H, W, C), jnp.float32),
        grid=(B // bblk,),
        in_specs=in_specs,
        out_specs=pl.BlockSpec((bblk, H, W, C), lambda g: (g, 0, 0, 0)),
        scratch_shapes=[
            pltpu.VMEM((bblk, H + 2, W + 2, C), jnp.float32),   # conv pad buffer
            pltpu.VMEM((bblk, H + 2, W + 2, 2), jnp.float32),   # SA pad buffer
        ],
        compiler_params=pltpu.CompilerParams(
            dimension_semantics=("parallel",)),
    )(x, *plist)


def dab_reference(x, params):
    """Pure-JAX reference mirroring the PyTorch DAB.forward semantics."""
    dn = ('NHWC', 'HWIO', 'NHWC')

    def conv2d(v, w, b=None):
        o = lax.conv_general_dilated(v, w, (1, 1), 'SAME', dimension_numbers=dn)
        if b is not None:
            o = o + b.reshape(1, 1, 1, -1)
        return o

    r = jax.nn.relu(conv2d(x, params['w1'], params['b1']))
    res = conv2d(r, params['w2'], params['b2'])
    # spatial attention
    mx = jnp.max(res, axis=-1, keepdims=True)
    mn = jnp.mean(res, axis=-1, keepdims=True)
    comp = jnp.concatenate([mx, mn], axis=-1)
    sa = res * jax.nn.sigmoid(conv2d(comp, params['wsa']))
    # channel attention
    gap = jnp.mean(res, axis=(1, 2))
    h = jax.nn.relu(gap @ params['wca1'] + params['bca1'])
    yca = jax.nn.sigmoid(h @ params['wca2'] + params['bca2'])
    ca = res * yca[:, None, None, :]
    # concat + 1x1 + residual
    cat = jnp.concatenate([sa, ca], axis=-1)
    out = jnp.einsum('bhwc,cd->bhwd', cat, params['w11'])
    out = out + params['b11'].reshape(1, 1, 1, -1)
    return out + x


if __name__ == "__main__":
    # n_feat=16, kernel_size=3, reduction=4 -> CA hidden = 4
    B, H, W, C, RED = 2, 16, 16, 16, 4
    Cr = C // RED

    key = jax.random.PRNGKey(0)
    ks = jax.random.split(key, 12)

    def rnd(k, shape, scale):
        return scale * jax.random.normal(k, shape, jnp.float32)

    params = dict(
        w1=rnd(ks[0], (3, 3, C, C), 0.08),
        b1=rnd(ks[1], (1, C), 0.05),
        w2=rnd(ks[2], (3, 3, C, C), 0.08),
        b2=rnd(ks[3], (1, C), 0.05),
        wsa=rnd(ks[4], (3, 3, 2, 1), 0.3),        # BasicConv(2,1,3, bias=False)
        wca1=rnd(ks[5], (C, Cr), 0.2),
        bca1=rnd(ks[6], (1, Cr), 0.05),
        wca2=rnd(ks[7], (Cr, C), 0.2),
        bca2=rnd(ks[8], (1, C), 0.05),
        w11=rnd(ks[9], (2 * C, C), 0.1),          # conv1x1: 2*n_feat -> n_feat
        b11=rnd(ks[10], (1, C), 0.05),
    )
    x = jax.random.normal(ks[11], (B, H, W, C), jnp.float32)

    out = jax.block_until_ready(jax.jit(dab_forward)(x, params))
    ref = jax.block_until_ready(dab_reference(x, params))

    assert out.shape == (B, H, W, C)
    err = float(jnp.max(jnp.abs(out - ref)))
    assert err < 5e-2, f"max abs err vs reference: {err}"
    print("KERNEL_OK")
</pallas_src>

<mosaic_0001>
module attributes {stable_mosaic.version = 11 : i64} {
  func.func @dab_kernel(%arg0: i32, %arg1: memref<1x16x16x16xf32, #tpu.memory_space<vmem>>, %arg2: memref<9x16x16xbf16, #tpu.memory_space<vmem>>, %arg3: memref<1x16xf32, #tpu.memory_space<vmem>>, %arg4: memref<9x16x16xbf16, #tpu.memory_space<vmem>>, %arg5: memref<1x16xf32, #tpu.memory_space<vmem>>, %arg6: memref<18xf32, #tpu.memory_space<smem>>, %arg7: memref<16x4xbf16, #tpu.memory_space<vmem>>, %arg8: memref<1x4xf32, #tpu.memory_space<vmem>>, %arg9: memref<4x16xbf16, #tpu.memory_space<vmem>>, %arg10: memref<1x16xf32, #tpu.memory_space<vmem>>, %arg11: memref<16x16xbf16, #tpu.memory_space<vmem>>, %arg12: memref<16x16xbf16, #tpu.memory_space<vmem>>, %arg13: memref<1x16xf32, #tpu.memory_space<vmem>>, %arg14: memref<1x16x16x16xf32, #tpu.memory_space<vmem>>, %arg15: memref<1x18x18x16xf32, #tpu.memory_space<vmem>>, %arg16: memref<1x18x18x2xf32, #tpu.memory_space<vmem>>) attributes {dimension_semantics = [#tpu.dimension_semantics<parallel>], iteration_bounds = array<i64: 2>, scalar_prefetch = 0 : i64, scratch_operands = 2 : i64, tpu.core_type = #tpu.core_type<tc>, window_params = [{transform_indices = @transform_0, window_bounds = array<i64: 1, 16, 16, 16>}, {pipeline_mode = #tpu.pipeline_mode<synchronous>, transform_indices = @transform_1, window_bounds = array<i64: 9, 16, 16>}, {pipeline_mode = #tpu.pipeline_mode<synchronous>, transform_indices = @transform_2, window_bounds = array<i64: 1, 16>}, {pipeline_mode = #tpu.pipeline_mode<synchronous>, transform_indices = @transform_3, window_bounds = array<i64: 9, 16, 16>}, {pipeline_mode = #tpu.pipeline_mode<synchronous>, transform_indices = @transform_4, window_bounds = array<i64: 1, 16>}, {transform_indices = @transform_5, window_bounds = array<i64: 18>}, {pipeline_mode = #tpu.pipeline_mode<synchronous>, transform_indices = @transform_6, window_bounds = array<i64: 16, 4>}, {pipeline_mode = #tpu.pipeline_mode<synchronous>, transform_indices = @transform_7, window_bounds = array<i64: 1, 4>}, {pipeline_mode = #tpu.pipeline_mode<synchronous>, transform_indices = @transform_8, window_bounds = array<i64: 4, 16>}, {pipeline_mode = #tpu.pipeline_mode<synchronous>, transform_indices = @transform_9, window_bounds = array<i64: 1, 16>}, {pipeline_mode = #tpu.pipeline_mode<synchronous>, transform_indices = @transform_10, window_bounds = array<i64: 16, 16>}, {pipeline_mode = #tpu.pipeline_mode<synchronous>, transform_indices = @transform_11, window_bounds = array<i64: 16, 16>}, {pipeline_mode = #tpu.pipeline_mode<synchronous>, transform_indices = @transform_12, window_bounds = array<i64: 1, 16>}, {transform_indices = @transform_13, window_bounds = array<i64: 1, 16, 16, 16>}]} {
    %cst = arith.constant 0.000000e+00 : f32
    %0 = vector.broadcast %cst : f32 to vector<1x1x18x16xf32>
    %cst_0 = arith.constant 0.000000e+00 : f32
    %1 = vector.broadcast %cst_0 : f32 to vector<1x18x1x16xf32>
    %c0 = arith.constant 0 : index
    %c0_1 = arith.constant 0 : index
    %c0_2 = arith.constant 0 : index
    %c0_3 = arith.constant 0 : index
    %2 = vector.load %arg15[%c0, %c0_1, %c0_2, %c0_3] : memref<1x18x18x16xf32, #tpu.memory_space<vmem>>, vector<1x1x18x16xf32>
    tpu.vector_store %arg15[%c0, %c0_1, %c0_2, %c0_3], %0 {strides = array<i32>} : memref<1x18x18x16xf32, #tpu.memory_space<vmem>>, vector<1x1x18x16xf32>,
    %c0_4 = arith.constant 0 : index
    %c17 = arith.constant 17 : index
    %c0_5 = arith.constant 0 : index
    %c0_6 = arith.constant 0 : index
    %3 = vector.load %arg15[%c0_4, %c17, %c0_5, %c0_6] : memref<1x18x18x16xf32, #tpu.memory_space<vmem>>, vector<1x1x18x16xf32>
    tpu.vector_store %arg15[%c0_4, %c17, %c0_5, %c0_6], %0 {strides = array<i32>} : memref<1x18x18x16xf32, #tpu.memory_space<vmem>>, vector<1x1x18x16xf32>,
    %c0_7 = arith.constant 0 : index
    %c0_8 = arith.constant 0 : index
    %c0_9 = arith.constant 0 : index
    %c0_10 = arith.constant 0 : index
    %4 = vector.load %arg15[%c0_7, %c0_8, %c0_9, %c0_10] : memref<1x18x18x16xf32, #tpu.memory_space<vmem>>, vector<1x18x1x16xf32>
    tpu.vector_store %arg15[%c0_7, %c0_8, %c0_9, %c0_10], %1 {strides = array<i32>} : memref<1x18x18x16xf32, #tpu.memory_space<vmem>>, vector<1x18x1x16xf32>,
    %c0_11 = arith.constant 0 : index
    %c0_12 = arith.constant 0 : index
    %c17_13 = arith.constant 17 : index
    %c0_14 = arith.constant 0 : index
    %5 = vector.load %arg15[%c0_11, %c0_12, %c17_13, %c0_14] : memref<1x18x18x16xf32, #tpu.memory_space<vmem>>, vector<1x18x1x16xf32>
    tpu.vector_store %arg15[%c0_11, %c0_12, %c17_13, %c0_14], %1 {strides = array<i32>} : memref<1x18x18x16xf32, #tpu.memory_space<vmem>>, vector<1x18x1x16xf32>,
    %cst_15 = arith.constant 0.000000e+00 : f32
    %6 = vector.broadcast %cst_15 : f32 to vector<1x18x18x2xf32>
    %c0_16 = arith.constant 0 : index
    %c0_17 = arith.constant 0 : index
    %c0_18 = arith.constant 0 : index
    %c0_19 = arith.constant 0 : index
    %7 = vector.load %arg16[%c0_16, %c0_17, %c0_18, %c0_19] : memref<1x18x18x2xf32, #tpu.memory_space<vmem>>, vector<1x18x18x2xf32>
    tpu.vector_store %arg16[%c0_16, %c0_17, %c0_18, %c0_19], %6 {strides = array<i32>} : memref<1x18x18x2xf32, #tpu.memory_space<vmem>>, vector<1x18x18x2xf32>,
    %c0_20 = arith.constant 0 : index
    %c0_21 = arith.constant 0 : index
    %c0_22 = arith.constant 0 : index
    %c0_23 = arith.constant 0 : index
    %8 = vector.load %arg1[%c0_20, %c0_21, %c0_22, %c0_23] : memref<1x16x16x16xf32, #tpu.memory_space<vmem>>, vector<1x16x16x16xf32>
    %c0_24 = arith.constant 0 : index
    %c1 = arith.constant 1 : index
    %c1_25 = arith.constant 1 : index
    %c0_26 = arith.constant 0 : index
    %9 = vector.load %arg15[%c0_24, %c1, %c1_25, %c0_26] : memref<1x18x18x16xf32, #tpu.memory_space<vmem>>, vector<1x16x16x16xf32>
    tpu.vector_store %arg15[%c0_24, %c1, %c1_25, %c0_26], %8 {strides = array<i32>} : memref<1x18x18x16xf32, #tpu.memory_space<vmem>>, vector<1x16x16x16xf32>,
    %cst_27 = arith.constant 0.000000e+00 : f32
    %10 = vector.broadcast %cst_27 : f32 to vector<256x16xf32>
    %c0_28 = arith.constant 0 : index
    %c0_29 = arith.constant 0 : index
    %c0_30 = arith.constant 0 : index
    %c0_31 = arith.constant 0 : index
    %11 = vector.load %arg15[%c0_28, %c0_29, %c0_30, %c0_31] : memref<1x18x18x16xf32, #tpu.memory_space<vmem>>, vector<1x16x16x16xf32>
    %12 = vector.shape_cast %11 : vector<1x16x16x16xf32> to vector<256x16xf32>
    %13 = arith.truncf %12 : vector<256x16xf32> to vector<256x16xbf16>
    %c0_32 = arith.constant 0 : index
    %c0_33 = arith.constant 0 : index
    %c0_34 = arith.constant 0 : index
    %14 = vector.load %arg2[%c0_32, %c0_33, %c0_34] : memref<9x16x16xbf16, #tpu.memory_space<vmem>>, vector<1x16x16xbf16>
    %15 = vector.shape_cast %14 : vector<1x16x16xbf16> to vector<16x16xbf16>
    %cst_35 = arith.constant dense<0.000000e+00> : vector<256x16xf32>
    %16 = tpu.matmul %13, %15, %cst_35 {dimension_numbers = #tpu.dot_dimension_numbers<[1], [0], [0], [1], [0, 0, 1, 1], [], []>} : vector<256x16xbf16>, vector<16x16xbf16>, vector<256x16xf32> -> vector<256x16xf32>
    %17 = arith.addf %10, %16 : vector<256x16xf32>
    %c0_36 = arith.constant 0 : index
    %c0_37 = arith.constant 0 : index
    %c1_38 = arith.constant 1 : index
    %c0_39 = arith.constant 0 : index
    %18 = vector.load %arg15[%c0_36, %c0_37, %c1_38, %c0_39] : memref<1x18x18x16xf32, #tpu.memory_space<vmem>>, vector<1x16x16x16xf32>
    %19 = vector.shape_cast %18 : vector<1x16x16x16xf32> to vector<256x16xf32>
    %20 = arith.truncf %19 : vector<256x16xf32> to vector<256x16xbf16>
    %c1_40 = arith.constant 1 : index
    %c0_41 = arith.constant 0 : index
    %c0_42 = arith.constant 0 : index
    %21 = vector.load %arg2[%c1_40, %c0_41, %c0_42] : memref<9x16x16xbf16, #tpu.memory_space<vmem>>, vector<1x16x16xbf16>
    %22 = vector.shape_cast %21 : vector<1x16x16xbf16> to vector<16x16xbf16>
    %cst_43 = arith.constant dense<0.000000e+00> : vector<256x16xf32>
    %23 = tpu.matmul %20, %22, %cst_43 {dimension_numbers = #tpu.dot_dimension_numbers<[1], [0], [0], [1], [0, 0, 1, 1], [], []>} : vector<256x16xbf16>, vector<16x16xbf16>, vector<256x16xf32> -> vector<256x16xf32>
    %24 = arith.addf %17, %23 : vector<256x16xf32>
    %c0_44 = arith.constant 0 : index
    %c0_45 = arith.constant 0 : index
    %c2 = arith.constant 2 : index
    %c0_46 = arith.constant 0 : index
    %25 = vector.load %arg15[%c0_44, %c0_45, %c2, %c0_46] : memref<1x18x18x16xf32, #tpu.memory_space<vmem>>, vector<1x16x16x16xf32>
    %26 = vector.shape_cast %25 : vector<1x16x16x16xf32> to vector<256x16xf32>
    %27 = arith.truncf %26 : vector<256x16xf32> to vector<256x16xbf16>
    %c2_47 = arith.constant 2 : index
    %c0_48 = arith.constant 0 : index
    %c0_49 = arith.constant 0 : index
    %28 = vector.load %arg2[%c2_47, %c0_48, %c0_49] : memref<9x16x16xbf16, #tpu.memory_space<vmem>>, vector<1x16x16xbf16>
    %29 = vector.shape_cast %28 : vector<1x16x16xbf16> to vector<16x16xbf16>
    %cst_50 = arith.constant dense<0.000000e+00> : vector<256x16xf32>
    %30 = tpu.matmul %27, %29, %cst_50 {dimension_numbers = #tpu.dot_dimension_numbers<[1], [0], [0], [1], [0, 0, 1, 1], [], []>} : vector<256x16xbf16>, vector<16x16xbf16>, vector<256x16xf32> -> vector<256x16xf32>
    %31 = arith.addf %24, %30 : vector<256x16xf32>
    %c0_51 = arith.constant 0 : index
    %c1_52 = arith.constant 1 : index
    %c0_53 = arith.constant 0 : index
    %c0_54 = arith.constant 0 : index
    %32 = vector.load %arg15[%c0_51, %c1_52, %c0_53, %c0_54] : memref<1x18x18x16xf32, #tpu.memory_space<vmem>>, vector<1x16x16x16xf32>
    %33 = vector.shape_cast %32 : vector<1x16x16x16xf32> to vector<256x16xf32>
    %34 = arith.truncf %33 : vector<256x16xf32> to vector<256x16xbf16>
    %c3 = arith.constant 3 : index
    %c0_55 = arith.constant 0 : index
    %c0_56 = arith.constant 0 : index
    %35 = vector.load %arg2[%c3, %c0_55, %c0_56] : memref<9x16x16xbf16, #tpu.memory_space<vmem>>, vector<1x16x16xbf16>
    %36 = vector.shape_cast %35 : vector<1x16x16xbf16> to vector<16x16xbf16>
    %cst_57 = arith.constant dense<0.000000e+00> : vector<256x16xf32>
    %37 = tpu.matmul %34, %36, %cst_57 {dimension_numbers = #tpu.dot_dimension_numbers<[1], [0], [0], [1], [0, 0, 1, 1], [], []>} : vector<256x16xbf16>, vector<16x16xbf16>, vector<256x16xf32> -> vector<256x16xf32>
    %38 = arith.addf %31, %37 : vector<256x16xf32>
    %c0_58 = arith.constant 0 : index
    %c1_59 = arith.constant 1 : index
    %c1_60 = arith.constant 1 : index
    %c0_61 = arith.constant 0 : index
    %39 = vector.load %arg15[%c0_58, %c1_59, %c1_60, %c0_61] : memref<1x18x18x16xf32, #tpu.memory_space<vmem>>, vector<1x16x16x16xf32>
    %40 = vector.shape_cast %39 : vector<1x16x16x16xf32> to vector<256x16xf32>
    %41 = arith.truncf %40 : vector<256x16xf32> to vector<256x16xbf16>
    %c4 = arith.constant 4 : index
    %c0_62 = arith.constant 0 : index
    %c0_63 = arith.constant 0 : index
    %42 = vector.load %arg2[%c4, %c0_62, %c0_63] : memref<9x16x16xbf16, #tpu.memory_space<vmem>>, vector<1x16x16xbf16>
    %43 = vector.shape_cast %42 : vector<1x16x16xbf16> to vector<16x16xbf16>
    %cst_64 = arith.constant dense<0.000000e+00> : vector<256x16xf32>
    %44 = tpu.matmul %41, %43, %cst_64 {dimension_numbers = #tpu.dot_dimension_numbers<[1], [0], [0], [1], [0, 0, 1, 1], [], []>} : vector<256x16xbf16>, vector<16x16xbf16>, vector<256x16xf32> -> vector<256x16xf32>
    %45 = arith.addf %38, %44 : vector<256x16xf32>
    %c0_65 = arith.constant 0 : index
    %c1_66 = arith.constant 1 : index
    %c2_67 = arith.constant 2 : index
    %c0_68 = arith.constant 0 : index
    %46 = vector.load %arg15[%c0_65, %c1_66, %c2_67, %c0_68] : memref<1x18x18x16xf32, #tpu.memory_space<vmem>>, vector<1x16x16x16xf32>
    %47 = vector.shape_cast %46 : vector<1x16x16x16xf32> to vector<256x16xf32>
    %48 = arith.truncf %47 : vector<256x16xf32> to vector<256x16xbf16>
    %c5 = arith.constant 5 : index
    %c0_69 = arith.constant 0 : index
    %c0_70 = arith.constant 0 : index
    %49 = vector.load %arg2[%c5, %c0_69, %c0_70] : memref<9x16x16xbf16, #tpu.memory_space<vmem>>, vector<1x16x16xbf16>
    %50 = vector.shape_cast %49 : vector<1x16x16xbf16> to vector<16x16xbf16>
    %cst_71 = arith.constant dense<0.000000e+00> : vector<256x16xf32>
    %51 = tpu.matmul %48, %50, %cst_71 {dimension_numbers = #tpu.dot_dimension_numbers<[1], [0], [0], [1], [0, 0, 1, 1], [], []>} : vector<256x16xbf16>, vector<16x16xbf16>, vector<256x16xf32> -> vector<256x16xf32>
    %52 = arith.addf %45, %51 : vector<256x16xf32>
    %c0_72 = arith.constant 0 : index
    %c2_73 = arith.constant 2 : index
    %c0_74 = arith.constant 0 : index
    %c0_75 = arith.constant 0 : index
    %53 = vector.load %arg15[%c0_72, %c2_73, %c0_74, %c0_75] : memref<1x18x18x16xf32, #tpu.memory_space<vmem>>, vector<1x16x16x16xf32>
    %54 = vector.shape_cast %53 : vector<1x16x16x16xf32> to vector<256x16xf32>
    %55 = arith.truncf %54 : vector<256x16xf32> to vector<256x16xbf16>
    %c6 = arith.constant 6 : index
    %c0_76 = arith.constant 0 : index
    %c0_77 = arith.constant 0 : index
    %56 = vector.load %arg2[%c6, %c0_76, %c0_77] : memref<9x16x16xbf16, #tpu.memory_space<vmem>>, vector<1x16x16xbf16>
    %57 = vector.shape_cast %56 : vector<1x16x16xbf16> to vector<16x16xbf16>
    %cst_78 = arith.constant dense<0.000000e+00> : vector<256x16xf32>
    %58 = tpu.matmul %55, %57, %cst_78 {dimension_numbers = #tpu.dot_dimension_numbers<[1], [0], [0], [1], [0, 0, 1, 1], [], []>} : vector<256x16xbf16>, vector<16x16xbf16>, vector<256x16xf32> -> vector<256x16xf32>
    %59 = arith.addf %52, %58 : vector<256x16xf32>
    %c0_79 = arith.constant 0 : index
    %c2_80 = arith.constant 2 : index
    %c1_81 = arith.constant 1 : index
    %c0_82 = arith.constant 0 : index
    %60 = vector.load %arg15[%c0_79, %c2_80, %c1_81, %c0_82] : memref<1x18x18x16xf32, #tpu.memory_space<vmem>>, vector<1x16x16x16xf32>
    %61 = vector.shape_cast %60 : vector<1x16x16x16xf32> to vector<256x16xf32>
    %62 = arith.truncf %61 : vector<256x16xf32> to vector<256x16xbf16>
    %c7 = arith.constant 7 : index
    %c0_83 = arith.constant 0 : index
    %c0_84 = arith.constant 0 : index
    %63 = vector.load %arg2[%c7, %c0_83, %c0_84] : memref<9x16x16xbf16, #tpu.memory_space<vmem>>, vector<1x16x16xbf16>
    %64 = vector.shape_cast %63 : vector<1x16x16xbf16> to vector<16x16xbf16>
    %cst_85 = arith.constant dense<0.000000e+00> : vector<256x16xf32>
    %65 = tpu.matmul %62, %64, %cst_85 {dimension_numbers = #tpu.dot_dimension_numbers<[1], [0], [0], [1], [0, 0, 1, 1], [], []>} : vector<256x16xbf16>, vector<16x16xbf16>, vector<256x16xf32> -> vector<256x16xf32>
    %66 = arith.addf %59, %65 : vector<256x16xf32>
    %c0_86 = arith.constant 0 : index
    %c2_87 = arith.constant 2 : index
    %c2_88 = arith.constant 2 : index
    %c0_89 = arith.constant 0 : index
    %67 = vector.load %arg15[%c0_86, %c2_87, %c2_88, %c0_89] : memref<1x18x18x16xf32, #tpu.memory_space<vmem>>, vector<1x16x16x16xf32>
    %68 = vector.shape_cast %67 : vector<1x16x16x16xf32> to vector<256x16xf32>
    %69 = arith.truncf %68 : vector<256x16xf32> to vector<256x16xbf16>
    %c8 = arith.constant 8 : index
    %c0_90 = arith.constant 0 : index
    %c0_91 = arith.constant 0 : index
    %70 = vector.load %arg2[%c8, %c0_90, %c0_91] : memref<9x16x16xbf16, #tpu.memory_space<vmem>>, vector<1x16x16xbf16>
    %71 = vector.shape_cast %70 : vector<1x16x16xbf16> to vector<16x16xbf16>
    %cst_92 = arith.constant dense<0.000000e+00> : vector<256x16xf32>
    %72 = tpu.matmul %69, %71, %cst_92 {dimension_numbers = #tpu.dot_dimension_numbers<[1], [0], [0], [1], [0, 0, 1, 1], [], []>} : vector<256x16xbf16>, vector<16x16xbf16>, vector<256x16xf32> -> vector<256x16xf32>
    %73 = arith.addf %66, %72 : vector<256x16xf32>
    %c0_93 = arith.constant 0 : index
    %c0_94 = arith.constant 0 : index
    %74 = vector.load %arg3[%c0_93, %c0_94] : memref<1x16xf32, #tpu.memory_space<vmem>>, vector<1x16xf32>
    %75 = vector.broadcast %74 : vector<1x16xf32> to vector<256x16xf32>
    %76 = arith.addf %73, %75 : vector<256x16xf32>
    %cst_95 = arith.constant 0.000000e+00 : f32
    %77 = vector.broadcast %cst_95 : f32 to vector<256x16xf32>
    %78 = arith.maximumf %76, %77 : vector<256x16xf32>
    %79 = vector.shape_cast %78 : vector<256x16xf32> to vector<1x16x16x16xf32>
    %c0_96 = arith.constant 0 : index
    %c1_97 = arith.constant 1 : index
    %c1_98 = arith.constant 1 : index
    %c0_99 = arith.constant 0 : index
    %80 = vector.load %arg15[%c0_96, %c1_97, %c1_98, %c0_99] : memref<1x18x18x16xf32, #tpu.memory_space<vmem>>, vector<1x16x16x16xf32>
    tpu.vector_store %arg15[%c0_96, %c1_97, %c1_98, %c0_99], %79 {strides = array<i32>} : memref<1x18x18x16xf32, #tpu.memory_space<vmem>>, vector<1x16x16x16xf32>,
    %cst_100 = arith.constant 0.000000e+00 : f32
    %81 = vector.broadcast %cst_100 : f32 to vector<256x16xf32>
    %c0_101 = arith.constant 0 : index
    %c0_102 = arith.constant 0 : index
    %c0_103 = arith.constant 0 : index
    %c0_104 = arith.constant 0 : index
    %82 = vector.load %arg15[%c0_101, %c0_102, %c0_103, %c0_104] : memref<1x18x18x16xf32, #tpu.memory_space<vmem>>, vector<1x16x16x16xf32>
    %83 = vector.shape_cast %82 : vector<1x16x16x16xf32> to vector<256x16xf32>
    %84 = arith.truncf %83 : vector<256x16xf32> to vector<256x16xbf16>
    %c0_105 = arith.constant 0 : index
    %c0_106 = arith.constant 0 : index
    %c0_107 = arith.constant 0 : index
    %85 = vector.load %arg4[%c0_105, %c0_106, %c0_107] : memref<9x16x16xbf16, #tpu.memory_space<vmem>>, vector<1x16x16xbf16>
    %86 = vector.shape_cast %85 : vector<1x16x16xbf16> to vector<16x16xbf16>
    %cst_108 = arith.constant dense<0.000000e+00> : vector<256x16xf32>
    %87 = tpu.matmul %84, %86, %cst_108 {dimension_numbers = #tpu.dot_dimension_numbers<[1], [0], [0], [1], [0, 0, 1, 1], [], []>} : vector<256x16xbf16>, vector<16x16xbf16>, vector<256x16xf32> -> vector<256x16xf32>
    %88 = arith.addf %81, %87 : vector<256x16xf32>
    %c0_109 = arith.constant 0 : index
    %c0_110 = arith.constant 0 : index
    %c1_111 = arith.constant 1 : index
    %c0_112 = arith.constant 0 : index
    %89 = vector.load %arg15[%c0_109, %c0_110, %c1_111, %c0_112] : memref<1x18x18x16xf32, #tpu.memory_space<vmem>>, vector<1x16x16x16xf32>
    %90 = vector.shape_cast %89 : vector<1x16x16x16xf32> to vector<256x16xf32>
    %91 = arith.truncf %90 : vector<256x16xf32> to vector<256x16xbf16>
    %c1_113 = arith.constant 1 : index
    %c0_114 = arith.constant 0 : index
    %c0_115 = arith.constant 0 : index
    %92 = vector.load %arg4[%c1_113, %c0_114, %c0_115] : memref<9x16x16xbf16, #tpu.memory_space<vmem>>, vector<1x16x16xbf16>
    %93 = vector.shape_cast %92 : vector<1x16x16xbf16> to vector<16x16xbf16>
    %cst_116 = arith.constant dense<0.000000e+00> : vector<256x16xf32>
    %94 = tpu.matmul %91, %93, %cst_116 {dimension_numbers = #tpu.dot_dimension_numbers<[1], [0], [0], [1], [0, 0, 1, 1], [], []>} : vector<256x16xbf16>, vector<16x16xbf16>, vector<256x16xf32> -> vector<256x16xf32>
    %95 = arith.addf %88, %94 : vector<256x16xf32>
    %c0_117 = arith.constant 0 : index
    %c0_118 = arith.constant 0 : index
    %c2_119 = arith.constant 2 : index
    %c0_120 = arith.constant 0 : index
    %96 = vector.load %arg15[%c0_117, %c0_118, %c2_119, %c0_120] : memref<1x18x18x16xf32, #tpu.memory_space<vmem>>, vector<1x16x16x16xf32>
    %97 = vector.shape_cast %96 : vector<1x16x16x16xf32> to vector<256x16xf32>
    %98 = arith.truncf %97 : vector<256x16xf32> to vector<256x16xbf16>
    %c2_121 = arith.constant 2 : index
    %c0_122 = arith.constant 0 : index
    %c0_123 = arith.constant 0 : index
    %99 = vector.load %arg4[%c2_121, %c0_122, %c0_123] : memref<9x16x16xbf16, #tpu.memory_space<vmem>>, vector<1x16x16xbf16>
    %100 = vector.shape_cast %99 : vector<1x16x16xbf16> to vector<16x16xbf16>
    %cst_124 = arith.constant dense<0.000000e+00> : vector<256x16xf32>
    %101 = tpu.matmul %98, %100, %cst_124 {dimension_numbers = #tpu.dot_dimension_numbers<[1], [0], [0], [1], [0, 0, 1, 1], [], []>} : vector<256x16xbf16>, vector<16x16xbf16>, vector<256x16xf32> -> vector<256x16xf32>
    %102 = arith.addf %95, %101 : vector<256x16xf32>
    %c0_125 = arith.constant 0 : index
    %c1_126 = arith.constant 1 : index
    %c0_127 = arith.constant 0 : index
    %c0_128 = arith.constant 0 : index
    %103 = vector.load %arg15[%c0_125, %c1_126, %c0_127, %c0_128] : memref<1x18x18x16xf32, #tpu.memory_space<vmem>>, vector<1x16x16x16xf32>
    %104 = vector.shape_cast %103 : vector<1x16x16x16xf32> to vector<256x16xf32>
    %105 = arith.truncf %104 : vector<256x16xf32> to vector<256x16xbf16>
    %c3_129 = arith.constant 3 : index
    %c0_130 = arith.constant 0 : index
    %c0_131 = arith.constant 0 : index
    %106 = vector.load %arg4[%c3_129, %c0_130, %c0_131] : memref<9x16x16xbf16, #tpu.memory_space<vmem>>, vector<1x16x16xbf16>
    %107 = vector.shape_cast %106 : vector<1x16x16xbf16> to vector<16x16xbf16>
    %cst_132 = arith.constant dense<0.000000e+00> : vector<256x16xf32>
    %108 = tpu.matmul %105, %107, %cst_132 {dimension_numbers = #tpu.dot_dimension_numbers<[1], [0], [0], [1], [0, 0, 1, 1], [], []>} : vector<256x16xbf16>, vector<16x16xbf16>, vector<256x16xf32> -> vector<256x16xf32>
    %109 = arith.addf %102, %108 : vector<256x16xf32>
    %c0_133 = arith.constant 0 : index
    %c1_134 = arith.constant 1 : index
    %c1_135 = arith.constant 1 : index
    %c0_136 = arith.constant 0 : index
    %110 = vector.load %arg15[%c0_133, %c1_134, %c1_135, %c0_136] : memref<1x18x18x16xf32, #tpu.memory_space<vmem>>, vector<1x16x16x16xf32>
    %111 = vector.shape_cast %110 : vector<1x16x16x16xf32> to vector<256x16xf32>
    %112 = arith.truncf %111 : vector<256x16xf32> to vector<256x16xbf16>
    %c4_137 = arith.constant 4 : index
    %c0_138 = arith.constant 0 : index
    %c0_139 = arith.constant 0 : index
    %113 = vector.load %arg4[%c4_137, %c0_138, %c0_139] : memref<9x16x16xbf16, #tpu.memory_space<vmem>>, vector<1x16x16xbf16>
    %114 = vector.shape_cast %113 : vector<1x16x16xbf16> to vector<16x16xbf16>
    %cst_140 = arith.constant dense<0.000000e+00> : vector<256x16xf32>
    %115 = tpu.matmul %112, %114, %cst_140 {dimension_numbers = #tpu.dot_dimension_numbers<[1], [0], [0], [1], [0, 0, 1, 1], [], []>} : vector<256x16xbf16>, vector<16x16xbf16>, vector<256x16xf32> -> vector<256x16xf32>
    %116 = arith.addf %109, %115 : vector<256x16xf32>
    %c0_141 = arith.constant 0 : index
    %c1_142 = arith.constant 1 : index
    %c2_143 = arith.constant 2 : index
    %c0_144 = arith.constant 0 : index
    %117 = vector.load %arg15[%c0_141, %c1_142, %c2_143, %c0_144] : memref<1x18x18x16xf32, #tpu.memory_space<vmem>>, vector<1x16x16x16xf32>
    %118 = vector.shape_cast %117 : vector<1x16x16x16xf32> to vector<256x16xf32>
    %119 = arith.truncf %118 : vector<256x16xf32> to vector<256x16xbf16>
    %c5_145 = arith.constant 5 : index
    %c0_146 = arith.constant 0 : index
    %c0_147 = arith.constant 0 : index
    %120 = vector.load %arg4[%c5_145, %c0_146, %c0_147] : memref<9x16x16xbf16, #tpu.memory_space<vmem>>, vector<1x16x16xbf16>
    %121 = vector.shape_cast %120 : vector<1x16x16xbf16> to vector<16x16xbf16>
    %cst_148 = arith.constant dense<0.000000e+00> : vector<256x16xf32>
    %122 = tpu.matmul %119, %121, %cst_148 {dimension_numbers = #tpu.dot_dimension_numbers<[1], [0], [0], [1], [0, 0, 1, 1], [], []>} : vector<256x16xbf16>, vector<16x16xbf16>, vector<256x16xf32> -> vector<256x16xf32>
    %123 = arith.addf %116, %122 : vector<256x16xf32>
    %c0_149 = arith.constant 0 : index
    %c2_150 = arith.constant 2 : index
    %c0_151 = arith.constant 0 : index
    %c0_152 = arith.constant 0 : index
    %124 = vector.load %arg15[%c0_149, %c2_150, %c0_151, %c0_152] : memref<1x18x18x16xf32, #tpu.memory_space<vmem>>, vector<1x16x16x16xf32>
    %125 = vector.shape_cast %124 : vector<1x16x16x16xf32> to vector<256x16xf32>
    %126 = arith.truncf %125 : vector<256x16xf32> to vector<256x16xbf16>
    %c6_153 = arith.constant 6 : index
    %c0_154 = arith.constant 0 : index
    %c0_155 = arith.constant 0 : index
    %127 = vector.load %arg4[%c6_153, %c0_154, %c0_155] : memref<9x16x16xbf16, #tpu.memory_space<vmem>>, vector<1x16x16xbf16>
    %128 = vector.shape_cast %127 : vector<1x16x16xbf16> to vector<16x16xbf16>
    %cst_156 = arith.constant dense<0.000000e+00> : vector<256x16xf32>
    %129 = tpu.matmul %126, %128, %cst_156 {dimension_numbers = #tpu.dot_dimension_numbers<[1], [0], [0], [1], [0, 0, 1, 1], [], []>} : vector<256x16xbf16>, vector<16x16xbf16>, vector<256x16xf32> -> vector<256x16xf32>
    %130 = arith.addf %123, %129 : vector<256x16xf32>
    %c0_157 = arith.constant 0 : index
    %c2_158 = arith.constant 2 : index
    %c1_159 = arith.constant 1 : index
    %c0_160 = arith.constant 0 : index
    %131 = vector.load %arg15[%c0_157, %c2_158, %c1_159, %c0_160] : memref<1x18x18x16xf32, #tpu.memory_space<vmem>>, vector<1x16x16x16xf32>
    %132 = vector.shape_cast %131 : vector<1x16x16x16xf32> to vector<256x16xf32>
    %133 = arith.truncf %132 : vector<256x16xf32> to vector<256x16xbf16>
    %c7_161 = arith.constant 7 : index
    %c0_162 = arith.constant 0 : index
    %c0_163 = arith.constant 0 : index
    %134 = vector.load %arg4[%c7_161, %c0_162, %c0_163] : memref<9x16x16xbf16, #tpu.memory_space<vmem>>, vector<1x16x16xbf16>
    %135 = vector.shape_cast %134 : vector<1x16x16xbf16> to vector<16x16xbf16>
    %cst_164 = arith.constant dense<0.000000e+00> : vector<256x16xf32>
    %136 = tpu.matmul %133, %135, %cst_164 {dimension_numbers = #tpu.dot_dimension_numbers<[1], [0], [0], [1], [0, 0, 1, 1], [], []>} : vector<256x16xbf16>, vector<16x16xbf16>, vector<256x16xf32> -> vector<256x16xf32>
    %137 = arith.addf %130, %136 : vector<256x16xf32>
    %c0_165 = arith.constant 0 : index
    %c2_166 = arith.constant 2 : index
    %c2_167 = arith.constant 2 : index
    %c0_168 = arith.constant 0 : index
    %138 = vector.load %arg15[%c0_165, %c2_166, %c2_167, %c0_168] : memref<1x18x18x16xf32, #tpu.memory_space<vmem>>, vector<1x16x16x16xf32>
    %139 = vector.shape_cast %138 : vector<1x16x16x16xf32> to vector<256x16xf32>
    %140 = arith.truncf %139 : vector<256x16xf32> to vector<256x16xbf16>
    %c8_169 = arith.constant 8 : index
    %c0_170 = arith.constant 0 : index
    %c0_171 = arith.constant 0 : index
    %141 = vector.load %arg4[%c8_169, %c0_170, %c0_171] : memref<9x16x16xbf16, #tpu.memory_space<vmem>>, vector<1x16x16xbf16>
    %142 = vector.shape_cast %141 : vector<1x16x16xbf16> to vector<16x16xbf16>
    %cst_172 = arith.constant dense<0.000000e+00> : vector<256x16xf32>
    %143 = tpu.matmul %140, %142, %cst_172 {dimension_numbers = #tpu.dot_dimension_numbers<[1], [0], [0], [1], [0, 0, 1, 1], [], []>} : vector<256x16xbf16>, vector<16x16xbf16>, vector<256x16xf32> -> vector<256x16xf32>
    %144 = arith.addf %137, %143 : vector<256x16xf32>
    %c0_173 = arith.constant 0 : index
    %c0_174 = arith.constant 0 : index
    %145 = vector.load %arg5[%c0_173, %c0_174] : memref<1x16xf32, #tpu.memory_space<vmem>>, vector<1x16xf32>
    %146 = vector.broadcast %145 : vector<1x16xf32> to vector<256x16xf32>
    %147 = arith.addf %144, %146 : vector<256x16xf32>
    %148 = vector.shape_cast %147 : vector<256x16xf32> to vector<1x16x16x16xf32>
    %cst_175 = arith.constant dense<0xFF800000> : vector<1x16x16xf32>
    %149 = vector.multi_reduction <maximumf>, %148, %cst_175 [3] : vector<1x16x16x16xf32> to vector<1x16x16xf32>
    %150 = vector.shape_cast %149 : vector<1x16x16xf32> to vector<1x16x16x1xf32>
    %cst_176 = arith.constant dense<0.000000e+00> : vector<1x16x16xf32>
    %151 = vector.multi_reduction <add>, %148, %cst_176 [3] : vector<1x16x16x16xf32> to vector<1x16x16xf32>
    %152 = vector.shape_cast %151 : vector<1x16x16xf32> to vector<1x16x16x1xf32>
    %cst_177 = arith.constant 1.600000e+01 : f32
    %153 = vector.broadcast %cst_177 : f32 to vector<1x16x16x1xf32>
    %154 = arith.divf %152, %153 : vector<1x16x16x1xf32>
    %155 = tpu.concatenate %150, %154 in 3 : vector<1x16x16x1xf32>, vector<1x16x16x1xf32> -> vector<1x16x16x2xf32>
    %c0_178 = arith.constant 0 : index
    %c1_179 = arith.constant 1 : index
    %c1_180 = arith.constant 1 : index
    %c0_181 = arith.constant 0 : index
    %156 = vector.load %arg16[%c0_178, %c1_179, %c1_180, %c0_181] : memref<1x18x18x2xf32, #tpu.memory_space<vmem>>, vector<1x16x16x2xf32>
    tpu.vector_store %arg16[%c0_178, %c1_179, %c1_180, %c0_181], %155 {strides = array<i32>} : memref<1x18x18x2xf32, #tpu.memory_space<vmem>>, vector<1x16x16x2xf32>,
    %cst_182 = arith.constant 0.000000e+00 : f32
    %157 = vector.broadcast %cst_182 : f32 to vector<1x16x16x1xf32>
    %c0_183 = arith.constant 0 : index
    %c0_184 = arith.constant 0 : index
    %c0_185 = arith.constant 0 : index
    %c0_186 = arith.constant 0 : index
    %158 = vector.load %arg16[%c0_183, %c0_184, %c0_185, %c0_186] : memref<1x18x18x2xf32, #tpu.memory_space<vmem>>, vector<1x16x16x2xf32>
    %159 = vector.extract_strided_slice %158 {offsets = [0, 0, 0, 0], sizes = [1, 16, 16, 1], strides = [1, 1, 1, 1]} : vector<1x16x16x2xf32> to vector<1x16x16x1xf32>
    %c0_187 = arith.constant 0 : index
    %160 = memref.load %arg6[%c0_187] : memref<18xf32, #tpu.memory_space<smem>>
    %161 = vector.broadcast %160 : f32 to vector<1x16x16x1xf32>
    %162 = arith.mulf %159, %161 : vector<1x16x16x1xf32>
    %163 = arith.addf %157, %162 : vector<1x16x16x1xf32>
    %164 = vector.extract_strided_slice %158 {offsets = [0, 0, 0, 1], sizes = [1, 16, 16, 1], strides = [1, 1, 1, 1]} : vector<1x16x16x2xf32> to vector<1x16x16x1xf32>
    %c1_188 = arith.constant 1 : index
    %165 = memref.load %arg6[%c1_188] : memref<18xf32, #tpu.memory_space<smem>>
    %166 = vector.broadcast %165 : f32 to vector<1x16x16x1xf32>
    %167 = arith.mulf %164, %166 : vector<1x16x16x1xf32>
    %168 = arith.addf %163, %167 : vector<1x16x16x1xf32>
    %c0_189 = arith.constant 0 : index
    %c0_190 = arith.constant 0 : index
    %c1_191 = arith.constant 1 : index
    %c0_192 = arith.constant 0 : index
    %169 = vector.load %arg16[%c0_189, %c0_190, %c1_191, %c0_192] : memref<1x18x18x2xf32, #tpu.memory_space<vmem>>, vector<1x16x16x2xf32>
    %170 = vector.extract_strided_slice %169 {offsets = [0, 0, 0, 0], sizes = [1, 16, 16, 1], strides = [1, 1, 1, 1]} : vector<1x16x16x2xf32> to vector<1x16x16x1xf32>
    %c2_193 = arith.constant 2 : index
    %171 = memref.load %arg6[%c2_193] : memref<18xf32, #tpu.memory_space<smem>>
    %172 = vector.broadcast %171 : f32 to vector<1x16x16x1xf32>
    %173 = arith.mulf %170, %172 : vector<1x16x16x1xf32>
    %174 = arith.addf %168, %173 : vector<1x16x16x1xf32>
    %175 = vector.extract_strided_slice %169 {offsets = [0, 0, 0, 1], sizes = [1, 16, 16, 1], strides = [1, 1, 1, 1]} : vector<1x16x16x2xf32> to vector<1x16x16x1xf32>
    %c3_194 = arith.constant 3 : index
    %176 = memref.load %arg6[%c3_194] : memref<18xf32, #tpu.memory_space<smem>>
    %177 = vector.broadcast %176 : f32 to vector<1x16x16x1xf32>
    %178 = arith.mulf %175, %177 : vector<1x16x16x1xf32>
    %179 = arith.addf %174, %178 : vector<1x16x16x1xf32>
    %c0_195 = arith.constant 0 : index
    %c0_196 = arith.constant 0 : index
    %c2_197 = arith.constant 2 : index
    %c0_198 = arith.constant 0 : index
    %180 = vector.load %arg16[%c0_195, %c0_196, %c2_197, %c0_198] : memref<1x18x18x2xf32, #tpu.memory_space<vmem>>, vector<1x16x16x2xf32>
    %181 = vector.extract_strided_slice %180 {offsets = [0, 0, 0, 0], sizes = [1, 16, 16, 1], strides = [1, 1, 1, 1]} : vector<1x16x16x2xf32> to vector<1x16x16x1xf32>
    %c4_199 = arith.constant 4 : index
    %182 = memref.load %arg6[%c4_199] : memref<18xf32, #tpu.memory_space<smem>>
    %183 = vector.broadcast %182 : f32 to vector<1x16x16x1xf32>
    %184 = arith.mulf %181, %183 : vector<1x16x16x1xf32>
    %185 = arith.addf %179, %184 : vector<1x16x16x1xf32>
    %186 = vector.extract_strided_slice %180 {offsets = [0, 0, 0, 1], sizes = [1, 16, 16, 1], strides = [1, 1, 1, 1]} : vector<1x16x16x2xf32> to vector<1x16x16x1xf32>
    %c5_200 = arith.constant 5 : index
    %187 = memref.load %arg6[%c5_200] : memref<18xf32, #tpu.memory_space<smem>>
    %188 = vector.broadcast %187 : f32 to vector<1x16x16x1xf32>
    %189 = arith.mulf %186, %188 : vector<1x16x16x1xf32>
    %190 = arith.addf %185, %189 : vector<1x16x16x1xf32>
    %c0_201 = arith.constant 0 : index
    %c1_202 = arith.constant 1 : index
    %c0_203 = arith.constant 0 : index
    %c0_204 = arith.constant 0 : index
    %191 = vector.load %arg16[%c0_201, %c1_202, %c0_203, %c0_204] : memref<1x18x18x2xf32, #tpu.memory_space<vmem>>, vector<1x16x16x2xf32>
    %192 = vector.extract_strided_slice %191 {offsets = [0, 0, 0, 0], sizes = [1, 16, 16, 1], strides = [1, 1, 1, 1]} : vector<1x16x16x2xf32> to vector<1x16x16x1xf32>
    %c6_205 = arith.constant 6 : index
    %193 = memref.load %arg6[%c6_205] : memref<18xf32, #tpu.memory_space<smem>>
    %194 = vector.broadcast %193 : f32 to vector<1x16x16x1xf32>
    %195 = arith.mulf %192, %194 : vector<1x16x16x1xf32>
    %196 = arith.addf %190, %195 : vector<1x16x16x1xf32>
    %197 = vector.extract_strided_slice %191 {offsets = [0, 0, 0, 1], sizes = [1, 16, 16, 1], strides = [1, 1, 1, 1]} : vector<1x16x16x2xf32> to vector<1x16x16x1xf32>
    %c7_206 = arith.constant 7 : index
    %198 = memref.load %arg6[%c7_206] : memref<18xf32, #tpu.memory_space<smem>>
    %199 = vector.broadcast %198 : f32 to vector<1x16x16x1xf32>
    %200 = arith.mulf %197, %199 : vector<1x16x16x1xf32>
    %201 = arith.addf %196, %200 : vector<1x16x16x1xf32>
    %c0_207 = arith.constant 0 : index
    %c1_208 = arith.constant 1 : index
    %c1_209 = arith.constant 1 : index
    %c0_210 = arith.constant 0 : index
    %202 = vector.load %arg16[%c0_207, %c1_208, %c1_209, %c0_210] : memref<1x18x18x2xf32, #tpu.memory_space<vmem>>, vector<1x16x16x2xf32>
    %203 = vector.extract_strided_slice %202 {offsets = [0, 0, 0, 0], sizes = [1, 16, 16, 1], strides = [1, 1, 1, 1]} : vector<1x16x16x2xf32> to vector<1x16x16x1xf32>
    %c8_211 = arith.constant 8 : index
    %204 = memref.load %arg6[%c8_211] : memref<18xf32, #tpu.memory_space<smem>>
    %205 = vector.broadcast %204 : f32 to vector<1x16x16x1xf32>
    %206 = arith.mulf %203, %205 : vector<1x16x16x1xf32>
    %207 = arith.addf %201, %206 : vector<1x16x16x1xf32>
    %208 = vector.extract_strided_slice %202 {offsets = [0, 0, 0, 1], sizes = [1, 16, 16, 1], strides = [1, 1, 1, 1]} : vector<1x16x16x2xf32> to vector<1x16x16x1xf32>
    %c9 = arith.constant 9 : index
    %209 = memref.load %arg6[%c9] : memref<18xf32, #tpu.memory_space<smem>>
    %210 = vector.broadcast %209 : f32 to vector<1x16x16x1xf32>
    %211 = arith.mulf %208, %210 : vector<1x16x16x1xf32>
    %212 = arith.addf %207, %211 : vector<1x16x16x1xf32>
    %c0_212 = arith.constant 0 : index
    %c1_213 = arith.constant 1 : index
    %c2_214 = arith.constant 2 : index
    %c0_215 = arith.constant 0 : index
    %213 = vector.load %arg16[%c0_212, %c1_213, %c2_214, %c0_215] : memref<1x18x18x2xf32, #tpu.memory_space<vmem>>, vector<1x16x16x2xf32>
    %214 = vector.extract_strided_slice %213 {offsets = [0, 0, 0, 0], sizes = [1, 16, 16, 1], strides = [1, 1, 1, 1]} : vector<1x16x16x2xf32> to vector<1x16x16x1xf32>
    %c10 = arith.constant 10 : index
    %215 = memref.load %arg6[%c10] : memref<18xf32, #tpu.memory_space<smem>>
    %216 = vector.broadcast %215 : f32 to vector<1x16x16x1xf32>
    %217 = arith.mulf %214, %216 : vector<1x16x16x1xf32>
    %218 = arith.addf %212, %217 : vector<1x16x16x1xf32>
    %219 = vector.extract_strided_slice %213 {offsets = [0, 0, 0, 1], sizes = [1, 16, 16, 1], strides = [1, 1, 1, 1]} : vector<1x16x16x2xf32> to vector<1x16x16x1xf32>
    %c11 = arith.constant 11 : index
    %220 = memref.load %arg6[%c11] : memref<18xf32, #tpu.memory_space<smem>>
    %221 = vector.broadcast %220 : f32 to vector<1x16x16x1xf32>
    %222 = arith.mulf %219, %221 : vector<1x16x16x1xf32>
    %223 = arith.addf %218, %222 : vector<1x16x16x1xf32>
    %c0_216 = arith.constant 0 : index
    %c2_217 = arith.constant 2 : index
    %c0_218 = arith.constant 0 : index
    %c0_219 = arith.constant 0 : index
    %224 = vector.load %arg16[%c0_216, %c2_217, %c0_218, %c0_219] : memref<1x18x18x2xf32, #tpu.memory_space<vmem>>, vector<1x16x16x2xf32>
    %225 = vector.extract_strided_slice %224 {offsets = [0, 0, 0, 0], sizes = [1, 16, 16, 1], strides = [1, 1, 1, 1]} : vector<1x16x16x2xf32> to vector<1x16x16x1xf32>
    %c12 = arith.constant 12 : index
    %226 = memref.load %arg6[%c12] : memref<18xf32, #tpu.memory_space<smem>>
    %227 = vector.broadcast %226 : f32 to vector<1x16x16x1xf32>
    %228 = arith.mulf %225, %227 : vector<1x16x16x1xf32>
    %229 = arith.addf %223, %228 : vector<1x16x16x1xf32>
    %230 = vector.extract_strided_slice %224 {offsets = [0, 0, 0, 1], sizes = [1, 16, 16, 1], strides = [1, 1, 1, 1]} : vector<1x16x16x2xf32> to vector<1x16x16x1xf32>
    %c13 = arith.constant 13 : index
    %231 = memref.load %arg6[%c13] : memref<18xf32, #tpu.memory_space<smem>>
    %232 = vector.broadcast %231 : f32 to vector<1x16x16x1xf32>
    %233 = arith.mulf %230, %232 : vector<1x16x16x1xf32>
    %234 = arith.addf %229, %233 : vector<1x16x16x1xf32>
    %c0_220 = arith.constant 0 : index
    %c2_221 = arith.constant 2 : index
    %c1_222 = arith.constant 1 : index
    %c0_223 = arith.constant 0 : index
    %235 = vector.load %arg16[%c0_220, %c2_221, %c1_222, %c0_223] : memref<1x18x18x2xf32, #tpu.memory_space<vmem>>, vector<1x16x16x2xf32>
    %236 = vector.extract_strided_slice %235 {offsets = [0, 0, 0, 0], sizes = [1, 16, 16, 1], strides = [1, 1, 1, 1]} : vector<1x16x16x2xf32> to vector<1x16x16x1xf32>
    %c14 = arith.constant 14 : index
    %237 = memref.load %arg6[%c14] : memref<18xf32, #tpu.memory_space<smem>>
    %238 = vector.broadcast %237 : f32 to vector<1x16x16x1xf32>
    %239 = arith.mulf %236, %238 : vector<1x16x16x1xf32>
    %240 = arith.addf %234, %239 : vector<1x16x16x1xf32>
    %241 = vector.extract_strided_slice %235 {offsets = [0, 0, 0, 1], sizes = [1, 16, 16, 1], strides = [1, 1, 1, 1]} : vector<1x16x16x2xf32> to vector<1x16x16x1xf32>
    %c15 = arith.constant 15 : index
    %242 = memref.load %arg6[%c15] : memref<18xf32, #tpu.memory_space<smem>>
    %243 = vector.broadcast %242 : f32 to vector<1x16x16x1xf32>
    %244 = arith.mulf %241, %243 : vector<1x16x16x1xf32>
    %245 = arith.addf %240, %244 : vector<1x16x16x1xf32>
    %c0_224 = arith.constant 0 : index
    %c2_225 = arith.constant 2 : index
    %c2_226 = arith.constant 2 : index
    %c0_227 = arith.constant 0 : index
    %246 = vector.load %arg16[%c0_224, %c2_225, %c2_226, %c0_227] : memref<1x18x18x2xf32, #tpu.memory_space<vmem>>, vector<1x16x16x2xf32>
    %247 = vector.extract_strided_slice %246 {offsets = [0, 0, 0, 0], sizes = [1, 16, 16, 1], strides = [1, 1, 1, 1]} : vector<1x16x16x2xf32> to vector<1x16x16x1xf32>
    %c16 = arith.constant 16 : index
    %248 = memref.load %arg6[%c16] : memref<18xf32, #tpu.memory_space<smem>>
    %249 = vector.broadcast %248 : f32 to vector<1x16x16x1xf32>
    %250 = arith.mulf %247, %249 : vector<1x16x16x1xf32>
    %251 = arith.addf %245, %250 : vector<1x16x16x1xf32>
    %252 = vector.extract_strided_slice %246 {offsets = [0, 0, 0, 1], sizes = [1, 16, 16, 1], strides = [1, 1, 1, 1]} : vector<1x16x16x2xf32> to vector<1x16x16x1xf32>
    %c17_228 = arith.constant 17 : index
    %253 = memref.load %arg6[%c17_228] : memref<18xf32, #tpu.memory_space<smem>>
    %254 = vector.broadcast %253 : f32 to vector<1x16x16x1xf32>
    %255 = arith.mulf %252, %254 : vector<1x16x16x1xf32>
    %256 = arith.addf %251, %255 : vector<1x16x16x1xf32>
    %257 = arith.negf %256 : vector<1x16x16x1xf32>
    %258 = math.exp %257 : vector<1x16x16x1xf32>
    %cst_229 = arith.constant 1.000000e+00 : f32
    %259 = vector.broadcast %cst_229 : f32 to vector<1x16x16x1xf32>
    %260 = arith.addf %259, %258 : vector<1x16x16x1xf32>
    %261 = arith.divf %259, %260 : vector<1x16x16x1xf32>
    %262 = vector.broadcast %261 : vector<1x16x16x1xf32> to vector<1x16x16x16xf32>
    %263 = arith.mulf %148, %262 : vector<1x16x16x16xf32>
    %264 = vector.shape_cast %263 : vector<1x16x16x16xf32> to vector<256x16xf32>
    %265 = vector.shape_cast %147 : vector<256x16xf32> to vector<1x256x16xf32>
    %cst_230 = arith.constant dense<0.000000e+00> : vector<1x16xf32>
    %266 = vector.multi_reduction <add>, %265, %cst_230 [1] : vector<1x256x16xf32> to vector<1x16xf32>
    %cst_231 = arith.constant 2.560000e+02 : f32
    %267 = vector.broadcast %cst_231 : f32 to vector<1x16xf32>
    %268 = arith.divf %266, %267 : vector<1x16xf32>
    %269 = arith.truncf %268 : vector<1x16xf32> to vector<1x16xbf16>
    %c0_232 = arith.constant 0 : index
    %c0_233 = arith.constant 0 : index
    %270 = vector.load %arg7[%c0_232, %c0_233] : memref<16x4xbf16, #tpu.memory_space<vmem>>, vector<16x4xbf16>
    %cst_234 = arith.constant dense<0.000000e+00> : vector<1x4xf32>
    %271 = tpu.matmul %269, %270, %cst_234 {dimension_numbers = #tpu.dot_dimension_numbers<[1], [0], [0], [1], [0, 0, 1, 1], [], []>} : vector<1x16xbf16>, vector<16x4xbf16>, vector<1x4xf32> -> vector<1x4xf32>
    %c0_235 = arith.constant 0 : index
    %c0_236 = arith.constant 0 : index
    %272 = vector.load %arg8[%c0_235, %c0_236] : memref<1x4xf32, #tpu.memory_space<vmem>>, vector<1x4xf32>
    %273 = arith.addf %271, %272 : vector<1x4xf32>
    %cst_237 = arith.constant 0.000000e+00 : f32
    %274 = vector.broadcast %cst_237 : f32 to vector<1x4xf32>
    %275 = arith.maximumf %273, %274 : vector<1x4xf32>
    %276 = arith.truncf %275 : vector<1x4xf32> to vector<1x4xbf16>
    %c0_238 = arith.constant 0 : index
    %c0_239 = arith.constant 0 : index
    %277 = vector.load %arg9[%c0_238, %c0_239] : memref<4x16xbf16, #tpu.memory_space<vmem>>, vector<4x16xbf16>
    %cst_240 = arith.constant dense<0.000000e+00> : vector<1x16xf32>
    %278 = tpu.matmul %276, %277, %cst_240 {dimension_numbers = #tpu.dot_dimension_numbers<[1], [0], [0], [1], [0, 0, 1, 1], [], []>} : vector<1x4xbf16>, vector<4x16xbf16>, vector<1x16xf32> -> vector<1x16xf32>
    %c0_241 = arith.constant 0 : index
    %c0_242 = arith.constant 0 : index
    %279 = vector.load %arg10[%c0_241, %c0_242] : memref<1x16xf32, #tpu.memory_space<vmem>>, vector<1x16xf32>
    %280 = arith.addf %278, %279 : vector<1x16xf32>
    %281 = arith.negf %280 : vector<1x16xf32>
    %282 = math.exp %281 : vector<1x16xf32>
    %cst_243 = arith.constant 1.000000e+00 : f32
    %283 = vector.broadcast %cst_243 : f32 to vector<1x16xf32>
    %284 = arith.addf %283, %282 : vector<1x16xf32>
    %285 = arith.divf %283, %284 : vector<1x16xf32>
    %286 = vector.shape_cast %285 : vector<1x16xf32> to vector<1x1x1x16xf32>
    %287 = vector.broadcast %286 : vector<1x1x1x16xf32> to vector<1x16x16x16xf32>
    %288 = arith.mulf %148, %287 : vector<1x16x16x16xf32>
    %289 = vector.shape_cast %288 : vector<1x16x16x16xf32> to vector<256x16xf32>
    %290 = arith.truncf %264 : vector<256x16xf32> to vector<256x16xbf16>
    %c0_244 = arith.constant 0 : index
    %c0_245 = arith.constant 0 : index
    %291 = vector.load %arg11[%c0_244, %c0_245] : memref<16x16xbf16, #tpu.memory_space<vmem>>, vector<16x16xbf16>
    %cst_246 = arith.constant dense<0.000000e+00> : vector<256x16xf32>
    %292 = tpu.matmul %290, %291, %cst_246 {dimension_numbers = #tpu.dot_dimension_numbers<[1], [0], [0], [1], [0, 0, 1, 1], [], []>} : vector<256x16xbf16>, vector<16x16xbf16>, vector<256x16xf32> -> vector<256x16xf32>
    %293 = arith.truncf %289 : vector<256x16xf32> to vector<256x16xbf16>
    %c0_247 = arith.constant 0 : index
    %c0_248 = arith.constant 0 : index
    %294 = vector.load %arg12[%c0_247, %c0_248] : memref<16x16xbf16, #tpu.memory_space<vmem>>, vector<16x16xbf16>
    %cst_249 = arith.constant dense<0.000000e+00> : vector<256x16xf32>
    %295 = tpu.matmul %293, %294, %cst_249 {dimension_numbers = #tpu.dot_dimension_numbers<[1], [0], [0], [1], [0, 0, 1, 1], [], []>} : vector<256x16xbf16>, vector<16x16xbf16>, vector<256x16xf32> -> vector<256x16xf32>
    %296 = arith.addf %292, %295 : vector<256x16xf32>
    %c0_250 = arith.constant 0 : index
    %c0_251 = arith.constant 0 : index
    %297 = vector.load %arg13[%c0_250, %c0_251] : memref<1x16xf32, #tpu.memory_space<vmem>>, vector<1x16xf32>
    %298 = vector.broadcast %297 : vector<1x16xf32> to vector<256x16xf32>
    %299 = arith.addf %296, %298 : vector<256x16xf32>
    %300 = vector.shape_cast %299 : vector<256x16xf32> to vector<1x16x16x16xf32>
    %301 = arith.addf %300, %8 : vector<1x16x16x16xf32>
    %c0_252 = arith.constant 0 : index
    %c0_253 = arith.constant 0 : index
    %c0_254 = arith.constant 0 : index
    %c0_255 = arith.constant 0 : index
    %302 = vector.load %arg14[%c0_252, %c0_253, %c0_254, %c0_255] : memref<1x16x16x16xf32, #tpu.memory_space<vmem>>, vector<1x16x16x16xf32>
    tpu.vector_store %arg14[%c0_252, %c0_253, %c0_254, %c0_255], %301 {strides = array<i32>} : memref<1x16x16x16xf32, #tpu.memory_space<vmem>>, vector<1x16x16x16xf32>,
    return
  }
  func.func @transform_0(%arg0: i32) -> (i32, i32, i32, i32) {
    %c0_i32 = arith.constant 0 : i32
    %c0_i32_0 = arith.constant 0 : i32
    %c0_i32_1 = arith.constant 0 : i32
    %c0_i32_2 = arith.constant 0 : i32
    return %arg0, %c0_i32, %c0_i32_0, %c0_i32_1 : i32, i32, i32, i32
  }
  func.func @transform_1(%arg0: i32) -> (i32, i32, i32) {
    %c0_i32 = arith.constant 0 : i32
    %c0_i32_0 = arith.constant 0 : i32
    %c0_i32_1 = arith.constant 0 : i32
    %c0_i32_2 = arith.constant 0 : i32
    return %c0_i32, %c0_i32_0, %c0_i32_1 : i32, i32, i32
  }
  func.func @transform_2(%arg0: i32) -> (i32, i32) {
    %c0_i32 = arith.constant 0 : i32
    %c0_i32_0 = arith.constant 0 : i32
    %c0_i32_1 = arith.constant 0 : i32
    return %c0_i32, %c0_i32_0 : i32, i32
  }
  func.func @transform_3(%arg0: i32) -> (i32, i32, i32) {
    %c0_i32 = arith.constant 0 : i32
    %c0_i32_0 = arith.constant 0 : i32
    %c0_i32_1 = arith.constant 0 : i32
    %c0_i32_2 = arith.constant 0 : i32
    return %c0_i32, %c0_i32_0, %c0_i32_1 : i32, i32, i32
  }
  func.func @transform_4(%arg0: i32) -> (i32, i32) {
    %c0_i32 = arith.constant 0 : i32
    %c0_i32_0 = arith.constant 0 : i32
    %c0_i32_1 = arith.constant 0 : i32
    return %c0_i32, %c0_i32_0 : i32, i32
  }
  func.func @transform_5(%arg0: i32) -> i32 {
    %c0_i32 = arith.constant 0 : i32
    %c0_i32_0 = arith.constant 0 : i32
    return %c0_i32 : i32
  }
  func.func @transform_6(%arg0: i32) -> (i32, i32) {
    %c0_i32 = arith.constant 0 : i32
    %c0_i32_0 = arith.constant 0 : i32
    %c0_i32_1 = arith.constant 0 : i32
    return %c0_i32, %c0_i32_0 : i32, i32
  }
  func.func @transform_7(%arg0: i32) -> (i32, i32) {
    %c0_i32 = arith.constant 0 : i32
    %c0_i32_0 = arith.constant 0 : i32
    %c0_i32_1 = arith.constant 0 : i32
    return %c0_i32, %c0_i32_0 : i32, i32
  }
  func.func @transform_8(%arg0: i32) -> (i32, i32) {
    %c0_i32 = arith.constant 0 : i32
    %c0_i32_0 = arith.constant 0 : i32
    %c0_i32_1 = arith.constant 0 : i32
    return %c0_i32, %c0_i32_0 : i32, i32
  }
  func.func @transform_9(%arg0: i32) -> (i32, i32) {
    %c0_i32 = arith.constant 0 : i32
    %c0_i32_0 = arith.constant 0 : i32
    %c0_i32_1 = arith.constant 0 : i32
    return %c0_i32, %c0_i32_0 : i32, i32
  }
  func.func @transform_10(%arg0: i32) -> (i32, i32) {
    %c0_i32 = arith.constant 0 : i32
    %c0_i32_0 = arith.constant 0 : i32
    %c0_i32_1 = arith.constant 0 : i32
    return %c0_i32, %c0_i32_0 : i32, i32
  }
  func.func @transform_11(%arg0: i32) -> (i32, i32) {
    %c0_i32 = arith.constant 0 : i32
    %c0_i32_0 = arith.constant 0 : i32
    %c0_i32_1 = arith.constant 0 : i32
    return %c0_i32, %c0_i32_0 : i32, i32
  }
  func.func @transform_12(%arg0: i32) -> (i32, i32) {
    %c0_i32 = arith.constant 0 : i32
    %c0_i32_0 = arith.constant 0 : i32
    %c0_i32_1 = arith.constant 0 : i32
    return %c0_i32, %c0_i32_0 : i32, i32
  }
  func.func @transform_13(%arg0: i32) -> (i32, i32, i32, i32) {
    %c0_i32 = arith.constant 0 : i32
    %c0_i32_0 = arith.constant 0 : i32
    %c0_i32_1 = arith.constant 0 : i32
    %c0_i32_2 = arith.constant 0 : i32
    return %arg0, %c0_i32, %c0_i32_0, %c0_i32_1 : i32, i32, i32, i32
  }
}

</mosaic_0001>

<llo_original>
// kernel: dab_forward.1
$region0: #{dab_forward.1}
  #allocation0 [shape = 'u32[]', space=smem, size = 0x4, offset = 0x4, fixed_abs, tag = 'smem constant byte address 0x4 - core index']
  #allocation1 [shape = 'u32[144,128]{1,0:T(1,128)}', space=vmem, size = 0x12000, scoped, tag = 'internal scratch']
  #allocation2 [shape = 'f32[1,18,18,16]{3,2,1,0:T(8,128)}', space=vmem, size = 0x36000, scoped, tag = 'scratch operand']
  #allocation3 [shape = 'f32[1,18,18,2]{3,2,1,0:T(8,128)}', space=vmem, size = 0x36000, scoped, tag = 'scratch operand']
  %s0 = inlined_call_operand.vmem [shape: f32[2,16,16,16], index: 0, kind: input, shape index: {}]
  %s1 = inlined_call_operand.vmem [shape: bf16[9,16,16], index: 1, kind: input, shape index: {}]
  %s2 = inlined_call_operand.vmem [shape: f32[1,16], index: 2, kind: input, shape index: {}]
  %s3 = inlined_call_operand.vmem [shape: bf16[9,16,16], index: 3, kind: input, shape index: {}]
  %s4 = inlined_call_operand.vmem [shape: f32[1,16], index: 4, kind: input, shape index: {}]
  %s5 = inlined_call_operand.vmem [shape: f32[18], index: 5, kind: input, shape index: {}]
  %s6 = inlined_call_operand.vmem [shape: bf16[16,4], index: 6, kind: input, shape index: {}]
  %s7 = inlined_call_operand.vmem [shape: f32[1,4], index: 7, kind: input, shape index: {}]
  %s8 = inlined_call_operand.vmem [shape: bf16[4,16], index: 8, kind: input, shape index: {}]
  %s9 = inlined_call_operand.vmem [shape: f32[1,16], index: 9, kind: input, shape index: {}]
  %s10 = inlined_call_operand.vmem [shape: bf16[16,16], index: 10, kind: input, shape index: {}]
  %s11 = inlined_call_operand.vmem [shape: bf16[16,16], index: 11, kind: input, shape index: {}]
  %s12 = inlined_call_operand.vmem [shape: f32[1,16], index: 12, kind: input, shape index: {}]
  %s13 = inlined_call_operand.hbm [shape: f32[2,16,16,16], index: 13, kind: output, shape index: {}]
  %s14 = sld [smem:[#allocation0]]
  $region89: #{dab_forward.1} parent=0
    _
  %s16 = ssub.s32 1, %s14
  %s17 = scalar_select 0, %s16, %s14
  $region1: #{dab_forward.1} parent=0
    #allocation4 [shape = 'u8[512]{0}', space=smem, size = 0x200, scoped, tag = 'input window, operand 5, single buffered']
    #allocation5 [shape = 's32[2]{0}', space=sflag, size = 0x8, scoped, tag = 'scoped memory for dab_forward.1']
    #allocation6 [shape = 's32[2]{0}', space=sflag, size = 0x8, scoped, tag = 'scoped memory for dab_forward.1']
    #allocation7 [shape = 'u8[262144]{0}', space=vmem, size = 0x40000, scoped, tag = 'output window, operand 0']
    %18 = vsyncpa [#allocation6], 0
    %19 = vsyncpa [#allocation5], 0
    %s20 = scalar_lea.sflag [#allocation5], 1
    %21 = vsyncpa %s20, 0
    loop: start=0, step=1, limit=4
    $region2: #{dab_forward.1} parent=1 // loop_pre_header
      _
    $region3: #{dab_forward.1} parent=1 // loop_header
      %s23 = sphi 0, %s27
      %p24 = scmp.ge.s32.totalorder %s23, 4
      %s33 = sphi 0, %s35
      %s36 = sphi 0, %s33
      %s37 = sphi 0, %s36
      %s53 = sphi 0, %s37
      %s57 = sphi 0, %s57
      %s59 = sphi 0, %s57
      %s60 = sphi 0, %s59
      %s74 = sphi 0, %s60
      %s78 = sphi 0, %s78
      %s80 = sphi 0, %s78
      %s81 = sphi 0, %s80
      %s95 = sphi 0, %s81
      %s99 = sphi 0, %s99
      %s101 = sphi 0, %s99
      %s102 = sphi 0, %s101
      %s116 = sphi 0, %s102
      %s120 = sphi 0, %s120
      %s122 = sphi 0, %s120
      %s123 = sphi 0, %s122
      %s137 = sphi 0, %s123
      %s141 = sphi 0, %s141
      %s143 = sphi 0, %s141
      %s144 = sphi 0, %s143
      %s158 = sphi 0, %s144
      %s162 = sphi 0, %s162
      %s164 = sphi 0, %s162
      %s165 = sphi 0, %s164
      %s179 = sphi 0, %s165
      %s183 = sphi 0, %s183
      %s185 = sphi 0, %s183
      %s186 = sphi 0, %s185
      %s200 = sphi 0, %s186
      %s204 = sphi 0, %s204
      %s206 = sphi 0, %s204
      %s207 = sphi 0, %s206
      %s221 = sphi 0, %s207
      %s225 = sphi 0, %s225
      %s227 = sphi 0, %s225
      %s228 = sphi 0, %s227
      %s242 = sphi 0, %s228
      %s246 = sphi 0, %s246
      %s248 = sphi 0, %s246
      %s249 = sphi 0, %s248
      %s263 = sphi 0, %s249
      %s267 = sphi 0, %s267
      %s269 = sphi 0, %s267
      %s270 = sphi 0, %s269
      %s284 = sphi 0, %s270
      %s288 = sphi 0, %s288
      %s290 = sphi 0, %s288
      %s291 = sphi 0, %s290
      %s305 = sphi 0, %s291
      %s311 = sphi 0, %s313
      %s314 = sphi 0, %s311
      %s315 = sphi 0, %s314
      %s331 = sphi 0, %s315
    $region4: #{dab_forward.1} parent=1 // loop_header_branch
      %26 = sbr.rel (%p24) target = $region8
    $region5: #{dab_forward.1} parent=1 // loop_body
      %s28 = ssub.s32 %s23, 1
      %s29 = ssub.s32 %s23, 2
      %s30 = sadd.s32 %s23, 1
      %s31 = ssub.s32 %s23, %s30
      %p32 = scmp.eq.s32.totalorder %s31, 0
      %s34 = sadd.s32 %s33, 1
      %s35 = scalar_select %p32, %s33, %s34
      %p38 = pneg %p32
      %p39 = scmp.eq.s32.totalorder %s23, 1
      %p40 = por %p38, %p39
      %p41 = scmp.ne.s32.totalorder %s33, %s36
      %p42 = scmp.eq.s32.totalorder %s23, 0
      %p43 = por %p41, %p42
      %p44 = scmp.ne.s32.totalorder %s33, %s36
      %p45 = scmp.eq.s32.totalorder %s28, 1
      %p46 = por %p44, %p45
      %p47 = scmp.ne.s32.totalorder %s36, %s37
      %p48 = scmp.eq.s32.totalorder %s28, 0
      %p49 = por %p47, %p48
      %p50 = scmp.ne.s32.totalorder %s36, %s37
      %p51 = scmp.eq.s32.totalorder %s29, 1
      %p52 = por %p50, %p51
      %p54 = scmp.ne.s32.totalorder %s37, %s53
      %p55 = scmp.eq.s32.totalorder %s29, 0
      %p56 = por %p54, %p55
      %s58 = sadd.s32 %s57, 1
      %p61 = scmp.eq.s32.totalorder %s23, 1
      %p62 = scmp.ne.s32.totalorder %s57, %s59
      %p63 = scmp.eq.s32.totalorder %s23, 0
      %p64 = por %p62, %p63
      %p65 = scmp.ne.s32.totalorder %s57, %s59
      %p66 = scmp.eq.s32.totalorder %s28, 1
      %p67 = por %p65, %p66
      %p68 = scmp.ne.s32.totalorder %s59, %s60
      %p69 = scmp.eq.s32.totalorder %s28, 0
      %p70 = por %p68, %p69
      %p71 = scmp.ne.s32.totalorder %s59, %s60
      %p72 = scmp.eq.s32.totalorder %s29, 1
      %p73 = por %p71, %p72
      %p75 = scmp.ne.s32.totalorder %s60, %s74
      %p76 = scmp.eq.s32.totalorder %s29, 0
      %p77 = por %p75, %p76
      %s79 = sadd.s32 %s78, 1
      %p82 = scmp.eq.s32.totalorder %s23, 1
      %p83 = scmp.ne.s32.totalorder %s78, %s80
      %p84 = scmp.eq.s32.totalorder %s23, 0
      %p85 = por %p83, %p84
      %p86 = scmp.ne.s32.totalorder %s78, %s80
      %p87 = scmp.eq.s32.totalorder %s28, 1
      %p88 = por %p86, %p87
      %p89 = scmp.ne.s32.totalorder %s80, %s81
      %p90 = scmp.eq.s32.totalorder %s28, 0
      %p91 = por %p89, %p90
      %p92 = scmp.ne.s32.totalorder %s80, %s81
      %p93 = scmp.eq.s32.totalorder %s29, 1
      %p94 = por %p92, %p93
      %p96 = scmp.ne.s32.totalorder %s81, %s95
      %p97 = scmp.eq.s32.totalorder %s29, 0
      %p98 = por %p96, %p97
      %s100 = sadd.s32 %s99, 1
      %p103 = scmp.eq.s32.totalorder %s23, 1
      %p104 = scmp.ne.s32.totalorder %s99, %s101
      %p105 = scmp.eq.s32.totalorder %s23, 0
      %p106 = por %p104, %p105
      %p107 = scmp.ne.s32.totalorder %s99, %s101
      %p108 = scmp.eq.s32.totalorder %s28, 1
      %p109 = por %p107, %p108
      %p110 = scmp.ne.s32.totalorder %s101, %s102
      %p111 = scmp.eq.s32.totalorder %s28, 0
      %p112 = por %p110, %p111
      %p113 = scmp.ne.s32.totalorder %s101, %s102
      %p114 = scmp.eq.s32.totalorder %s29, 1
      %p115 = por %p113, %p114
      %p117 = scmp.ne.s32.totalorder %s102, %s116
      %p118 = scmp.eq.s32.totalorder %s29, 0
      %p119 = por %p117, %p118
      %s121 = sadd.s32 %s120, 1
      %p124 = scmp.eq.s32.totalorder %s23, 1
      %p125 = scmp.ne.s32.totalorder %s120, %s122
      %p126 = scmp.eq.s32.totalorder %s23, 0
      %p127 = por %p125, %p126
      %p128 = scmp.ne.s32.totalorder %s120, %s122
      %p129 = scmp.eq.s32.totalorder %s28, 1
      %p130 = por %p128, %p129
      %p131 = scmp.ne.s32.totalorder %s122, %s123
      %p132 = scmp.eq.s32.totalorder %s28, 0
      %p133 = por %p131, %p132
      %p134 = scmp.ne.s32.totalorder %s122, %s123
      %p135 = scmp.eq.s32.totalorder %s29, 1
      %p136 = por %p134, %p135
      %p138 = scmp.ne.s32.totalorder %s123, %s137
      %p139 = scmp.eq.s32.totalorder %s29, 0
      %p140 = por %p138, %p139
      %s142 = sadd.s32 %s141, 1
      %p145 = scmp.eq.s32.totalorder %s23, 1
      %p146 = scmp.ne.s32.totalorder %s141, %s143
      %p147 = scmp.eq.s32.totalorder %s23, 0
      %p148 = por %p146, %p147
      %p149 = scmp.ne.s32.totalorder %s141, %s143
      %p150 = scmp.eq.s32.totalorder %s28, 1
      %p151 = por %p149, %p150
      %p152 = scmp.ne.s32.totalorder %s143, %s144
      %p153 = scmp.eq.s32.totalorder %s28, 0
      %p154 = por %p152, %p153
      %p155 = scmp.ne.s32.totalorder %s143, %s144
      %p156 = scmp.eq.s32.totalorder %s29, 1
      %p157 = por %p155, %p156
      %p159 = scmp.ne.s32.totalorder %s144, %s158
      %p160 = scmp.eq.s32.totalorder %s29, 0
      %p161 = por %p159, %p160
      %s163 = sadd.s32 %s162, 1
      %p166 = scmp.eq.s32.totalorder %s23, 1
      %p167 = scmp.ne.s32.totalorder %s162, %s164
      %p168 = scmp.eq.s32.totalorder %s23, 0
      %p169 = por %p167, %p168
      %p170 = scmp.ne.s32.totalorder %s162, %s164
      %p171 = scmp.eq.s32.totalorder %s28, 1
      %p172 = por %p170, %p171
      %p173 = scmp.ne.s32.totalorder %s164, %s165
      %p174 = scmp.eq.s32.totalorder %s28, 0
      %p175 = por %p173, %p174
      %p176 = scmp.ne.s32.totalorder %s164, %s165
      %p177 = scmp.eq.s32.totalorder %s29, 1
      %p178 = por %p176, %p177
      %p180 = scmp.ne.s32.totalorder %s165, %s179
      %p181 = scmp.eq.s32.totalorder %s29, 0
      %p182 = por %p180, %p181
      %s184 = sadd.s32 %s183, 1
      %p187 = scmp.eq.s32.totalorder %s23, 1
      %p188 = scmp.ne.s32.totalorder %s183, %s185
      %p189 = scmp.eq.s32.totalorder %s23, 0
      %p190 = por %p188, %p189
      %p191 = scmp.ne.s32.totalorder %s183, %s185
      %p192 = scmp.eq.s32.totalorder %s28, 1
      %p193 = por %p191, %p192
      %p194 = scmp.ne.s32.totalorder %s185, %s186
      %p195 = scmp.eq.s32.totalorder %s28, 0
      %p196 = por %p194, %p195
      %p197 = scmp.ne.s32.totalorder %s185, %s186
      %p198 = scmp.eq.s32.totalorder %s29, 1
      %p199 = por %p197, %p198
      %p201 = scmp.ne.s32.totalorder %s186, %s200
      %p202 = scmp.eq.s32.totalorder %s29, 0
      %p203 = por %p201, %p202
      %s205 = sadd.s32 %s204, 1
      %p208 = scmp.eq.s32.totalorder %s23, 1
      %p209 = scmp.ne.s32.totalorder %s204, %s206
      %p210 = scmp.eq.s32.totalorder %s23, 0
      %p211 = por %p209, %p210
      %p212 = scmp.ne.s32.totalorder %s204, %s206
      %p213 = scmp.eq.s32.totalorder %s28, 1
      %p214 = por %p212, %p213
      %p215 = scmp.ne.s32.totalorder %s206, %s207
      %p216 = scmp.eq.s32.totalorder %s28, 0
      %p217 = por %p215, %p216
      %p218 = scmp.ne.s32.totalorder %s206, %s207
      %p219 = scmp.eq.s32.totalorder %s29, 1
      %p220 = por %p218, %p219
      %p222 = scmp.ne.s32.totalorder %s207, %s221
      %p223 = scmp.eq.s32.totalorder %s29, 0
      %p224 = por %p222, %p223
      %s226 = sadd.s32 %s225, 1
      %p229 = scmp.eq.s32.totalorder %s23, 1
      %p230 = scmp.ne.s32.totalorder %s225, %s227
      %p231 = scmp.eq.s32.totalorder %s23, 0
      %p232 = por %p230, %p231
      %p233 = scmp.ne.s32.totalorder %s225, %s227
      %p234 = scmp.eq.s32.totalorder %s28, 1
      %p235 = por %p233, %p234
      %p236 = scmp.ne.s32.totalorder %s227, %s228
      %p237 = scmp.eq.s32.totalorder %s28, 0
      %p238 = por %p236, %p237
      %p239 = scmp.ne.s32.totalorder %s227, %s228
      %p240 = scmp.eq.s32.totalorder %s29, 1
      %p241 = por %p239, %p240
      %p243 = scmp.ne.s32.totalorder %s228, %s242
      %p244 = scmp.eq.s32.totalorder %s29, 0
      %p245 = por %p243, %p244
      %s247 = sadd.s32 %s246, 1
      %p250 = scmp.eq.s32.totalorder %s23, 1
      %p251 = scmp.ne.s32.totalorder %s246, %s248
      %p252 = scmp.eq.s32.totalorder %s23, 0
      %p253 = por %p251, %p252
      %p254 = scmp.ne.s32.totalorder %s246, %s248
      %p255 = scmp.eq.s32.totalorder %s28, 1
      %p256 = por %p254, %p255
      %p257 = scmp.ne.s32.totalorder %s248, %s249
      %p258 = scmp.eq.s32.totalorder %s28, 0
      %p259 = por %p257, %p258
      %p260 = scmp.ne.s32.totalorder %s248, %s249
      %p261 = scmp.eq.s32.totalorder %s29, 1
      %p262 = por %p260, %p261
      %p264 = scmp.ne.s32.totalorder %s249, %s263
      %p265 = scmp.eq.s32.totalorder %s29, 0
      %p266 = por %p264, %p265
      %s268 = sadd.s32 %s267, 1
      %p271 = scmp.eq.s32.totalorder %s23, 1
      %p272 = scmp.ne.s32.totalorder %s267, %s269
      %p273 = scmp.eq.s32.totalorder %s23, 0
      %p274 = por %p272, %p273
      %p275 = scmp.ne.s32.totalorder %s267, %s269
      %p276 = scmp.eq.s32.totalorder %s28, 1
      %p277 = por %p275, %p276
      %p278 = scmp.ne.s32.totalorder %s269, %s270
      %p279 = scmp.eq.s32.totalorder %s28, 0
      %p280 = por %p278, %p279
      %p281 = scmp.ne.s32.totalorder %s269, %s270
      %p282 = scmp.eq.s32.totalorder %s29, 1
      %p283 = por %p281, %p282
      %p285 = scmp.ne.s32.totalorder %s270, %s284
      %p286 = scmp.eq.s32.totalorder %s29, 0
      %p287 = por %p285, %p286
      %s289 = sadd.s32 %s288, 1
      %p292 = scmp.eq.s32.totalorder %s23, 1
      %p293 = scmp.ne.s32.totalorder %s288, %s290
      %p294 = scmp.eq.s32.totalorder %s23, 0
      %p295 = por %p293, %p294
      %p296 = scmp.ne.s32.totalorder %s288, %s290
      %p297 = scmp.eq.s32.totalorder %s28, 1
      %p298 = por %p296, %p297
      %p299 = scmp.ne.s32.totalorder %s290, %s291
      %p300 = scmp.eq.s32.totalorder %s28, 0
      %p301 = por %p299, %p300
      %p302 = scmp.ne.s32.totalorder %s290, %s291
      %p303 = scmp.eq.s32.totalorder %s29, 1
      %p304 = por %p302, %p303
      %p306 = scmp.ne.s32.totalorder %s291, %s305
      %p307 = scmp.eq.s32.totalorder %s29, 0
      %p308 = por %p306, %p307
      %s309 = ssub.s32 %s23, %s30
      %p310 = scmp.eq.s32.totalorder %s309, 0
      %s312 = sadd.s32 %s311, 1
      %s313 = scalar_select %p310, %s311, %s312
      %p316 = pneg %p310
      %p317 = scmp.eq.s32.totalorder %s23, 1
      %p318 = por %p316, %p317
      %p319 = scmp.ne.s32.totalorder %s311, %s314
      %p320 = scmp.eq.s32.totalorder %s23, 0
      %p321 = por %p319, %p320
      %p322 = scmp.ne.s32.totalorder %s311, %s314
      %p323 = scmp.eq.s32.totalorder %s28, 1
      %p324 = por %p322, %p323
      %p325 = scmp.ne.s32.totalorder %s314, %s315
      %p326 = scmp.eq.s32.totalorder %s28, 0
      %p327 = por %p325, %p326
      %p328 = scmp.ne.s32.totalorder %s314, %s315
      %p329 = scmp.eq.s32.totalorder %s29, 1
      %p330 = por %p328, %p329
      %p332 = scmp.ne.s32.totalorder %s315, %s331
      %p333 = scmp.eq.s32.totalorder %s29, 0
      %p334 = por %p332, %p333
      %p335 = scmp.le.s32.totalorder 1, %s23
      %p336 = scmp.lt.s32.totalorder %s23, 3
      %p337 = pnand %p335, %p336
      %p338 = pneg %p337
      // Predicated region
      $region9: #{dab_forward.1} parent=5 // pred_check
        _
      $region10: #{dab_forward.1} parent=5 // pred_check_branch
        %340 = sbr.rel (%p337) target = $region12
      $region11: #{dab_forward.1} parent=5 // pred_region
        %s341 = ssub.s32 %s23, 1
        // Predicated region
        $region13: #{dab_forward.1} parent=11 // pred_check
          %p342 = pneg %p70
        $region14: #{dab_forward.1} parent=11 // pred_check_branch
          %344 = sbr.rel (%p342) target = $region16
        $region15: #{dab_forward.1} parent=11 // pred_region
          _
        $region16: #{dab_forward.1} parent=11 // pred_fallthru
          _
        // Predicated region
        $region17: #{dab_forward.1} parent=11 // pred_check
          %p345 = pneg %p91
        $region18: #{dab_forward.1} parent=11 // pred_check_branch
          %347 = sbr.rel (%p345) target = $region20
        $region19: #{dab_forward.1} parent=11 // pred_region
          _
        $region20: #{dab_forward.1} parent=11 // pred_fallthru
          _
        // Predicated region
        $region21: #{dab_forward.1} parent=11 // pred_check
          %p348 = pneg %p112
        $region22: #{dab_forward.1} parent=11 // pred_check_branch
          %350 = sbr.rel (%p348) target = $region24
        $region23: #{dab_forward.1} parent=11 // pred_region
          _
        $region24: #{dab_forward.1} parent=11 // pred_fallthru
          _
        // Predicated region
        $region25: #{dab_forward.1} parent=11 // pred_check
          %p351 = pneg %p133
        $region26: #{dab_forward.1} parent=11 // pred_check_branch
          %353 = sbr.rel (%p351) target = $region28
        $region27: #{dab_forward.1} parent=11 // pred_region
          _
        $region28: #{dab_forward.1} parent=11 // pred_fallthru
          _
        // Predicated region
        $region29: #{dab_forward.1} parent=11 // pred_check
          %p354 = pneg %p154
        $region30: #{dab_forward.1} parent=11 // pred_check_branch
          %356 = sbr.rel (%p354) target = $region32
        $region31: #{dab_forward.1} parent=11 // pred_region
          %s358 = ssub.s32 16, 16
          %359 = vsyncadd [#allocation6], %s358
          %s361 = sshll.u32 %s5, 4
          %s362 = int_to_ptr.vmem [resolvable:$true] %s361
          %364 = dma.vmem_to_smem %s362, 16, [#allocation4], [#allocation6]
        $region32: #{dab_forward.1} parent=11 // pred_fallthru
          _
        // Predicated region
        $region33: #{dab_forward.1} parent=11 // pred_check
          %p365 = pneg %p175
        $region34: #{dab_forward.1} parent=11 // pred_check_branch
          %367 = sbr.rel (%p365) target = $region36
        $region35: #{dab_forward.1} parent=11 // pred_region
          _
        $region36: #{dab_forward.1} parent=11 // pred_fallthru
          _
        // Predicated region
        $region37: #{dab_forward.1} parent=11 // pred_check
          %p368 = pneg %p196
        $region38: #{dab_forward.1} parent=11 // pred_check_branch
          %370 = sbr.rel (%p368) target = $region40
        $region39: #{dab_forward.1} parent=11 // pred_region
          _
        $region40: #{dab_forward.1} parent=11 // pred_fallthru
          _
        // Predicated region
        $region41: #{dab_forward.1} parent=11 // pred_check
          %p371 = pneg %p217
        $region42: #{dab_forward.1} parent=11 // pred_check_branch
          %373 = sbr.rel (%p371) target = $region44
        $region43: #{dab_forward.1} parent=11 // pred_region
          _
        $region44: #{dab_forward.1} parent=11 // pred_fallthru
          _
        // Predicated region
        $region45: #{dab_forward.1} parent=11 // pred_check
          %p374 = pneg %p238
        $region46: #{dab_forward.1} parent=11 // pred_check_branch
          %376 = sbr.rel (%p374) target = $region48
        $region47: #{dab_forward.1} parent=11 // pred_region
          _
        $region48: #{dab_forward.1} parent=11 // pred_fallthru
          _
        // Predicated region
        $region49: #{dab_forward.1} parent=11 // pred_check
          %p377 = pneg %p259
        $region50: #{dab_forward.1} parent=11 // pred_check_branch
          %379 = sbr.rel (%p377) target = $region52
        $region51: #{dab_forward.1} parent=11 // pred_region
          _
        $region52: #{dab_forward.1} parent=11 // pred_fallthru
          _
        // Predicated region
        $region53: #{dab_forward.1} parent=11 // pred_check
          %p380 = pneg %p280
        $region54: #{dab_forward.1} parent=11 // pred_check_branch
          %382 = sbr.rel (%p380) target = $region56
        $region55: #{dab_forward.1} parent=11 // pred_region
          _
        $region56: #{dab_forward.1} parent=11 // pred_fallthru
          _
        // Predicated region
        $region57: #{dab_forward.1} parent=11 // pred_check
          %p383 = pneg %p301
        $region58: #{dab_forward.1} parent=11 // pred_check_branch
          %385 = sbr.rel (%p383) target = $region60
        $region59: #{dab_forward.1} parent=11 // pred_region
          _
        $region60: #{dab_forward.1} parent=11 // pred_fallthru
          _
      $region12: #{dab_forward.1} parent=5 // pred_fallthru
        _
      %p386 = scmp.lt.s32.totalorder %s23, 2
      // Predicated region
      $region61: #{dab_forward.1} parent=5 // pred_check
        %p387 = pneg %p386
      $region62: #{dab_forward.1} parent=5 // pred_check_branch
        %389 = sbr.rel (%p387) target = $region64
      $region63: #{dab_forward.1} parent=5 // pred_region
        // Predicated region
        $region65: #{dab_forward.1} parent=63 // pred_check
          %p390 = pneg %p43
        $region66: #{dab_forward.1} parent=63 // pred_check_branch
          %392 = sbr.rel (%p390) target = $region68
        $region67: #{dab_forward.1} parent=63 // pred_region
          %p393 = scmp.lt.s32.totalorder %s23, 1
          %s394 = scalar_select %p393, %s23, 1
          %s395 = smul.addr %s394, 32
          %s396 = smul.addr %s395, 8
          %s397 = scalar_lea.vmem %s0, %s396
        $region68: #{dab_forward.1} parent=63 // pred_fallthru
          _
      $region64: #{dab_forward.1} parent=5 // pred_fallthru
        _
      %p398 = scmp.le.s32.totalorder 1, %s23
      %p399 = scmp.lt.s32.totalorder %s23, 3
      %p400 = pnand %p398, %p399
      %p401 = pneg %p400
      // Predicated region
      $region69: #{dab_forward.1} parent=5 // pred_check
        _
      $region70: #{dab_forward.1} parent=5 // pred_check_branch
        %403 = sbr.rel (%p400) target = $region72
      $region71: #{dab_forward.1} parent=5 // pred_region
        %s404 = ssub.s32 %s23, 1
        // Predicated region
        $region73: #{dab_forward.1} parent=71 // pred_check
          %p405 = pneg %p154
        $region74: #{dab_forward.1} parent=71 // pred_check_branch
          %407 = sbr.rel (%p405) target = $region76
        $region75: #{dab_forward.1} parent=71 // pred_region
          %408 = dma.done [#allocation6], 16
        $region76: #{dab_forward.1} parent=71 // pred_fallthru
          _
        %409 = sfence
        %p410 = scmp.lt.s32.totalorder %s28, 1
        %s411 = scalar_select %p410, %s28, 1
        %s412 = smul.addr %s411, 32
        %s413 = smul.addr %s412, 8
        %s414 = scalar_lea.vmem %s0, %s413
        %p415 = pneg %p49
        %p416 = pneg %p46
        %p417 = pneg %p70
        %p418 = pneg %p67
        %p419 = pneg %p91
        %p420 = pneg %p88
        %p421 = pneg %p112
        %p422 = pneg %p109
        %p423 = pneg %p133
        %p424 = pneg %p130
        %p425 = pneg %p154
        %p426 = pneg %p151
        %p427 = pneg %p175
        %p428 = pneg %p172
        %p429 = pneg %p196
        %p430 = pneg %p193
        %p431 = pneg %p217
        %p432 = pneg %p214
        %p433 = pneg %p238
        %p434 = pneg %p235
        %p435 = pneg %p259
        %p436 = pneg %p256
        %p437 = pneg %p280
        %p438 = pneg %p277
        %p439 = pneg %p301
        %p440 = pneg %p298
        %p441 = pneg %p327
        %p442 = pneg %p324
        %s443 = sand.u32 %s314, 1
        %s444 = scalar_lea.sflag [#allocation5], %s443
        %s445 = sand.u32 %s314, 1
        %s446 = smul.addr %s445, 256
        %s447 = scalar_lea.vmem [#allocation7], %s446
        %p448 = scmp.lt.s32.totalorder %s28, 1
        %s449 = scalar_select %p448, %s28, 1
        %s450 = smul.addr %s449, 32
        %s451 = smul.addr %s450, 8
        %s452 = scalar_lea.vmem %s0, %s451
        %vm454 = vcmask 130048
        %455 = vst.msk [vmem:[#allocation2] sm:$0xff] %vm454, 0.0
        %456 = vst.msk [vmem:[#allocation2 + $0x8] sm:$0xff] %vm454, 0.0
        %vm457 = vcmask 123904
        %458 = vst.msk [vmem:[#allocation2 + $0x10] sm:$0x3] %vm457, 0.0
        %s459 = scalar_lea.vmem [#allocation2], 408
        %460 = vst.msk [vmem:[%s459] sm:$0xff] %vm454, 0.0
        %461 = vst.msk [vmem:[%s459 + $0x8] sm:$0xff] %vm454, 0.0
        %462 = vst.msk [vmem:[%s459 + $0x10] sm:$0x3] %vm457, 0.0
        %vm463 = vcmask 122880
        %464 = vst.msk [vmem:[#allocation2] sm:$0x1] %vm463, 0.0
        %465 = vst.msk [vmem:[#allocation2 + $0x18] sm:$0x1] %vm463, 0.0
        %466 = vst.msk [vmem:[#allocation2 + $0x30] sm:$0x1] %vm463, 0.0
        %467 = vst.msk [vmem:[#allocation2 + $0x48] sm:$0x1] %vm463, 0.0
        %468 = vst.msk [vmem:[#allocation2 + $0x60] sm:$0x1] %vm463, 0.0
        %469 = vst.msk [vmem:[#allocation2 + $0x78] sm:$0x1] %vm463, 0.0
        %470 = vst.msk [vmem:[#allocation2 + $0x90] sm:$0x1] %vm463, 0.0
        %471 = vst.msk [vmem:[#allocation2 + $0xa8] sm:$0x1] %vm463, 0.0
        %472 = vst.msk [vmem:[#allocation2 + $0xc0] sm:$0x1] %vm463, 0.0
        %473 = vst.msk [vmem:[#allocation2 + $0xd8] sm:$0x1] %vm463, 0.0
        %474 = vst.msk [vmem:[#allocation2 + $0xf0] sm:$0x1] %vm463, 0.0
        %475 = vst.msk [vmem:[#allocation2 + $0x108] sm:$0x1] %vm463, 0.0
        %476 = vst.msk [vmem:[#allocation2 + $0x120] sm:$0x1] %vm463, 0.0
        %477 = vst.msk [vmem:[#allocation2 + $0x138] sm:$0x1] %vm463, 0.0
        %478 = vst.msk [vmem:[#allocation2 + $0x150] sm:$0x1] %vm463, 0.0
        %479 = vst.msk [vmem:[#allocation2 + $0x168] sm:$0x1] %vm463, 0.0
        %480 = vst.msk [vmem:[#allocation2 + $0x180] sm:$0x1] %vm463, 0.0
        %481 = vst.msk [vmem:[#allocation2 + $0x198] sm:$0x1] %vm463, 0.0
        %482 = vst.msk [vmem:[#allocation2 + $0x11] sm:$0x1] %vm463, 0.0
        %483 = vst.msk [vmem:[#allocation2 + $0x29] sm:$0x1] %vm463, 0.0
        %484 = vst.msk [vmem:[#allocation2 + $0x41] sm:$0x1] %vm463, 0.0
        %485 = vst.msk [vmem:[#allocation2 + $0x59] sm:$0x1] %vm463, 0.0
        %486 = vst.msk [vmem:[#allocation2 + $0x71] sm:$0x1] %vm463, 0.0
        %487 = vst.msk [vmem:[#allocation2 + $0x89] sm:$0x1] %vm463, 0.0
        %488 = vst.msk [vmem:[#allocation2 + $0xa1] sm:$0x1] %vm463, 0.0
        %489 = vst.msk [vmem:[#allocation2 + $0xb9] sm:$0x1] %vm463, 0.0
        %490 = vst.msk [vmem:[#allocation2 + $0xd1] sm:$0x1] %vm463, 0.0
        %491 = vst.msk [vmem:[#allocation2 + $0xe9] sm:$0x1] %vm463, 0.0
        %492 = vst.msk [vmem:[#allocation2 + $0x101] sm:$0x1] %vm463, 0.0
        %493 = vst.msk [vmem:[#allocation2 + $0x119] sm:$0x1] %vm463, 0.0
        %494 = vst.msk [vmem:[#allocation2 + $0x131] sm:$0x1] %vm463, 0.0
        %495 = vst.msk [vmem:[#allocation2 + $0x149] sm:$0x1] %vm463, 0.0
        %496 = vst.msk [vmem:[#allocation2 + $0x161] sm:$0x1] %vm463, 0.0
        %497 = vst.msk [vmem:[#allocation2 + $0x179] sm:$0x1] %vm463, 0.0
        %498 = vst.msk [vmem:[#allocation2 + $0x191] sm:$0x1] %vm463, 0.0
        %499 = vst.msk [vmem:[#allocation2 + $0x1a9] sm:$0x1] %vm463, 0.0
        %vm500 = vcmask 15360
        %501 = vst.msk [vmem:[#allocation3] sm:$0xff] %vm500, 0.0
        %502 = vst.msk [vmem:[#allocation3 + $0x8] sm:$0xff] %vm500, 0.0
        %vm503 = vcmask 9216
        %504 = vst.msk [vmem:[#allocation3 + $0x10] sm:$0x3] %vm503, 0.0
        %505 = vst.msk [vmem:[#allocation3 + $0x18] sm:$0xff] %vm500, 0.0
        %506 = vst.msk [vmem:[#allocation3 + $0x20] sm:$0xff] %vm500, 0.0
        %507 = vst.msk [vmem:[#allocation3 + $0x28] sm:$0x3] %vm503, 0.0
        %508 = vst.msk [vmem:[#allocation3 + $0x30] sm:$0xff] %vm500, 0.0
        %509 = vst.msk [vmem:[#allocation3 + $0x38] sm:$0xff] %vm500, 0.0
        %510 = vst.msk [vmem:[#allocation3 + $0x40] sm:$0x3] %vm503, 0.0
        %511 = vst.msk [vmem:[#allocation3 + $0x48] sm:$0xff] %vm500, 0.0
        %512 = vst.msk [vmem:[#allocation3 + $0x50] sm:$0xff] %vm500, 0.0
        %513 = vst.msk [vmem:[#allocation3 + $0x58] sm:$0x3] %vm503, 0.0
        %514 = vst.msk [vmem:[#allocation3 + $0x60] sm:$0xff] %vm500, 0.0
        %515 = vst.msk [vmem:[#allocation3 + $0x68] sm:$0xff] %vm500, 0.0
        %516 = vst.msk [vmem:[#allocation3 + $0x70] sm:$0x3] %vm503, 0.0
        %517 = vst.msk [vmem:[#allocation3 + $0x78] sm:$0xff] %vm500, 0.0
        %518 = vst.msk [vmem:[#allocation3 + $0x80] sm:$0xff] %vm500, 0.0
        %519 = vst.msk [vmem:[#allocation3 + $0x88] sm:$0x3] %vm503, 0.0
        %520 = vst.msk [vmem:[#allocation3 + $0x90] sm:$0xff] %vm500, 0.0
        %521 = vst.msk [vmem:[#allocation3 + $0x98] sm:$0xff] %vm500, 0.0
        %522 = vst.msk [vmem:[#allocation3 + $0xa0] sm:$0x3] %vm503, 0.0
        %523 = vst.msk [vmem:[#allocation3 + $0xa8] sm:$0xff] %vm500, 0.0
        %524 = vst.msk [vmem:[#allocation3 + $0xb0] sm:$0xff] %vm500, 0.0
        %525 = vst.msk [vmem:[#allocation3 + $0xb8] sm:$0x3] %vm503, 0.0
        %526 = vst.msk [vmem:[#allocation3 + $0xc0] sm:$0xff] %vm500, 0.0
        %527 = vst.msk [vmem:[#allocation3 + $0xc8] sm:$0xff] %vm500, 0.0
        %528 = vst.msk [vmem:[#allocation3 + $0xd0] sm:$0x3] %vm503, 0.0
        %529 = vst.msk [vmem:[#allocation3 + $0xd8] sm:$0xff] %vm500, 0.0
        %530 = vst.msk [vmem:[#allocation3 + $0xe0] sm:$0xff] %vm500, 0.0
        %531 = vst.msk [vmem:[#allocation3 + $0xe8] sm:$0x3] %vm503, 0.0
        %532 = vst.msk [vmem:[#allocation3 + $0xf0] sm:$0xff] %vm500, 0.0
        %533 = vst.msk [vmem:[#allocation3 + $0xf8] sm:$0xff] %vm500, 0.0
        %534 = vst.msk [vmem:[#allocation3 + $0x100] sm:$0x3] %vm503, 0.0
        %535 = vst.msk [vmem:[#allocation3 + $0x108] sm:$0xff] %vm500, 0.0
        %536 = vst.msk [vmem:[#allocation3 + $0x110] sm:$0xff] %vm500, 0.0
        %537 = vst.msk [vmem:[#allocation3 + $0x118] sm:$0x3] %vm503, 0.0
        %538 = vst.msk [vmem:[#allocation3 + $0x120] sm:$0xff] %vm500, 0.0
        %539 = vst.msk [vmem:[#allocation3 + $0x128] sm:$0xff] %vm500, 0.0
        %540 = vst.msk [vmem:[#allocation3 + $0x130] sm:$0x3] %vm503, 0.0
        %541 = vst.msk [vmem:[#allocation3 + $0x138] sm:$0xff] %vm500, 0.0
        %542 = vst.msk [vmem:[#allocation3 + $0x140] sm:$0xff] %vm500, 0.0
        %543 = vst.msk [vmem:[#allocation3 + $0x148] sm:$0x3] %vm503, 0.0
        %544 = vst.msk [vmem:[#allocation3 + $0x150] sm:$0xff] %vm500, 0.0
        %545 = vst.msk [vmem:[#allocation3 + $0x158] sm:$0xff] %vm500, 0.0
        %546 = vst.msk [vmem:[#allocation3 + $0x160] sm:$0x3] %vm503, 0.0
        %547 = vst.msk [vmem:[#allocation3 + $0x168] sm:$0xff] %vm500, 0.0
        %548 = vst.msk [vmem:[#allocation3 + $0x170] sm:$0xff] %vm500, 0.0
        %549 = vst.msk [vmem:[#allocation3 + $0x178] sm:$0x3] %vm503, 0.0
        %550 = vst.msk [vmem:[#allocation3 + $0x180] sm:$0xff] %vm500, 0.0
        %551 = vst.msk [vmem:[#allocation3 + $0x188] sm:$0xff] %vm500, 0.0
        %552 = vst.msk [vmem:[#allocation3 + $0x190] sm:$0x3] %vm503, 0.0
        %553 = vst.msk [vmem:[#allocation3 + $0x198] sm:$0xff] %vm500, 0.0
        %554 = vst.msk [vmem:[#allocation3 + $0x1a0] sm:$0xff] %vm500, 0.0
        %555 = vst.msk [vmem:[#allocation3 + $0x1a8] sm:$0x3] %vm503, 0.0
        %v556 = vld [vmem:[%s452] sm:$0xff]
        %v557 = vld [vmem:[%s452 + $0x8] sm:$0xff]
        %v558 = vld [vmem:[%s452 + $0x10] sm:$0xff]
        %v559 = vld [vmem:[%s452 + $0x18] sm:$0xff]
        %v560 = vld [vmem:[%s452 + $0x20] sm:$0xff]
        %v561 = vld [vmem:[%s452 + $0x28] sm:$0xff]
        %v562 = vld [vmem:[%s452 + $0x30] sm:$0xff]
        %v563 = vld [vmem:[%s452 + $0x38] sm:$0xff]
        %v564 = vld [vmem:[%s452 + $0x40] sm:$0xff]
        %v565 = vld [vmem:[%s452 + $0x48] sm:$0xff]
        %v566 = vld [vmem:[%s452 + $0x50] sm:$0xff]
        %v567 = vld [vmem:[%s452 + $0x58] sm:$0xff]
        %v568 = vld [vmem:[%s452 + $0x60] sm:$0xff]
        %v569 = vld [vmem:[%s452 + $0x68] sm:$0xff]
        %v570 = vld [vmem:[%s452 + $0x70] sm:$0xff]
        %v571 = vld [vmem:[%s452 + $0x78] sm:$0xff]
        %v572 = vld [vmem:[%s452 + $0x80] sm:$0xff]
        %v573 = vld [vmem:[%s452 + $0x88] sm:$0xff]
        %v574 = vld [vmem:[%s452 + $0x90] sm:$0xff]
        %v575 = vld [vmem:[%s452 + $0x98] sm:$0xff]
        %v576 = vld [vmem:[%s452 + $0xa0] sm:$0xff]
        %v577 = vld [vmem:[%s452 + $0xa8] sm:$0xff]
        %v578 = vld [vmem:[%s452 + $0xb0] sm:$0xff]
        %v579 = vld [vmem:[%s452 + $0xb8] sm:$0xff]
        %v580 = vld [vmem:[%s452 + $0xc0] sm:$0xff]
        %v581 = vld [vmem:[%s452 + $0xc8] sm:$0xff]
        %v582 = vld [vmem:[%s452 + $0xd0] sm:$0xff]
        %v583 = vld [vmem:[%s452 + $0xd8] sm:$0xff]
        %v584 = vld [vmem:[%s452 + $0xe0] sm:$0xff]
        %v585 = vld [vmem:[%s452 + $0xe8] sm:$0xff]
        %v586 = vld [vmem:[%s452 + $0xf0] sm:$0xff]
        %v587 = vld [vmem:[%s452 + $0xf8] sm:$0xff]
        %s588 = scalar_lea.vmem [#allocation2], 24
        %589 = vst.msk [vmem:[%s588 + $0x1] sm:$0xff] %vm454, %v556
        %590 = vst.msk [vmem:[%s588 + $0x9] sm:$0xff] %vm454, %v557
        %591 = vst.msk [vmem:[%s588 + $0x19] sm:$0xff] %vm454, %v558
        %592 = vst.msk [vmem:[%s588 + $0x21] sm:$0xff] %vm454, %v559
        %593 = vst.msk [vmem:[%s588 + $0x31] sm:$0xff] %vm454, %v560
        %594 = vst.msk [vmem:[%s588 + $0x39] sm:$0xff] %vm454, %v561
        %595 = vst.msk [vmem:[%s588 + $0x49] sm:$0xff] %vm454, %v562
        %596 = vst.msk [vmem:[%s588 + $0x51] sm:$0xff] %vm454, %v563
        %597 = vst.msk [vmem:[%s588 + $0x61] sm:$0xff] %vm454, %v564
        %598 = vst.msk [vmem:[%s588 + $0x69] sm:$0xff] %vm454, %v565
        %599 = vst.msk [vmem:[%s588 + $0x79] sm:$0xff] %vm454, %v566
        %600 = vst.msk [vmem:[%s588 + $0x81] sm:$0xff] %vm454, %v567
        %601 = vst.msk [vmem:[%s588 + $0x91] sm:$0xff] %vm454, %v568
        %602 = vst.msk [vmem:[%s588 + $0x99] sm:$0xff] %vm454, %v569
        %603 = vst.msk [vmem:[%s588 + $0xa9] sm:$0xff] %vm454, %v570
        %604 = vst.msk [vmem:[%s588 + $0xb1] sm:$0xff] %vm454, %v571
        %605 = vst.msk [vmem:[%s588 + $0xc1] sm:$0xff] %vm454, %v572
        %606 = vst.msk [vmem:[%s588 + $0xc9] sm:$0xff] %vm454, %v573
        %607 = vst.msk [vmem:[%s588 + $0xd9] sm:$0xff] %vm454, %v574
        %608 = vst.msk [vmem:[%s588 + $0xe1] sm:$0xff] %vm454, %v575
        %609 = vst.msk [vmem:[%s588 + $0xf1] sm:$0xff] %vm454, %v576
        %610 = vst.msk [vmem:[%s588 + $0xf9] sm:$0xff] %vm454, %v577
        %611 = vst.msk [vmem:[%s588 + $0x109] sm:$0xff] %vm454, %v578
        %612 = vst.msk [vmem:[%s588 + $0x111] sm:$0xff] %vm454, %v579
        %613 = vst.msk [vmem:[%s588 + $0x121] sm:$0xff] %vm454, %v580
        %614 = vst.msk [vmem:[%s588 + $0x129] sm:$0xff] %vm454, %v581
        %615 = vst.msk [vmem:[%s588 + $0x139] sm:$0xff] %vm454, %v582
        %616 = vst.msk [vmem:[%s588 + $0x141] sm:$0xff] %vm454, %v583
        %617 = vst.msk [vmem:[%s588 + $0x151] sm:$0xff] %vm454, %v584
        %618 = vst.msk [vmem:[%s588 + $0x159] sm:$0xff] %vm454, %v585
        %619 = vst.msk [vmem:[%s588 + $0x169] sm:$0xff] %vm454, %v586
        %620 = vst.msk [vmem:[%s588 + $0x171] sm:$0xff] %vm454, %v587
        %v621 = vld [vmem:[#allocation2] sm:$0xff]
        %v622 = vld [vmem:[#allocation2 + $0x8] sm:$0xff]
        %v623 = vld [vmem:[#allocation2 + $0x18] sm:$0xff]
        %v624 = vld [vmem:[#allocation2 + $0x20] sm:$0xff]
        %v625 = vld [vmem:[#allocation2 + $0x30] sm:$0xff]
        %v626 = vld [vmem:[#allocation2 + $0x38] sm:$0xff]
        %v627 = vld [vmem:[#allocation2 + $0x48] sm:$0xff]
        %v628 = vld [vmem:[#allocation2 + $0x50] sm:$0xff]
        %v629 = vld [vmem:[#allocation2 + $0x60] sm:$0xff]
        %v630 = vld [vmem:[#allocation2 + $0x68] sm:$0xff]
        %v631 = vld [vmem:[#allocation2 + $0x78] sm:$0xff]
        %v632 = vld [vmem:[#allocation2 + $0x80] sm:$0xff]
        %v633 = vld [vmem:[#allocation2 + $0x90] sm:$0xff]
        %v634 = vld [vmem:[#allocation2 + $0x98] sm:$0xff]
        %v635 = vld [vmem:[#allocation2 + $0xa8] sm:$0xff]
        %v636 = vld [vmem:[#allocation2 + $0xb0] sm:$0xff]
        %v637 = vld [vmem:[#allocation2 + $0xc0] sm:$0xff]
        %v638 = vld [vmem:[#allocation2 + $0xc8] sm:$0xff]
        %v639 = vld [vmem:[#allocation2 + $0xd8] sm:$0xff]
        %v640 = vld [vmem:[#allocation2 + $0xe0] sm:$0xff]
        %v641 = vld [vmem:[#allocation2 + $0xf0] sm:$0xff]
        %v642 = vld [vmem:[#allocation2 + $0xf8] sm:$0xff]
        %v643 = vld [vmem:[#allocation2 + $0x108] sm:$0xff]
        %v644 = vld [vmem:[#allocation2 + $0x110] sm:$0xff]
        %v645 = vld [vmem:[#allocation2 + $0x120] sm:$0xff]
        %v646 = vld [vmem:[#allocation2 + $0x128] sm:$0xff]
        %v647 = vld [vmem:[#allocation2 + $0x138] sm:$0xff]
        %v648 = vld [vmem:[#allocation2 + $0x140] sm:$0xff]
        %v649 = vld [vmem:[#allocation2 + $0x150] sm:$0xff]
        %v650 = vld [vmem:[#allocation2 + $0x158] sm:$0xff]
        %v651 = vld [vmem:[#allocation2 + $0x168] sm:$0xff]
        %v652 = vld [vmem:[#allocation2 + $0x170] sm:$0xff]
        %v653 = vpack.c.bf16 %v622, %v621
        %v654 = vpack.c.bf16 %v624, %v623
        %v655 = vpack.c.bf16 %v626, %v625
        %v656 = vpack.c.bf16 %v628, %v627
        %v657 = vpack.c.bf16 %v630, %v629
        %v658 = vpack.c.bf16 %v632, %v631
        %v659 = vpack.c.bf16 %v634, %v633
        %v660 = vpack.c.bf16 %v636, %v635
        %v661 = vpack.c.bf16 %v638, %v637
        %v662 = vpack.c.bf16 %v640, %v639
        %v663 = vpack.c.bf16 %v642, %v641
        %v664 = vpack.c.bf16 %v644, %v643
        %v665 = vpack.c.bf16 %v646, %v645
        %v666 = vpack.c.bf16 %v648, %v647
        %v667 = vpack.c.bf16 %v650, %v649
        %v668 = vpack.c.bf16 %v652, %v651
        %v669 = vld [vmem:[%s1] sm:$0xf]
        %v670 = vld [vmem:[%s1 + $0x4] sm:$0xf]
        %v671 = vld [vmem:[#allocation2 + $0x1] sm:$0xff]
        %v672 = vld [vmem:[#allocation2 + $0x9] sm:$0xff]
        %v673 = vld [vmem:[#allocation2 + $0x19] sm:$0xff]
        %v674 = vld [vmem:[#allocation2 + $0x21] sm:$0xff]
        %v675 = vld [vmem:[#allocation2 + $0x31] sm:$0xff]
        %v676 = vld [vmem:[#allocation2 + $0x39] sm:$0xff]
        %v677 = vld [vmem:[#allocation2 + $0x49] sm:$0xff]
        %v678 = vld [vmem:[#allocation2 + $0x51] sm:$0xff]
        %v679 = vld [vmem:[#allocation2 + $0x61] sm:$0xff]
        %v680 = vld [vmem:[#allocation2 + $0x69] sm:$0xff]
        %v681 = vld [vmem:[#allocation2 + $0x79] sm:$0xff]
        %v682 = vld [vmem:[#allocation2 + $0x81] sm:$0xff]
        %v683 = vld [vmem:[#allocation2 + $0x91] sm:$0xff]
        %v684 = vld [vmem:[#allocation2 + $0x99] sm:$0xff]
        %v685 = vld [vmem:[#allocation2 + $0xa9] sm:$0xff]
        %v686 = vld [vmem:[#allocation2 + $0xb1] sm:$0xff]
        %v687 = vld [vmem:[#allocation2 + $0xc1] sm:$0xff]
        %v688 = vld [vmem:[#allocation2 + $0xc9] sm:$0xff]
        %v689 = vld [vmem:[#allocation2 + $0xd9] sm:$0xff]
        %v690 = vld [vmem:[#allocation2 + $0xe1] sm:$0xff]
        %v691 = vld [vmem:[#allocation2 + $0xf1] sm:$0xff]
        %v692 = vld [vmem:[#allocation2 + $0xf9] sm:$0xff]
        %v693 = vld [vmem:[#allocation2 + $0x109] sm:$0xff]
        %v694 = vld [vmem:[#allocation2 + $0x111] sm:$0xff]
        %v695 = vld [vmem:[#allocation2 + $0x121] sm:$0xff]
        %v696 = vld [vmem:[#allocation2 + $0x129] sm:$0xff]
        %v697 = vld [vmem:[#allocation2 + $0x139] sm:$0xff]
        %v698 = vld [vmem:[#allocation2 + $0x141] sm:$0xff]
        %v699 = vld [vmem:[#allocation2 + $0x151] sm:$0xff]
        %v700 = vld [vmem:[#allocation2 + $0x159] sm:$0xff]
        %v701 = vld [vmem:[#allocation2 + $0x169] sm:$0xff]
        %v702 = vld [vmem:[#allocation2 + $0x171] sm:$0xff]
        %v703 = vpack.c.bf16 %v672, %v671
        %v704 = vpack.c.bf16 %v674, %v673
        %v705 = vpack.c.bf16 %v676, %v675
        %v706 = vpack.c.bf16 %v678, %v677
        %v707 = vpack.c.bf16 %v680, %v679
        %v708 = vpack.c.bf16 %v682, %v681
        %v709 = vpack.c.bf16 %v684, %v683
        %v710 = vpack.c.bf16 %v686, %v685
        %v711 = vpack.c.bf16 %v688, %v687
        %v712 = vpack.c.bf16 %v690, %v689
        %v713 = vpack.c.bf16 %v692, %v691
        %v714 = vpack.c.bf16 %v694, %v693
        %v715 = vpack.c.bf16 %v696, %v695
        %v716 = vpack.c.bf16 %v698, %v697
        %v717 = vpack.c.bf16 %v700, %v699
        %v718 = vpack.c.bf16 %v702, %v701
        %s719 = scalar_lea.vmem %s1, 8
        %v720 = vld [vmem:[%s719] sm:$0xf]
        %v721 = vld [vmem:[%s719 + $0x4] sm:$0xf]
        %v724 = vunpack.c.l.b16 %v720
        %v725 = vunpack.c.l.b16 %v721
        %v726 = vpack.c.b16 %v725, %v724
        %v729 = vsel %vm454, %v703, 0
        %v732 = vsel %vm454, %v704, 0
        %v735 = vsel %vm454, %v705, 0
        %v738 = vsel %vm454, %v706, 0
        %v741 = vsel %vm454, %v707, 0
        %v744 = vsel %vm454, %v708, 0
        %v747 = vsel %vm454, %v709, 0
        %v750 = vsel %vm454, %v710, 0
        %v753 = vsel %vm454, %v711, 0
        %v756 = vsel %vm454, %v712, 0
        %v759 = vsel %vm454, %v713, 0
        %v762 = vsel %vm454, %v714, 0
        %v765 = vsel %vm454, %v715, 0
        %v768 = vsel %vm454, %v716, 0
        %v771 = vsel %vm454, %v717, 0
        %v774 = vsel %vm454, %v718, 0
        %776 = vmatprep.subr.bf16.mxu0 0
        %777 = vmatpush1.bf16.msra.mxu0 %v726
        %778 = vmatprep.subr.bf16.mxu0 0
        %779 = vmatpush1.bf16.msra.mxu0 0
        %780 = vmatprep.subr.bf16.mxu0 0
        %781 = vmatpush1.bf16.msra.mxu0 0
        %782 = vmatprep.subr.bf16.mxu0 0
        %783 = vmatpush1.bf16.msra.mxu0 0
        %784 = vmatprep.subr.bf16.mxu0 0
        %785 = vmatpush1.bf16.msra.mxu0 0
        %786 = vmatprep.subr.bf16.mxu0 0
        %787 = vmatpush1.bf16.msra.mxu0 0
        %788 = vmatprep.subr.bf16.mxu0 0
        %789 = vmatpush1.bf16.msra.mxu0 0
        %790 = vmatprep.subr.bf16.mxu0 0
        %791 = vmatpush1.bf16.msra.mxu0 0
        %792 = vmatprep.subr.bf16.mxu0 0
        %793 = vmatpush1.bf16.msra.mxu0 0
        %794 = vmatprep.subr.bf16.mxu0 0
        %795 = vmatpush1.bf16.msra.mxu0 0
        %796 = vmatprep.subr.bf16.mxu0 0
        %797 = vmatpush1.bf16.msra.mxu0 0
        %798 = vmatprep.subr.bf16.mxu0 0
        %799 = vmatpush1.bf16.msra.mxu0 0
        %800 = vmatprep.subr.bf16.mxu0 0
        %801 = vmatpush1.bf16.msra.mxu0 0
        %802 = vmatprep.subr.bf16.mxu0 0
        %803 = vmatpush1.bf16.msra.mxu0 0
        %804 = vmatprep.subr.bf16.mxu0 0
        %805 = vmatpush1.bf16.msra.mxu0 0
        %806 = vmatprep.subr.bf16.mxu0 0
        %807 = vmatpush1.bf16.msra.mxu0 0
        %808 = vmatprep.mubr.bf16.mxu0 0
        %809 = vmatmul.mubr.bf16.gmra.mrb[0].mxu0 %v729
        %v810 = vpop.f32.mrb[0].mxu0
        %v811 = vadd.f32 0.0, %v810
        %v812 = vpop.f32.mrb[0].mxu0
        %v813 = vpop.f32.mrb[0].mxu0
        %v814 = vadd.f32 0.0, %v813
        %v815 = vpop.f32.mrb[0].mxu0
        %816 = vmatprep.mubr.bf16.mxu0 0
        %817 = vmatmul.mubr.bf16.gmra.mrb[0].mxu0 %v732
        %v818 = vpop.f32.mrb[0].mxu0
        %v819 = vadd.f32 0.0, %v818
        %v820 = vpop.f32.mrb[0].mxu0
        %v821 = vpop.f32.mrb[0].mxu0
        %v822 = vadd.f32 0.0, %v821
        %v823 = vpop.f32.mrb[0].mxu0
        %824 = vmatprep.mubr.bf16.mxu0 0
        %825 = vmatmul.mubr.bf16.gmra.mrb[0].mxu0 %v735
        %v826 = vpop.f32.mrb[0].mxu0
        %v827 = vadd.f32 0.0, %v826
        %v828 = vpop.f32.mrb[0].mxu0
        %v829 = vpop.f32.mrb[0].mxu0
        %v830 = vadd.f32 0.0, %v829
        %v831 = vpop.f32.mrb[0].mxu0
        %832 = vmatprep.mubr.bf16.mxu0 0
        %833 = vmatmul.mubr.bf16.gmra.mrb[0].mxu0 %v738
        %v834 = vpop.f32.mrb[0].mxu0
        %v835 = vadd.f32 0.0, %v834
        %v836 = vpop.f32.mrb[0].mxu0
        %v837 = vpop.f32.mrb[0].mxu0
        %v838 = vadd.f32 0.0, %v837
        %v839 = vpop.f32.mrb[0].mxu0
        %840 = vmatprep.mubr.bf16.mxu0 0
        %841 = vmatmul.mubr.bf16.gmra.mrb[0].mxu0 %v741
        %v842 = vpop.f32.mrb[0].mxu0
        %v843 = vadd.f32 0.0, %v842
        %v844 = vpop.f32.mrb[0].mxu0
        %v845 = vpop.f32.mrb[0].mxu0
        %v846 = vadd.f32 0.0, %v845
        %v847 = vpop.f32.mrb[0].mxu0
        %848 = vmatprep.mubr.bf16.mxu0 0
        %849 = vmatmul.mubr.bf16.gmra.mrb[0].mxu0 %v744
        %v850 = vpop.f32.mrb[0].mxu0
        %v851 = vadd.f32 0.0, %v850
        %v852 = vpop.f32.mrb[0].mxu0
        %v853 = vpop.f32.mrb[0].mxu0
        %v854 = vadd.f32 0.0, %v853
        %v855 = vpop.f32.mrb[0].mxu0
        %856 = vmatprep.mubr.bf16.mxu0 0
        %857 = vmatmul.mubr.bf16.gmra.mrb[0].mxu0 %v747
        %v858 = vpop.f32.mrb[0].mxu0
        %v859 = vadd.f32 0.0, %v858
        %v860 = vpop.f32.mrb[0].mxu0
        %v861 = vpop.f32.mrb[0].mxu0
        %v862 = vadd.f32 0.0, %v861
        %v863 = vpop.f32.mrb[0].mxu0
        %864 = vmatprep.mubr.bf16.mxu0 0
        %865 = vmatmul.mubr.bf16.gmra.mrb[0].mxu0 %v750
        %v866 = vpop.f32.mrb[0].mxu0
        %v867 = vadd.f32 0.0, %v866
        %v868 = vpop.f32.mrb[0].mxu0
        %v869 = vpop.f32.mrb[0].mxu0
        %v870 = vadd.f32 0.0, %v869
        %v871 = vpop.f32.mrb[0].mxu0
        %872 = vmatprep.mubr.bf16.mxu0 0
        %873 = vmatmul.mubr.bf16.gmra.mrb[0].mxu0 %v753
        %v874 = vpop.f32.mrb[0].mxu0
        %v875 = vadd.f32 0.0, %v874
        %v876 = vpop.f32.mrb[0].mxu0
        %v877 = vpop.f32.mrb[0].mxu0
        %v878 = vadd.f32 0.0, %v877
        %v879 = vpop.f32.mrb[0].mxu0
        %880 = vmatprep.mubr.bf16.mxu0 0
        %881 = vmatmul.mubr.bf16.gmra.mrb[0].mxu0 %v756
        %v882 = vpop.f32.mrb[0].mxu0
        %v883 = vadd.f32 0.0, %v882
        %v884 = vpop.f32.mrb[0].mxu0
        %v885 = vpop.f32.mrb[0].mxu0
        %v886 = vadd.f32 0.0, %v885
        %v887 = vpop.f32.mrb[0].mxu0
        %888 = vmatprep.mubr.bf16.mxu0 0
        %889 = vmatmul.mubr.bf16.gmra.mrb[0].mxu0 %v759
        %v890 = vpop.f32.mrb[0].mxu0
        %v891 = vadd.f32 0.0, %v890
        %v892 = vpop.f32.mrb[0].mxu0
        %v893 = vpop.f32.mrb[0].mxu0
        %v894 = vadd.f32 0.0, %v893
        %v895 = vpop.f32.mrb[0].mxu0
        %896 = vmatprep.mubr.bf16.mxu0 0
        %897 = vmatmul.mubr.bf16.gmra.mrb[0].mxu0 %v762
        %v898 = vpop.f32.mrb[0].mxu0
        %v899 = vadd.f32 0.0, %v898
        %v900 = vpop.f32.mrb[0].mxu0
        %v901 = vpop.f32.mrb[0].mxu0
        %v902 = vadd.f32 0.0, %v901
        %v903 = vpop.f32.mrb[0].mxu0
        %904 = vmatprep.mubr.bf16.mxu0 0
        %905 = vmatmul.mubr.bf16.gmra.mrb[0].mxu0 %v765
        %v906 = vpop.f32.mrb[0].mxu0
        %v907 = vadd.f32 0.0, %v906
        %v908 = vpop.f32.mrb[0].mxu0
        %v909 = vpop.f32.mrb[0].mxu0
        %v910 = vadd.f32 0.0, %v909
        %v911 = vpop.f32.mrb[0].mxu0
        %912 = vmatprep.mubr.bf16.mxu0 0
        %913 = vmatmul.mubr.bf16.gmra.mrb[0].mxu0 %v768
        %v914 = vpop.f32.mrb[0].mxu0
        %v915 = vadd.f32 0.0, %v914
        %v916 = vpop.f32.mrb[0].mxu0
        %v917 = vpop.f32.mrb[0].mxu0
        %v918 = vadd.f32 0.0, %v917
        %v919 = vpop.f32.mrb[0].mxu0
        %920 = vmatprep.mubr.bf16.mxu0 0
        %921 = vmatmul.mubr.bf16.gmra.mrb[0].mxu0 %v771
        %v922 = vpop.f32.mrb[0].mxu0
        %v923 = vadd.f32 0.0, %v922
        %v924 = vpop.f32.mrb[0].mxu0
        %v925 = vpop.f32.mrb[0].mxu0
        %v926 = vadd.f32 0.0, %v925
        %v927 = vpop.f32.mrb[0].mxu0
        %928 = vmatprep.mubr.bf16.mxu0 0
        %929 = vmatmul.mubr.bf16.gmra.mrb[0].mxu0 %v774
        %v930 = vpop.f32.mrb[0].mxu0
        %v931 = vadd.f32 0.0, %v930
        %v932 = vpop.f32.mrb[0].mxu0
        %v933 = vpop.f32.mrb[0].mxu0
        %v934 = vadd.f32 0.0, %v933
        %v935 = vpop.f32.mrb[0].mxu0
        %936 = vdwg.mxu0
        %v939 = vunpack.c.l.b16 %v669
        %v940 = vunpack.c.l.b16 %v670
        %v941 = vpack.c.b16 %v940, %v939
        %v944 = vsel %vm454, %v653, 0
        %v947 = vsel %vm454, %v654, 0
        %v950 = vsel %vm454, %v655, 0
        %v953 = vsel %vm454, %v656, 0
        %v956 = vsel %vm454, %v657, 0
        %v959 = vsel %vm454, %v658, 0
        %v962 = vsel %vm454, %v659, 0
        %v965 = vsel %vm454, %v660, 0
        %v968 = vsel %vm454, %v661, 0
        %v971 = vsel %vm454, %v662, 0
        %v974 = vsel %vm454, %v663, 0
        %v977 = vsel %vm454, %v664, 0
        %v980 = vsel %vm454, %v665, 0
        %v983 = vsel %vm454, %v666, 0
        %v986 = vsel %vm454, %v667, 0
        %v989 = vsel %vm454, %v668, 0
        %991 = vmatprep.subr.bf16.mxu0 0
        %992 = vmatpush1.bf16.msra.mxu0 %v941
        %993 = vmatprep.subr.bf16.mxu0 0
        %994 = vmatpush1.bf16.msra.mxu0 0
        %995 = vmatprep.subr.bf16.mxu0 0
        %996 = vmatpush1.bf16.msra.mxu0 0
        %997 = vmatprep.subr.bf16.mxu0 0
        %998 = vmatpush1.bf16.msra.mxu0 0
        %999 = vmatprep.subr.bf16.mxu0 0
        %1000 = vmatpush1.bf16.msra.mxu0 0
        %1001 = vmatprep.subr.bf16.mxu0 0
        %1002 = vmatpush1.bf16.msra.mxu0 0
        %1003 = vmatprep.subr.bf16.mxu0 0
        %1004 = vmatpush1.bf16.msra.mxu0 0
        %1005 = vmatprep.subr.bf16.mxu0 0
        %1006 = vmatpush1.bf16.msra.mxu0 0
        %1007 = vmatprep.subr.bf16.mxu0 0
        %1008 = vmatpush1.bf16.msra.mxu0 0
        %1009 = vmatprep.subr.bf16.mxu0 0
        %1010 = vmatpush1.bf16.msra.mxu0 0
        %1011 = vmatprep.subr.bf16.mxu0 0
        %1012 = vmatpush1.bf16.msra.mxu0 0
        %1013 = vmatprep.subr.bf16.mxu0 0
        %1014 = vmatpush1.bf16.msra.mxu0 0
        %1015 = vmatprep.subr.bf16.mxu0 0
        %1016 = vmatpush1.bf16.msra.mxu0 0
        %1017 = vmatprep.subr.bf16.mxu0 0
        %1018 = vmatpush1.bf16.msra.mxu0 0
        %1019 = vmatprep.subr.bf16.mxu0 0
        %1020 = vmatpush1.bf16.msra.mxu0 0
        %1021 = vmatprep.subr.bf16.mxu0 0
        %1022 = vmatpush1.bf16.msra.mxu0 0
        %1023 = vmatprep.mubr.bf16.mxu0 0
        %1024 = vmatmul.mubr.bf16.gmra.mrb[0].mxu0 %v944
        %v1025 = vpop.f32.mrb[0].mxu0
        %v1026 = vadd.f32 %v811, %v1025
        %v1027 = vpop.f32.mrb[0].mxu0
        %v1028 = vpop.f32.mrb[0].mxu0
        %v1029 = vadd.f32 %v814, %v1028
        %v1030 = vpop.f32.mrb[0].mxu0
        %1031 = vmatprep.mubr.bf16.mxu0 0
        %1032 = vmatmul.mubr.bf16.gmra.mrb[0].mxu0 %v947
        %v1033 = vpop.f32.mrb[0].mxu0
        %v1034 = vadd.f32 %v819, %v1033
        %v1035 = vpop.f32.mrb[0].mxu0
        %v1036 = vpop.f32.mrb[0].mxu0
        %v1037 = vadd.f32 %v822, %v1036
        %v1038 = vpop.f32.mrb[0].mxu0
        %1039 = vmatprep.mubr.bf16.mxu0 0
        %1040 = vmatmul.mubr.bf16.gmra.mrb[0].mxu0 %v950
        %v1041 = vpop.f32.mrb[0].mxu0
        %v1042 = vadd.f32 %v827, %v1041
        %v1043 = vpop.f32.mrb[0].mxu0
        %v1044 = vpop.f32.mrb[0].mxu0
        %v1045 = vadd.f32 %v830, %v1044
        %v1046 = vpop.f32.mrb[0].mxu0
        %1047 = vmatprep.mubr.bf16.mxu0 0
        %1048 = vmatmul.mubr.bf16.gmra.mrb[0].mxu0 %v953
        %v1049 = vpop.f32.mrb[0].mxu0
        %v1050 = vadd.f32 %v835, %v1049
        %v1051 = vpop.f32.mrb[0].mxu0
        %v1052 = vpop.f32.mrb[0].mxu0
        %v1053 = vadd.f32 %v838, %v1052
        %v1054 = vpop.f32.mrb[0].mxu0
        %1055 = vmatprep.mubr.bf16.mxu0 0
        %1056 = vmatmul.mubr.bf16.gmra.mrb[0].mxu0 %v956
        %v1057 = vpop.f32.mrb[0].mxu0
        %v1058 = vadd.f32 %v843, %v1057
        %v1059 = vpop.f32.mrb[0].mxu0
        %v1060 = vpop.f32.mrb[0].mxu0
        %v1061 = vadd.f32 %v846, %v1060
        %v1062 = vpop.f32.mrb[0].mxu0
        %1063 = vmatprep.mubr.bf16.mxu0 0
        %1064 = vmatmul.mubr.bf16.gmra.mrb[0].mxu0 %v959
        %v1065 = vpop.f32.mrb[0].mxu0
        %v1066 = vadd.f32 %v851, %v1065
        %v1067 = vpop.f32.mrb[0].mxu0
        %v1068 = vpop.f32.mrb[0].mxu0
        %v1069 = vadd.f32 %v854, %v1068
        %v1070 = vpop.f32.mrb[0].mxu0
        %1071 = vmatprep.mubr.bf16.mxu0 0
        %1072 = vmatmul.mubr.bf16.gmra.mrb[0].mxu0 %v962
        %v1073 = vpop.f32.mrb[0].mxu0
        %v1074 = vadd.f32 %v859, %v1073
        %v1075 = vpop.f32.mrb[0].mxu0
        %v1076 = vpop.f32.mrb[0].mxu0
        %v1077 = vadd.f32 %v862, %v1076
        %v1078 = vpop.f32.mrb[0].mxu0
        %1079 = vmatprep.mubr.bf16.mxu0 0
        %1080 = vmatmul.mubr.bf16.gmra.mrb[0].mxu0 %v965
        %v1081 = vpop.f32.mrb[0].mxu0
        %v1082 = vadd.f32 %v867, %v1081
        %v1083 = vpop.f32.mrb[0].mxu0
        %v1084 = vpop.f32.mrb[0].mxu0
        %v1085 = vadd.f32 %v870, %v1084
        %v1086 = vpop.f32.mrb[0].mxu0
        %1087 = vmatprep.mubr.bf16.mxu0 0
        %1088 = vmatmul.mubr.bf16.gmra.mrb[0].mxu0 %v968
        %v1089 = vpop.f32.mrb[0].mxu0
        %v1090 = vadd.f32 %v875, %v1089
        %v1091 = vpop.f32.mrb[0].mxu0
        %v1092 = vpop.f32.mrb[0].mxu0
        %v1093 = vadd.f32 %v878, %v1092
        %v1094 = vpop.f32.mrb[0].mxu0
        %1095 = vmatprep.mubr.bf16.mxu0 0
        %1096 = vmatmul.mubr.bf16.gmra.mrb[0].mxu0 %v971
        %v1097 = vpop.f32.mrb[0].mxu0
        %v1098 = vadd.f32 %v883, %v1097
        %v1099 = vpop.f32.mrb[0].mxu0
        %v1100 = vpop.f32.mrb[0].mxu0
        %v1101 = vadd.f32 %v886, %v1100
        %v1102 = vpop.f32.mrb[0].mxu0
        %1103 = vmatprep.mubr.bf16.mxu0 0
        %1104 = vmatmul.mubr.bf16.gmra.mrb[0].mxu0 %v974
        %v1105 = vpop.f32.mrb[0].mxu0
        %v1106 = vadd.f32 %v891, %v1105
        %v1107 = vpop.f32.mrb[0].mxu0
        %v1108 = vpop.f32.mrb[0].mxu0
        %v1109 = vadd.f32 %v894, %v1108
        %v1110 = vpop.f32.mrb[0].mxu0
        %1111 = vmatprep.mubr.bf16.mxu0 0
        %1112 = vmatmul.mubr.bf16.gmra.mrb[0].mxu0 %v977
        %v1113 = vpop.f32.mrb[0].mxu0
        %v1114 = vadd.f32 %v899, %v1113
        %v1115 = vpop.f32.mrb[0].mxu0
        %v1116 = vpop.f32.mrb[0].mxu0
        %v1117 = vadd.f32 %v902, %v1116
        %v1118 = vpop.f32.mrb[0].mxu0
        %1119 = vmatprep.mubr.bf16.mxu0 0
        %1120 = vmatmul.mubr.bf16.gmra.mrb[0].mxu0 %v980
        %v1121 = vpop.f32.mrb[0].mxu0
        %v1122 = vadd.f32 %v907, %v1121
        %v1123 = vpop.f32.mrb[0].mxu0
        %v1124 = vpop.f32.mrb[0].mxu0
        %v1125 = vadd.f32 %v910, %v1124
        %v1126 = vpop.f32.mrb[0].mxu0
        %1127 = vmatprep.mubr.bf16.mxu0 0
        %1128 = vmatmul.mubr.bf16.gmra.mrb[0].mxu0 %v983
        %v1129 = vpop.f32.mrb[0].mxu0
        %v1130 = vadd.f32 %v915, %v1129
        %v1131 = vpop.f32.mrb[0].mxu0
        %v1132 = vpop.f32.mrb[0].mxu0
        %v1133 = vadd.f32 %v918, %v1132
        %v1134 = vpop.f32.mrb[0].mxu0
        %1135 = vmatprep.mubr.bf16.mxu0 0
        %1136 = vmatmul.mubr.bf16.gmra.mrb[0].mxu0 %v986
        %v1137 = vpop.f32.mrb[0].mxu0
        %v1138 = vadd.f32 %v923, %v1137
        %v1139 = vpop.f32.mrb[0].mxu0
        %v1140 = vpop.f32.mrb[0].mxu0
        %v1141 = vadd.f32 %v926, %v1140
        %v1142 = vpop.f32.mrb[0].mxu0
        %1143 = vmatprep.mubr.bf16.mxu0 0
        %1144 = vmatmul.mubr.bf16.gmra.mrb[0].mxu0 %v989
        %v1145 = vpop.f32.mrb[0].mxu0
        %v1146 = vadd.f32 %v931, %v1145
        %v1147 = vpop.f32.mrb[0].mxu0
        %v1148 = vpop.f32.mrb[0].mxu0
        %v1149 = vadd.f32 %v934, %v1148
        %v1150 = vpop.f32.mrb[0].mxu0
        %1151 = vdwg.mxu0
        %v1152 = vld [vmem:[#allocation2 + $0x2] sm:$0xff]
        %v1153 = vld [vmem:[#allocation2 + $0xa] sm:$0xff]
        %v1154 = vld [vmem:[#allocation2 + $0x1a] sm:$0xff]
        %v1155 = vld [vmem:[#allocation2 + $0x22] sm:$0xff]
        %v1156 = vld [vmem:[#allocation2 + $0x32] sm:$0xff]
        %v1157 = vld [vmem:[#allocation2 + $0x3a] sm:$0xff]
        %v1158 = vld [vmem:[#allocation2 + $0x4a] sm:$0xff]
        %v1159 = vld [vmem:[#allocation2 + $0x52] sm:$0xff]
        %v1160 = vld [vmem:[#allocation2 + $0x62] sm:$0xff]
        %v1161 = vld [vmem:[#allocation2 + $0x6a] sm:$0xff]
        %v1162 = vld [vmem:[#allocation2 + $0x7a] sm:$0xff]
        %v1163 = vld [vmem:[#allocation2 + $0x82] sm:$0xff]
        %v1164 = vld [vmem:[#allocation2 + $0x92] sm:$0xff]
        %v1165 = vld [vmem:[#allocation2 + $0x9a] sm:$0xff]
        %v1166 = vld [vmem:[#allocation2 + $0xaa] sm:$0xff]
        %v1167 = vld [vmem:[#allocation2 + $0xb2] sm:$0xff]
        %v1168 = vld [vmem:[#allocation2 + $0xc2] sm:$0xff]
        %v1169 = vld [vmem:[#allocation2 + $0xca] sm:$0xff]
        %v1170 = vld [vmem:[#allocation2 + $0xda] sm:$0xff]
        %v1171 = vld [vmem:[#allocation2 + $0xe2] sm:$0xff]
        %v1172 = vld [vmem:[#allocation2 + $0xf2] sm:$0xff]
        %v1173 = vld [vmem:[#allocation2 + $0xfa] sm:$0xff]
        %v1174 = vld [vmem:[#allocation2 + $0x10a] sm:$0xff]
        %v1175 = vld [vmem:[#allocation2 + $0x112] sm:$0xff]
        %v1176 = vld [vmem:[#allocation2 + $0x122] sm:$0xff]
        %v1177 = vld [vmem:[#allocation2 + $0x12a] sm:$0xff]
        %v1178 = vld [vmem:[#allocation2 + $0x13a] sm:$0xff]
        %v1179 = vld [vmem:[#allocation2 + $0x142] sm:$0xff]
        %v1180 = vld [vmem:[#allocation2 + $0x152] sm:$0xff]
        %v1181 = vld [vmem:[#allocation2 + $0x15a] sm:$0xff]
        %v1182 = vld [vmem:[#allocation2 + $0x16a] sm:$0xff]
        %v1183 = vld [vmem:[#allocation2 + $0x172] sm:$0xff]
        %v1184 = vpack.c.bf16 %v1153, %v1152
        %v1185 = vpack.c.bf16 %v1155, %v1154
        %v1186 = vpack.c.bf16 %v1157, %v1156
        %v1187 = vpack.c.bf16 %v1159, %v1158
        %v1188 = vpack.c.bf16 %v1161, %v1160
        %v1189 = vpack.c.bf16 %v1163, %v1162
        %v1190 = vpack.c.bf16 %v1165, %v1164
        %v1191 = vpack.c.bf16 %v1167, %v1166
        %v1192 = vpack.c.bf16 %v1169, %v1168
        %v1193 = vpack.c.bf16 %v1171, %v1170
        %v1194 = vpack.c.bf16 %v1173, %v1172
        %v1195 = vpack.c.bf16 %v1175, %v1174
        %v1196 = vpack.c.bf16 %v1177, %v1176
        %v1197 = vpack.c.bf16 %v1179, %v1178
        %v1198 = vpack.c.bf16 %v1181, %v1180
        %v1199 = vpack.c.bf16 %v1183, %v1182
        %s1200 = scalar_lea.vmem %s1, 16
        %v1201 = vld [vmem:[%s1200] sm:$0xf]
        %v1202 = vld [vmem:[%s1200 + $0x4] sm:$0xf]
        %v1205 = vunpack.c.l.b16 %v1201
        %v1206 = vunpack.c.l.b16 %v1202
        %v1207 = vpack.c.b16 %v1206, %v1205
        %v1210 = vsel %vm454, %v1184, 0
        %v1213 = vsel %vm454, %v1185, 0
        %v1216 = vsel %vm454, %v1186, 0
        %v1219 = vsel %vm454, %v1187, 0
        %v1222 = vsel %vm454, %v1188, 0
        %v1225 = vsel %vm454, %v1189, 0
        %v1228 = vsel %vm454, %v1190, 0
        %v1231 = vsel %vm454, %v1191, 0
        %v1234 = vsel %vm454, %v1192, 0
        %v1237 = vsel %vm454, %v1193, 0
        %v1240 = vsel %vm454, %v1194, 0
        %v1243 = vsel %vm454, %v1195, 0
        %v1246 = vsel %vm454, %v1196, 0
        %v1249 = vsel %vm454, %v1197, 0
        %v1252 = vsel %vm454, %v1198, 0
        %v1255 = vsel %vm454, %v1199, 0
        %1257 = vmatprep.subr.bf16.mxu0 0
        %1258 = vmatpush1.bf16.msra.mxu0 %v1207
        %1259 = vmatprep.subr.bf16.mxu0 0
        %1260 = vmatpush1.bf16.msra.mxu0 0
        %1261 = vmatprep.subr.bf16.mxu0 0
        %1262 = vmatpush1.bf16.msra.mxu0 0
        %1263 = vmatprep.subr.bf16.mxu0 0
        %1264 = vmatpush1.bf16.msra.mxu0 0
        %1265 = vmatprep.subr.bf16.mxu0 0
        %1266 = vmatpush1.bf16.msra.mxu0 0
        %1267 = vmatprep.subr.bf16.mxu0 0
        %1268 = vmatpush1.bf16.msra.mxu0 0
        %1269 = vmatprep.subr.bf16.mxu0 0
        %1270 = vmatpush1.bf16.msra.mxu0 0
        %1271 = vmatprep.subr.bf16.mxu0 0
        %1272 = vmatpush1.bf16.msra.mxu0 0
        %1273 = vmatprep.subr.bf16.mxu0 0
        %1274 = vmatpush1.bf16.msra.mxu0 0
        %1275 = vmatprep.subr.bf16.mxu0 0
        %1276 = vmatpush1.bf16.msra.mxu0 0
        %1277 = vmatprep.subr.bf16.mxu0 0
        %1278 = vmatpush1.bf16.msra.mxu0 0
        %1279 = vmatprep.subr.bf16.mxu0 0
        %1280 = vmatpush1.bf16.msra.mxu0 0
        %1281 = vmatprep.subr.bf16.mxu0 0
        %1282 = vmatpush1.bf16.msra.mxu0 0
        %1283 = vmatprep.subr.bf16.mxu0 0
        %1284 = vmatpush1.bf16.msra.mxu0 0
        %1285 = vmatprep.subr.bf16.mxu0 0
        %1286 = vmatpush1.bf16.msra.mxu0 0
        %1287 = vmatprep.subr.bf16.mxu0 0
        %1288 = vmatpush1.bf16.msra.mxu0 0
        %1289 = vmatprep.mubr.bf16.mxu0 0
        %1290 = vmatmul.mubr.bf16.gmra.mrb[0].mxu0 %v1210
        %v1291 = vpop.f32.mrb[0].mxu0
        %v1292 = vadd.f32 0.0, %v1291
        %v1293 = vpop.f32.mrb[0].mxu0
        %v1294 = vpop.f32.mrb[0].mxu0
        %v1295 = vadd.f32 0.0, %v1294
        %v1296 = vpop.f32.mrb[0].mxu0
        %1297 = vmatprep.mubr.bf16.mxu0 0
        %1298 = vmatmul.mubr.bf16.gmra.mrb[0].mxu0 %v1213
        %v1299 = vpop.f32.mrb[0].mxu0
        %v1300 = vadd.f32 0.0, %v1299
        %v1301 = vpop.f32.mrb[0].mxu0
        %v1302 = vpop.f32.mrb[0].mxu0
        %v1303 = vadd.f32 0.0, %v1302
        %v1304 = vpop.f32.mrb[0].mxu0
        %1305 = vmatprep.mubr.bf16.mxu0 0
        %1306 = vmatmul.mubr.bf16.gmra.mrb[0].mxu0 %v1216
        %v1307 = vpop.f32.mrb[0].mxu0
        %v1308 = vadd.f32 0.0, %v1307
        %v1309 = vpop.f32.mrb[0].mxu0
        %v1310 = vpop.f32.mrb[0].mxu0
        %v1311 = vadd.f32 0.0, %v1310
        %v1312 = vpop.f32.mrb[0].mxu0
        %1313 = vmatprep.mubr.bf16.mxu0 0
        %1314 = vmatmul.mubr.bf16.gmra.mrb[0].mxu0 %v1219
        %v1315 = vpop.f32.mrb[0].mxu0
        %v1316 = vadd.f32 0.0, %v1315
        %v1317 = vpop.f32.mrb[0].mxu0
        %v1318 = vpop.f32.mrb[0].mxu0
        %v1319 = vadd.f32 0.0, %v1318
        %v1320 = vpop.f32.mrb[0].mxu0
        %1321 = vmatprep.mubr.bf16.mxu0 0
        %1322 = vmatmul.mubr.bf16.gmra.mrb[0].mxu0 %v1222
        %v1323 = vpop.f32.mrb[0].mxu0
        %v1324 = vadd.f32 0.0, %v1323
        %v1325 = vpop.f32.mrb[0].mxu0
        %v1326 = vpop.f32.mrb[0].mxu0
        %v1327 = vadd.f32 0.0, %v1326
        %v1328 = vpop.f32.mrb[0].mxu0
        %1329 = vmatprep.mubr.bf16.mxu0 0
        %1330 = vmatmul.mubr.bf16.gmra.mrb[0].mxu0 %v1225
        %v1331 = vpop.f32.mrb[0].mxu0
        %v1332 = vadd.f32 0.0, %v1331
        %v1333 = vpop.f32.mrb[0].mxu0
        %v1334 = vpop.f32.mrb[0].mxu0
        %v1335 = vadd.f32 0.0, %v1334
        %v1336 = vpop.f32.mrb[0].mxu0
        %1337 = vmatprep.mubr.bf16.mxu0 0
        %1338 = vmatmul.mubr.bf16.gmra.mrb[0].mxu0 %v1228
        %v1339 = vpop.f32.mrb[0].mxu0
        %v1340 = vadd.f32 0.0, %v1339
        %v1341 = vpop.f32.mrb[0].mxu0
        %v1342 = vpop.f32.mrb[0].mxu0
        %v1343 = vadd.f32 0.0, %v1342
        %v1344 = vpop.f32.mrb[0].mxu0
        %1345 = vmatprep.mubr.bf16.mxu0 0
        %1346 = vmatmul.mubr.bf16.gmra.mrb[0].mxu0 %v1231
        %v1347 = vpop.f32.mrb[0].mxu0
        %v1348 = vadd.f32 0.0, %v1347
        %v1349 = vpop.f32.mrb[0].mxu0
        %v1350 = vpop.f32.mrb[0].mxu0
        %v1351 = vadd.f32 0.0, %v1350
        %v1352 = vpop.f32.mrb[0].mxu0
        %1353 = vmatprep.mubr.bf16.mxu0 0
        %1354 = vmatmul.mubr.bf16.gmra.mrb[0].mxu0 %v1234
        %v1355 = vpop.f32.mrb[0].mxu0
        %v1356 = vadd.f32 0.0, %v1355
        %v1357 = vpop.f32.mrb[0].mxu0
        %v1358 = vpop.f32.mrb[0].mxu0
        %v1359 = vadd.f32 0.0, %v1358
        %v1360 = vpop.f32.mrb[0].mxu0
        %1361 = vmatprep.mubr.bf16.mxu0 0
        %1362 = vmatmul.mubr.bf16.gmra.mrb[0].mxu0 %v1237
        %v1363 = vpop.f32.mrb[0].mxu0
        %v1364 = vadd.f32 0.0, %v1363
        %v1365 = vpop.f32.mrb[0].mxu0
        %v1366 = vpop.f32.mrb[0].mxu0
        %v1367 = vadd.f32 0.0, %v1366
        %v1368 = vpop.f32.mrb[0].mxu0
        %1369 = vmatprep.mubr.bf16.mxu0 0
        %1370 = vmatmul.mubr.bf16.gmra.mrb[0].mxu0 %v1240
        %v1371 = vpop.f32.mrb[0].mxu0
        %v1372 = vadd.f32 0.0, %v1371
        %v1373 = vpop.f32.mrb[0].mxu0
        %v1374 = vpop.f32.mrb[0].mxu0
        %v1375 = vadd.f32 0.0, %v1374
        %v1376 = vpop.f32.mrb[0].mxu0
        %1377 = vmatprep.mubr.bf16.mxu0 0
        %1378 = vmatmul.mubr.bf16.gmra.mrb[0].mxu0 %v1243
        %v1379 = vpop.f32.mrb[0].mxu0
        %v1380 = vadd.f32 0.0, %v1379
        %v1381 = vpop.f32.mrb[0].mxu0
        %v1382 = vpop.f32.mrb[0].mxu0
        %v1383 = vadd.f32 0.0, %v1382
        %v1384 = vpop.f32.mrb[0].mxu0
        %1385 = vmatprep.mubr.bf16.mxu0 0
        %1386 = vmatmul.mubr.bf16.gmra.mrb[0].mxu0 %v1246
        %v1387 = vpop.f32.mrb[0].mxu0
        %v1388 = vadd.f32 0.0, %v1387
        %v1389 = vpop.f32.mrb[0].mxu0
        %v1390 = vpop.f32.mrb[0].mxu0
        %v1391 = vadd.f32 0.0, %v1390
        %v1392 = vpop.f32.mrb[0].mxu0
        %1393 = vmatprep.mubr.bf16.mxu0 0
        %1394 = vmatmul.mubr.bf16.gmra.mrb[0].mxu0 %v1249
        %v1395 = vpop.f32.mrb[0].mxu0
        %v1396 = vadd.f32 0.0, %v1395
        %v1397 = vpop.f32.mrb[0].mxu0
        %v1398 = vpop.f32.mrb[0].mxu0
        %v1399 = vadd.f32 0.0, %v1398
        %v1400 = vpop.f32.mrb[0].mxu0
        %1401 = vmatprep.mubr.bf16.mxu0 0
        %1402 = vmatmul.mubr.bf16.gmra.mrb[0].mxu0 %v1252
        %v1403 = vpop.f32.mrb[0].mxu0
        %v1404 = vadd.f32 0.0, %v1403
        %v1405 = vpop.f32.mrb[0].mxu0
        %v1406 = vpop.f32.mrb[0].mxu0
        %v1407 = vadd.f32 0.0, %v1406
        %v1408 = vpop.f32.mrb[0].mxu0
        %1409 = vmatprep.mubr.bf16.mxu0 0
        %1410 = vmatmul.mubr.bf16.gmra.mrb[0].mxu0 %v1255
        %v1411 = vpop.f32.mrb[0].mxu0
        %v1412 = vadd.f32 0.0, %v1411
        %v1413 = vpop.f32.mrb[0].mxu0
        %v1414 = vpop.f32.mrb[0].mxu0
        %v1415 = vadd.f32 0.0, %v1414
        %v1416 = vpop.f32.mrb[0].mxu0
        %1417 = vdwg.mxu0
        %v1418 = vadd.f32 %v1026, %v1292
        %v1419 = vadd.f32 %v1029, %v1295
        %v1420 = vadd.f32 %v1034, %v1300
        %v1421 = vadd.f32 %v1037, %v1303
        %v1422 = vadd.f32 %v1042, %v1308
        %v1423 = vadd.f32 %v1045, %v1311
        %v1424 = vadd.f32 %v1050, %v1316
        %v1425 = vadd.f32 %v1053, %v1319
        %v1426 = vadd.f32 %v1058, %v1324
        %v1427 = vadd.f32 %v1061, %v1327
        %v1428 = vadd.f32 %v1066, %v1332
        %v1429 = vadd.f32 %v1069, %v1335
        %v1430 = vadd.f32 %v1074, %v1340
        %v1431 = vadd.f32 %v1077, %v1343
        %v1432 = vadd.f32 %v1082, %v1348
        %v1433 = vadd.f32 %v1085, %v1351
        %v1434 = vadd.f32 %v1090, %v1356
        %v1435 = vadd.f32 %v1093, %v1359
        %v1436 = vadd.f32 %v1098, %v1364
        %v1437 = vadd.f32 %v1101, %v1367
        %v1438 = vadd.f32 %v1106, %v1372
        %v1439 = vadd.f32 %v1109, %v1375
        %v1440 = vadd.f32 %v1114, %v1380
        %v1441 = vadd.f32 %v1117, %v1383
        %v1442 = vadd.f32 %v1122, %v1388
        %v1443 = vadd.f32 %v1125, %v1391
        %v1444 = vadd.f32 %v1130, %v1396
        %v1445 = vadd.f32 %v1133, %v1399
        %v1446 = vadd.f32 %v1138, %v1404
        %v1447 = vadd.f32 %v1141, %v1407
        %v1448 = vadd.f32 %v1146, %v1412
        %v1449 = vadd.f32 %v1149, %v1415
        %v1450 = vld [vmem:[%s588] sm:$0xff]
        %v1451 = vld [vmem:[%s588 + $0x8] sm:$0xff]
        %v1452 = vld [vmem:[%s588 + $0x18] sm:$0xff]
        %v1453 = vld [vmem:[%s588 + $0x20] sm:$0xff]
        %v1454 = vld [vmem:[%s588 + $0x30] sm:$0xff]
        %v1455 = vld [vmem:[%s588 + $0x38] sm:$0xff]
        %v1456 = vld [vmem:[%s588 + $0x48] sm:$0xff]
        %v1457 = vld [vmem:[%s588 + $0x50] sm:$0xff]
        %v1458 = vld [vmem:[%s588 + $0x60] sm:$0xff]
        %v1459 = vld [vmem:[%s588 + $0x68] sm:$0xff]
        %v1460 = vld [vmem:[%s588 + $0x78] sm:$0xff]
        %v1461 = vld [vmem:[%s588 + $0x80] sm:$0xff]
        %v1462 = vld [vmem:[%s588 + $0x90] sm:$0xff]
        %v1463 = vld [vmem:[%s588 + $0x98] sm:$0xff]
        %v1464 = vld [vmem:[%s588 + $0xa8] sm:$0xff]
        %v1465 = vld [vmem:[%s588 + $0xb0] sm:$0xff]
        %v1466 = vld [vmem:[%s588 + $0xc0] sm:$0xff]
        %v1467 = vld [vmem:[%s588 + $0xc8] sm:$0xff]
        %v1468 = vld [vmem:[%s588 + $0xd8] sm:$0xff]
        %v1469 = vld [vmem:[%s588 + $0xe0] sm:$0xff]
        %v1470 = vld [vmem:[%s588 + $0xf0] sm:$0xff]
        %v1471 = vld [vmem:[%s588 + $0xf8] sm:$0xff]
        %v1472 = vld [vmem:[%s588 + $0x108] sm:$0xff]
        %v1473 = vld [vmem:[%s588 + $0x110] sm:$0xff]
        %v1474 = vld [vmem:[%s588 + $0x120] sm:$0xff]
        %v1475 = vld [vmem:[%s588 + $0x128] sm:$0xff]
        %v1476 = vld [vmem:[%s588 + $0x138] sm:$0xff]
        %v1477 = vld [vmem:[%s588 + $0x140] sm:$0xff]
        %v1478 = vld [vmem:[%s588 + $0x150] sm:$0xff]
        %v1479 = vld [vmem:[%s588 + $0x158] sm:$0xff]
        %v1480 = vld [vmem:[%s588 + $0x168] sm:$0xff]
        %v1481 = vld [vmem:[%s588 + $0x170] sm:$0xff]
        %v1482 = vpack.c.bf16 %v1451, %v1450
        %v1483 = vpack.c.bf16 %v1453, %v1452
        %v1484 = vpack.c.bf16 %v1455, %v1454
        %v1485 = vpack.c.bf16 %v1457, %v1456
        %v1486 = vpack.c.bf16 %v1459, %v1458
        %v1487 = vpack.c.bf16 %v1461, %v1460
        %v1488 = vpack.c.bf16 %v1463, %v1462
        %v1489 = vpack.c.bf16 %v1465, %v1464
        %v1490 = vpack.c.bf16 %v1467, %v1466
        %v1491 = vpack.c.bf16 %v1469, %v1468
        %v1492 = vpack.c.bf16 %v1471, %v1470
        %v1493 = vpack.c.bf16 %v1473, %v1472
        %v1494 = vpack.c.bf16 %v1475, %v1474
        %v1495 = vpack.c.bf16 %v1477, %v1476
        %v1496 = vpack.c.bf16 %v1479, %v1478
        %v1497 = vpack.c.bf16 %v1481, %v1480
        %s1498 = scalar_lea.vmem %s1, 24
        %v1499 = vld [vmem:[%s1498] sm:$0xf]
        %v1500 = vld [vmem:[%s1498 + $0x4] sm:$0xf]
        %v1503 = vunpack.c.l.b16 %v1499
        %v1504 = vunpack.c.l.b16 %v1500
        %v1505 = vpack.c.b16 %v1504, %v1503
        %v1508 = vsel %vm454, %v1482, 0
        %v1511 = vsel %vm454, %v1483, 0
        %v1514 = vsel %vm454, %v1484, 0
        %v1517 = vsel %vm454, %v1485, 0
        %v1520 = vsel %vm454, %v1486, 0
        %v1523 = vsel %vm454, %v1487, 0
        %v1526 = vsel %vm454, %v1488, 0
        %v1529 = vsel %vm454, %v1489, 0
        %v1532 = vsel %vm454, %v1490, 0
        %v1535 = vsel %vm454, %v1491, 0
        %v1538 = vsel %vm454, %v1492, 0
        %v1541 = vsel %vm454, %v1493, 0
        %v1544 = vsel %vm454, %v1494, 0
        %v1547 = vsel %vm454, %v1495, 0
        %v1550 = vsel %vm454, %v1496, 0
        %v1553 = vsel %vm454, %v1497, 0
        %1555 = vmatprep.subr.bf16.mxu0 0
        %1556 = vmatpush1.bf16.msra.mxu0 %v1505
        %1557 = vmatprep.subr.bf16.mxu0 0
        %1558 = vmatpush1.bf16.msra.mxu0 0
        %1559 = vmatprep.subr.bf16.mxu0 0
        %1560 = vmatpush1.bf16.msra.mxu0 0
        %1561 = vmatprep.subr.bf16.mxu0 0
        %1562 = vmatpush1.bf16.msra.mxu0 0
        %1563 = vmatprep.subr.bf16.mxu0 0
        %1564 = vmatpush1.bf16.msra.mxu0 0
        %1565 = vmatprep.subr.bf16.mxu0 0
        %1566 = vmatpush1.bf16.msra.mxu0 0
        %1567 = vmatprep.subr.bf16.mxu0 0
        %1568 = vmatpush1.bf16.msra.mxu0 0
        %1569 = vmatprep.subr.bf16.mxu0 0
        %1570 = vmatpush1.bf16.msra.mxu0 0
        %1571 = vmatprep.subr.bf16.mxu0 0
        %1572 = vmatpush1.bf16.msra.mxu0 0
        %1573 = vmatprep.subr.bf16.mxu0 0
        %1574 = vmatpush1.bf16.msra.mxu0 0
        %1575 = vmatprep.subr.bf16.mxu0 0
        %1576 = vmatpush1.bf16.msra.mxu0 0
        %1577 = vmatprep.subr.bf16.mxu0 0
        %1578 = vmatpush1.bf16.msra.mxu0 0
        %1579 = vmatprep.subr.bf16.mxu0 0
        %1580 = vmatpush1.bf16.msra.mxu0 0
        %1581 = vmatprep.subr.bf16.mxu0 0
        %1582 = vmatpush1.bf16.msra.mxu0 0
        %1583 = vmatprep.subr.bf16.mxu0 0
        %1584 = vmatpush1.bf16.msra.mxu0 0
        %1585 = vmatprep.subr.bf16.mxu0 0
        %1586 = vmatpush1.bf16.msra.mxu0 0
        %1587 = vmatprep.mubr.bf16.mxu0 0
        %1588 = vmatmul.mubr.bf16.gmra.mrb[0].mxu0 %v1508
        %v1589 = vpop.f32.mrb[0].mxu0
        %v1590 = vadd.f32 0.0, %v1589
        %v1591 = vpop.f32.mrb[0].mxu0
        %v1592 = vpop.f32.mrb[0].mxu0
        %v1593 = vadd.f32 0.0, %v1592
        %v1594 = vpop.f32.mrb[0].mxu0
        %1595 = vmatprep.mubr.bf16.mxu0 0
        %1596 = vmatmul.mubr.bf16.gmra.mrb[0].mxu0 %v1511
        %v1597 = vpop.f32.mrb[0].mxu0
        %v1598 = vadd.f32 0.0, %v1597
        %v1599 = vpop.f32.mrb[0].mxu0
        %v1600 = vpop.f32.mrb[0].mxu0
        %v1601 = vadd.f32 0.0, %v1600
        %v1602 = vpop.f32.mrb[0].mxu0
        %1603 = vmatprep.mubr.bf16.mxu0 0
        %1604 = vmatmul.mubr.bf16.gmra.mrb[0].mxu0 %v1514
        %v1605 = vpop.f32.mrb[0].mxu0
        %v1606 = vadd.f32 0.0, %v1605
        %v1607 = vpop.f32.mrb[0].mxu0
        %v1608 = vpop.f32.mrb[0].mxu0
        %v1609 = vadd.f32 0.0, %v1608
        %v1610 = vpop.f32.mrb[0].mxu0
        %1611 = vmatprep.mubr.bf16.mxu0 0
        %1612 = vmatmul.mubr.bf16.gmra.mrb[0].mxu0 %v1517
        %v1613 = vpop.f32.mrb[0].mxu0
        %v1614 = vadd.f32 0.0, %v1613
        %v1615 = vpop.f32.mrb[0].mxu0
        %v1616 = vpop.f32.mrb[0].mxu0
        %v1617 = vadd.f32 0.0, %v1616
        %v1618 = vpop.f32.mrb[0].mxu0
        %1619 = vmatprep.mubr.bf16.mxu0 0
        %1620 = vmatmul.mubr.bf16.gmra.mrb[0].mxu0 %v1520
        %v1621 = vpop.f32.mrb[0].mxu0
        %v1622 = vadd.f32 0.0, %v1621
        %v1623 = vpop.f32.mrb[0].mxu0
        %v1624 = vpop.f32.mrb[0].mxu0
        %v1625 = vadd.f32 0.0, %v1624
        %v1626 = vpop.f32.mrb[0].mxu0
        %1627 = vmatprep.mubr.bf16.mxu0 0
        %1628 = vmatmul.mubr.bf16.gmra.mrb[0].mxu0 %v1523
        %v1629 = vpop.f32.mrb[0].mxu0
        %v1630 = vadd.f32 0.0, %v1629
        %v1631 = vpop.f32.mrb[0].mxu0
        %v1632 = vpop.f32.mrb[0].mxu0
        %v1633 = vadd.f32 0.0, %v1632
        %v1634 = vpop.f32.mrb[0].mxu0
        %1635 = vmatprep.mubr.bf16.mxu0 0
        %1636 = vmatmul.mubr.bf16.gmra.mrb[0].mxu0 %v1526
        %v1637 = vpop.f32.mrb[0].mxu0
        %v1638 = vadd.f32 0.0, %v1637
        %v1639 = vpop.f32.mrb[0].mxu0
        %v1640 = vpop.f32.mrb[0].mxu0
        %v1641 = vadd.f32 0.0, %v1640
        %v1642 = vpop.f32.mrb[0].mxu0
        %1643 = vmatprep.mubr.bf16.mxu0 0
        %1644 = vmatmul.mubr.bf16.gmra.mrb[0].mxu0 %v1529
        %v1645 = vpop.f32.mrb[0].mxu0
        %v1646 = vadd.f32 0.0, %v1645
        %v1647 = vpop.f32.mrb[0].mxu0
        %v1648 = vpop.f32.mrb[0].mxu0
        %v1649 = vadd.f32 0.0, %v1648
        %v1650 = vpop.f32.mrb[0].mxu0
        %1651 = vmatprep.mubr.bf16.mxu0 0
        %1652 = vmatmul.mubr.bf16.gmra.mrb[0].mxu0 %v1532
        %v1653 = vpop.f32.mrb[0].mxu0
        %v1654 = vadd.f32 0.0, %v1653
        %v1655 = vpop.f32.mrb[0].mxu0
        %v1656 = vpop.f32.mrb[0].mxu0
        %v1657 = vadd.f32 0.0, %v1656
        %v1658 = vpop.f32.mrb[0].mxu0
        %1659 = vmatprep.mubr.bf16.mxu0 0
        %1660 = vmatmul.mubr.bf16.gmra.mrb[0].mxu0 %v1535
        %v1661 = vpop.f32.mrb[0].mxu0
        %v1662 = vadd.f32 0.0, %v1661
        %v1663 = vpop.f32.mrb[0].mxu0
        %v1664 = vpop.f32.mrb[0].mxu0
        %v1665 = vadd.f32 0.0, %v1664
        %v1666 = vpop.f32.mrb[0].mxu0
        %1667 = vmatprep.mubr.bf16.mxu0 0
        %1668 = vmatmul.mubr.bf16.gmra.mrb[0].mxu0 %v1538
        %v1669 = vpop.f32.mrb[0].mxu0
        %v1670 = vadd.f32 0.0, %v1669
        %v1671 = vpop.f32.mrb[0].mxu0
        %v1672 = vpop.f32.mrb[0].mxu0
        %v1673 = vadd.f32 0.0, %v1672
        %v1674 = vpop.f32.mrb[0].mxu0
        %1675 = vmatprep.mubr.bf16.mxu0 0
        %1676 = vmatmul.mubr.bf16.gmra.mrb[0].mxu0 %v1541
        %v1677 = vpop.f32.mrb[0].mxu0
        %v1678 = vadd.f32 0.0, %v1677
        %v1679 = vpop.f32.mrb[0].mxu0
        %v1680 = vpop.f32.mrb[0].mxu0
        %v1681 = vadd.f32 0.0, %v1680
        %v1682 = vpop.f32.mrb[0].mxu0
        %1683 = vmatprep.mubr.bf16.mxu0 0
        %1684 = vmatmul.mubr.bf16.gmra.mrb[0].mxu0 %v1544
        %v1685 = vpop.f32.mrb[0].mxu0
        %v1686 = vadd.f32 0.0, %v1685
        %v1687 = vpop.f32.mrb[0].mxu0
        %v1688 = vpop.f32.mrb[0].mxu0
        %v1689 = vadd.f32 0.0, %v1688
        %v1690 = vpop.f32.mrb[0].mxu0
        %1691 = vmatprep.mubr.bf16.mxu0 0
        %1692 = vmatmul.mubr.bf16.gmra.mrb[0].mxu0 %v1547
        %v1693 = vpop.f32.mrb[0].mxu0
        %v1694 = vadd.f32 0.0, %v1693
        %v1695 = vpop.f32.mrb[0].mxu0
        %v1696 = vpop.f32.mrb[0].mxu0
        %v1697 = vadd.f32 0.0, %v1696
        %v1698 = vpop.f32.mrb[0].mxu0
        %1699 = vmatprep.mubr.bf16.mxu0 0
        %1700 = vmatmul.mubr.bf16.gmra.mrb[0].mxu0 %v1550
        %v1701 = vpop.f32.mrb[0].mxu0
        %v1702 = vadd.f32 0.0, %v1701
        %v1703 = vpop.f32.mrb[0].mxu0
        %v1704 = vpop.f32.mrb[0].mxu0
        %v1705 = vadd.f32 0.0, %v1704
        %v1706 = vpop.f32.mrb[0].mxu0
        %1707 = vmatprep.mubr.bf16.mxu0 0
        %1708 = vmatmul.mubr.bf16.gmra.mrb[0].mxu0 %v1553
        %v1709 = vpop.f32.mrb[0].mxu0
        %v1710 = vadd.f32 0.0, %v1709
        %v1711 = vpop.f32.mrb[0].mxu0
        %v1712 = vpop.f32.mrb[0].mxu0
        %v1713 = vadd.f32 0.0, %v1712
        %v1714 = vpop.f32.mrb[0].mxu0
        %1715 = vdwg.mxu0
        %v1716 = vadd.f32 %v1418, %v1590
        %v1717 = vadd.f32 %v1419, %v1593
        %v1718 = vadd.f32 %v1420, %v1598
        %v1719 = vadd.f32 %v1421, %v1601
        %v1720 = vadd.f32 %v1422, %v1606
        %v1721 = vadd.f32 %v1423, %v1609
        %v1722 = vadd.f32 %v1424, %v1614
        %v1723 = vadd.f32 %v1425, %v1617
        %v1724 = vadd.f32 %v1426, %v1622
        %v1725 = vadd.f32 %v1427, %v1625
        %v1726 = vadd.f32 %v1428, %v1630
        %v1727 = vadd.f32 %v1429, %v1633
        %v1728 = vadd.f32 %v1430, %v1638
        %v1729 = vadd.f32 %v1431, %v1641
        %v1730 = vadd.f32 %v1432, %v1646
        %v1731 = vadd.f32 %v1433, %v1649
        %v1732 = vadd.f32 %v1434, %v1654
        %v1733 = vadd.f32 %v1435, %v1657
        %v1734 = vadd.f32 %v1436, %v1662
        %v1735 = vadd.f32 %v1437, %v1665
        %v1736 = vadd.f32 %v1438, %v1670
        %v1737 = vadd.f32 %v1439, %v1673
        %v1738 = vadd.f32 %v1440, %v1678
        %v1739 = vadd.f32 %v1441, %v1681
        %v1740 = vadd.f32 %v1442, %v1686
        %v1741 = vadd.f32 %v1443, %v1689
        %v1742 = vadd.f32 %v1444, %v1694
        %v1743 = vadd.f32 %v1445, %v1697
        %v1744 = vadd.f32 %v1446, %v1702
        %v1745 = vadd.f32 %v1447, %v1705
        %v1746 = vadd.f32 %v1448, %v1710
        %v1747 = vadd.f32 %v1449, %v1713
        %v1748 = vld [vmem:[%s588 + $0x1] sm:$0xff]
        %v1749 = vld [vmem:[%s588 + $0x9] sm:$0xff]
        %v1750 = vld [vmem:[%s588 + $0x19] sm:$0xff]
        %v1751 = vld [vmem:[%s588 + $0x21] sm:$0xff]
        %v1752 = vld [vmem:[%s588 + $0x31] sm:$0xff]
        %v1753 = vld [vmem:[%s588 + $0x39] sm:$0xff]
        %v1754 = vld [vmem:[%s588 + $0x49] sm:$0xff]
        %v1755 = vld [vmem:[%s588 + $0x51] sm:$0xff]
        %v1756 = vld [vmem:[%s588 + $0x61] sm:$0xff]
        %v1757 = vld [vmem:[%s588 + $0x69] sm:$0xff]
        %v1758 = vld [vmem:[%s588 + $0x79] sm:$0xff]
        %v1759 = vld [vmem:[%s588 + $0x81] sm:$0xff]
        %v1760 = vld [vmem:[%s588 + $0x91] sm:$0xff]
        %v1761 = vld [vmem:[%s588 + $0x99] sm:$0xff]
        %v1762 = vld [vmem:[%s588 + $0xa9] sm:$0xff]
        %v1763 = vld [vmem:[%s588 + $0xb1] sm:$0xff]
        %v1764 = vld [vmem:[%s588 + $0xc1] sm:$0xff]
        %v1765 = vld [vmem:[%s588 + $0xc9] sm:$0xff]
        %v1766 = vld [vmem:[%s588 + $0xd9] sm:$0xff]
        %v1767 = vld [vmem:[%s588 + $0xe1] sm:$0xff]
        %v1768 = vld [vmem:[%s588 + $0xf1] sm:$0xff]
        %v1769 = vld [vmem:[%s588 + $0xf9] sm:$0xff]
        %v1770 = vld [vmem:[%s588 + $0x109] sm:$0xff]
        %v1771 = vld [vmem:[%s588 + $0x111] sm:$0xff]
        %v1772 = vld [vmem:[%s588 + $0x121] sm:$0xff]
        %v1773 = vld [vmem:[%s588 + $0x129] sm:$0xff]
        %v1774 = vld [vmem:[%s588 + $0x139] sm:$0xff]
        %v1775 = vld [vmem:[%s588 + $0x141] sm:$0xff]
        %v1776 = vld [vmem:[%s588 + $0x151] sm:$0xff]
        %v1777 = vld [vmem:[%s588 + $0x159] sm:$0xff]
        %v1778 = vld [vmem:[%s588 + $0x169] sm:$0xff]
        %v1779 = vld [vmem:[%s588 + $0x171] sm:$0xff]
        %v1780 = vpack.c.bf16 %v1749, %v1748
        %v1781 = vpack.c.bf16 %v1751, %v1750
        %v1782 = vpack.c.bf16 %v1753, %v1752
        %v1783 = vpack.c.bf16 %v1755, %v1754
        %v1784 = vpack.c.bf16 %v1757, %v1756
        %v1785 = vpack.c.bf16 %v1759, %v1758
        %v1786 = vpack.c.bf16 %v1761, %v1760
        %v1787 = vpack.c.bf16 %v1763, %v1762
        %v1788 = vpack.c.bf16 %v1765, %v1764
        %v1789 = vpack.c.bf16 %v1767, %v1766
        %v1790 = vpack.c.bf16 %v1769, %v1768
        %v1791 = vpack.c.bf16 %v1771, %v1770
        %v1792 = vpack.c.bf16 %v1773, %v1772
        %v1793 = vpack.c.bf16 %v1775, %v1774
        %v1794 = vpack.c.bf16 %v1777, %v1776
        %v1795 = vpack.c.bf16 %v1779, %v1778
        %s1796 = scalar_lea.vmem %s1, 32
        %v1797 = vld [vmem:[%s1796] sm:$0xf]
        %v1798 = vld [vmem:[%s1796 + $0x4] sm:$0xf]
        %v1801 = vunpack.c.l.b16 %v1797
        %v1802 = vunpack.c.l.b16 %v1798
        %v1803 = vpack.c.b16 %v1802, %v1801
        %v1806 = vsel %vm454, %v1780, 0
        %v1809 = vsel %vm454, %v1781, 0
        %v1812 = vsel %vm454, %v1782, 0
        %v1815 = vsel %vm454, %v1783, 0
        %v1818 = vsel %vm454, %v1784, 0
        %v1821 = vsel %vm454, %v1785, 0
        %v1824 = vsel %vm454, %v1786, 0
        %v1827 = vsel %vm454, %v1787, 0
        %v1830 = vsel %vm454, %v1788, 0
        %v1833 = vsel %vm454, %v1789, 0
        %v1836 = vsel %vm454, %v1790, 0
        %v1839 = vsel %vm454, %v1791, 0
        %v1842 = vsel %vm454, %v1792, 0
        %v1845 = vsel %vm454, %v1793, 0
        %v1848 = vsel %vm454, %v1794, 0
        %v1851 = vsel %vm454, %v1795, 0
        %1853 = vmatprep.subr.bf16.mxu0 0
        %1854 = vmatpush1.bf16.msra.mxu0 %v1803
        %1855 = vmatprep.subr.bf16.mxu0 0
        %1856 = vmatpush1.bf16.msra.mxu0 0
        %1857 = vmatprep.subr.bf16.mxu0 0
        %1858 = vmatpush1.bf16.msra.mxu0 0
        %1859 = vmatprep.subr.bf16.mxu0 0
        %1860 = vmatpush1.bf16.msra.mxu0 0
        %1861 = vmatprep.subr.bf16.mxu0 0
        %1862 = vmatpush1.bf16.msra.mxu0 0
        %1863 = vmatprep.subr.bf16.mxu0 0
        %1864 = vmatpush1.bf16.msra.mxu0 0
        %1865 = vmatprep.subr.bf16.mxu0 0
        %1866 = vmatpush1.bf16.msra.mxu0 0
        %1867 = vmatprep.subr.bf16.mxu0 0
        %1868 = vmatpush1.bf16.msra.mxu0 0
        %1869 = vmatprep.subr.bf16.mxu0 0
        %1870 = vmatpush1.bf16.msra.mxu0 0
        %1871 = vmatprep.subr.bf16.mxu0 0
        %1872 = vmatpush1.bf16.msra.mxu0 0
        %1873 = vmatprep.subr.bf16.mxu0 0
        %1874 = vmatpush1.bf16.msra.mxu0 0
        %1875 = vmatprep.subr.bf16.mxu0 0
        %1876 = vmatpush1.bf16.msra.mxu0 0
        %1877 = vmatprep.subr.bf16.mxu0 0
        %1878 = vmatpush1.bf16.msra.mxu0 0
        %1879 = vmatprep.subr.bf16.mxu0 0
        %1880 = vmatpush1.bf16.msra.mxu0 0
        %1881 = vmatprep.subr.bf16.mxu0 0
        %1882 = vmatpush1.bf16.msra.mxu0 0
        %1883 = vmatprep.subr.bf16.mxu0 0
        %1884 = vmatpush1.bf16.msra.mxu0 0
        %1885 = vmatprep.mubr.bf16.mxu0 0
        %1886 = vmatmul.mubr.bf16.gmra.mrb[0].mxu0 %v1806
        %v1887 = vpop.f32.mrb[0].mxu0
        %v1888 = vadd.f32 0.0, %v1887
        %v1889 = vpop.f32.mrb[0].mxu0
        %v1890 = vpop.f32.mrb[0].mxu0
        %v1891 = vadd.f32 0.0, %v1890
        %v1892 = vpop.f32.mrb[0].mxu0
        %1893 = vmatprep.mubr.bf16.mxu0 0
        %1894 = vmatmul.mubr.bf16.gmra.mrb[0].mxu0 %v1809
        %v1895 = vpop.f32.mrb[0].mxu0
        %v1896 = vadd.f32 0.0, %v1895
        %v1897 = vpop.f32.mrb[0].mxu0
        %v1898 = vpop.f32.mrb[0].mxu0
        %v1899 = vadd.f32 0.0, %v1898
        %v1900 = vpop.f32.mrb[0].mxu0
        %1901 = vmatprep.mubr.bf16.mxu0 0
        %1902 = vmatmul.mubr.bf16.gmra.mrb[0].mxu0 %v1812
        %v1903 = vpop.f32.mrb[0].mxu0
        %v1904 = vadd.f32 0.0, %v1903
        %v1905 = vpop.f32.mrb[0].mxu0
        %v1906 = vpop.f32.mrb[0].mxu0
        %v1907 = vadd.f32 0.0, %v1906
        %v1908 = vpop.f32.mrb[0].mxu0
        %1909 = vmatprep.mubr.bf16.mxu0 0
        %1910 = vmatmul.mubr.bf16.gmra.mrb[0].mxu0 %v1815
        %v1911 = vpop.f32.mrb[0].mxu0
        %v1912 = vadd.f32 0.0, %v1911
        %v1913 = vpop.f32.mrb[0].mxu0
        %v1914 = vpop.f32.mrb[0].mxu0
        %v1915 = vadd.f32 0.0, %v1914
        %v1916 = vpop.f32.mrb[0].mxu0
        %1917 = vmatprep.mubr.bf16.mxu0 0
        %1918 = vmatmul.mubr.bf16.gmra.mrb[0].mxu0 %v1818
        %v1919 = vpop.f32.mrb[0].mxu0
        %v1920 = vadd.f32 0.0, %v1919
        %v1921 = vpop.f32.mrb[0].mxu0
        %v1922 = vpop.f32.mrb[0].mxu0
        %v1923 = vadd.f32 0.0, %v1922
        %v1924 = vpop.f32.mrb[0].mxu0
        %1925 = vmatprep.mubr.bf16.mxu0 0
        %1926 = vmatmul.mubr.bf16.gmra.mrb[0].mxu0 %v1821
        %v1927 = vpop.f32.mrb[0].mxu0
        %v1928 = vadd.f32 0.0, %v1927
        %v1929 = vpop.f32.mrb[0].mxu0
        %v1930 = vpop.f32.mrb[0].mxu0
        %v1931 = vadd.f32 0.0, %v1930
        %v1932 = vpop.f32.mrb[0].mxu0
        %1933 = vmatprep.mubr.bf16.mxu0 0
        %1934 = vmatmul.mubr.bf16.gmra.mrb[0].mxu0 %v1824
        %v1935 = vpop.f32.mrb[0].mxu0
        %v1936 = vadd.f32 0.0, %v1935
        %v1937 = vpop.f32.mrb[0].mxu0
        %v1938 = vpop.f32.mrb[0].mxu0
        %v1939 = vadd.f32 0.0, %v1938
        %v1940 = vpop.f32.mrb[0].mxu0
        %1941 = vmatprep.mubr.bf16.mxu0 0
        %1942 = vmatmul.mubr.bf16.gmra.mrb[0].mxu0 %v1827
        %v1943 = vpop.f32.mrb[0].mxu0
        %v1944 = vadd.f32 0.0, %v1943
        %v1945 = vpop.f32.mrb[0].mxu0
        %v1946 = vpop.f32.mrb[0].mxu0
        %v1947 = vadd.f32 0.0, %v1946
        %v1948 = vpop.f32.mrb[0].mxu0
        %1949 = vmatprep.mubr.bf16.mxu0 0
        %1950 = vmatmul.mubr.bf16.gmra.mrb[0].mxu0 %v1830
        %v1951 = vpop.f32.mrb[0].mxu0
        %v1952 = vadd.f32 0.0, %v1951
        %v1953 = vpop.f32.mrb[0].mxu0
        %v1954 = vpop.f32.mrb[0].mxu0
        %v1955 = vadd.f32 0.0, %v1954
        %v1956 = vpop.f32.mrb[0].mxu0
        %1957 = vmatprep.mubr.bf16.mxu0 0
        %1958 = vmatmul.mubr.bf16.gmra.mrb[0].mxu0 %v1833
        %v1959 = vpop.f32.mrb[0].mxu0
        %v1960 = vadd.f32 0.0, %v1959
        %v1961 = vpop.f32.mrb[0].mxu0
        %v1962 = vpop.f32.mrb[0].mxu0
        %v1963 = vadd.f32 0.0, %v1962
        %v1964 = vpop.f32.mrb[0].mxu0
        %1965 = vmatprep.mubr.bf16.mxu0 0
        %1966 = vmatmul.mubr.bf16.gmra.mrb[0].mxu0 %v1836
        %v1967 = vpop.f32.mrb[0].mxu0
        %v1968 = vadd.f32 0.0, %v1967
        %v1969 = vpop.f32.mrb[0].mxu0
        %v1970 = vpop.f32.mrb[0].mxu0
        %v1971 = vadd.f32 0.0, %v1970
        %v1972 = vpop.f32.mrb[0].mxu0
        %1973 = vmatprep.mubr.bf16.mxu0 0
        %1974 = vmatmul.mubr.bf16.gmra.mrb[0].mxu0 %v1839
        %v1975 = vpop.f32.mrb[0].mxu0
        %v1976 = vadd.f32 0.0, %v1975
        %v1977 = vpop.f32.mrb[0].mxu0
        %v1978 = vpop.f32.mrb[0].mxu0
        %v1979 = vadd.f32 0.0, %v1978
        %v1980 = vpop.f32.mrb[0].mxu0
        %1981 = vmatprep.mubr.bf16.mxu0 0
        %1982 = vmatmul.mubr.bf16.gmra.mrb[0].mxu0 %v1842
        %v1983 = vpop.f32.mrb[0].mxu0
        %v1984 = vadd.f32 0.0, %v1983
        %v1985 = vpop.f32.mrb[0].mxu0
        %v1986 = vpop.f32.mrb[0].mxu0
        %v1987 = vadd.f32 0.0, %v1986
        %v1988 = vpop.f32.mrb[0].mxu0
        %1989 = vmatprep.mubr.bf16.mxu0 0
        %1990 = vmatmul.mubr.bf16.gmra.mrb[0].mxu0 %v1845
        %v1991 = vpop.f32.mrb[0].mxu0
        %v1992 = vadd.f32 0.0, %v1991
        %v1993 = vpop.f32.mrb[0].mxu0
        %v1994 = vpop.f32.mrb[0].mxu0
        %v1995 = vadd.f32 0.0, %v1994
        %v1996 = vpop.f32.mrb[0].mxu0
        %1997 = vmatprep.mubr.bf16.mxu0 0
        %1998 = vmatmul.mubr.bf16.gmra.mrb[0].mxu0 %v1848
        %v1999 = vpop.f32.mrb[0].mxu0
        %v2000 = vadd.f32 0.0, %v1999
        %v2001 = vpop.f32.mrb[0].mxu0
        %v2002 = vpop.f32.mrb[0].mxu0
        %v2003 = vadd.f32 0.0, %v2002
        %v2004 = vpop.f32.mrb[0].mxu0
        %2005 = vmatprep.mubr.bf16.mxu0 0
        %2006 = vmatmul.mubr.bf16.gmra.mrb[0].mxu0 %v1851
        %v2007 = vpop.f32.mrb[0].mxu0
        %v2008 = vadd.f32 0.0, %v2007
        %v2009 = vpop.f32.mrb[0].mxu0
        %v2010 = vpop.f32.mrb[0].mxu0
        %v2011 = vadd.f32 0.0, %v2010
        %v2012 = vpop.f32.mrb[0].mxu0
        %2013 = vdwg.mxu0
        %v2014 = vadd.f32 %v1716, %v1888
        %v2015 = vadd.f32 %v1717, %v1891
        %v2016 = vadd.f32 %v1718, %v1896
        %v2017 = vadd.f32 %v1719, %v1899
        %v2018 = vadd.f32 %v1720, %v1904
        %v2019 = vadd.f32 %v1721, %v1907
        %v2020 = vadd.f32 %v1722, %v1912
        %v2021 = vadd.f32 %v1723, %v1915
        %v2022 = vadd.f32 %v1724, %v1920
        %v2023 = vadd.f32 %v1725, %v1923
        %v2024 = vadd.f32 %v1726, %v1928
        %v2025 = vadd.f32 %v1727, %v1931
        %v2026 = vadd.f32 %v1728, %v1936
        %v2027 = vadd.f32 %v1729, %v1939
        %v2028 = vadd.f32 %v1730, %v1944
        %v2029 = vadd.f32 %v1731, %v1947
        %v2030 = vadd.f32 %v1732, %v1952
        %v2031 = vadd.f32 %v1733, %v1955
        %v2032 = vadd.f32 %v1734, %v1960
        %v2033 = vadd.f32 %v1735, %v1963
        %v2034 = vadd.f32 %v1736, %v1968
        %v2035 = vadd.f32 %v1737, %v1971
        %v2036 = vadd.f32 %v1738, %v1976
        %v2037 = vadd.f32 %v1739, %v1979
        %v2038 = vadd.f32 %v1740, %v1984
        %v2039 = vadd.f32 %v1741, %v1987
        %v2040 = vadd.f32 %v1742, %v1992
        %v2041 = vadd.f32 %v1743, %v1995
        %v2042 = vadd.f32 %v1744, %v2000
        %v2043 = vadd.f32 %v1745, %v2003
        %v2044 = vadd.f32 %v1746, %v2008
        %v2045 = vadd.f32 %v1747, %v2011
        %v2046 = vld [vmem:[%s588 + $0x2] sm:$0xff]
        %v2047 = vld [vmem:[%s588 + $0xa] sm:$0xff]
        %v2048 = vld [vmem:[%s588 + $0x1a] sm:$0xff]
        %v2049 = vld [vmem:[%s588 + $0x22] sm:$0xff]
        %v2050 = vld [vmem:[%s588 + $0x32] sm:$0xff]
        %v2051 = vld [vmem:[%s588 + $0x3a] sm:$0xff]
        %v2052 = vld [vmem:[%s588 + $0x4a] sm:$0xff]
        %v2053 = vld [vmem:[%s588 + $0x52] sm:$0xff]
        %v2054 = vld [vmem:[%s588 + $0x62] sm:$0xff]
        %v2055 = vld [vmem:[%s588 + $0x6a] sm:$0xff]
        %v2056 = vld [vmem:[%s588 + $0x7a] sm:$0xff]
        %v2057 = vld [vmem:[%s588 + $0x82] sm:$0xff]
        %v2058 = vld [vmem:[%s588 + $0x92] sm:$0xff]
        %v2059 = vld [vmem:[%s588 + $0x9a] sm:$0xff]
        %v2060 = vld [vmem:[%s588 + $0xaa] sm:$0xff]
        %v2061 = vld [vmem:[%s588 + $0xb2] sm:$0xff]
        %v2062 = vld [vmem:[%s588 + $0xc2] sm:$0xff]
        %v2063 = vld [vmem:[%s588 + $0xca] sm:$0xff]
        %v2064 = vld [vmem:[%s588 + $0xda] sm:$0xff]
        %v2065 = vld [vmem:[%s588 + $0xe2] sm:$0xff]
        %v2066 = vld [vmem:[%s588 + $0xf2] sm:$0xff]
        %v2067 = vld [vmem:[%s588 + $0xfa] sm:$0xff]
        %v2068 = vld [vmem:[%s588 + $0x10a] sm:$0xff]
        %v2069 = vld [vmem:[%s588 + $0x112] sm:$0xff]
        %v2070 = vld [vmem:[%s588 + $0x122] sm:$0xff]
        %v2071 = vld [vmem:[%s588 + $0x12a] sm:$0xff]
        %v2072 = vld [vmem:[%s588 + $0x13a] sm:$0xff]
        %v2073 = vld [vmem:[%s588 + $0x142] sm:$0xff]
        %v2074 = vld [vmem:[%s588 + $0x152] sm:$0xff]
        %v2075 = vld [vmem:[%s588 + $0x15a] sm:$0xff]
        %v2076 = vld [vmem:[%s588 + $0x16a] sm:$0xff]
        %v2077 = vld [vmem:[%s588 + $0x172] sm:$0xff]
        %v2078 = vpack.c.bf16 %v2047, %v2046
        %v2079 = vpack.c.bf16 %v2049, %v2048
        %v2080 = vpack.c.bf16 %v2051, %v2050
        %v2081 = vpack.c.bf16 %v2053, %v2052
        %v2082 = vpack.c.bf16 %v2055, %v2054
        %v2083 = vpack.c.bf16 %v2057, %v2056
        %v2084 = vpack.c.bf16 %v2059, %v2058
        %v2085 = vpack.c.bf16 %v2061, %v2060
        %v2086 = vpack.c.bf16 %v2063, %v2062
        %v2087 = vpack.c.bf16 %v2065, %v2064
        %v2088 = vpack.c.bf16 %v2067, %v2066
        %v2089 = vpack.c.bf16 %v2069, %v2068
        %v2090 = vpack.c.bf16 %v2071, %v2070
        %v2091 = vpack.c.bf16 %v2073, %v2072
        %v2092 = vpack.c.bf16 %v2075, %v2074
        %v2093 = vpack.c.bf16 %v2077, %v2076
        %s2094 = scalar_lea.vmem %s1, 40
        %v2095 = vld [vmem:[%s2094] sm:$0xf]
        %v2096 = vld [vmem:[%s2094 + $0x4] sm:$0xf]
        %v2099 = vunpack.c.l.b16 %v2095
        %v2100 = vunpack.c.l.b16 %v2096
        %v2101 = vpack.c.b16 %v2100, %v2099
        %v2104 = vsel %vm454, %v2078, 0
        %v2107 = vsel %vm454, %v2079, 0
        %v2110 = vsel %vm454, %v2080, 0
        %v2113 = vsel %vm454, %v2081, 0
        %v2116 = vsel %vm454, %v2082, 0
        %v2119 = vsel %vm454, %v2083, 0
        %v2122 = vsel %vm454, %v2084, 0
        %v2125 = vsel %vm454, %v2085, 0
        %v2128 = vsel %vm454, %v2086, 0
        %v2131 = vsel %vm454, %v2087, 0
        %v2134 = vsel %vm454, %v2088, 0
        %v2137 = vsel %vm454, %v2089, 0
        %v2140 = vsel %vm454, %v2090, 0
        %v2143 = vsel %vm454, %v2091, 0
        %v2146 = vsel %vm454, %v2092, 0
        %v2149 = vsel %vm454, %v2093, 0
        %2151 = vmatprep.subr.bf16.mxu0 0
        %2152 = vmatpush1.bf16.msra.mxu0 %v2101
        %2153 = vmatprep.subr.bf16.mxu0 0
        %2154 = vmatpush1.bf16.msra.mxu0 0
        %2155 = vmatprep.subr.bf16.mxu0 0
        %2156 = vmatpush1.bf16.msra.mxu0 0
        %2157 = vmatprep.subr.bf16.mxu0 0
        %2158 = vmatpush1.bf16.msra.mxu0 0
        %2159 = vmatprep.subr.bf16.mxu0 0
        %2160 = vmatpush1.bf16.msra.mxu0 0
        %2161 = vmatprep.subr.bf16.mxu0 0
        %2162 = vmatpush1.bf16.msra.mxu0 0
        %2163 = vmatprep.subr.bf16.mxu0 0
        %2164 = vmatpush1.bf16.msra.mxu0 0
        %2165 = vmatprep.subr.bf16.mxu0 0
        %2166 = vmatpush1.bf16.msra.mxu0 0
        %2167 = vmatprep.subr.bf16.mxu0 0
        %2168 = vmatpush1.bf16.msra.mxu0 0
        %2169 = vmatprep.subr.bf16.mxu0 0
        %2170 = vmatpush1.bf16.msra.mxu0 0
        %2171 = vmatprep.subr.bf16.mxu0 0
        %2172 = vmatpush1.bf16.msra.mxu0 0
        %2173 = vmatprep.subr.bf16.mxu0 0
        %2174 = vmatpush1.bf16.msra.mxu0 0
        %2175 = vmatprep.subr.bf16.mxu0 0
        %2176 = vmatpush1.bf16.msra.mxu0 0
        %2177 = vmatprep.subr.bf16.mxu0 0
        %2178 = vmatpush1.bf16.msra.mxu0 0
        %2179 = vmatprep.subr.bf16.mxu0 0
        %2180 = vmatpush1.bf16.msra.mxu0 0
        %2181 = vmatprep.subr.bf16.mxu0 0
        %2182 = vmatpush1.bf16.msra.mxu0 0
        %2183 = vmatprep.mubr.bf16.mxu0 0
        %2184 = vmatmul.mubr.bf16.gmra.mrb[0].mxu0 %v2104
        %v2185 = vpop.f32.mrb[0].mxu0
        %v2186 = vadd.f32 0.0, %v2185
        %v2187 = vpop.f32.mrb[0].mxu0
        %v2188 = vpop.f32.mrb[0].mxu0
        %v2189 = vadd.f32 0.0, %v2188
        %v2190 = vpop.f32.mrb[0].mxu0
        %2191 = vmatprep.mubr.bf16.mxu0 0
        %2192 = vmatmul.mubr.bf16.gmra.mrb[0].mxu0 %v2107
        %v2193 = vpop.f32.mrb[0].mxu0
        %v2194 = vadd.f32 0.0, %v2193
        %v2195 = vpop.f32.mrb[0].mxu0
        %v2196 = vpop.f32.mrb[0].mxu0
        %v2197 = vadd.f32 0.0, %v2196
        %v2198 = vpop.f32.mrb[0].mxu0
        %2199 = vmatprep.mubr.bf16.mxu0 0
        %2200 = vmatmul.mubr.bf16.gmra.mrb[0].mxu0 %v2110
        %v2201 = vpop.f32.mrb[0].mxu0
        %v2202 = vadd.f32 0.0, %v2201
        %v2203 = vpop.f32.mrb[0].mxu0
        %v2204 = vpop.f32.mrb[0].mxu0
        %v2205 = vadd.f32 0.0, %v2204
        %v2206 = vpop.f32.mrb[0].mxu0
        %2207 = vmatprep.mubr.bf16.mxu0 0
        %2208 = vmatmul.mubr.bf16.gmra.mrb[0].mxu0 %v2113
        %v2209 = vpop.f32.mrb[0].mxu0
        %v2210 = vadd.f32 0.0, %v2209
        %v2211 = vpop.f32.mrb[0].mxu0
        %v2212 = vpop.f32.mrb[0].mxu0
        %v2213 = vadd.f32 0.0, %v2212
        %v2214 = vpop.f32.mrb[0].mxu0
        %2215 = vmatprep.mubr.bf16.mxu0 0
        %2216 = vmatmul.mubr.bf16.gmra.mrb[0].mxu0 %v2116
        %v2217 = vpop.f32.mrb[0].mxu0
        %v2218 = vadd.f32 0.0, %v2217
        %v2219 = vpop.f32.mrb[0].mxu0
        %v2220 = vpop.f32.mrb[0].mxu0
        %v2221 = vadd.f32 0.0, %v2220
        %v2222 = vpop.f32.mrb[0].mxu0
        %2223 = vmatprep.mubr.bf16.mxu0 0
        %2224 = vmatmul.mubr.bf16.gmra.mrb[0].mxu0 %v2119
        %v2225 = vpop.f32.mrb[0].mxu0
        %v2226 = vadd.f32 0.0, %v2225
        %v2227 = vpop.f32.mrb[0].mxu0
        %v2228 = vpop.f32.mrb[0].mxu0
        %v2229 = vadd.f32 0.0, %v2228
        %v2230 = vpop.f32.mrb[0].mxu0
        %2231 = vmatprep.mubr.bf16.mxu0 0
        %2232 = vmatmul.mubr.bf16.gmra.mrb[0].mxu0 %v2122
        %v2233 = vpop.f32.mrb[0].mxu0
        %v2234 = vadd.f32 0.0, %v2233
        %v2235 = vpop.f32.mrb[0].mxu0
        %v2236 = vpop.f32.mrb[0].mxu0
        %v2237 = vadd.f32 0.0, %v2236
        %v2238 = vpop.f32.mrb[0].mxu0
        %2239 = vmatprep.mubr.bf16.mxu0 0
        %2240 = vmatmul.mubr.bf16.gmra.mrb[0].mxu0 %v2125
        %v2241 = vpop.f32.mrb[0].mxu0
        %v2242 = vadd.f32 0.0, %v2241
        %v2243 = vpop.f32.mrb[0].mxu0
        %v2244 = vpop.f32.mrb[0].mxu0
        %v2245 = vadd.f32 0.0, %v2244
        %v2246 = vpop.f32.mrb[0].mxu0
        %2247 = vmatprep.mubr.bf16.mxu0 0
        %2248 = vmatmul.mubr.bf16.gmra.mrb[0].mxu0 %v2128
        %v2249 = vpop.f32.mrb[0].mxu0
        %v2250 = vadd.f32 0.0, %v2249
        %v2251 = vpop.f32.mrb[0].mxu0
        %v2252 = vpop.f32.mrb[0].mxu0
        %v2253 = vadd.f32 0.0, %v2252
        %v2254 = vpop.f32.mrb[0].mxu0
        %2255 = vmatprep.mubr.bf16.mxu0 0
        %2256 = vmatmul.mubr.bf16.gmra.mrb[0].mxu0 %v2131
        %v2257 = vpop.f32.mrb[0].mxu0
        %v2258 = vadd.f32 0.0, %v2257
        %v2259 = vpop.f32.mrb[0].mxu0
        %v2260 = vpop.f32.mrb[0].mxu0
        %v2261 = vadd.f32 0.0, %v2260
        %v2262 = vpop.f32.mrb[0].mxu0
        %2263 = vmatprep.mubr.bf16.mxu0 0
        %2264 = vmatmul.mubr.bf16.gmra.mrb[0].mxu0 %v2134
        %v2265 = vpop.f32.mrb[0].mxu0
        %v2266 = vadd.f32 0.0, %v2265
        %v2267 = vpop.f32.mrb[0].mxu0
        %v2268 = vpop.f32.mrb[0].mxu0
        %v2269 = vadd.f32 0.0, %v2268
        %v2270 = vpop.f32.mrb[0].mxu0
        %2271 = vmatprep.mubr.bf16.mxu0 0
        %2272 = vmatmul.mubr.bf16.gmra.mrb[0].mxu0 %v2137
        %v2273 = vpop.f32.mrb[0].mxu0
        %v2274 = vadd.f32 0.0, %v2273
        %v2275 = vpop.f32.mrb[0].mxu0
        %v2276 = vpop.f32.mrb[0].mxu0
        %v2277 = vadd.f32 0.0, %v2276
        %v2278 = vpop.f32.mrb[0].mxu0
        %2279 = vmatprep.mubr.bf16.mxu0 0
        %2280 = vmatmul.mubr.bf16.gmra.mrb[0].mxu0 %v2140
        %v2281 = vpop.f32.mrb[0].mxu0
        %v2282 = vadd.f32 0.0, %v2281
        %v2283 = vpop.f32.mrb[0].mxu0
        %v2284 = vpop.f32.mrb[0].mxu0
        %v2285 = vadd.f32 0.0, %v2284
        %v2286 = vpop.f32.mrb[0].mxu0
        %2287 = vmatprep.mubr.bf16.mxu0 0
        %2288 = vmatmul.mubr.bf16.gmra.mrb[0].mxu0 %v2143
        %v2289 = vpop.f32.mrb[0].mxu0
        %v2290 = vadd.f32 0.0, %v2289
        %v2291 = vpop.f32.mrb[0].mxu0
        %v2292 = vpop.f32.mrb[0].mxu0
        %v2293 = vadd.f32 0.0, %v2292
        %v2294 = vpop.f32.mrb[0].mxu0
        %2295 = vmatprep.mubr.bf16.mxu0 0
        %2296 = vmatmul.mubr.bf16.gmra.mrb[0].mxu0 %v2146
        %v2297 = vpop.f32.mrb[0].mxu0
        %v2298 = vadd.f32 0.0, %v2297
        %v2299 = vpop.f32.mrb[0].mxu0
        %v2300 = vpop.f32.mrb[0].mxu0
        %v2301 = vadd.f32 0.0, %v2300
        %v2302 = vpop.f32.mrb[0].mxu0
        %2303 = vmatprep.mubr.bf16.mxu0 0
        %2304 = vmatmul.mubr.bf16.gmra.mrb[0].mxu0 %v2149
        %v2305 = vpop.f32.mrb[0].mxu0
        %v2306 = vadd.f32 0.0, %v2305
        %v2307 = vpop.f32.mrb[0].mxu0
        %v2308 = vpop.f32.mrb[0].mxu0
        %v2309 = vadd.f32 0.0, %v2308
        %v2310 = vpop.f32.mrb[0].mxu0
        %2311 = vdwg.mxu0
        %v2312 = vadd.f32 %v2014, %v2186
        %v2313 = vadd.f32 %v2015, %v2189
        %v2314 = vadd.f32 %v2016, %v2194
        %v2315 = vadd.f32 %v2017, %v2197
        %v2316 = vadd.f32 %v2018, %v2202
        %v2317 = vadd.f32 %v2019, %v2205
        %v2318 = vadd.f32 %v2020, %v2210
        %v2319 = vadd.f32 %v2021, %v2213
        %v2320 = vadd.f32 %v2022, %v2218
        %v2321 = vadd.f32 %v2023, %v2221
        %v2322 = vadd.f32 %v2024, %v2226
        %v2323 = vadd.f32 %v2025, %v2229
        %v2324 = vadd.f32 %v2026, %v2234
        %v2325 = vadd.f32 %v2027, %v2237
        %v2326 = vadd.f32 %v2028, %v2242
        %v2327 = vadd.f32 %v2029, %v2245
        %v2328 = vadd.f32 %v2030, %v2250
        %v2329 = vadd.f32 %v2031, %v2253
        %v2330 = vadd.f32 %v2032, %v2258
        %v2331 = vadd.f32 %v2033, %v2261
        %v2332 = vadd.f32 %v2034, %v2266
        %v2333 = vadd.f32 %v2035, %v2269
        %v2334 = vadd.f32 %v2036, %v2274
        %v2335 = vadd.f32 %v2037, %v2277
        %v2336 = vadd.f32 %v2038, %v2282
        %v2337 = vadd.f32 %v2039, %v2285
        %v2338 = vadd.f32 %v2040, %v2290
        %v2339 = vadd.f32 %v2041, %v2293
        %v2340 = vadd.f32 %v2042, %v2298
        %v2341 = vadd.f32 %v2043, %v2301
        %v2342 = vadd.f32 %v2044, %v2306
        %v2343 = vadd.f32 %v2045, %v2309
        %s2344 = scalar_lea.vmem [#allocation2], 48
        %v2345 = vld [vmem:[%s2344] sm:$0xff]
        %v2346 = vld [vmem:[%s2344 + $0x8] sm:$0xff]
        %v2347 = vld [vmem:[%s2344 + $0x18] sm:$0xff]
        %v2348 = vld [vmem:[%s2344 + $0x20] sm:$0xff]
        %v2349 = vld [vmem:[%s2344 + $0x30] sm:$0xff]
        %v2350 = vld [vmem:[%s2344 + $0x38] sm:$0xff]
        %v2351 = vld [vmem:[%s2344 + $0x48] sm:$0xff]
        %v2352 = vld [vmem:[%s2344 + $0x50] sm:$0xff]
        %v2353 = vld [vmem:[%s2344 + $0x60] sm:$0xff]
        %v2354 = vld [vmem:[%s2344 + $0x68] sm:$0xff]
        %v2355 = vld [vmem:[%s2344 + $0x78] sm:$0xff]
        %v2356 = vld [vmem:[%s2344 + $0x80] sm:$0xff]
        %v2357 = vld [vmem:[%s2344 + $0x90] sm:$0xff]
        %v2358 = vld [vmem:[%s2344 + $0x98] sm:$0xff]
        %v2359 = vld [vmem:[%s2344 + $0xa8] sm:$0xff]
        %v2360 = vld [vmem:[%s2344 + $0xb0] sm:$0xff]
        %v2361 = vld [vmem:[%s2344 + $0xc0] sm:$0xff]
        %v2362 = vld [vmem:[%s2344 + $0xc8] sm:$0xff]
        %v2363 = vld [vmem:[%s2344 + $0xd8] sm:$0xff]
        %v2364 = vld [vmem:[%s2344 + $0xe0] sm:$0xff]
        %v2365 = vld [vmem:[%s2344 + $0xf0] sm:$0xff]
        %v2366 = vld [vmem:[%s2344 + $0xf8] sm:$0xff]
        %v2367 = vld [vmem:[%s2344 + $0x108] sm:$0xff]
        %v2368 = vld [vmem:[%s2344 + $0x110] sm:$0xff]
        %v2369 = vld [vmem:[%s2344 + $0x120] sm:$0xff]
        %v2370 = vld [vmem:[%s2344 + $0x128] sm:$0xff]
        %v2371 = vld [vmem:[%s2344 + $0x138] sm:$0xff]
        %v2372 = vld [vmem:[%s2344 + $0x140] sm:$0xff]
        %v2373 = vld [vmem:[%s2344 + $0x150] sm:$0xff]
        %v2374 = vld [vmem:[%s2344 + $0x158] sm:$0xff]
        %v2375 = vld [vmem:[%s2344 + $0x168] sm:$0xff]
        %v2376 = vld [vmem:[%s2344 + $0x170] sm:$0xff]
        %v2377 = vpack.c.bf16 %v2346, %v2345
        %v2378 = vpack.c.bf16 %v2348, %v2347
        %v2379 = vpack.c.bf16 %v2350, %v2349
        %v2380 = vpack.c.bf16 %v2352, %v2351
        %v2381 = vpack.c.bf16 %v2354, %v2353
        %v2382 = vpack.c.bf16 %v2356, %v2355
        %v2383 = vpack.c.bf16 %v2358, %v2357
        %v2384 = vpack.c.bf16 %v2360, %v2359
        %v2385 = vpack.c.bf16 %v2362, %v2361
        %v2386 = vpack.c.bf16 %v2364, %v2363
        %v2387 = vpack.c.bf16 %v2366, %v2365
        %v2388 = vpack.c.bf16 %v2368, %v2367
        %v2389 = vpack.c.bf16 %v2370, %v2369
        %v2390 = vpack.c.bf16 %v2372, %v2371
        %v2391 = vpack.c.bf16 %v2374, %v2373
        %v2392 = vpack.c.bf16 %v2376, %v2375
        %s2393 = scalar_lea.vmem %s1, 48
        %v2394 = vld [vmem:[%s2393] sm:$0xf]
        %v2395 = vld [vmem:[%s2393 + $0x4] sm:$0xf]
        %v2398 = vunpack.c.l.b16 %v2394
        %v2399 = vunpack.c.l.b16 %v2395
        %v2400 = vpack.c.b16 %v2399, %v2398
        %v2403 = vsel %vm454, %v2377, 0
        %v2406 = vsel %vm454, %v2378, 0
        %v2409 = vsel %vm454, %v2379, 0
        %v2412 = vsel %vm454, %v2380, 0
        %v2415 = vsel %vm454, %v2381, 0
        %v2418 = vsel %vm454, %v2382, 0
        %v2421 = vsel %vm454, %v2383, 0
        %v2424 = vsel %vm454, %v2384, 0
        %v2427 = vsel %vm454, %v2385, 0
        %v2430 = vsel %vm454, %v2386, 0
        %v2433 = vsel %vm454, %v2387, 0
        %v2436 = vsel %vm454, %v2388, 0
        %v2439 = vsel %vm454, %v2389, 0
        %v2442 = vsel %vm454, %v2390, 0
        %v2445 = vsel %vm454, %v2391, 0
        %v2448 = vsel %vm454, %v2392, 0
        %2450 = vmatprep.subr.bf16.mxu0 0
        %2451 = vmatpush1.bf16.msra.mxu0 %v2400
        %2452 = vmatprep.subr.bf16.mxu0 0
        %2453 = vmatpush1.bf16.msra.mxu0 0
        %2454 = vmatprep.subr.bf16.mxu0 0
        %2455 = vmatpush1.bf16.msra.mxu0 0
        %2456 = vmatprep.subr.bf16.mxu0 0
        %2457 = vmatpush1.bf16.msra.mxu0 0
        %2458 = vmatprep.subr.bf16.mxu0 0
        %2459 = vmatpush1.bf16.msra.mxu0 0
        %2460 = vmatprep.subr.bf16.mxu0 0
        %2461 = vmatpush1.bf16.msra.mxu0 0
        %2462 = vmatprep.subr.bf16.mxu0 0
        %2463 = vmatpush1.bf16.msra.mxu0 0
        %2464 = vmatprep.subr.bf16.mxu0 0
        %2465 = vmatpush1.bf16.msra.mxu0 0
        %2466 = vmatprep.subr.bf16.mxu0 0
        %2467 = vmatpush1.bf16.msra.mxu0 0
        %2468 = vmatprep.subr.bf16.mxu0 0
        %2469 = vmatpush1.bf16.msra.mxu0 0
        %2470 = vmatprep.subr.bf16.mxu0 0
        %2471 = vmatpush1.bf16.msra.mxu0 0
        %2472 = vmatprep.subr.bf16.mxu0 0
        %2473 = vmatpush1.bf16.msra.mxu0 0
        %2474 = vmatprep.subr.bf16.mxu0 0
        %2475 = vmatpush1.bf16.msra.mxu0 0
        %2476 = vmatprep.subr.bf16.mxu0 0
        %2477 = vmatpush1.bf16.msra.mxu0 0
        %2478 = vmatprep.subr.bf16.mxu0 0
        %2479 = vmatpush1.bf16.msra.mxu0 0
        %2480 = vmatprep.subr.bf16.mxu0 0
        %2481 = vmatpush1.bf16.msra.mxu0 0
        %2482 = vmatprep.mubr.bf16.mxu0 0
        %2483 = vmatmul.mubr.bf16.gmra.mrb[0].mxu0 %v2403
        %v2484 = vpop.f32.mrb[0].mxu0
        %v2485 = vadd.f32 0.0, %v2484
        %v2486 = vpop.f32.mrb[0].mxu0
        %v2487 = vpop.f32.mrb[0].mxu0
        %v2488 = vadd.f32 0.0, %v2487
        %v2489 = vpop.f32.mrb[0].mxu0
        %2490 = vmatprep.mubr.bf16.mxu0 0
        %2491 = vmatmul.mubr.bf16.gmra.mrb[0].mxu0 %v2406
        %v2492 = vpop.f32.mrb[0].mxu0
        %v2493 = vadd.f32 0.0, %v2492
        %v2494 = vpop.f32.mrb[0].mxu0
        %v2495 = vpop.f32.mrb[0].mxu0
        %v2496 = vadd.f32 0.0, %v2495
        %v2497 = vpop.f32.mrb[0].mxu0
        %2498 = vmatprep.mubr.bf16.mxu0 0
        %2499 = vmatmul.mubr.bf16.gmra.mrb[0].mxu0 %v2409
        %v2500 = vpop.f32.mrb[0].mxu0
        %v2501 = vadd.f32 0.0, %v2500
        %v2502 = vpop.f32.mrb[0].mxu0
        %v2503 = vpop.f32.mrb[0].mxu0
        %v2504 = vadd.f32 0.0, %v2503
        %v2505 = vpop.f32.mrb[0].mxu0
        %2506 = vmatprep.mubr.bf16.mxu0 0
        %2507 = vmatmul.mubr.bf16.gmra.mrb[0].mxu0 %v2412
        %v2508 = vpop.f32.mrb[0].mxu0
        %v2509 = vadd.f32 0.0, %v2508
        %v2510 = vpop.f32.mrb[0].mxu0
        %v2511 = vpop.f32.mrb[0].mxu0
        %v2512 = vadd.f32 0.0, %v2511
        %v2513 = vpop.f32.mrb[0].mxu0
        %2514 = vmatprep.mubr.bf16.mxu0 0
        %2515 = vmatmul.mubr.bf16.gmra.mrb[0].mxu0 %v2415
        %v2516 = vpop.f32.mrb[0].mxu0
        %v2517 = vadd.f32 0.0, %v2516
        %v2518 = vpop.f32.mrb[0].mxu0
        %v2519 = vpop.f32.mrb[0].mxu0
        %v2520 = vadd.f32 0.0, %v2519
        %v2521 = vpop.f32.mrb[0].mxu0
        %2522 = vmatprep.mubr.bf16.mxu0 0
        %2523 = vmatmul.mubr.bf16.gmra.mrb[0].mxu0 %v2418
        %v2524 = vpop.f32.mrb[0].mxu0
        %v2525 = vadd.f32 0.0, %v2524
        %v2526 = vpop.f32.mrb[0].mxu0
        %v2527 = vpop.f32.mrb[0].mxu0
        %v2528 = vadd.f32 0.0, %v2527
        %v2529 = vpop.f32.mrb[0].mxu0
        %2530 = vmatprep.mubr.bf16.mxu0 0
        %2531 = vmatmul.mubr.bf16.gmra.mrb[0].mxu0 %v2421
        %v2532 = vpop.f32.mrb[0].mxu0
        %v2533 = vadd.f32 0.0, %v2532
        %v2534 = vpop.f32.mrb[0].mxu0
        %v2535 = vpop.f32.mrb[0].mxu0
        %v2536 = vadd.f32 0.0, %v2535
        %v2537 = vpop.f32.mrb[0].mxu0
        %2538 = vmatprep.mubr.bf16.mxu0 0
        %2539 = vmatmul.mubr.bf16.gmra.mrb[0].mxu0 %v2424
        %v2540 = vpop.f32.mrb[0].mxu0
        %v2541 = vadd.f32 0.0, %v2540
        %v2542 = vpop.f32.mrb[0].mxu0
        %v2543 = vpop.f32.mrb[0].mxu0
        %v2544 = vadd.f32 0.0, %v2543
        %v2545 = vpop.f32.mrb[0].mxu0
        %2546 = vmatprep.mubr.bf16.mxu0 0
        %2547 = vmatmul.mubr.bf16.gmra.mrb[0].mxu0 %v2427
        %v2548 = vpop.f32.mrb[0].mxu0
        %v2549 = vadd.f32 0.0, %v2548
        %v2550 = vpop.f32.mrb[0].mxu0
        %v2551 = vpop.f32.mrb[0].mxu0
        %v2552 = vadd.f32 0.0, %v2551
        %v2553 = vpop.f32.mrb[0].mxu0
        %2554 = vmatprep.mubr.bf16.mxu0 0
        %2555 = vmatmul.mubr.bf16.gmra.mrb[0].mxu0 %v2430
        %v2556 = vpop.f32.mrb[0].mxu0
        %v2557 = vadd.f32 0.0, %v2556
        %v2558 = vpop.f32.mrb[0].mxu0
        %v2559 = vpop.f32.mrb[0].mxu0
        %v2560 = vadd.f32 0.0, %v2559
        %v2561 = vpop.f32.mrb[0].mxu0
        %2562 = vmatprep.mubr.bf16.mxu0 0
        %2563 = vmatmul.mubr.bf16.gmra.mrb[0].mxu0 %v2433
        %v2564 = vpop.f32.mrb[0].mxu0
        %v2565 = vadd.f32 0.0, %v2564
        %v2566 = vpop.f32.mrb[0].mxu0
        %v2567 = vpop.f32.mrb[0].mxu0
        %v2568 = vadd.f32 0.0, %v2567
        %v2569 = vpop.f32.mrb[0].mxu0
        %2570 = vmatprep.mubr.bf16.mxu0 0
        %2571 = vmatmul.mubr.bf16.gmra.mrb[0].mxu0 %v2436
        %v2572 = vpop.f32.mrb[0].mxu0
        %v2573 = vadd.f32 0.0, %v2572
        %v2574 = vpop.f32.mrb[0].mxu0
        %v2575 = vpop.f32.mrb[0].mxu0
        %v2576 = vadd.f32 0.0, %v2575
        %v2577 = vpop.f32.mrb[0].mxu0
        %2578 = vmatprep.mubr.bf16.mxu0 0
        %2579 = vmatmul.mubr.bf16.gmra.mrb[0].mxu0 %v2439
        %v2580 = vpop.f32.mrb[0].mxu0
        %v2581 = vadd.f32 0.0, %v2580
        %v2582 = vpop.f32.mrb[0].mxu0
        %v2583 = vpop.f32.mrb[0].mxu0
        %v2584 = vadd.f32 0.0, %v2583
        %v2585 = vpop.f32.mrb[0].mxu0
        %2586 = vmatprep.mubr.bf16.mxu0 0
        %2587 = vmatmul.mubr.bf16.gmra.mrb[0].mxu0 %v2442
        %v2588 = vpop.f32.mrb[0].mxu0
        %v2589 = vadd.f32 0.0, %v2588
        %v2590 = vpop.f32.mrb[0].mxu0
        %v2591 = vpop.f32.mrb[0].mxu0
        %v2592 = vadd.f32 0.0, %v2591
        %v2593 = vpop.f32.mrb[0].mxu0
        %2594 = vmatprep.mubr.bf16.mxu0 0
        %2595 = vmatmul.mubr.bf16.gmra.mrb[0].mxu0 %v2445
        %v2596 = vpop.f32.mrb[0].mxu0
        %v2597 = vadd.f32 0.0, %v2596
        %v2598 = vpop.f32.mrb[0].mxu0
        %v2599 = vpop.f32.mrb[0].mxu0
        %v2600 = vadd.f32 0.0, %v2599
        %v2601 = vpop.f32.mrb[0].mxu0
        %2602 = vmatprep.mubr.bf16.mxu0 0
        %2603 = vmatmul.mubr.bf16.gmra.mrb[0].mxu0 %v2448
        %v2604 = vpop.f32.mrb[0].mxu0
        %v2605 = vadd.f32 0.0, %v2604
        %v2606 = vpop.f32.mrb[0].mxu0
        %v2607 = vpop.f32.mrb[0].mxu0
        %v2608 = vadd.f32 0.0, %v2607
        %v2609 = vpop.f32.mrb[0].mxu0
        %2610 = vdwg.mxu0
        %v2611 = vadd.f32 %v2312, %v2485
        %v2612 = vadd.f32 %v2313, %v2488
        %v2613 = vadd.f32 %v2314, %v2493
        %v2614 = vadd.f32 %v2315, %v2496
        %v2615 = vadd.f32 %v2316, %v2501
        %v2616 = vadd.f32 %v2317, %v2504
        %v2617 = vadd.f32 %v2318, %v2509
        %v2618 = vadd.f32 %v2319, %v2512
        %v2619 = vadd.f32 %v2320, %v2517
        %v2620 = vadd.f32 %v2321, %v2520
        %v2621 = vadd.f32 %v2322, %v2525
        %v2622 = vadd.f32 %v2323, %v2528
        %v2623 = vadd.f32 %v2324, %v2533
        %v2624 = vadd.f32 %v2325, %v2536
        %v2625 = vadd.f32 %v2326, %v2541
        %v2626 = vadd.f32 %v2327, %v2544
        %v2627 = vadd.f32 %v2328, %v2549
        %v2628 = vadd.f32 %v2329, %v2552
        %v2629 = vadd.f32 %v2330, %v2557
        %v2630 = vadd.f32 %v2331, %v2560
        %v2631 = vadd.f32 %v2332, %v2565
        %v2632 = vadd.f32 %v2333, %v2568
        %v2633 = vadd.f32 %v2334, %v2573
        %v2634 = vadd.f32 %v2335, %v2576
        %v2635 = vadd.f32 %v2336, %v2581
        %v2636 = vadd.f32 %v2337, %v2584
        %v2637 = vadd.f32 %v2338, %v2589
        %v2638 = vadd.f32 %v2339, %v2592
        %v2639 = vadd.f32 %v2340, %v2597
        %v2640 = vadd.f32 %v2341, %v2600
        %v2641 = vadd.f32 %v2342, %v2605
        %v2642 = vadd.f32 %v2343, %v2608
        %v2643 = vld [vmem:[%s2344 + $0x1] sm:$0xff]
        %v2644 = vld [vmem:[%s2344 + $0x9] sm:$0xff]
        %v2645 = vld [vmem:[%s2344 + $0x19] sm:$0xff]
        %v2646 = vld [vmem:[%s2344 + $0x21] sm:$0xff]
        %v2647 = vld [vmem:[%s2344 + $0x31] sm:$0xff]
        %v2648 = vld [vmem:[%s2344 + $0x39] sm:$0xff]
        %v2649 = vld [vmem:[%s2344 + $0x49] sm:$0xff]
        %v2650 = vld [vmem:[%s2344 + $0x51] sm:$0xff]
        %v2651 = vld [vmem:[%s2344 + $0x61] sm:$0xff]
        %v2652 = vld [vmem:[%s2344 + $0x69] sm:$0xff]
        %v2653 = vld [vmem:[%s2344 + $0x79] sm:$0xff]
        %v2654 = vld [vmem:[%s2344 + $0x81] sm:$0xff]
        %v2655 = vld [vmem:[%s2344 + $0x91] sm:$0xff]
        %v2656 = vld [vmem:[%s2344 + $0x99] sm:$0xff]
        %v2657 = vld [vmem:[%s2344 + $0xa9] sm:$0xff]
        %v2658 = vld [vmem:[%s2344 + $0xb1] sm:$0xff]
        %v2659 = vld [vmem:[%s2344 + $0xc1] sm:$0xff]
        %v2660 = vld [vmem:[%s2344 + $0xc9] sm:$0xff]
        %v2661 = vld [vmem:[%s2344 + $0xd9] sm:$0xff]
        %v2662 = vld [vmem:[%s2344 + $0xe1] sm:$0xff]
        %v2663 = vld [vmem:[%s2344 + $0xf1] sm:$0xff]
        %v2664 = vld [vmem:[%s2344 + $0xf9] sm:$0xff]
        %v2665 = vld [vmem:[%s2344 + $0x109] sm:$0xff]
        %v2666 = vld [vmem:[%s2344 + $0x111] sm:$0xff]
        %v2667 = vld [vmem:[%s2344 + $0x121] sm:$0xff]
        %v2668 = vld [vmem:[%s2344 + $0x129] sm:$0xff]
        %v2669 = vld [vmem:[%s2344 + $0x139] sm:$0xff]
        %v2670 = vld [vmem:[%s2344 + $0x141] sm:$0xff]
        %v2671 = vld [vmem:[%s2344 + $0x151] sm:$0xff]
        %v2672 = vld [vmem:[%s2344 + $0x159] sm:$0xff]
        %v2673 = vld [vmem:[%s2344 + $0x169] sm:$0xff]
        %v2674 = vld [vmem:[%s2344 + $0x171] sm:$0xff]
        %v2675 = vpack.c.bf16 %v2644, %v2643
        %v2676 = vpack.c.bf16 %v2646, %v2645
        %v2677 = vpack.c.bf16 %v2648, %v2647
        %v2678 = vpack.c.bf16 %v2650, %v2649
        %v2679 = vpack.c.bf16 %v2652, %v2651
        %v2680 = vpack.c.bf16 %v2654, %v2653
        %v2681 = vpack.c.bf16 %v2656, %v2655
        %v2682 = vpack.c.bf16 %v2658, %v2657
        %v2683 = vpack.c.bf16 %v2660, %v2659
        %v2684 = vpack.c.bf16 %v2662, %v2661
        %v2685 = vpack.c.bf16 %v2664, %v2663
        %v2686 = vpack.c.bf16 %v2666, %v2665
        %v2687 = vpack.c.bf16 %v2668, %v2667
        %v2688 = vpack.c.bf16 %v2670, %v2669
        %v2689 = vpack.c.bf16 %v2672, %v2671
        %v2690 = vpack.c.bf16 %v2674, %v2673
        %s2691 = scalar_lea.vmem %s1, 56
        %v2692 = vld [vmem:[%s2691] sm:$0xf]
        %v2693 = vld [vmem:[%s2691 + $0x4] sm:$0xf]
        %v2696 = vunpack.c.l.b16 %v2692
        %v2697 = vunpack.c.l.b16 %v2693
        %v2698 = vpack.c.b16 %v2697, %v2696
        %v2701 = vsel %vm454, %v2675, 0
        %v2704 = vsel %vm454, %v2676, 0
        %v2707 = vsel %vm454, %v2677, 0
        %v2710 = vsel %vm454, %v2678, 0
        %v2713 = vsel %vm454, %v2679, 0
        %v2716 = vsel %vm454, %v2680, 0
        %v2719 = vsel %vm454, %v2681, 0
        %v2722 = vsel %vm454, %v2682, 0
        %v2725 = vsel %vm454, %v2683, 0
        %v2728 = vsel %vm454, %v2684, 0
        %v2731 = vsel %vm454, %v2685, 0
        %v2734 = vsel %vm454, %v2686, 0
        %v2737 = vsel %vm454, %v2687, 0
        %v2740 = vsel %vm454, %v2688, 0
        %v2743 = vsel %vm454, %v2689, 0
        %v2746 = vsel %vm454, %v2690, 0
        %2748 = vmatprep.subr.bf16.mxu0 0
        %2749 = vmatpush1.bf16.msra.mxu0 %v2698
        %2750 = vmatprep.subr.bf16.mxu0 0
        %2751 = vmatpush1.bf16.msra.mxu0 0
        %2752 = vmatprep.subr.bf16.mxu0 0
        %2753 = vmatpush1.bf16.msra.mxu0 0
        %2754 = vmatprep.subr.bf16.mxu0 0
        %2755 = vmatpush1.bf16.msra.mxu0 0
        %2756 = vmatprep.subr.bf16.mxu0 0
        %2757 = vmatpush1.bf16.msra.mxu0 0
        %2758 = vmatprep.subr.bf16.mxu0 0
        %2759 = vmatpush1.bf16.msra.mxu0 0
        %2760 = vmatprep.subr.bf16.mxu0 0
        %2761 = vmatpush1.bf16.msra.mxu0 0
        %2762 = vmatprep.subr.bf16.mxu0 0
        %2763 = vmatpush1.bf16.msra.mxu0 0
        %2764 = vmatprep.subr.bf16.mxu0 0
        %2765 = vmatpush1.bf16.msra.mxu0 0
        %2766 = vmatprep.subr.bf16.mxu0 0
        %2767 = vmatpush1.bf16.msra.mxu0 0
        %2768 = vmatprep.subr.bf16.mxu0 0
        %2769 = vmatpush1.bf16.msra.mxu0 0
        %2770 = vmatprep.subr.bf16.mxu0 0
        %2771 = vmatpush1.bf16.msra.mxu0 0
        %2772 = vmatprep.subr.bf16.mxu0 0
        %2773 = vmatpush1.bf16.msra.mxu0 0
        %2774 = vmatprep.subr.bf16.mxu0 0
        %2775 = vmatpush1.bf16.msra.mxu0 0
        %2776 = vmatprep.subr.bf16.mxu0 0
        %2777 = vmatpush1.bf16.msra.mxu0 0
        %2778 = vmatprep.subr.bf16.mxu0 0
        %2779 = vmatpush1.bf16.msra.mxu0 0
        %2780 = vmatprep.mubr.bf16.mxu0 0
        %2781 = vmatmul.mubr.bf16.gmra.mrb[0].mxu0 %v2701
        %v2782 = vpop.f32.mrb[0].mxu0
        %v2783 = vadd.f32 0.0, %v2782
        %v2784 = vpop.f32.mrb[0].mxu0
        %v2785 = vpop.f32.mrb[0].mxu0
        %v2786 = vadd.f32 0.0, %v2785
        %v2787 = vpop.f32.mrb[0].mxu0
        %2788 = vmatprep.mubr.bf16.mxu0 0
        %2789 = vmatmul.mubr.bf16.gmra.mrb[0].mxu0 %v2704
        %v2790 = vpop.f32.mrb[0].mxu0
        %v2791 = vadd.f32 0.0, %v2790
        %v2792 = vpop.f32.mrb[0].mxu0
        %v2793 = vpop.f32.mrb[0].mxu0
        %v2794 = vadd.f32 0.0, %v2793
        %v2795 = vpop.f32.mrb[0].mxu0
        %2796 = vmatprep.mubr.bf16.mxu0 0
        %2797 = vmatmul.mubr.bf16.gmra.mrb[0].mxu0 %v2707
        %v2798 = vpop.f32.mrb[0].mxu0
        %v2799 = vadd.f32 0.0, %v2798
        %v2800 = vpop.f32.mrb[0].mxu0
        %v2801 = vpop.f32.mrb[0].mxu0
        %v2802 = vadd.f32 0.0, %v2801
        %v2803 = vpop.f32.mrb[0].mxu0
        %2804 = vmatprep.mubr.bf16.mxu0 0
        %2805 = vmatmul.mubr.bf16.gmra.mrb[0].mxu0 %v2710
        %v2806 = vpop.f32.mrb[0].mxu0
        %v2807 = vadd.f32 0.0, %v2806
        %v2808 = vpop.f32.mrb[0].mxu0
        %v2809 = vpop.f32.mrb[0].mxu0
        %v2810 = vadd.f32 0.0, %v2809
        %v2811 = vpop.f32.mrb[0].mxu0
        %2812 = vmatprep.mubr.bf16.mxu0 0
        %2813 = vmatmul.mubr.bf16.gmra.mrb[0].mxu0 %v2713
        %v2814 = vpop.f32.mrb[0].mxu0
        %v2815 = vadd.f32 0.0, %v2814
        %v2816 = vpop.f32.mrb[0].mxu0
        %v2817 = vpop.f32.mrb[0].mxu0
        %v2818 = vadd.f32 0.0, %v2817
        %v2819 = vpop.f32.mrb[0].mxu0
        %2820 = vmatprep.mubr.bf16.mxu0 0
        %2821 = vmatmul.mubr.bf16.gmra.mrb[0].mxu0 %v2716
        %v2822 = vpop.f32.mrb[0].mxu0
        %v2823 = vadd.f32 0.0, %v2822
        %v2824 = vpop.f32.mrb[0].mxu0
        %v2825 = vpop.f32.mrb[0].mxu0
        %v2826 = vadd.f32 0.0, %v2825
        %v2827 = vpop.f32.mrb[0].mxu0
        %2828 = vmatprep.mubr.bf16.mxu0 0
        %2829 = vmatmul.mubr.bf16.gmra.mrb[0].mxu0 %v2719
        %v2830 = vpop.f32.mrb[0].mxu0
        %v2831 = vadd.f32 0.0, %v2830
        %v2832 = vpop.f32.mrb[0].mxu0
        %v2833 = vpop.f32.mrb[0].mxu0
        %v2834 = vadd.f32 0.0, %v2833
        %v2835 = vpop.f32.mrb[0].mxu0
        %2836 = vmatprep.mubr.bf16.mxu0 0
        %2837 = vmatmul.mubr.bf16.gmra.mrb[0].mxu0 %v2722
        %v2838 = vpop.f32.mrb[0].mxu0
        %v2839 = vadd.f32 0.0, %v2838
        %v2840 = vpop.f32.mrb[0].mxu0
        %v2841 = vpop.f32.mrb[0].mxu0
        %v2842 = vadd.f32 0.0, %v2841
        %v2843 = vpop.f32.mrb[0].mxu0
        %2844 = vmatprep.mubr.bf16.mxu0 0
        %2845 = vmatmul.mubr.bf16.gmra.mrb[0].mxu0 %v2725
        %v2846 = vpop.f32.mrb[0].mxu0
        %v2847 = vadd.f32 0.0, %v2846
        %v2848 = vpop.f32.mrb[0].mxu0
        %v2849 = vpop.f32.mrb[0].mxu0
        %v2850 = vadd.f32 0.0, %v2849
        %v2851 = vpop.f32.mrb[0].mxu0
        %2852 = vmatprep.mubr.bf16.mxu0 0
        %2853 = vmatmul.mubr.bf16.gmra.mrb[0].mxu0 %v2728
        %v2854 = vpop.f32.mrb[0].mxu0
        %v2855 = vadd.f32 0.0, %v2854
        %v2856 = vpop.f32.mrb[0].mxu0
        %v2857 = vpop.f32.mrb[0].mxu0
        %v2858 = vadd.f32 0.0, %v2857
        %v2859 = vpop.f32.mrb[0].mxu0
        %2860 = vmatprep.mubr.bf16.mxu0 0
        %2861 = vmatmul.mubr.bf16.gmra.mrb[0].mxu0 %v2731
        %v2862 = vpop.f32.mrb[0].mxu0
        %v2863 = vadd.f32 0.0, %v2862
        %v2864 = vpop.f32.mrb[0].mxu0
        %v2865 = vpop.f32.mrb[0].mxu0
        %v2866 = vadd.f32 0.0, %v2865
        %v2867 = vpop.f32.mrb[0].mxu0
        %2868 = vmatprep.mubr.bf16.mxu0 0
        %2869 = vmatmul.mubr.bf16.gmra.mrb[0].mxu0 %v2734
        %v2870 = vpop.f32.mrb[0].mxu0
        %v2871 = vadd.f32 0.0, %v2870
        %v2872 = vpop.f32.mrb[0].mxu0
        %v2873 = vpop.f32.mrb[0].mxu0
        %v2874 = vadd.f32 0.0, %v2873
        %v2875 = vpop.f32.mrb[0].mxu0
        %2876 = vmatprep.mubr.bf16.mxu0 0
        %2877 = vmatmul.mubr.bf16.gmra.mrb[0].mxu0 %v2737
        %v2878 = vpop.f32.mrb[0].mxu0
        %v2879 = vadd.f32 0.0, %v2878
        %v2880 = vpop.f32.mrb[0].mxu0
        %v2881 = vpop.f32.mrb[0].mxu0
        %v2882 = vadd.f32 0.0, %v2881
        %v2883 = vpop.f32.mrb[0].mxu0
        %2884 = vmatprep.mubr.bf16.mxu0 0
        %2885 = vmatmul.mubr.bf16.gmra.mrb[0].mxu0 %v2740
        %v2886 = vpop.f32.mrb[0].mxu0
        %v2887 = vadd.f32 0.0, %v2886
        %v2888 = vpop.f32.mrb[0].mxu0
        %v2889 = vpop.f32.mrb[0].mxu0
        %v2890 = vadd.f32 0.0, %v2889
        %v2891 = vpop.f32.mrb[0].mxu0
        %2892 = vmatprep.mubr.bf16.mxu0 0
        %2893 = vmatmul.mubr.bf16.gmra.mrb[0].mxu0 %v2743
        %v2894 = vpop.f32.mrb[0].mxu0
        %v2895 = vadd.f32 0.0, %v2894
        %v2896 = vpop.f32.mrb[0].mxu0
        %v2897 = vpop.f32.mrb[0].mxu0
        %v2898 = vadd.f32 0.0, %v2897
        %v2899 = vpop.f32.mrb[0].mxu0
        %2900 = vmatprep.mubr.bf16.mxu0 0
        %2901 = vmatmul.mubr.bf16.gmra.mrb[0].mxu0 %v2746
        %v2902 = vpop.f32.mrb[0].mxu0
        %v2903 = vadd.f32 0.0, %v2902
        %v2904 = vpop.f32.mrb[0].mxu0
        %v2905 = vpop.f32.mrb[0].mxu0
        %v2906 = vadd.f32 0.0, %v2905
        %v2907 = vpop.f32.mrb[0].mxu0
        %2908 = vdwg.mxu0
        %v2909 = vadd.f32 %v2611, %v2783
        %v2910 = vadd.f32 %v2612, %v2786
        %v2911 = vadd.f32 %v2613, %v2791
        %v2912 = vadd.f32 %v2614, %v2794
        %v2913 = vadd.f32 %v2615, %v2799
        %v2914 = vadd.f32 %v2616, %v2802
        %v2915 = vadd.f32 %v2617, %v2807
        %v2916 = vadd.f32 %v2618, %v2810
        %v2917 = vadd.f32 %v2619, %v2815
        %v2918 = vadd.f32 %v2620, %v2818
        %v2919 = vadd.f32 %v2621, %v2823
        %v2920 = vadd.f32 %v2622, %v2826
        %v2921 = vadd.f32 %v2623, %v2831
        %v2922 = vadd.f32 %v2624, %v2834
        %v2923 = vadd.f32 %v2625, %v2839
        %v2924 = vadd.f32 %v2626, %v2842
        %v2925 = vadd.f32 %v2627, %v2847
        %v2926 = vadd.f32 %v2628, %v2850
        %v2927 = vadd.f32 %v2629, %v2855
        %v2928 = vadd.f32 %v2630, %v2858
        %v2929 = vadd.f32 %v2631, %v2863
        %v2930 = vadd.f32 %v2632, %v2866
        %v2931 = vadd.f32 %v2633, %v2871
        %v2932 = vadd.f32 %v2634, %v2874
        %v2933 = vadd.f32 %v2635, %v2879
        %v2934 = vadd.f32 %v2636, %v2882
        %v2935 = vadd.f32 %v2637, %v2887
        %v2936 = vadd.f32 %v2638, %v2890
        %v2937 = vadd.f32 %v2639, %v2895
        %v2938 = vadd.f32 %v2640, %v2898
        %v2939 = vadd.f32 %v2641, %v2903
        %v2940 = vadd.f32 %v2642, %v2906
        %v2941 = vld [vmem:[%s2344 + $0x2] sm:$0xff]
        %v2942 = vld [vmem:[%s2344 + $0xa] sm:$0xff]
        %v2943 = vld [vmem:[%s2344 + $0x1a] sm:$0xff]
        %v2944 = vld [vmem:[%s2344 + $0x22] sm:$0xff]
        %v2945 = vld [vmem:[%s2344 + $0x32] sm:$0xff]
        %v2946 = vld [vmem:[%s2344 + $0x3a] sm:$0xff]
        %v2947 = vld [vmem:[%s2344 + $0x4a] sm:$0xff]
        %v2948 = vld [vmem:[%s2344 + $0x52] sm:$0xff]
        %v2949 = vld [vmem:[%s2344 + $0x62] sm:$0xff]
        %v2950 = vld [vmem:[%s2344 + $0x6a] sm:$0xff]
        %v2951 = vld [vmem:[%s2344 + $0x7a] sm:$0xff]
        %v2952 = vld [vmem:[%s2344 + $0x82] sm:$0xff]
        %v2953 = vld [vmem:[%s2344 + $0x92] sm:$0xff]
        %v2954 = vld [vmem:[%s2344 + $0x9a] sm:$0xff]
        %v2955 = vld [vmem:[%s2344 + $0xaa] sm:$0xff]
        %v2956 = vld [vmem:[%s2344 + $0xb2] sm:$0xff]
        %v2957 = vld [vmem:[%s2344 + $0xc2] sm:$0xff]
        %v2958 = vld [vmem:[%s2344 + $0xca] sm:$0xff]
        %v2959 = vld [vmem:[%s2344 + $0xda] sm:$0xff]
        %v2960 = vld [vmem:[%s2344 + $0xe2] sm:$0xff]
        %v2961 = vld [vmem:[%s2344 + $0xf2] sm:$0xff]
        %v2962 = vld [vmem:[%s2344 + $0xfa] sm:$0xff]
        %v2963 = vld [vmem:[%s2344 + $0x10a] sm:$0xff]
        %v2964 = vld [vmem:[%s2344 + $0x112] sm:$0xff]
        %v2965 = vld [vmem:[%s2344 + $0x122] sm:$0xff]
        %v2966 = vld [vmem:[%s2344 + $0x12a] sm:$0xff]
        %v2967 = vld [vmem:[%s2344 + $0x13a] sm:$0xff]
        %v2968 = vld [vmem:[%s2344 + $0x142] sm:$0xff]
        %v2969 = vld [vmem:[%s2344 + $0x152] sm:$0xff]
        %v2970 = vld [vmem:[%s2344 + $0x15a] sm:$0xff]
        %v2971 = vld [vmem:[%s2344 + $0x16a] sm:$0xff]
        %v2972 = vld [vmem:[%s2344 + $0x172] sm:$0xff]
        %v2973 = vpack.c.bf16 %v2942, %v2941
        %v2974 = vpack.c.bf16 %v2944, %v2943
        %v2975 = vpack.c.bf16 %v2946, %v2945
        %v2976 = vpack.c.bf16 %v2948, %v2947
        %v2977 = vpack.c.bf16 %v2950, %v2949
        %v2978 = vpack.c.bf16 %v2952, %v2951
        %v2979 = vpack.c.bf16 %v2954, %v2953
        %v2980 = vpack.c.bf16 %v2956, %v2955
        %v2981 = vpack.c.bf16 %v2958, %v2957
        %v2982 = vpack.c.bf16 %v2960, %v2959
        %v2983 = vpack.c.bf16 %v2962, %v2961
        %v2984 = vpack.c.bf16 %v2964, %v2963
        %v2985 = vpack.c.bf16 %v2966, %v2965
        %v2986 = vpack.c.bf16 %v2968, %v2967
        %v2987 = vpack.c.bf16 %v2970, %v2969
        %v2988 = vpack.c.bf16 %v2972, %v2971
        %s2989 = scalar_lea.vmem %s1, 64
        %v2990 = vld [vmem:[%s2989] sm:$0xf]
        %v2991 = vld [vmem:[%s2989 + $0x4] sm:$0xf]
        %v2994 = vunpack.c.l.b16 %v2990
        %v2995 = vunpack.c.l.b16 %v2991
        %v2996 = vpack.c.b16 %v2995, %v2994
        %v2999 = vsel %vm454, %v2973, 0
        %v3002 = vsel %vm454, %v2974, 0
        %v3005 = vsel %vm454, %v2975, 0
        %v3008 = vsel %vm454, %v2976, 0
        %v3011 = vsel %vm454, %v2977, 0
        %v3014 = vsel %vm454, %v2978, 0
        %v3017 = vsel %vm454, %v2979, 0
        %v3020 = vsel %vm454, %v2980, 0
        %v3023 = vsel %vm454, %v2981, 0
        %v3026 = vsel %vm454, %v2982, 0
        %v3029 = vsel %vm454, %v2983, 0
        %v3032 = vsel %vm454, %v2984, 0
        %v3035 = vsel %vm454, %v2985, 0
        %v3038 = vsel %vm454, %v2986, 0
        %v3041 = vsel %vm454, %v2987, 0
        %v3044 = vsel %vm454, %v2988, 0
        %3046 = vmatprep.subr.bf16.mxu0 0
        %3047 = vmatpush1.bf16.msra.mxu0 %v2996
        %3048 = vmatprep.subr.bf16.mxu0 0
        %3049 = vmatpush1.bf16.msra.mxu0 0
        %3050 = vmatprep.subr.bf16.mxu0 0
        %3051 = vmatpush1.bf16.msra.mxu0 0
        %3052 = vmatprep.subr.bf16.mxu0 0
        %3053 = vmatpush1.bf16.msra.mxu0 0
        %3054 = vmatprep.subr.bf16.mxu0 0
        %3055 = vmatpush1.bf16.msra.mxu0 0
        %3056 = vmatprep.subr.bf16.mxu0 0
        %3057 = vmatpush1.bf16.msra.mxu0 0
        %3058 = vmatprep.subr.bf16.mxu0 0
        %3059 = vmatpush1.bf16.msra.mxu0 0
        %3060 = vmatprep.subr.bf16.mxu0 0
        %3061 = vmatpush1.bf16.msra.mxu0 0
        %3062 = vmatprep.subr.bf16.mxu0 0
        %3063 = vmatpush1.bf16.msra.mxu0 0
        %3064 = vmatprep.subr.bf16.mxu0 0
        %3065 = vmatpush1.bf16.msra.mxu0 0
        %3066 = vmatprep.subr.bf16.mxu0 0
        %3067 = vmatpush1.bf16.msra.mxu0 0
        %3068 = vmatprep.subr.bf16.mxu0 0
        %3069 = vmatpush1.bf16.msra.mxu0 0
        %3070 = vmatprep.subr.bf16.mxu0 0
        %3071 = vmatpush1.bf16.msra.mxu0 0
        %3072 = vmatprep.subr.bf16.mxu0 0
        %3073 = vmatpush1.bf16.msra.mxu0 0
        %3074 = vmatprep.subr.bf16.mxu0 0
        %3075 = vmatpush1.bf16.msra.mxu0 0
        %3076 = vmatprep.subr.bf16.mxu0 0
        %3077 = vmatpush1.bf16.msra.mxu0 0
        %3078 = vmatprep.mubr.bf16.mxu0 0
        %3079 = vmatmul.mubr.bf16.gmra.mrb[0].mxu0 %v2999
        %v3080 = vpop.f32.mrb[0].mxu0
        %v3081 = vadd.f32 0.0, %v3080
        %v3082 = vpop.f32.mrb[0].mxu0
        %v3083 = vpop.f32.mrb[0].mxu0
        %v3084 = vadd.f32 0.0, %v3083
        %v3085 = vpop.f32.mrb[0].mxu0
        %3086 = vmatprep.mubr.bf16.mxu0 0
        %3087 = vmatmul.mubr.bf16.gmra.mrb[0].mxu0 %v3002
        %v3088 = vpop.f32.mrb[0].mxu0
        %v3089 = vadd.f32 0.0, %v3088
        %v3090 = vpop.f32.mrb[0].mxu0
        %v3091 = vpop.f32.mrb[0].mxu0
        %v3092 = vadd.f32 0.0, %v3091
        %v3093 = vpop.f32.mrb[0].mxu0
        %3094 = vmatprep.mubr.bf16.mxu0 0
        %3095 = vmatmul.mubr.bf16.gmra.mrb[0].mxu0 %v3005
        %v3096 = vpop.f32.mrb[0].mxu0
        %v3097 = vadd.f32 0.0, %v3096
        %v3098 = vpop.f32.mrb[0].mxu0
        %v3099 = vpop.f32.mrb[0].mxu0
        %v3100 = vadd.f32 0.0, %v3099
        %v3101 = vpop.f32.mrb[0].mxu0
        %3102 = vmatprep.mubr.bf16.mxu0 0
        %3103 = vmatmul.mubr.bf16.gmra.mrb[0].mxu0 %v3008
        %v3104 = vpop.f32.mrb[0].mxu0
        %v3105 = vadd.f32 0.0, %v3104
        %v3106 = vpop.f32.mrb[0].mxu0
        %v3107 = vpop.f32.mrb[0].mxu0
        %v3108 = vadd.f32 0.0, %v3107
        %v3109 = vpop.f32.mrb[0].mxu0
        %3110 = vmatprep.mubr.bf16.mxu0 0
        %3111 = vmatmul.mubr.bf16.gmra.mrb[0].mxu0 %v3011
        %v3112 = vpop.f32.mrb[0].mxu0
        %v3113 = vadd.f32 0.0, %v3112
        %v3114 = vpop.f32.mrb[0].mxu0
        %v3115 = vpop.f32.mrb[0].mxu0
        %v3116 = vadd.f32 0.0, %v3115
        %v3117 = vpop.f32.mrb[0].mxu0
        %3118 = vmatprep.mubr.bf16.mxu0 0
        %3119 = vmatmul.mubr.bf16.gmra.mrb[0].mxu0 %v3014
        %v3120 = vpop.f32.mrb[0].mxu0
        %v3121 = vadd.f32 0.0, %v3120
        %v3122 = vpop.f32.mrb[0].mxu0
        %v3123 = vpop.f32.mrb[0].mxu0
        %v3124 = vadd.f32 0.0, %v3123
        %v3125 = vpop.f32.mrb[0].mxu0
        %3126 = vmatprep.mubr.bf16.mxu0 0
        %3127 = vmatmul.mubr.bf16.gmra.mrb[0].mxu0 %v3017
        %v3128 = vpop.f32.mrb[0].mxu0
        %v3129 = vadd.f32 0.0, %v3128
        %v3130 = vpop.f32.mrb[0].mxu0
        %v3131 = vpop.f32.mrb[0].mxu0
        %v3132 = vadd.f32 0.0, %v3131
        %v3133 = vpop.f32.mrb[0].mxu0
        %3134 = vmatprep.mubr.bf16.mxu0 0
        %3135 = vmatmul.mubr.bf16.gmra.mrb[0].mxu0 %v3020
        %v3136 = vpop.f32.mrb[0].mxu0
        %v3137 = vadd.f32 0.0, %v3136
        %v3138 = vpop.f32.mrb[0].mxu0
        %v3139 = vpop.f32.mrb[0].mxu0
        %v3140 = vadd.f32 0.0, %v3139
        %v3141 = vpop.f32.mrb[0].mxu0
        %3142 = vmatprep.mubr.bf16.mxu0 0
        %3143 = vmatmul.mubr.bf16.gmra.mrb[0].mxu0 %v3023
        %v3144 = vpop.f32.mrb[0].mxu0
        %v3145 = vadd.f32 0.0, %v3144
        %v3146 = vpop.f32.mrb[0].mxu0
        %v3147 = vpop.f32.mrb[0].mxu0
        %v3148 = vadd.f32 0.0, %v3147
        %v3149 = vpop.f32.mrb[0].mxu0
        %3150 = vmatprep.mubr.bf16.mxu0 0
        %3151 = vmatmul.mubr.bf16.gmra.mrb[0].mxu0 %v3026
        %v3152 = vpop.f32.mrb[0].mxu0
        %v3153 = vadd.f32 0.0, %v3152
        %v3154 = vpop.f32.mrb[0].mxu0
        %v3155 = vpop.f32.mrb[0].mxu0
        %v3156 = vadd.f32 0.0, %v3155
        %v3157 = vpop.f32.mrb[0].mxu0
        %3158 = vmatprep.mubr.bf16.mxu0 0
        %3159 = vmatmul.mubr.bf16.gmra.mrb[0].mxu0 %v3029
        %v3160 = vpop.f32.mrb[0].mxu0
        %v3161 = vadd.f32 0.0, %v3160
        %v3162 = vpop.f32.mrb[0].mxu0
        %v3163 = vpop.f32.mrb[0].mxu0
        %v3164 = vadd.f32 0.0, %v3163
        %v3165 = vpop.f32.mrb[0].mxu0
        %3166 = vmatprep.mubr.bf16.mxu0 0
        %3167 = vmatmul.mubr.bf16.gmra.mrb[0].mxu0 %v3032
        %v3168 = vpop.f32.mrb[0].mxu0
        %v3169 = vadd.f32 0.0, %v3168
        %v3170 = vpop.f32.mrb[0].mxu0
        %v3171 = vpop.f32.mrb[0].mxu0
        %v3172 = vadd.f32 0.0, %v3171
        %v3173 = vpop.f32.mrb[0].mxu0
        %3174 = vmatprep.mubr.bf16.mxu0 0
        %3175 = vmatmul.mubr.bf16.gmra.mrb[0].mxu0 %v3035
        %v3176 = vpop.f32.mrb[0].mxu0
        %v3177 = vadd.f32 0.0, %v3176
        %v3178 = vpop.f32.mrb[0].mxu0
        %v3179 = vpop.f32.mrb[0].mxu0
        %v3180 = vadd.f32 0.0, %v3179
        %v3181 = vpop.f32.mrb[0].mxu0
        %3182 = vmatprep.mubr.bf16.mxu0 0
        %3183 = vmatmul.mubr.bf16.gmra.mrb[0].mxu0 %v3038
        %v3184 = vpop.f32.mrb[0].mxu0
        %v3185 = vadd.f32 0.0, %v3184
        %v3186 = vpop.f32.mrb[0].mxu0
        %v3187 = vpop.f32.mrb[0].mxu0
        %v3188 = vadd.f32 0.0, %v3187
        %v3189 = vpop.f32.mrb[0].mxu0
        %3190 = vmatprep.mubr.bf16.mxu0 0
        %3191 = vmatmul.mubr.bf16.gmra.mrb[0].mxu0 %v3041
        %v3192 = vpop.f32.mrb[0].mxu0
        %v3193 = vadd.f32 0.0, %v3192
        %v3194 = vpop.f32.mrb[0].mxu0
        %v3195 = vpop.f32.mrb[0].mxu0
        %v3196 = vadd.f32 0.0, %v3195
        %v3197 = vpop.f32.mrb[0].mxu0
        %3198 = vmatprep.mubr.bf16.mxu0 0
        %3199 = vmatmul.mubr.bf16.gmra.mrb[0].mxu0 %v3044
        %v3200 = vpop.f32.mrb[0].mxu0
        %v3201 = vadd.f32 0.0, %v3200
        %v3202 = vpop.f32.mrb[0].mxu0
        %v3203 = vpop.f32.mrb[0].mxu0
        %v3204 = vadd.f32 0.0, %v3203
        %v3205 = vpop.f32.mrb[0].mxu0
        %3206 = vdwg.mxu0
        %v3207 = vadd.f32 %v2909, %v3081
        %v3208 = vadd.f32 %v2910, %v3084
        %v3209 = vadd.f32 %v2911, %v3089
        %v3210 = vadd.f32 %v2912, %v3092
        %v3211 = vadd.f32 %v2913, %v3097
        %v3212 = vadd.f32 %v2914, %v3100
        %v3213 = vadd.f32 %v2915, %v3105
        %v3214 = vadd.f32 %v2916, %v3108
        %v3215 = vadd.f32 %v2917, %v3113
        %v3216 = vadd.f32 %v2918, %v3116
        %v3217 = vadd.f32 %v2919, %v3121
        %v3218 = vadd.f32 %v2920, %v3124
        %v3219 = vadd.f32 %v2921, %v3129
        %v3220 = vadd.f32 %v2922, %v3132
        %v3221 = vadd.f32 %v2923, %v3137
        %v3222 = vadd.f32 %v2924, %v3140
        %v3223 = vadd.f32 %v2925, %v3145
        %v3224 = vadd.f32 %v2926, %v3148
        %v3225 = vadd.f32 %v2927, %v3153
        %v3226 = vadd.f32 %v2928, %v3156
        %v3227 = vadd.f32 %v2929, %v3161
        %v3228 = vadd.f32 %v2930, %v3164
        %v3229 = vadd.f32 %v2931, %v3169
        %v3230 = vadd.f32 %v2932, %v3172
        %v3231 = vadd.f32 %v2933, %v3177
        %v3232 = vadd.f32 %v2934, %v3180
        %v3233 = vadd.f32 %v2935, %v3185
        %v3234 = vadd.f32 %v2936, %v3188
        %v3235 = vadd.f32 %v2937, %v3193
        %v3236 = vadd.f32 %v2938, %v3196
        %v3237 = vadd.f32 %v2939, %v3201
        %v3238 = vadd.f32 %v2940, %v3204
        %v3239 = vld [vmem:[%s2] sm:$0x1]
        %v3241 = vlaneseq
        %v3242 = vshrl.u32 %v3241, 7
        %v3243 = vsub.s32 0, %v3242
        %v3244 = vrot.slane %v3239, %v3243
        %v3246 = vadd.f32 %v3207, %v3244
        %v3247 = vadd.f32 %v3208, %v3244
        %v3248 = vadd.f32 %v3209, %v3244
        %v3249 = vadd.f32 %v3210, %v3244
        %v3250 = vadd.f32 %v3211, %v3244
        %v3251 = vadd.f32 %v3212, %v3244
        %v3252 = vadd.f32 %v3213, %v3244
        %v3253 = vadd.f32 %v3214, %v3244
        %v3254 = vadd.f32 %v3215, %v3244
        %v3255 = vadd.f32 %v3216, %v3244
        %v3256 = vadd.f32 %v3217, %v3244
        %v3257 = vadd.f32 %v3218, %v3244
        %v3258 = vadd.f32 %v3219, %v3244
        %v3259 = vadd.f32 %v3220, %v3244
        %v3260 = vadd.f32 %v3221, %v3244
        %v3261 = vadd.f32 %v3222, %v3244
        %v3262 = vadd.f32 %v3223, %v3244
        %v3263 = vadd.f32 %v3224, %v3244
        %v3264 = vadd.f32 %v3225, %v3244
        %v3265 = vadd.f32 %v3226, %v3244
        %v3266 = vadd.f32 %v3227, %v3244
        %v3267 = vadd.f32 %v3228, %v3244
        %v3268 = vadd.f32 %v3229, %v3244
        %v3269 = vadd.f32 %v3230, %v3244
        %v3270 = vadd.f32 %v3231, %v3244
        %v3271 = vadd.f32 %v3232, %v3244
        %v3272 = vadd.f32 %v3233, %v3244
        %v3273 = vadd.f32 %v3234, %v3244
        %v3274 = vadd.f32 %v3235, %v3244
        %v3275 = vadd.f32 %v3236, %v3244
        %v3276 = vadd.f32 %v3237, %v3244
        %v3277 = vadd.f32 %v3238, %v3244
        %v3278 = vmax.f32 %v3246, 0.0
        %v3279 = vmax.f32 %v3247, 0.0
        %v3280 = vmax.f32 %v3248, 0.0
        %v3281 = vmax.f32 %v3249, 0.0
        %v3282 = vmax.f32 %v3250, 0.0
        %v3283 = vmax.f32 %v3251, 0.0
        %v3284 = vmax.f32 %v3252, 0.0
        %v3285 = vmax.f32 %v3253, 0.0
        %v3286 = vmax.f32 %v3254, 0.0
        %v3287 = vmax.f32 %v3255, 0.0
        %v3288 = vmax.f32 %v3256, 0.0
        %v3289 = vmax.f32 %v3257, 0.0
        %v3290 = vmax.f32 %v3258, 0.0
        %v3291 = vmax.f32 %v3259, 0.0
        %v3292 = vmax.f32 %v3260, 0.0
        %v3293 = vmax.f32 %v3261, 0.0
        %v3294 = vmax.f32 %v3262, 0.0
        %v3295 = vmax.f32 %v3263, 0.0
        %v3296 = vmax.f32 %v3264, 0.0
        %v3297 = vmax.f32 %v3265, 0.0
        %v3298 = vmax.f32 %v3266, 0.0
        %v3299 = vmax.f32 %v3267, 0.0
        %v3300 = vmax.f32 %v3268, 0.0
        %v3301 = vmax.f32 %v3269, 0.0
        %v3302 = vmax.f32 %v3270, 0.0
        %v3303 = vmax.f32 %v3271, 0.0
        %v3304 = vmax.f32 %v3272, 0.0
        %v3305 = vmax.f32 %v3273, 0.0
        %v3306 = vmax.f32 %v3274, 0.0
        %v3307 = vmax.f32 %v3275, 0.0
        %v3308 = vmax.f32 %v3276, 0.0
        %v3309 = vmax.f32 %v3277, 0.0
        %3310 = vst.msk [vmem:[%s588 + $0x1] sm:$0xff] %vm454, %v3278
        %3311 = vst.msk [vmem:[%s588 + $0x9] sm:$0xff] %vm454, %v3279
        %3312 = vst.msk [vmem:[%s588 + $0x19] sm:$0xff] %vm454, %v3280
        %3313 = vst.msk [vmem:[%s588 + $0x21] sm:$0xff] %vm454, %v3281
        %3314 = vst.msk [vmem:[%s588 + $0x31] sm:$0xff] %vm454, %v3282
        %3315 = vst.msk [vmem:[%s588 + $0x39] sm:$0xff] %vm454, %v3283
        %3316 = vst.msk [vmem:[%s588 + $0x49] sm:$0xff] %vm454, %v3284
        %3317 = vst.msk [vmem:[%s588 + $0x51] sm:$0xff] %vm454, %v3285
        %3318 = vst.msk [vmem:[%s588 + $0x61] sm:$0xff] %vm454, %v3286
        %3319 = vst.msk [vmem:[%s588 + $0x69] sm:$0xff] %vm454, %v3287
        %3320 = vst.msk [vmem:[%s588 + $0x79] sm:$0xff] %vm454, %v3288
        %3321 = vst.msk [vmem:[%s588 + $0x81] sm:$0xff] %vm454, %v3289
        %3322 = vst.msk [vmem:[%s588 + $0x91] sm:$0xff] %vm454, %v3290
        %3323 = vst.msk [vmem:[%s588 + $0x99] sm:$0xff] %vm454, %v3291
        %3324 = vst.msk [vmem:[%s588 + $0xa9] sm:$0xff] %vm454, %v3292
        %3325 = vst.msk [vmem:[%s588 + $0xb1] sm:$0xff] %vm454, %v3293
        %3326 = vst.msk [vmem:[%s588 + $0xc1] sm:$0xff] %vm454, %v3294
        %3327 = vst.msk [vmem:[%s588 + $0xc9] sm:$0xff] %vm454, %v3295
        %3328 = vst.msk [vmem:[%s588 + $0xd9] sm:$0xff] %vm454, %v3296
        %3329 = vst.msk [vmem:[%s588 + $0xe1] sm:$0xff] %vm454, %v3297
        %3330 = vst.msk [vmem:[%s588 + $0xf1] sm:$0xff] %vm454, %v3298
        %3331 = vst.msk [vmem:[%s588 + $0xf9] sm:$0xff] %vm454, %v3299
        %3332 = vst.msk [vmem:[%s588 + $0x109] sm:$0xff] %vm454, %v3300
        %3333 = vst.msk [vmem:[%s588 + $0x111] sm:$0xff] %vm454, %v3301
        %3334 = vst.msk [vmem:[%s588 + $0x121] sm:$0xff] %vm454, %v3302
        %3335 = vst.msk [vmem:[%s588 + $0x129] sm:$0xff] %vm454, %v3303
        %3336 = vst.msk [vmem:[%s588 + $0x139] sm:$0xff] %vm454, %v3304
        %3337 = vst.msk [vmem:[%s588 + $0x141] sm:$0xff] %vm454, %v3305
        %3338 = vst.msk [vmem:[%s588 + $0x151] sm:$0xff] %vm454, %v3306
        %3339 = vst.msk [vmem:[%s588 + $0x159] sm:$0xff] %vm454, %v3307
        %3340 = vst.msk [vmem:[%s588 + $0x169] sm:$0xff] %vm454, %v3308
        %3341 = vst.msk [vmem:[%s588 + $0x171] sm:$0xff] %vm454, %v3309
        %v3342 = vld [vmem:[#allocation2] sm:$0xff]
        %v3343 = vld [vmem:[#allocation2 + $0x8] sm:$0xff]
        %v3344 = vld [vmem:[#allocation2 + $0x18] sm:$0xff]
        %v3345 = vld [vmem:[#allocation2 + $0x20] sm:$0xff]
        %v3346 = vld [vmem:[#allocation2 + $0x30] sm:$0xff]
        %v3347 = vld [vmem:[#allocation2 + $0x38] sm:$0xff]
        %v3348 = vld [vmem:[#allocation2 + $0x48] sm:$0xff]
        %v3349 = vld [vmem:[#allocation2 + $0x50] sm:$0xff]
        %v3350 = vld [vmem:[#allocation2 + $0x60] sm:$0xff]
        %v3351 = vld [vmem:[#allocation2 + $0x68] sm:$0xff]
        %v3352 = vld [vmem:[#allocation2 + $0x78] sm:$0xff]
        %v3353 = vld [vmem:[#allocation2 + $0x80] sm:$0xff]
        %v3354 = vld [vmem:[#allocation2 + $0x90] sm:$0xff]
        %v3355 = vld [vmem:[#allocation2 + $0x98] sm:$0xff]
        %v3356 = vld [vmem:[#allocation2 + $0xa8] sm:$0xff]
        %v3357 = vld [vmem:[#allocation2 + $0xb0] sm:$0xff]
        %v3358 = vld [vmem:[#allocation2 + $0xc0] sm:$0xff]
        %v3359 = vld [vmem:[#allocation2 + $0xc8] sm:$0xff]
        %v3360 = vld [vmem:[#allocation2 + $0xd8] sm:$0xff]
        %v3361 = vld [vmem:[#allocation2 + $0xe0] sm:$0xff]
        %v3362 = vld [vmem:[#allocation2 + $0xf0] sm:$0xff]
        %v3363 = vld [vmem:[#allocation2 + $0xf8] sm:$0xff]
        %v3364 = vld [vmem:[#allocation2 + $0x108] sm:$0xff]
        %v3365 = vld [vmem:[#allocation2 + $0x110] sm:$0xff]
        %v3366 = vld [vmem:[#allocation2 + $0x120] sm:$0xff]
        %v3367 = vld [vmem:[#allocation2 + $0x128] sm:$0xff]
        %v3368 = vld [vmem:[#allocation2 + $0x138] sm:$0xff]
        %v3369 = vld [vmem:[#allocation2 + $0x140] sm:$0xff]
        %v3370 = vld [vmem:[#allocation2 + $0x150] sm:$0xff]
        %v3371 = vld [vmem:[#allocation2 + $0x158] sm:$0xff]
        %v3372 = vld [vmem:[#allocation2 + $0x168] sm:$0xff]
        %v3373 = vld [vmem:[#allocation2 + $0x170] sm:$0xff]
        %v3374 = vpack.c.bf16 %v3343, %v3342
        %v3375 = vpack.c.bf16 %v3345, %v3344
        %v3376 = vpack.c.bf16 %v3347, %v3346
        %v3377 = vpack.c.bf16 %v3349, %v3348
        %v3378 = vpack.c.bf16 %v3351, %v3350
        %v3379 = vpack.c.bf16 %v3353, %v3352
        %v3380 = vpack.c.bf16 %v3355, %v3354
        %v3381 = vpack.c.bf16 %v3357, %v3356
        %v3382 = vpack.c.bf16 %v3359, %v3358
        %v3383 = vpack.c.bf16 %v3361, %v3360
        %v3384 = vpack.c.bf16 %v3363, %v3362
        %v3385 = vpack.c.bf16 %v3365, %v3364
        %v3386 = vpack.c.bf16 %v3367, %v3366
        %v3387 = vpack.c.bf16 %v3369, %v3368
        %v3388 = vpack.c.bf16 %v3371, %v3370
        %v3389 = vpack.c.bf16 %v3373, %v3372
        %v3390 = vld [vmem:[%s3] sm:$0xf]
        %v3391 = vld [vmem:[%s3 + $0x4] sm:$0xf]
        %v3392 = vld [vmem:[#allocation2 + $0x1] sm:$0xff]
        %v3393 = vld [vmem:[#allocation2 + $0x9] sm:$0xff]
        %v3394 = vld [vmem:[#allocation2 + $0x19] sm:$0xff]
        %v3395 = vld [vmem:[#allocation2 + $0x21] sm:$0xff]
        %v3396 = vld [vmem:[#allocation2 + $0x31] sm:$0xff]
        %v3397 = vld [vmem:[#allocation2 + $0x39] sm:$0xff]
        %v3398 = vld [vmem:[#allocation2 + $0x49] sm:$0xff]
        %v3399 = vld [vmem:[#allocation2 + $0x51] sm:$0xff]
        %v3400 = vld [vmem:[#allocation2 + $0x61] sm:$0xff]
        %v3401 = vld [vmem:[#allocation2 + $0x69] sm:$0xff]
        %v3402 = vld [vmem:[#allocation2 + $0x79] sm:$0xff]
        %v3403 = vld [vmem:[#allocation2 + $0x81] sm:$0xff]
        %v3404 = vld [vmem:[#allocation2 + $0x91] sm:$0xff]
        %v3405 = vld [vmem:[#allocation2 + $0x99] sm:$0xff]
        %v3406 = vld [vmem:[#allocation2 + $0xa9] sm:$0xff]
        %v3407 = vld [vmem:[#allocation2 + $0xb1] sm:$0xff]
        %v3408 = vld [vmem:[#allocation2 + $0xc1] sm:$0xff]
        %v3409 = vld [vmem:[#allocation2 + $0xc9] sm:$0xff]
        %v3410 = vld [vmem:[#allocation2 + $0xd9] sm:$0xff]
        %v3411 = vld [vmem:[#allocation2 + $0xe1] sm:$0xff]
        %v3412 = vld [vmem:[#allocation2 + $0xf1] sm:$0xff]
        %v3413 = vld [vmem:[#allocation2 + $0xf9] sm:$0xff]
        %v3414 = vld [vmem:[#allocation2 + $0x109] sm:$0xff]
        %v3415 = vld [vmem:[#allocation2 + $0x111] sm:$0xff]
        %v3416 = vld [vmem:[#allocation2 + $0x121] sm:$0xff]
        %v3417 = vld [vmem:[#allocation2 + $0x129] sm:$0xff]
        %v3418 = vld [vmem:[#allocation2 + $0x139] sm:$0xff]
        %v3419 = vld [vmem:[#allocation2 + $0x141] sm:$0xff]
        %v3420 = vld [vmem:[#allocation2 + $0x151] sm:$0xff]
        %v3421 = vld [vmem:[#allocation2 + $0x159] sm:$0xff]
        %v3422 = vld [vmem:[#allocation2 + $0x169] sm:$0xff]
        %v3423 = vld [vmem:[#allocation2 + $0x171] sm:$0xff]
        %v3424 = vpack.c.bf16 %v3393, %v3392
        %v3425 = vpack.c.bf16 %v3395, %v3394
        %v3426 = vpack.c.bf16 %v3397, %v3396
        %v3427 = vpack.c.bf16 %v3399, %v3398
        %v3428 = vpack.c.bf16 %v3401, %v3400
        %v3429 = vpack.c.bf16 %v3403, %v3402
        %v3430 = vpack.c.bf16 %v3405, %v3404
        %v3431 = vpack.c.bf16 %v3407, %v3406
        %v3432 = vpack.c.bf16 %v3409, %v3408
        %v3433 = vpack.c.bf16 %v3411, %v3410
        %v3434 = vpack.c.bf16 %v3413, %v3412
        %v3435 = vpack.c.bf16 %v3415, %v3414
        %v3436 = vpack.c.bf16 %v3417, %v3416
        %v3437 = vpack.c.bf16 %v3419, %v3418
        %v3438 = vpack.c.bf16 %v3421, %v3420
        %v3439 = vpack.c.bf16 %v3423, %v3422
        %s3440 = scalar_lea.vmem %s3, 8
        %v3441 = vld [vmem:[%s3440] sm:$0xf]
        %v3442 = vld [vmem:[%s3440 + $0x4] sm:$0xf]
        %v3445 = vunpack.c.l.b16 %v3441
        %v3446 = vunpack.c.l.b16 %v3442
        %v3447 = vpack.c.b16 %v3446, %v3445
        %v3450 = vsel %vm454, %v3424, 0
        %v3453 = vsel %vm454, %v3425, 0
        %v3456 = vsel %vm454, %v3426, 0
        %v3459 = vsel %vm454, %v3427, 0
        %v3462 = vsel %vm454, %v3428, 0
        %v3465 = vsel %vm454, %v3429, 0
        %v3468 = vsel %vm454, %v3430, 0
        %v3471 = vsel %vm454, %v3431, 0
        %v3474 = vsel %vm454, %v3432, 0
        %v3477 = vsel %vm454, %v3433, 0
        %v3480 = vsel %vm454, %v3434, 0
        %v3483 = vsel %vm454, %v3435, 0
        %v3486 = vsel %vm454, %v3436, 0
        %v3489 = vsel %vm454, %v3437, 0
        %v3492 = vsel %vm454, %v3438, 0
        %v3495 = vsel %vm454, %v3439, 0
        %3497 = vmatprep.subr.bf16.mxu0 0
        %3498 = vmatpush1.bf16.msra.mxu0 %v3447
        %3499 = vmatprep.subr.bf16.mxu0 0
        %3500 = vmatpush1.bf16.msra.mxu0 0
        %3501 = vmatprep.subr.bf16.mxu0 0
        %3502 = vmatpush1.bf16.msra.mxu0 0
        %3503 = vmatprep.subr.bf16.mxu0 0
        %3504 = vmatpush1.bf16.msra.mxu0 0
        %3505 = vmatprep.subr.bf16.mxu0 0
        %3506 = vmatpush1.bf16.msra.mxu0 0
        %3507 = vmatprep.subr.bf16.mxu0 0
        %3508 = vmatpush1.bf16.msra.mxu0 0
        %3509 = vmatprep.subr.bf16.mxu0 0
        %3510 = vmatpush1.bf16.msra.mxu0 0
        %3511 = vmatprep.subr.bf16.mxu0 0
        %3512 = vmatpush1.bf16.msra.mxu0 0
        %3513 = vmatprep.subr.bf16.mxu0 0
        %3514 = vmatpush1.bf16.msra.mxu0 0
        %3515 = vmatprep.subr.bf16.mxu0 0
        %3516 = vmatpush1.bf16.msra.mxu0 0
        %3517 = vmatprep.subr.bf16.mxu0 0
        %3518 = vmatpush1.bf16.msra.mxu0 0
        %3519 = vmatprep.subr.bf16.mxu0 0
        %3520 = vmatpush1.bf16.msra.mxu0 0
        %3521 = vmatprep.subr.bf16.mxu0 0
        %3522 = vmatpush1.bf16.msra.mxu0 0
        %3523 = vmatprep.subr.bf16.mxu0 0
        %3524 = vmatpush1.bf16.msra.mxu0 0
        %3525 = vmatprep.subr.bf16.mxu0 0
        %3526 = vmatpush1.bf16.msra.mxu0 0
        %3527 = vmatprep.subr.bf16.mxu0 0
        %3528 = vmatpush1.bf16.msra.mxu0 0
        %3529 = vmatprep.mubr.bf16.mxu0 0
        %3530 = vmatmul.mubr.bf16.gmra.mrb[0].mxu0 %v3450
        %v3531 = vpop.f32.mrb[0].mxu0
        %v3532 = vadd.f32 0.0, %v3531
        %v3533 = vpop.f32.mrb[0].mxu0
        %v3534 = vpop.f32.mrb[0].mxu0
        %v3535 = vadd.f32 0.0, %v3534
        %v3536 = vpop.f32.mrb[0].mxu0
        %3537 = vmatprep.mubr.bf16.mxu0 0
        %3538 = vmatmul.mubr.bf16.gmra.mrb[0].mxu0 %v3453
        %v3539 = vpop.f32.mrb[0].mxu0
        %v3540 = vadd.f32 0.0, %v3539
        %v3541 = vpop.f32.mrb[0].mxu0
        %v3542 = vpop.f32.mrb[0].mxu0
        %v3543 = vadd.f32 0.0, %v3542
        %v3544 = vpop.f32.mrb[0].mxu0
        %3545 = vmatprep.mubr.bf16.mxu0 0
        %3546 = vmatmul.mubr.bf16.gmra.mrb[0].mxu0 %v3456
        %v3547 = vpop.f32.mrb[0].mxu0
        %v3548 = vadd.f32 0.0, %v3547
        %v3549 = vpop.f32.mrb[0].mxu0
        %v3550 = vpop.f32.mrb[0].mxu0
        %v3551 = vadd.f32 0.0, %v3550
        %v3552 = vpop.f32.mrb[0].mxu0
        %3553 = vmatprep.mubr.bf16.mxu0 0
        %3554 = vmatmul.mubr.bf16.gmra.mrb[0].mxu0 %v3459
        %v3555 = vpop.f32.mrb[0].mxu0
        %v3556 = vadd.f32 0.0, %v3555
        %v3557 = vpop.f32.mrb[0].mxu0
        %v3558 = vpop.f32.mrb[0].mxu0
        %v3559 = vadd.f32 0.0, %v3558
        %v3560 = vpop.f32.mrb[0].mxu0
        %3561 = vmatprep.mubr.bf16.mxu0 0
        %3562 = vmatmul.mubr.bf16.gmra.mrb[0].mxu0 %v3462
        %v3563 = vpop.f32.mrb[0].mxu0
        %v3564 = vadd.f32 0.0, %v3563
        %v3565 = vpop.f32.mrb[0].mxu0
        %v3566 = vpop.f32.mrb[0].mxu0
        %v3567 = vadd.f32 0.0, %v3566
        %v3568 = vpop.f32.mrb[0].mxu0
        %3569 = vmatprep.mubr.bf16.mxu0 0
        %3570 = vmatmul.mubr.bf16.gmra.mrb[0].mxu0 %v3465
        %v3571 = vpop.f32.mrb[0].mxu0
        %v3572 = vadd.f32 0.0, %v3571
        %v3573 = vpop.f32.mrb[0].mxu0
        %v3574 = vpop.f32.mrb[0].mxu0
        %v3575 = vadd.f32 0.0, %v3574
        %v3576 = vpop.f32.mrb[0].mxu0
        %3577 = vmatprep.mubr.bf16.mxu0 0
        %3578 = vmatmul.mubr.bf16.gmra.mrb[0].mxu0 %v3468
        %v3579 = vpop.f32.mrb[0].mxu0
        %v3580 = vadd.f32 0.0, %v3579
        %v3581 = vpop.f32.mrb[0].mxu0
        %v3582 = vpop.f32.mrb[0].mxu0
        %v3583 = vadd.f32 0.0, %v3582
        %v3584 = vpop.f32.mrb[0].mxu0
        %3585 = vmatprep.mubr.bf16.mxu0 0
        %3586 = vmatmul.mubr.bf16.gmra.mrb[0].mxu0 %v3471
        %v3587 = vpop.f32.mrb[0].mxu0
        %v3588 = vadd.f32 0.0, %v3587
        %v3589 = vpop.f32.mrb[0].mxu0
        %v3590 = vpop.f32.mrb[0].mxu0
        %v3591 = vadd.f32 0.0, %v3590
        %v3592 = vpop.f32.mrb[0].mxu0
        %3593 = vmatprep.mubr.bf16.mxu0 0
        %3594 = vmatmul.mubr.bf16.gmra.mrb[0].mxu0 %v3474
        %v3595 = vpop.f32.mrb[0].mxu0
        %v3596 = vadd.f32 0.0, %v3595
        %v3597 = vpop.f32.mrb[0].mxu0
        %v3598 = vpop.f32.mrb[0].mxu0
        %v3599 = vadd.f32 0.0, %v3598
        %v3600 = vpop.f32.mrb[0].mxu0
        %3601 = vmatprep.mubr.bf16.mxu0 0
        %3602 = vmatmul.mubr.bf16.gmra.mrb[0].mxu0 %v3477
        %v3603 = vpop.f32.mrb[0].mxu0
        %v3604 = vadd.f32 0.0, %v3603
        %v3605 = vpop.f32.mrb[0].mxu0
        %v3606 = vpop.f32.mrb[0].mxu0
        %v3607 = vadd.f32 0.0, %v3606
        %v3608 = vpop.f32.mrb[0].mxu0
        %3609 = vmatprep.mubr.bf16.mxu0 0
        %3610 = vmatmul.mubr.bf16.gmra.mrb[0].mxu0 %v3480
        %v3611 = vpop.f32.mrb[0].mxu0
        %v3612 = vadd.f32 0.0, %v3611
        %v3613 = vpop.f32.mrb[0].mxu0
        %v3614 = vpop.f32.mrb[0].mxu0
        %v3615 = vadd.f32 0.0, %v3614
        %v3616 = vpop.f32.mrb[0].mxu0
        %3617 = vmatprep.mubr.bf16.mxu0 0
        %3618 = vmatmul.mubr.bf16.gmra.mrb[0].mxu0 %v3483
        %v3619 = vpop.f32.mrb[0].mxu0
        %v3620 = vadd.f32 0.0, %v3619
        %v3621 = vpop.f32.mrb[0].mxu0
        %v3622 = vpop.f32.mrb[0].mxu0
        %v3623 = vadd.f32 0.0, %v3622
        %v3624 = vpop.f32.mrb[0].mxu0
        %3625 = vmatprep.mubr.bf16.mxu0 0
        %3626 = vmatmul.mubr.bf16.gmra.mrb[0].mxu0 %v3486
        %v3627 = vpop.f32.mrb[0].mxu0
        %v3628 = vadd.f32 0.0, %v3627
        %v3629 = vpop.f32.mrb[0].mxu0
        %v3630 = vpop.f32.mrb[0].mxu0
        %v3631 = vadd.f32 0.0, %v3630
        %v3632 = vpop.f32.mrb[0].mxu0
        %3633 = vmatprep.mubr.bf16.mxu0 0
        %3634 = vmatmul.mubr.bf16.gmra.mrb[0].mxu0 %v3489
        %v3635 = vpop.f32.mrb[0].mxu0
        %v3636 = vadd.f32 0.0, %v3635
        %v3637 = vpop.f32.mrb[0].mxu0
        %v3638 = vpop.f32.mrb[0].mxu0
        %v3639 = vadd.f32 0.0, %v3638
        %v3640 = vpop.f32.mrb[0].mxu0
        %3641 = vmatprep.mubr.bf16.mxu0 0
        %3642 = vmatmul.mubr.bf16.gmra.mrb[0].mxu0 %v3492
        %v3643 = vpop.f32.mrb[0].mxu0
        %v3644 = vadd.f32 0.0, %v3643
        %v3645 = vpop.f32.mrb[0].mxu0
        %v3646 = vpop.f32.mrb[0].mxu0
        %v3647 = vadd.f32 0.0, %v3646
        %v3648 = vpop.f32.mrb[0].mxu0
        %3649 = vmatprep.mubr.bf16.mxu0 0
        %3650 = vmatmul.mubr.bf16.gmra.mrb[0].mxu0 %v3495
        %v3651 = vpop.f32.mrb[0].mxu0
        %v3652 = vadd.f32 0.0, %v3651
        %v3653 = vpop.f32.mrb[0].mxu0
        %v3654 = vpop.f32.mrb[0].mxu0
        %v3655 = vadd.f32 0.0, %v3654
        %v3656 = vpop.f32.mrb[0].mxu0
        %3657 = vdwg.mxu0
        %v3660 = vunpack.c.l.b16 %v3390
        %v3661 = vunpack.c.l.b16 %v3391
        %v3662 = vpack.c.b16 %v3661, %v3660
        %v3665 = vsel %vm454, %v3374, 0
        %v3668 = vsel %vm454, %v3375, 0
        %v3671 = vsel %vm454, %v3376, 0
        %v3674 = vsel %vm454, %v3377, 0
        %v3677 = vsel %vm454, %v3378, 0
        %v3680 = vsel %vm454, %v3379, 0
        %v3683 = vsel %vm454, %v3380, 0
        %v3686 = vsel %vm454, %v3381, 0
        %v3689 = vsel %vm454, %v3382, 0
        %v3692 = vsel %vm454, %v3383, 0
        %v3695 = vsel %vm454, %v3384, 0
        %v3698 = vsel %vm454, %v3385, 0
        %v3701 = vsel %vm454, %v3386, 0
        %v3704 = vsel %vm454, %v3387, 0
        %v3707 = vsel %vm454, %v3388, 0
        %v3710 = vsel %vm454, %v3389, 0
        %3712 = vmatprep.subr.bf16.mxu0 0
        %3713 = vmatpush1.bf16.msra.mxu0 %v3662
        %3714 = vmatprep.subr.bf16.mxu0 0
        %3715 = vmatpush1.bf16.msra.mxu0 0
        %3716 = vmatprep.subr.bf16.mxu0 0
        %3717 = vmatpush1.bf16.msra.mxu0 0
        %3718 = vmatprep.subr.bf16.mxu0 0
        %3719 = vmatpush1.bf16.msra.mxu0 0
        %3720 = vmatprep.subr.bf16.mxu0 0
        %3721 = vmatpush1.bf16.msra.mxu0 0
        %3722 = vmatprep.subr.bf16.mxu0 0
        %3723 = vmatpush1.bf16.msra.mxu0 0
        %3724 = vmatprep.subr.bf16.mxu0 0
        %3725 = vmatpush1.bf16.msra.mxu0 0
        %3726 = vmatprep.subr.bf16.mxu0 0
        %3727 = vmatpush1.bf16.msra.mxu0 0
        %3728 = vmatprep.subr.bf16.mxu0 0
        %3729 = vmatpush1.bf16.msra.mxu0 0
        %3730 = vmatprep.subr.bf16.mxu0 0
        %3731 = vmatpush1.bf16.msra.mxu0 0
        %3732 = vmatprep.subr.bf16.mxu0 0
        %3733 = vmatpush1.bf16.msra.mxu0 0
        %3734 = vmatprep.subr.bf16.mxu0 0
        %3735 = vmatpush1.bf16.msra.mxu0 0
        %3736 = vmatprep.subr.bf16.mxu0 0
        %3737 = vmatpush1.bf16.msra.mxu0 0
        %3738 = vmatprep.subr.bf16.mxu0 0
        %3739 = vmatpush1.bf16.msra.mxu0 0
        %3740 = vmatprep.subr.bf16.mxu0 0
        %3741 = vmatpush1.bf16.msra.mxu0 0
        %3742 = vmatprep.subr.bf16.mxu0 0
        %3743 = vmatpush1.bf16.msra.mxu0 0
        %3744 = vmatprep.mubr.bf16.mxu0 0
        %3745 = vmatmul.mubr.bf16.gmra.mrb[0].mxu0 %v3665
        %v3746 = vpop.f32.mrb[0].mxu0
        %v3747 = vadd.f32 %v3532, %v3746
        %v3748 = vpop.f32.mrb[0].mxu0
        %v3749 = vpop.f32.mrb[0].mxu0
        %v3750 = vadd.f32 %v3535, %v3749
        %v3751 = vpop.f32.mrb[0].mxu0
        %3752 = vmatprep.mubr.bf16.mxu0 0
        %3753 = vmatmul.mubr.bf16.gmra.mrb[0].mxu0 %v3668
        %v3754 = vpop.f32.mrb[0].mxu0
        %v3755 = vadd.f32 %v3540, %v3754
        %v3756 = vpop.f32.mrb[0].mxu0
        %v3757 = vpop.f32.mrb[0].mxu0
        %v3758 = vadd.f32 %v3543, %v3757
        %v3759 = vpop.f32.mrb[0].mxu0
        %3760 = vmatprep.mubr.bf16.mxu0 0
        %3761 = vmatmul.mubr.bf16.gmra.mrb[0].mxu0 %v3671
        %v3762 = vpop.f32.mrb[0].mxu0
        %v3763 = vadd.f32 %v3548, %v3762
        %v3764 = vpop.f32.mrb[0].mxu0
        %v3765 = vpop.f32.mrb[0].mxu0
        %v3766 = vadd.f32 %v3551, %v3765
        %v3767 = vpop.f32.mrb[0].mxu0
        %3768 = vmatprep.mubr.bf16.mxu0 0
        %3769 = vmatmul.mubr.bf16.gmra.mrb[0].mxu0 %v3674
        %v3770 = vpop.f32.mrb[0].mxu0
        %v3771 = vadd.f32 %v3556, %v3770
        %v3772 = vpop.f32.mrb[0].mxu0
        %v3773 = vpop.f32.mrb[0].mxu0
        %v3774 = vadd.f32 %v3559, %v3773
        %v3775 = vpop.f32.mrb[0].mxu0
        %3776 = vmatprep.mubr.bf16.mxu0 0
        %3777 = vmatmul.mubr.bf16.gmra.mrb[0].mxu0 %v3677
        %v3778 = vpop.f32.mrb[0].mxu0
        %v3779 = vadd.f32 %v3564, %v3778
        %v3780 = vpop.f32.mrb[0].mxu0
        %v3781 = vpop.f32.mrb[0].mxu0
        %v3782 = vadd.f32 %v3567, %v3781
        %v3783 = vpop.f32.mrb[0].mxu0
        %3784 = vmatprep.mubr.bf16.mxu0 0
        %3785 = vmatmul.mubr.bf16.gmra.mrb[0].mxu0 %v3680
        %v3786 = vpop.f32.mrb[0].mxu0
        %v3787 = vadd.f32 %v3572, %v3786
        %v3788 = vpop.f32.mrb[0].mxu0
        %v3789 = vpop.f32.mrb[0].mxu0
        %v3790 = vadd.f32 %v3575, %v3789
        %v3791 = vpop.f32.mrb[0].mxu0
        %3792 = vmatprep.mubr.bf16.mxu0 0
        %3793 = vmatmul.mubr.bf16.gmra.mrb[0].mxu0 %v3683
        %v3794 = vpop.f32.mrb[0].mxu0
        %v3795 = vadd.f32 %v3580, %v3794
        %v3796 = vpop.f32.mrb[0].mxu0
        %v3797 = vpop.f32.mrb[0].mxu0
        %v3798 = vadd.f32 %v3583, %v3797
        %v3799 = vpop.f32.mrb[0].mxu0
        %3800 = vmatprep.mubr.bf16.mxu0 0
        %3801 = vmatmul.mubr.bf16.gmra.mrb[0].mxu0 %v3686
        %v3802 = vpop.f32.mrb[0].mxu0
        %v3803 = vadd.f32 %v3588, %v3802
        %v3804 = vpop.f32.mrb[0].mxu0
        %v3805 = vpop.f32.mrb[0].mxu0
        %v3806 = vadd.f32 %v3591, %v3805
        %v3807 = vpop.f32.mrb[0].mxu0
        %3808 = vmatprep.mubr.bf16.mxu0 0
        %3809 = vmatmul.mubr.bf16.gmra.mrb[0].mxu0 %v3689
        %v3810 = vpop.f32.mrb[0].mxu0
        %v3811 = vadd.f32 %v3596, %v3810
        %v3812 = vpop.f32.mrb[0].mxu0
        %v3813 = vpop.f32.mrb[0].mxu0
        %v3814 = vadd.f32 %v3599, %v3813
        %v3815 = vpop.f32.mrb[0].mxu0
        %3816 = vmatprep.mubr.bf16.mxu0 0
        %3817 = vmatmul.mubr.bf16.gmra.mrb[0].mxu0 %v3692
        %v3818 = vpop.f32.mrb[0].mxu0
        %v3819 = vadd.f32 %v3604, %v3818
        %v3820 = vpop.f32.mrb[0].mxu0
        %v3821 = vpop.f32.mrb[0].mxu0
        %v3822 = vadd.f32 %v3607, %v3821
        %v3823 = vpop.f32.mrb[0].mxu0
        %3824 = vmatprep.mubr.bf16.mxu0 0
        %3825 = vmatmul.mubr.bf16.gmra.mrb[0].mxu0 %v3695
        %v3826 = vpop.f32.mrb[0].mxu0
        %v3827 = vadd.f32 %v3612, %v3826
        %v3828 = vpop.f32.mrb[0].mxu0
        %v3829 = vpop.f32.mrb[0].mxu0
        %v3830 = vadd.f32 %v3615, %v3829
        %v3831 = vpop.f32.mrb[0].mxu0
        %3832 = vmatprep.mubr.bf16.mxu0 0
        %3833 = vmatmul.mubr.bf16.gmra.mrb[0].mxu0 %v3698
        %v3834 = vpop.f32.mrb[0].mxu0
        %v3835 = vadd.f32 %v3620, %v3834
        %v3836 = vpop.f32.mrb[0].mxu0
        %v3837 = vpop.f32.mrb[0].mxu0
        %v3838 = vadd.f32 %v3623, %v3837
        %v3839 = vpop.f32.mrb[0].mxu0
        %3840 = vmatprep.mubr.bf16.mxu0 0
        %3841 = vmatmul.mubr.bf16.gmra.mrb[0].mxu0 %v3701
        %v3842 = vpop.f32.mrb[0].mxu0
        %v3843 = vadd.f32 %v3628, %v3842
        %v3844 = vpop.f32.mrb[0].mxu0
        %v3845 = vpop.f32.mrb[0].mxu0
        %v3846 = vadd.f32 %v3631, %v3845
        %v3847 = vpop.f32.mrb[0].mxu0
        %3848 = vmatprep.mubr.bf16.mxu0 0
        %3849 = vmatmul.mubr.bf16.gmra.mrb[0].mxu0 %v3704
        %v3850 = vpop.f32.mrb[0].mxu0
        %v3851 = vadd.f32 %v3636, %v3850
        %v3852 = vpop.f32.mrb[0].mxu0
        %v3853 = vpop.f32.mrb[0].mxu0
        %v3854 = vadd.f32 %v3639, %v3853
        %v3855 = vpop.f32.mrb[0].mxu0
        %3856 = vmatprep.mubr.bf16.mxu0 0
        %3857 = vmatmul.mubr.bf16.gmra.mrb[0].mxu0 %v3707
        %v3858 = vpop.f32.mrb[0].mxu0
        %v3859 = vadd.f32 %v3644, %v3858
        %v3860 = vpop.f32.mrb[0].mxu0
        %v3861 = vpop.f32.mrb[0].mxu0
        %v3862 = vadd.f32 %v3647, %v3861
        %v3863 = vpop.f32.mrb[0].mxu0
        %3864 = vmatprep.mubr.bf16.mxu0 0
        %3865 = vmatmul.mubr.bf16.gmra.mrb[0].mxu0 %v3710
        %v3866 = vpop.f32.mrb[0].mxu0
        %v3867 = vadd.f32 %v3652, %v3866
        %v3868 = vpop.f32.mrb[0].mxu0
        %v3869 = vpop.f32.mrb[0].mxu0
        %v3870 = vadd.f32 %v3655, %v3869
        %v3871 = vpop.f32.mrb[0].mxu0
        %3872 = vdwg.mxu0
        %v3873 = vld [vmem:[#allocation2 + $0x2] sm:$0xff]
        %v3874 = vld [vmem:[#allocation2 + $0xa] sm:$0xff]
        %v3875 = vld [vmem:[#allocation2 + $0x1a] sm:$0xff]
        %v3876 = vld [vmem:[#allocation2 + $0x22] sm:$0xff]
        %v3877 = vld [vmem:[#allocation2 + $0x32] sm:$0xff]
        %v3878 = vld [vmem:[#allocation2 + $0x3a] sm:$0xff]
        %v3879 = vld [vmem:[#allocation2 + $0x4a] sm:$0xff]
        %v3880 = vld [vmem:[#allocation2 + $0x52] sm:$0xff]
        %v3881 = vld [vmem:[#allocation2 + $0x62] sm:$0xff]
        %v3882 = vld [vmem:[#allocation2 + $0x6a] sm:$0xff]
        %v3883 = vld [vmem:[#allocation2 + $0x7a] sm:$0xff]
        %v3884 = vld [vmem:[#allocation2 + $0x82] sm:$0xff]
        %v3885 = vld [vmem:[#allocation2 + $0x92] sm:$0xff]
        %v3886 = vld [vmem:[#allocation2 + $0x9a] sm:$0xff]
        %v3887 = vld [vmem:[#allocation2 + $0xaa] sm:$0xff]
        %v3888 = vld [vmem:[#allocation2 + $0xb2] sm:$0xff]
        %v3889 = vld [vmem:[#allocation2 + $0xc2] sm:$0xff]
        %v3890 = vld [vmem:[#allocation2 + $0xca] sm:$0xff]
        %v3891 = vld [vmem:[#allocation2 + $0xda] sm:$0xff]
        %v3892 = vld [vmem:[#allocation2 + $0xe2] sm:$0xff]
        %v3893 = vld [vmem:[#allocation2 + $0xf2] sm:$0xff]
        %v3894 = vld [vmem:[#allocation2 + $0xfa] sm:$0xff]
        %v3895 = vld [vmem:[#allocation2 + $0x10a] sm:$0xff]
        %v3896 = vld [vmem:[#allocation2 + $0x112] sm:$0xff]
        %v3897 = vld [vmem:[#allocation2 + $0x122] sm:$0xff]
        %v3898 = vld [vmem:[#allocation2 + $0x12a] sm:$0xff]
        %v3899 = vld [vmem:[#allocation2 + $0x13a] sm:$0xff]
        %v3900 = vld [vmem:[#allocation2 + $0x142] sm:$0xff]
        %v3901 = vld [vmem:[#allocation2 + $0x152] sm:$0xff]
        %v3902 = vld [vmem:[#allocation2 + $0x15a] sm:$0xff]
        %v3903 = vld [vmem:[#allocation2 + $0x16a] sm:$0xff]
        %v3904 = vld [vmem:[#allocation2 + $0x172] sm:$0xff]
        %v3905 = vpack.c.bf16 %v3874, %v3873
        %v3906 = vpack.c.bf16 %v3876, %v3875
        %v3907 = vpack.c.bf16 %v3878, %v3877
        %v3908 = vpack.c.bf16 %v3880, %v3879
        %v3909 = vpack.c.bf16 %v3882, %v3881
        %v3910 = vpack.c.bf16 %v3884, %v3883
        %v3911 = vpack.c.bf16 %v3886, %v3885
        %v3912 = vpack.c.bf16 %v3888, %v3887
        %v3913 = vpack.c.bf16 %v3890, %v3889
        %v3914 = vpack.c.bf16 %v3892, %v3891
        %v3915 = vpack.c.bf16 %v3894, %v3893
        %v3916 = vpack.c.bf16 %v3896, %v3895
        %v3917 = vpack.c.bf16 %v3898, %v3897
        %v3918 = vpack.c.bf16 %v3900, %v3899
        %v3919 = vpack.c.bf16 %v3902, %v3901
        %v3920 = vpack.c.bf16 %v3904, %v3903
        %s3921 = scalar_lea.vmem %s3, 16
        %v3922 = vld [vmem:[%s3921] sm:$0xf]
        %v3923 = vld [vmem:[%s3921 + $0x4] sm:$0xf]
        %v3926 = vunpack.c.l.b16 %v3922
        %v3927 = vunpack.c.l.b16 %v3923
        %v3928 = vpack.c.b16 %v3927, %v3926
        %v3931 = vsel %vm454, %v3905, 0
        %v3934 = vsel %vm454, %v3906, 0
        %v3937 = vsel %vm454, %v3907, 0
        %v3940 = vsel %vm454, %v3908, 0
        %v3943 = vsel %vm454, %v3909, 0
        %v3946 = vsel %vm454, %v3910, 0
        %v3949 = vsel %vm454, %v3911, 0
        %v3952 = vsel %vm454, %v3912, 0
        %v3955 = vsel %vm454, %v3913, 0
        %v3958 = vsel %vm454, %v3914, 0
        %v3961 = vsel %vm454, %v3915, 0
        %v3964 = vsel %vm454, %v3916, 0
        %v3967 = vsel %vm454, %v3917, 0
        %v3970 = vsel %vm454, %v3918, 0
        %v3973 = vsel %vm454, %v3919, 0
        %v3976 = vsel %vm454, %v3920, 0
        %3978 = vmatprep.subr.bf16.mxu0 0
        %3979 = vmatpush1.bf16.msra.mxu0 %v3928
        %3980 = vmatprep.subr.bf16.mxu0 0
        %3981 = vmatpush1.bf16.msra.mxu0 0
        %3982 = vmatprep.subr.bf16.mxu0 0
        %3983 = vmatpush1.bf16.msra.mxu0 0
        %3984 = vmatprep.subr.bf16.mxu0 0
        %3985 = vmatpush1.bf16.msra.mxu0 0
        %3986 = vmatprep.subr.bf16.mxu0 0
        %3987 = vmatpush1.bf16.msra.mxu0 0
        %3988 = vmatprep.subr.bf16.mxu0 0
        %3989 = vmatpush1.bf16.msra.mxu0 0
        %3990 = vmatprep.subr.bf16.mxu0 0
        %3991 = vmatpush1.bf16.msra.mxu0 0
        %3992 = vmatprep.subr.bf16.mxu0 0
        %3993 = vmatpush1.bf16.msra.mxu0 0
        %3994 = vmatprep.subr.bf16.mxu0 0
        %3995 = vmatpush1.bf16.msra.mxu0 0
        %3996 = vmatprep.subr.bf16.mxu0 0
        %3997 = vmatpush1.bf16.msra.mxu0 0
        %3998 = vmatprep.subr.bf16.mxu0 0
        %3999 = vmatpush1.bf16.msra.mxu0 0
        %4000 = vmatprep.subr.bf16.mxu0 0
        %4001 = vmatpush1.bf16.msra.mxu0 0
        %4002 = vmatprep.subr.bf16.mxu0 0
        %4003 = vmatpush1.bf16.msra.mxu0 0
        %4004 = vmatprep.subr.bf16.mxu0 0
        %4005 = vmatpush1.bf16.msra.mxu0 0
        %4006 = vmatprep.subr.bf16.mxu0 0
        %4007 = vmatpush1.bf16.msra.mxu0 0
        %4008 = vmatprep.subr.bf16.mxu0 0
        %4009 = vmatpush1.bf16.msra.mxu0 0
        %4010 = vmatprep.mubr.bf16.mxu0 0
        %4011 = vmatmul.mubr.bf16.gmra.mrb[0].mxu0 %v3931
        %v4012 = vpop.f32.mrb[0].mxu0
        %v4013 = vadd.f32 0.0, %v4012
        %v4014 = vpop.f32.mrb[0].mxu0
        %v4015 = vpop.f32.mrb[0].mxu0
        %v4016 = vadd.f32 0.0, %v4015
        %v4017 = vpop.f32.mrb[0].mxu0
        %4018 = vmatprep.mubr.bf16.mxu0 0
        %4019 = vmatmul.mubr.bf16.gmra.mrb[0].mxu0 %v3934
        %v4020 = vpop.f32.mrb[0].mxu0
        %v4021 = vadd.f32 0.0, %v4020
        %v4022 = vpop.f32.mrb[0].mxu0
        %v4023 = vpop.f32.mrb[0].mxu0
        %v4024 = vadd.f32 0.0, %v4023
        %v4025 = vpop.f32.mrb[0].mxu0
        %4026 = vmatprep.mubr.bf16.mxu0 0
        %4027 = vmatmul.mubr.bf16.gmra.mrb[0].mxu0 %v3937
        %v4028 = vpop.f32.mrb[0].mxu0
        %v4029 = vadd.f32 0.0, %v4028
        %v4030 = vpop.f32.mrb[0].mxu0
        %v4031 = vpop.f32.mrb[0].mxu0
        %v4032 = vadd.f32 0.0, %v4031
        %v4033 = vpop.f32.mrb[0].mxu0
        %4034 = vmatprep.mubr.bf16.mxu0 0
        %4035 = vmatmul.mubr.bf16.gmra.mrb[0].mxu0 %v3940
        %v4036 = vpop.f32.mrb[0].mxu0
        %v4037 = vadd.f32 0.0, %v4036
        %v4038 = vpop.f32.mrb[0].mxu0
        %v4039 = vpop.f32.mrb[0].mxu0
        %v4040 = vadd.f32 0.0, %v4039
        %v4041 = vpop.f32.mrb[0].mxu0
        %4042 = vmatprep.mubr.bf16.mxu0 0
        %4043 = vmatmul.mubr.bf16.gmra.mrb[0].mxu0 %v3943
        %v4044 = vpop.f32.mrb[0].mxu0
        %v4045 = vadd.f32 0.0, %v4044
        %v4046 = vpop.f32.mrb[0].mxu0
        %v4047 = vpop.f32.mrb[0].mxu0
        %v4048 = vadd.f32 0.0, %v4047
        %v4049 = vpop.f32.mrb[0].mxu0
        %4050 = vmatprep.mubr.bf16.mxu0 0
        %4051 = vmatmul.mubr.bf16.gmra.mrb[0].mxu0 %v3946
        %v4052 = vpop.f32.mrb[0].mxu0
        %v4053 = vadd.f32 0.0, %v4052
        %v4054 = vpop.f32.mrb[0].mxu0
        %v4055 = vpop.f32.mrb[0].mxu0
        %v4056 = vadd.f32 0.0, %v4055
        %v4057 = vpop.f32.mrb[0].mxu0
        %4058 = vmatprep.mubr.bf16.mxu0 0
        %4059 = vmatmul.mubr.bf16.gmra.mrb[0].mxu0 %v3949
        %v4060 = vpop.f32.mrb[0].mxu0
        %v4061 = vadd.f32 0.0, %v4060
        %v4062 = vpop.f32.mrb[0].mxu0
        %v4063 = vpop.f32.mrb[0].mxu0
        %v4064 = vadd.f32 0.0, %v4063
        %v4065 = vpop.f32.mrb[0].mxu0
        %4066 = vmatprep.mubr.bf16.mxu0 0
        %4067 = vmatmul.mubr.bf16.gmra.mrb[0].mxu0 %v3952
        %v4068 = vpop.f32.mrb[0].mxu0
        %v4069 = vadd.f32 0.0, %v4068
        %v4070 = vpop.f32.mrb[0].mxu0
        %v4071 = vpop.f32.mrb[0].mxu0
        %v4072 = vadd.f32 0.0, %v4071
        %v4073 = vpop.f32.mrb[0].mxu0
        %4074 = vmatprep.mubr.bf16.mxu0 0
        %4075 = vmatmul.mubr.bf16.gmra.mrb[0].mxu0 %v3955
        %v4076 = vpop.f32.mrb[0].mxu0
        %v4077 = vadd.f32 0.0, %v4076
        %v4078 = vpop.f32.mrb[0].mxu0
        %v4079 = vpop.f32.mrb[0].mxu0
        %v4080 = vadd.f32 0.0, %v4079
        %v4081 = vpop.f32.mrb[0].mxu0
        %4082 = vmatprep.mubr.bf16.mxu0 0
        %4083 = vmatmul.mubr.bf16.gmra.mrb[0].mxu0 %v3958
        %v4084 = vpop.f32.mrb[0].mxu0
        %v4085 = vadd.f32 0.0, %v4084
        %v4086 = vpop.f32.mrb[0].mxu0
        %v4087 = vpop.f32.mrb[0].mxu0
        %v4088 = vadd.f32 0.0, %v4087
        %v4089 = vpop.f32.mrb[0].mxu0
        %4090 = vmatprep.mubr.bf16.mxu0 0
        %4091 = vmatmul.mubr.bf16.gmra.mrb[0].mxu0 %v3961
        %v4092 = vpop.f32.mrb[0].mxu0
        %v4093 = vadd.f32 0.0, %v4092
        %v4094 = vpop.f32.mrb[0].mxu0
        %v4095 = vpop.f32.mrb[0].mxu0
        %v4096 = vadd.f32 0.0, %v4095
        %v4097 = vpop.f32.mrb[0].mxu0
        %4098 = vmatprep.mubr.bf16.mxu0 0
        %4099 = vmatmul.mubr.bf16.gmra.mrb[0].mxu0 %v3964
        %v4100 = vpop.f32.mrb[0].mxu0
        %v4101 = vadd.f32 0.0, %v4100
        %v4102 = vpop.f32.mrb[0].mxu0
        %v4103 = vpop.f32.mrb[0].mxu0
        %v4104 = vadd.f32 0.0, %v4103
        %v4105 = vpop.f32.mrb[0].mxu0
        %4106 = vmatprep.mubr.bf16.mxu0 0
        %4107 = vmatmul.mubr.bf16.gmra.mrb[0].mxu0 %v3967
        %v4108 = vpop.f32.mrb[0].mxu0
        %v4109 = vadd.f32 0.0, %v4108
        %v4110 = vpop.f32.mrb[0].mxu0
        %v4111 = vpop.f32.mrb[0].mxu0
        %v4112 = vadd.f32 0.0, %v4111
        %v4113 = vpop.f32.mrb[0].mxu0
        %4114 = vmatprep.mubr.bf16.mxu0 0
        %4115 = vmatmul.mubr.bf16.gmra.mrb[0].mxu0 %v3970
        %v4116 = vpop.f32.mrb[0].mxu0
        %v4117 = vadd.f32 0.0, %v4116
        %v4118 = vpop.f32.mrb[0].mxu0
        %v4119 = vpop.f32.mrb[0].mxu0
        %v4120 = vadd.f32 0.0, %v4119
        %v4121 = vpop.f32.mrb[0].mxu0
        %4122 = vmatprep.mubr.bf16.mxu0 0
        %4123 = vmatmul.mubr.bf16.gmra.mrb[0].mxu0 %v3973
        %v4124 = vpop.f32.mrb[0].mxu0
        %v4125 = vadd.f32 0.0, %v4124
        %v4126 = vpop.f32.mrb[0].mxu0
        %v4127 = vpop.f32.mrb[0].mxu0
        %v4128 = vadd.f32 0.0, %v4127
        %v4129 = vpop.f32.mrb[0].mxu0
        %4130 = vmatprep.mubr.bf16.mxu0 0
        %4131 = vmatmul.mubr.bf16.gmra.mrb[0].mxu0 %v3976
        %v4132 = vpop.f32.mrb[0].mxu0
        %v4133 = vadd.f32 0.0, %v4132
        %v4134 = vpop.f32.mrb[0].mxu0
        %v4135 = vpop.f32.mrb[0].mxu0
        %v4136 = vadd.f32 0.0, %v4135
        %v4137 = vpop.f32.mrb[0].mxu0
        %4138 = vdwg.mxu0
        %v4139 = vadd.f32 %v3747, %v4013
        %v4140 = vadd.f32 %v3750, %v4016
        %v4141 = vadd.f32 %v3755, %v4021
        %v4142 = vadd.f32 %v3758, %v4024
        %v4143 = vadd.f32 %v3763, %v4029
        %v4144 = vadd.f32 %v3766, %v4032
        %v4145 = vadd.f32 %v3771, %v4037
        %v4146 = vadd.f32 %v3774, %v4040
        %v4147 = vadd.f32 %v3779, %v4045
        %v4148 = vadd.f32 %v3782, %v4048
        %v4149 = vadd.f32 %v3787, %v4053
        %v4150 = vadd.f32 %v3790, %v4056
        %v4151 = vadd.f32 %v3795, %v4061
        %v4152 = vadd.f32 %v3798, %v4064
        %v4153 = vadd.f32 %v3803, %v4069
        %v4154 = vadd.f32 %v3806, %v4072
        %v4155 = vadd.f32 %v3811, %v4077
        %v4156 = vadd.f32 %v3814, %v4080
        %v4157 = vadd.f32 %v3819, %v4085
        %v4158 = vadd.f32 %v3822, %v4088
        %v4159 = vadd.f32 %v3827, %v4093
        %v4160 = vadd.f32 %v3830, %v4096
        %v4161 = vadd.f32 %v3835, %v4101
        %v4162 = vadd.f32 %v3838, %v4104
        %v4163 = vadd.f32 %v3843, %v4109
        %v4164 = vadd.f32 %v3846, %v4112
        %v4165 = vadd.f32 %v3851, %v4117
        %v4166 = vadd.f32 %v3854, %v4120
        %v4167 = vadd.f32 %v3859, %v4125
        %v4168 = vadd.f32 %v3862, %v4128
        %v4169 = vadd.f32 %v3867, %v4133
        %v4170 = vadd.f32 %v3870, %v4136
        %v4171 = vld [vmem:[%s588] sm:$0xff]
        %v4172 = vld [vmem:[%s588 + $0x8] sm:$0xff]
        %v4173 = vld [vmem:[%s588 + $0x18] sm:$0xff]
        %v4174 = vld [vmem:[%s588 + $0x20] sm:$0xff]
        %v4175 = vld [vmem:[%s588 + $0x30] sm:$0xff]
        %v4176 = vld [vmem:[%s588 + $0x38] sm:$0xff]
        %v4177 = vld [vmem:[%s588 + $0x48] sm:$0xff]
        %v4178 = vld [vmem:[%s588 + $0x50] sm:$0xff]
        %v4179 = vld [vmem:[%s588 + $0x60] sm:$0xff]
        %v4180 = vld [vmem:[%s588 + $0x68] sm:$0xff]
        %v4181 = vld [vmem:[%s588 + $0x78] sm:$0xff]
        %v4182 = vld [vmem:[%s588 + $0x80] sm:$0xff]
        %v4183 = vld [vmem:[%s588 + $0x90] sm:$0xff]
        %v4184 = vld [vmem:[%s588 + $0x98] sm:$0xff]
        %v4185 = vld [vmem:[%s588 + $0xa8] sm:$0xff]
        %v4186 = vld [vmem:[%s588 + $0xb0] sm:$0xff]
        %v4187 = vld [vmem:[%s588 + $0xc0] sm:$0xff]
        %v4188 = vld [vmem:[%s588 + $0xc8] sm:$0xff]
        %v4189 = vld [vmem:[%s588 + $0xd8] sm:$0xff]
        %v4190 = vld [vmem:[%s588 + $0xe0] sm:$0xff]
        %v4191 = vld [vmem:[%s588 + $0xf0] sm:$0xff]
        %v4192 = vld [vmem:[%s588 + $0xf8] sm:$0xff]
        %v4193 = vld [vmem:[%s588 + $0x108] sm:$0xff]
        %v4194 = vld [vmem:[%s588 + $0x110] sm:$0xff]
        %v4195 = vld [vmem:[%s588 + $0x120] sm:$0xff]
        %v4196 = vld [vmem:[%s588 + $0x128] sm:$0xff]
        %v4197 = vld [vmem:[%s588 + $0x138] sm:$0xff]
        %v4198 = vld [vmem:[%s588 + $0x140] sm:$0xff]
        %v4199 = vld [vmem:[%s588 + $0x150] sm:$0xff]
        %v4200 = vld [vmem:[%s588 + $0x158] sm:$0xff]
        %v4201 = vld [vmem:[%s588 + $0x168] sm:$0xff]
        %v4202 = vld [vmem:[%s588 + $0x170] sm:$0xff]
        %v4203 = vpack.c.bf16 %v4172, %v4171
        %v4204 = vpack.c.bf16 %v4174, %v4173
        %v4205 = vpack.c.bf16 %v4176, %v4175
        %v4206 = vpack.c.bf16 %v4178, %v4177
        %v4207 = vpack.c.bf16 %v4180, %v4179
        %v4208 = vpack.c.bf16 %v4182, %v4181
        %v4209 = vpack.c.bf16 %v4184, %v4183
        %v4210 = vpack.c.bf16 %v4186, %v4185
        %v4211 = vpack.c.bf16 %v4188, %v4187
        %v4212 = vpack.c.bf16 %v4190, %v4189
        %v4213 = vpack.c.bf16 %v4192, %v4191
        %v4214 = vpack.c.bf16 %v4194, %v4193
        %v4215 = vpack.c.bf16 %v4196, %v4195
        %v4216 = vpack.c.bf16 %v4198, %v4197
        %v4217 = vpack.c.bf16 %v4200, %v4199
        %v4218 = vpack.c.bf16 %v4202, %v4201
        %s4219 = scalar_lea.vmem %s3, 24
        %v4220 = vld [vmem:[%s4219] sm:$0xf]
        %v4221 = vld [vmem:[%s4219 + $0x4] sm:$0xf]
        %v4224 = vunpack.c.l.b16 %v4220
        %v4225 = vunpack.c.l.b16 %v4221
        %v4226 = vpack.c.b16 %v4225, %v4224
        %v4229 = vsel %vm454, %v4203, 0
        %v4232 = vsel %vm454, %v4204, 0
        %v4235 = vsel %vm454, %v4205, 0
        %v4238 = vsel %vm454, %v4206, 0
        %v4241 = vsel %vm454, %v4207, 0
        %v4244 = vsel %vm454, %v4208, 0
        %v4247 = vsel %vm454, %v4209, 0
        %v4250 = vsel %vm454, %v4210, 0
        %v4253 = vsel %vm454, %v4211, 0
        %v4256 = vsel %vm454, %v4212, 0
        %v4259 = vsel %vm454, %v4213, 0
        %v4262 = vsel %vm454, %v4214, 0
        %v4265 = vsel %vm454, %v4215, 0
        %v4268 = vsel %vm454, %v4216, 0
        %v4271 = vsel %vm454, %v4217, 0
        %v4274 = vsel %vm454, %v4218, 0
        %4276 = vmatprep.subr.bf16.mxu0 0
        %4277 = vmatpush1.bf16.msra.mxu0 %v4226
        %4278 = vmatprep.subr.bf16.mxu0 0
        %4279 = vmatpush1.bf16.msra.mxu0 0
        %4280 = vmatprep.subr.bf16.mxu0 0
        %4281 = vmatpush1.bf16.msra.mxu0 0
        %4282 = vmatprep.subr.bf16.mxu0 0
        %4283 = vmatpush1.bf16.msra.mxu0 0
        %4284 = vmatprep.subr.bf16.mxu0 0
        %4285 = vmatpush1.bf16.msra.mxu0 0
        %4286 = vmatprep.subr.bf16.mxu0 0
        %4287 = vmatpush1.bf16.msra.mxu0 0
        %4288 = vmatprep.subr.bf16.mxu0 0
        %4289 = vmatpush1.bf16.msra.mxu0 0
        %4290 = vmatprep.subr.bf16.mxu0 0
        %4291 = vmatpush1.bf16.msra.mxu0 0
        %4292 = vmatprep.subr.bf16.mxu0 0
        %4293 = vmatpush1.bf16.msra.mxu0 0
        %4294 = vmatprep.subr.bf16.mxu0 0
        %4295 = vmatpush1.bf16.msra.mxu0 0
        %4296 = vmatprep.subr.bf16.mxu0 0
        %4297 = vmatpush1.bf16.msra.mxu0 0
        %4298 = vmatprep.subr.bf16.mxu0 0
        %4299 = vmatpush1.bf16.msra.mxu0 0
        %4300 = vmatprep.subr.bf16.mxu0 0
        %4301 = vmatpush1.bf16.msra.mxu0 0
        %4302 = vmatprep.subr.bf16.mxu0 0
        %4303 = vmatpush1.bf16.msra.mxu0 0
        %4304 = vmatprep.subr.bf16.mxu0 0
        %4305 = vmatpush1.bf16.msra.mxu0 0
        %4306 = vmatprep.subr.bf16.mxu0 0
        %4307 = vmatpush1.bf16.msra.mxu0 0
        %4308 = vmatprep.mubr.bf16.mxu0 0
        %4309 = vmatmul.mubr.bf16.gmra.mrb[0].mxu0 %v4229
        %v4310 = vpop.f32.mrb[0].mxu0
        %v4311 = vadd.f32 0.0, %v4310
        %v4312 = vpop.f32.mrb[0].mxu0
        %v4313 = vpop.f32.mrb[0].mxu0
        %v4314 = vadd.f32 0.0, %v4313
        %v4315 = vpop.f32.mrb[0].mxu0
        %4316 = vmatprep.mubr.bf16.mxu0 0
        %4317 = vmatmul.mubr.bf16.gmra.mrb[0].mxu0 %v4232
        %v4318 = vpop.f32.mrb[0].mxu0
        %v4319 = vadd.f32 0.0, %v4318
        %v4320 = vpop.f32.mrb[0].mxu0
        %v4321 = vpop.f32.mrb[0].mxu0
        %v4322 = vadd.f32 0.0, %v4321
        %v4323 = vpop.f32.mrb[0].mxu0
        %4324 = vmatprep.mubr.bf16.mxu0 0
        %4325 = vmatmul.mubr.bf16.gmra.mrb[0].mxu0 %v4235
        %v4326 = vpop.f32.mrb[0].mxu0
        %v4327 = vadd.f32 0.0, %v4326
        %v4328 = vpop.f32.mrb[0].mxu0
        %v4329 = vpop.f32.mrb[0].mxu0
        %v4330 = vadd.f32 0.0, %v4329
        %v4331 = vpop.f32.mrb[0].mxu0
        %4332 = vmatprep.mubr.bf16.mxu0 0
        %4333 = vmatmul.mubr.bf16.gmra.mrb[0].mxu0 %v4238
        %v4334 = vpop.f32.mrb[0].mxu0
        %v4335 = vadd.f32 0.0, %v4334
        %v4336 = vpop.f32.mrb[0].mxu0
        %v4337 = vpop.f32.mrb[0].mxu0
        %v4338 = vadd.f32 0.0, %v4337
        %v4339 = vpop.f32.mrb[0].mxu0
        %4340 = vmatprep.mubr.bf16.mxu0 0
        %4341 = vmatmul.mubr.bf16.gmra.mrb[0].mxu0 %v4241
        %v4342 = vpop.f32.mrb[0].mxu0
        %v4343 = vadd.f32 0.0, %v4342
        %v4344 = vpop.f32.mrb[0].mxu0
        %v4345 = vpop.f32.mrb[0].mxu0
        %v4346 = vadd.f32 0.0, %v4345
        %v4347 = vpop.f32.mrb[0].mxu0
        %4348 = vmatprep.mubr.bf16.mxu0 0
        %4349 = vmatmul.mubr.bf16.gmra.mrb[0].mxu0 %v4244
        %v4350 = vpop.f32.mrb[0].mxu0
        %v4351 = vadd.f32 0.0, %v4350
        %v4352 = vpop.f32.mrb[0].mxu0
        %v4353 = vpop.f32.mrb[0].mxu0
        %v4354 = vadd.f32 0.0, %v4353
        %v4355 = vpop.f32.mrb[0].mxu0
        %4356 = vmatprep.mubr.bf16.mxu0 0
        %4357 = vmatmul.mubr.bf16.gmra.mrb[0].mxu0 %v4247
        %v4358 = vpop.f32.mrb[0].mxu0
        %v4359 = vadd.f32 0.0, %v4358
        %v4360 = vpop.f32.mrb[0].mxu0
        %v4361 = vpop.f32.mrb[0].mxu0
        %v4362 = vadd.f32 0.0, %v4361
        %v4363 = vpop.f32.mrb[0].mxu0
        %4364 = vmatprep.mubr.bf16.mxu0 0
        %4365 = vmatmul.mubr.bf16.gmra.mrb[0].mxu0 %v4250
        %v4366 = vpop.f32.mrb[0].mxu0
        %v4367 = vadd.f32 0.0, %v4366
        %v4368 = vpop.f32.mrb[0].mxu0
        %v4369 = vpop.f32.mrb[0].mxu0
        %v4370 = vadd.f32 0.0, %v4369
        %v4371 = vpop.f32.mrb[0].mxu0
        %4372 = vmatprep.mubr.bf16.mxu0 0
        %4373 = vmatmul.mubr.bf16.gmra.mrb[0].mxu0 %v4253
        %v4374 = vpop.f32.mrb[0].mxu0
        %v4375 = vadd.f32 0.0, %v4374
        %v4376 = vpop.f32.mrb[0].mxu0
        %v4377 = vpop.f32.mrb[0].mxu0
        %v4378 = vadd.f32 0.0, %v4377
        %v4379 = vpop.f32.mrb[0].mxu0
        %4380 = vmatprep.mubr.bf16.mxu0 0
        %4381 = vmatmul.mubr.bf16.gmra.mrb[0].mxu0 %v4256
        %v4382 = vpop.f32.mrb[0].mxu0
        %v4383 = vadd.f32 0.0, %v4382
        %v4384 = vpop.f32.mrb[0].mxu0
        %v4385 = vpop.f32.mrb[0].mxu0
        %v4386 = vadd.f32 0.0, %v4385
        %v4387 = vpop.f32.mrb[0].mxu0
        %4388 = vmatprep.mubr.bf16.mxu0 0
        %4389 = vmatmul.mubr.bf16.gmra.mrb[0].mxu0 %v4259
        %v4390 = vpop.f32.mrb[0].mxu0
        %v4391 = vadd.f32 0.0, %v4390
        %v4392 = vpop.f32.mrb[0].mxu0
        %v4393 = vpop.f32.mrb[0].mxu0
        %v4394 = vadd.f32 0.0, %v4393
        %v4395 = vpop.f32.mrb[0].mxu0
        %4396 = vmatprep.mubr.bf16.mxu0 0
        %4397 = vmatmul.mubr.bf16.gmra.mrb[0].mxu0 %v4262
        %v4398 = vpop.f32.mrb[0].mxu0
        %v4399 = vadd.f32 0.0, %v4398
        %v4400 = vpop.f32.mrb[0].mxu0
        %v4401 = vpop.f32.mrb[0].mxu0
        %v4402 = vadd.f32 0.0, %v4401
        %v4403 = vpop.f32.mrb[0].mxu0
        %4404 = vmatprep.mubr.bf16.mxu0 0
        %4405 = vmatmul.mubr.bf16.gmra.mrb[0].mxu0 %v4265
        %v4406 = vpop.f32.mrb[0].mxu0
        %v4407 = vadd.f32 0.0, %v4406
        %v4408 = vpop.f32.mrb[0].mxu0
        %v4409 = vpop.f32.mrb[0].mxu0
        %v4410 = vadd.f32 0.0, %v4409
        %v4411 = vpop.f32.mrb[0].mxu0
        %4412 = vmatprep.mubr.bf16.mxu0 0
        %4413 = vmatmul.mubr.bf16.gmra.mrb[0].mxu0 %v4268
        %v4414 = vpop.f32.mrb[0].mxu0
        %v4415 = vadd.f32 0.0, %v4414
        %v4416 = vpop.f32.mrb[0].mxu0
        %v4417 = vpop.f32.mrb[0].mxu0
        %v4418 = vadd.f32 0.0, %v4417
        %v4419 = vpop.f32.mrb[0].mxu0
        %4420 = vmatprep.mubr.bf16.mxu0 0
        %4421 = vmatmul.mubr.bf16.gmra.mrb[0].mxu0 %v4271
        %v4422 = vpop.f32.mrb[0].mxu0
        %v4423 = vadd.f32 0.0, %v4422
        %v4424 = vpop.f32.mrb[0].mxu0
        %v4425 = vpop.f32.mrb[0].mxu0
        %v4426 = vadd.f32 0.0, %v4425
        %v4427 = vpop.f32.mrb[0].mxu0
        %4428 = vmatprep.mubr.bf16.mxu0 0
        %4429 = vmatmul.mubr.bf16.gmra.mrb[0].mxu0 %v4274
        %v4430 = vpop.f32.mrb[0].mxu0
        %v4431 = vadd.f32 0.0, %v4430
        %v4432 = vpop.f32.mrb[0].mxu0
        %v4433 = vpop.f32.mrb[0].mxu0
        %v4434 = vadd.f32 0.0, %v4433
        %v4435 = vpop.f32.mrb[0].mxu0
        %4436 = vdwg.mxu0
        %v4437 = vadd.f32 %v4139, %v4311
        %v4438 = vadd.f32 %v4140, %v4314
        %v4439 = vadd.f32 %v4141, %v4319
        %v4440 = vadd.f32 %v4142, %v4322
        %v4441 = vadd.f32 %v4143, %v4327
        %v4442 = vadd.f32 %v4144, %v4330
        %v4443 = vadd.f32 %v4145, %v4335
        %v4444 = vadd.f32 %v4146, %v4338
        %v4445 = vadd.f32 %v4147, %v4343
        %v4446 = vadd.f32 %v4148, %v4346
        %v4447 = vadd.f32 %v4149, %v4351
        %v4448 = vadd.f32 %v4150, %v4354
        %v4449 = vadd.f32 %v4151, %v4359
        %v4450 = vadd.f32 %v4152, %v4362
        %v4451 = vadd.f32 %v4153, %v4367
        %v4452 = vadd.f32 %v4154, %v4370
        %v4453 = vadd.f32 %v4155, %v4375
        %v4454 = vadd.f32 %v4156, %v4378
        %v4455 = vadd.f32 %v4157, %v4383
        %v4456 = vadd.f32 %v4158, %v4386
        %v4457 = vadd.f32 %v4159, %v4391
        %v4458 = vadd.f32 %v4160, %v4394
        %v4459 = vadd.f32 %v4161, %v4399
        %v4460 = vadd.f32 %v4162, %v4402
        %v4461 = vadd.f32 %v4163, %v4407
        %v4462 = vadd.f32 %v4164, %v4410
        %v4463 = vadd.f32 %v4165, %v4415
        %v4464 = vadd.f32 %v4166, %v4418
        %v4465 = vadd.f32 %v4167, %v4423
        %v4466 = vadd.f32 %v4168, %v4426
        %v4467 = vadd.f32 %v4169, %v4431
        %v4468 = vadd.f32 %v4170, %v4434
        %v4469 = vld [vmem:[%s588 + $0x1] sm:$0xff]
        %v4470 = vld [vmem:[%s588 + $0x9] sm:$0xff]
        %v4471 = vld [vmem:[%s588 + $0x19] sm:$0xff]
        %v4472 = vld [vmem:[%s588 + $0x21] sm:$0xff]
        %v4473 = vld [vmem:[%s588 + $0x31] sm:$0xff]
        %v4474 = vld [vmem:[%s588 + $0x39] sm:$0xff]
        %v4475 = vld [vmem:[%s588 + $0x49] sm:$0xff]
        %v4476 = vld [vmem:[%s588 + $0x51] sm:$0xff]
        %v4477 = vld [vmem:[%s588 + $0x61] sm:$0xff]
        %v4478 = vld [vmem:[%s588 + $0x69] sm:$0xff]
        %v4479 = vld [vmem:[%s588 + $0x79] sm:$0xff]
        %v4480 = vld [vmem:[%s588 + $0x81] sm:$0xff]
        %v4481 = vld [vmem:[%s588 + $0x91] sm:$0xff]
        %v4482 = vld [vmem:[%s588 + $0x99] sm:$0xff]
        %v4483 = vld [vmem:[%s588 + $0xa9] sm:$0xff]
        %v4484 = vld [vmem:[%s588 + $0xb1] sm:$0xff]
        %v4485 = vld [vmem:[%s588 + $0xc1] sm:$0xff]
        %v4486 = vld [vmem:[%s588 + $0xc9] sm:$0xff]
        %v4487 = vld [vmem:[%s588 + $0xd9] sm:$0xff]
        %v4488 = vld [vmem:[%s588 + $0xe1] sm:$0xff]
        %v4489 = vld [vmem:[%s588 + $0xf1] sm:$0xff]
        %v4490 = vld [vmem:[%s588 + $0xf9] sm:$0xff]
        %v4491 = vld [vmem:[%s588 + $0x109] sm:$0xff]
        %v4492 = vld [vmem:[%s588 + $0x111] sm:$0xff]
        %v4493 = vld [vmem:[%s588 + $0x121] sm:$0xff]
        %v4494 = vld [vmem:[%s588 + $0x129] sm:$0xff]
        %v4495 = vld [vmem:[%s588 + $0x139] sm:$0xff]
        %v4496 = vld [vmem:[%s588 + $0x141] sm:$0xff]
        %v4497 = vld [vmem:[%s588 + $0x151] sm:$0xff]
        %v4498 = vld [vmem:[%s588 + $0x159] sm:$0xff]
        %v4499 = vld [vmem:[%s588 + $0x169] sm:$0xff]
        %v4500 = vld [vmem:[%s588 + $0x171] sm:$0xff]
        %v4501 = vpack.c.bf16 %v4470, %v4469
        %v4502 = vpack.c.bf16 %v4472, %v4471
        %v4503 = vpack.c.bf16 %v4474, %v4473
        %v4504 = vpack.c.bf16 %v4476, %v4475
        %v4505 = vpack.c.bf16 %v4478, %v4477
        %v4506 = vpack.c.bf16 %v4480, %v4479
        %v4507 = vpack.c.bf16 %v4482, %v4481
        %v4508 = vpack.c.bf16 %v4484, %v4483
        %v4509 = vpack.c.bf16 %v4486, %v4485
        %v4510 = vpack.c.bf16 %v4488, %v4487
        %v4511 = vpack.c.bf16 %v4490, %v4489
        %v4512 = vpack.c.bf16 %v4492, %v4491
        %v4513 = vpack.c.bf16 %v4494, %v4493
        %v4514 = vpack.c.bf16 %v4496, %v4495
        %v4515 = vpack.c.bf16 %v4498, %v4497
        %v4516 = vpack.c.bf16 %v4500, %v4499
        %s4517 = scalar_lea.vmem %s3, 32
        %v4518 = vld [vmem:[%s4517] sm:$0xf]
        %v4519 = vld [vmem:[%s4517 + $0x4] sm:$0xf]
        %v4522 = vunpack.c.l.b16 %v4518
        %v4523 = vunpack.c.l.b16 %v4519
        %v4524 = vpack.c.b16 %v4523, %v4522
        %v4527 = vsel %vm454, %v4501, 0
        %v4530 = vsel %vm454, %v4502, 0
        %v4533 = vsel %vm454, %v4503, 0
        %v4536 = vsel %vm454, %v4504, 0
        %v4539 = vsel %vm454, %v4505, 0
        %v4542 = vsel %vm454, %v4506, 0
        %v4545 = vsel %vm454, %v4507, 0
        %v4548 = vsel %vm454, %v4508, 0
        %v4551 = vsel %vm454, %v4509, 0
        %v4554 = vsel %vm454, %v4510, 0
        %v4557 = vsel %vm454, %v4511, 0
        %v4560 = vsel %vm454, %v4512, 0
        %v4563 = vsel %vm454, %v4513, 0
        %v4566 = vsel %vm454, %v4514, 0
        %v4569 = vsel %vm454, %v4515, 0
        %v4572 = vsel %vm454, %v4516, 0
        %4574 = vmatprep.subr.bf16.mxu0 0
        %4575 = vmatpush1.bf16.msra.mxu0 %v4524
        %4576 = vmatprep.subr.bf16.mxu0 0
        %4577 = vmatpush1.bf16.msra.mxu0 0
        %4578 = vmatprep.subr.bf16.mxu0 0
        %4579 = vmatpush1.bf16.msra.mxu0 0
        %4580 = vmatprep.subr.bf16.mxu0 0
        %4581 = vmatpush1.bf16.msra.mxu0 0
        %4582 = vmatprep.subr.bf16.mxu0 0
        %4583 = vmatpush1.bf16.msra.mxu0 0
        %4584 = vmatprep.subr.bf16.mxu0 0
        %4585 = vmatpush1.bf16.msra.mxu0 0
        %4586 = vmatprep.subr.bf16.mxu0 0
        %4587 = vmatpush1.bf16.msra.mxu0 0
        %4588 = vmatprep.subr.bf16.mxu0 0
        %4589 = vmatpush1.bf16.msra.mxu0 0
        %4590 = vmatprep.subr.bf16.mxu0 0
        %4591 = vmatpush1.bf16.msra.mxu0 0
        %4592 = vmatprep.subr.bf16.mxu0 0
        %4593 = vmatpush1.bf16.msra.mxu0 0
        %4594 = vmatprep.subr.bf16.mxu0 0
        %4595 = vmatpush1.bf16.msra.mxu0 0
        %4596 = vmatprep.subr.bf16.mxu0 0
        %4597 = vmatpush1.bf16.msra.mxu0 0
        %4598 = vmatprep.subr.bf16.mxu0 0
        %4599 = vmatpush1.bf16.msra.mxu0 0
        %4600 = vmatprep.subr.bf16.mxu0 0
        %4601 = vmatpush1.bf16.msra.mxu0 0
        %4602 = vmatprep.subr.bf16.mxu0 0
        %4603 = vmatpush1.bf16.msra.mxu0 0
        %4604 = vmatprep.subr.bf16.mxu0 0
        %4605 = vmatpush1.bf16.msra.mxu0 0
        %4606 = vmatprep.mubr.bf16.mxu0 0
        %4607 = vmatmul.mubr.bf16.gmra.mrb[0].mxu0 %v4527
        %v4608 = vpop.f32.mrb[0].mxu0
        %v4609 = vadd.f32 0.0, %v4608
        %v4610 = vpop.f32.mrb[0].mxu0
        %v4611 = vpop.f32.mrb[0].mxu0
        %v4612 = vadd.f32 0.0, %v4611
        %v4613 = vpop.f32.mrb[0].mxu0
        %4614 = vmatprep.mubr.bf16.mxu0 0
        %4615 = vmatmul.mubr.bf16.gmra.mrb[0].mxu0 %v4530
        %v4616 = vpop.f32.mrb[0].mxu0
        %v4617 = vadd.f32 0.0, %v4616
        %v4618 = vpop.f32.mrb[0].mxu0
        %v4619 = vpop.f32.mrb[0].mxu0
        %v4620 = vadd.f32 0.0, %v4619
        %v4621 = vpop.f32.mrb[0].mxu0
        %4622 = vmatprep.mubr.bf16.mxu0 0
        %4623 = vmatmul.mubr.bf16.gmra.mrb[0].mxu0 %v4533
        %v4624 = vpop.f32.mrb[0].mxu0
        %v4625 = vadd.f32 0.0, %v4624
        %v4626 = vpop.f32.mrb[0].mxu0
        %v4627 = vpop.f32.mrb[0].mxu0
        %v4628 = vadd.f32 0.0, %v4627
        %v4629 = vpop.f32.mrb[0].mxu0
        %4630 = vmatprep.mubr.bf16.mxu0 0
        %4631 = vmatmul.mubr.bf16.gmra.mrb[0].mxu0 %v4536
        %v4632 = vpop.f32.mrb[0].mxu0
        %v4633 = vadd.f32 0.0, %v4632
        %v4634 = vpop.f32.mrb[0].mxu0
        %v4635 = vpop.f32.mrb[0].mxu0
        %v4636 = vadd.f32 0.0, %v4635
        %v4637 = vpop.f32.mrb[0].mxu0
        %4638 = vmatprep.mubr.bf16.mxu0 0
        %4639 = vmatmul.mubr.bf16.gmra.mrb[0].mxu0 %v4539
        %v4640 = vpop.f32.mrb[0].mxu0
        %v4641 = vadd.f32 0.0, %v4640
        %v4642 = vpop.f32.mrb[0].mxu0
        %v4643 = vpop.f32.mrb[0].mxu0
        %v4644 = vadd.f32 0.0, %v4643
        %v4645 = vpop.f32.mrb[0].mxu0
        %4646 = vmatprep.mubr.bf16.mxu0 0
        %4647 = vmatmul.mubr.bf16.gmra.mrb[0].mxu0 %v4542
        %v4648 = vpop.f32.mrb[0].mxu0
        %v4649 = vadd.f32 0.0, %v4648
        %v4650 = vpop.f32.mrb[0].mxu0
        %v4651 = vpop.f32.mrb[0].mxu0
        %v4652 = vadd.f32 0.0, %v4651
        %v4653 = vpop.f32.mrb[0].mxu0
        %4654 = vmatprep.mubr.bf16.mxu0 0
        %4655 = vmatmul.mubr.bf16.gmra.mrb[0].mxu0 %v4545
        %v4656 = vpop.f32.mrb[0].mxu0
        %v4657 = vadd.f32 0.0, %v4656
        %v4658 = vpop.f32.mrb[0].mxu0
        %v4659 = vpop.f32.mrb[0].mxu0
        %v4660 = vadd.f32 0.0, %v4659
        %v4661 = vpop.f32.mrb[0].mxu0
        %4662 = vmatprep.mubr.bf16.mxu0 0
        %4663 = vmatmul.mubr.bf16.gmra.mrb[0].mxu0 %v4548
        %v4664 = vpop.f32.mrb[0].mxu0
        %v4665 = vadd.f32 0.0, %v4664
        %v4666 = vpop.f32.mrb[0].mxu0
        %v4667 = vpop.f32.mrb[0].mxu0
        %v4668 = vadd.f32 0.0, %v4667
        %v4669 = vpop.f32.mrb[0].mxu0
        %4670 = vmatprep.mubr.bf16.mxu0 0
        %4671 = vmatmul.mubr.bf16.gmra.mrb[0].mxu0 %v4551
        %v4672 = vpop.f32.mrb[0].mxu0
        %v4673 = vadd.f32 0.0, %v4672
        %v4674 = vpop.f32.mrb[0].mxu0
        %v4675 = vpop.f32.mrb[0].mxu0
        %v4676 = vadd.f32 0.0, %v4675
        %v4677 = vpop.f32.mrb[0].mxu0
        %4678 = vmatprep.mubr.bf16.mxu0 0
        %4679 = vmatmul.mubr.bf16.gmra.mrb[0].mxu0 %v4554
        %v4680 = vpop.f32.mrb[0].mxu0
        %v4681 = vadd.f32 0.0, %v4680
        %v4682 = vpop.f32.mrb[0].mxu0
        %v4683 = vpop.f32.mrb[0].mxu0
        %v4684 = vadd.f32 0.0, %v4683
        %v4685 = vpop.f32.mrb[0].mxu0
        %4686 = vmatprep.mubr.bf16.mxu0 0
        %4687 = vmatmul.mubr.bf16.gmra.mrb[0].mxu0 %v4557
        %v4688 = vpop.f32.mrb[0].mxu0
        %v4689 = vadd.f32 0.0, %v4688
        %v4690 = vpop.f32.mrb[0].mxu0
        %v4691 = vpop.f32.mrb[0].mxu0
        %v4692 = vadd.f32 0.0, %v4691
        %v4693 = vpop.f32.mrb[0].mxu0
        %4694 = vmatprep.mubr.bf16.mxu0 0
        %4695 = vmatmul.mubr.bf16.gmra.mrb[0].mxu0 %v4560
        %v4696 = vpop.f32.mrb[0].mxu0
        %v4697 = vadd.f32 0.0, %v4696
        %v4698 = vpop.f32.mrb[0].mxu0
        %v4699 = vpop.f32.mrb[0].mxu0
        %v4700 = vadd.f32 0.0, %v4699
        %v4701 = vpop.f32.mrb[0].mxu0
        %4702 = vmatprep.mubr.bf16.mxu0 0
        %4703 = vmatmul.mubr.bf16.gmra.mrb[0].mxu0 %v4563
        %v4704 = vpop.f32.mrb[0].mxu0
        %v4705 = vadd.f32 0.0, %v4704
        %v4706 = vpop.f32.mrb[0].mxu0
        %v4707 = vpop.f32.mrb[0].mxu0
        %v4708 = vadd.f32 0.0, %v4707
        %v4709 = vpop.f32.mrb[0].mxu0
        %4710 = vmatprep.mubr.bf16.mxu0 0
        %4711 = vmatmul.mubr.bf16.gmra.mrb[0].mxu0 %v4566
        %v4712 = vpop.f32.mrb[0].mxu0
        %v4713 = vadd.f32 0.0, %v4712
        %v4714 = vpop.f32.mrb[0].mxu0
        %v4715 = vpop.f32.mrb[0].mxu0
        %v4716 = vadd.f32 0.0, %v4715
        %v4717 = vpop.f32.mrb[0].mxu0
        %4718 = vmatprep.mubr.bf16.mxu0 0
        %4719 = vmatmul.mubr.bf16.gmra.mrb[0].mxu0 %v4569
        %v4720 = vpop.f32.mrb[0].mxu0
        %v4721 = vadd.f32 0.0, %v4720
        %v4722 = vpop.f32.mrb[0].mxu0
        %v4723 = vpop.f32.mrb[0].mxu0
        %v4724 = vadd.f32 0.0, %v4723
        %v4725 = vpop.f32.mrb[0].mxu0
        %4726 = vmatprep.mubr.bf16.mxu0 0
        %4727 = vmatmul.mubr.bf16.gmra.mrb[0].mxu0 %v4572
        %v4728 = vpop.f32.mrb[0].mxu0
        %v4729 = vadd.f32 0.0, %v4728
        %v4730 = vpop.f32.mrb[0].mxu0
        %v4731 = vpop.f32.mrb[0].mxu0
        %v4732 = vadd.f32 0.0, %v4731
        %v4733 = vpop.f32.mrb[0].mxu0
        %4734 = vdwg.mxu0
        %v4735 = vadd.f32 %v4437, %v4609
        %v4736 = vadd.f32 %v4438, %v4612
        %v4737 = vadd.f32 %v4439, %v4617
        %v4738 = vadd.f32 %v4440, %v4620
        %v4739 = vadd.f32 %v4441, %v4625
        %v4740 = vadd.f32 %v4442, %v4628
        %v4741 = vadd.f32 %v4443, %v4633
        %v4742 = vadd.f32 %v4444, %v4636
        %v4743 = vadd.f32 %v4445, %v4641
        %v4744 = vadd.f32 %v4446, %v4644
        %v4745 = vadd.f32 %v4447, %v4649
        %v4746 = vadd.f32 %v4448, %v4652
        %v4747 = vadd.f32 %v4449, %v4657
        %v4748 = vadd.f32 %v4450, %v4660
        %v4749 = vadd.f32 %v4451, %v4665
        %v4750 = vadd.f32 %v4452, %v4668
        %v4751 = vadd.f32 %v4453, %v4673
        %v4752 = vadd.f32 %v4454, %v4676
        %v4753 = vadd.f32 %v4455, %v4681
        %v4754 = vadd.f32 %v4456, %v4684
        %v4755 = vadd.f32 %v4457, %v4689
        %v4756 = vadd.f32 %v4458, %v4692
        %v4757 = vadd.f32 %v4459, %v4697
        %v4758 = vadd.f32 %v4460, %v4700
        %v4759 = vadd.f32 %v4461, %v4705
        %v4760 = vadd.f32 %v4462, %v4708
        %v4761 = vadd.f32 %v4463, %v4713
        %v4762 = vadd.f32 %v4464, %v4716
        %v4763 = vadd.f32 %v4465, %v4721
        %v4764 = vadd.f32 %v4466, %v4724
        %v4765 = vadd.f32 %v4467, %v4729
        %v4766 = vadd.f32 %v4468, %v4732
        %v4767 = vld [vmem:[%s588 + $0x2] sm:$0xff]
        %v4768 = vld [vmem:[%s588 + $0xa] sm:$0xff]
        %v4769 = vld [vmem:[%s588 + $0x1a] sm:$0xff]
        %v4770 = vld [vmem:[%s588 + $0x22] sm:$0xff]
        %v4771 = vld [vmem:[%s588 + $0x32] sm:$0xff]
        %v4772 = vld [vmem:[%s588 + $0x3a] sm:$0xff]
        %v4773 = vld [vmem:[%s588 + $0x4a] sm:$0xff]
        %v4774 = vld [vmem:[%s588 + $0x52] sm:$0xff]
        %v4775 = vld [vmem:[%s588 + $0x62] sm:$0xff]
        %v4776 = vld [vmem:[%s588 + $0x6a] sm:$0xff]
        %v4777 = vld [vmem:[%s588 + $0x7a] sm:$0xff]
        %v4778 = vld [vmem:[%s588 + $0x82] sm:$0xff]
        %v4779 = vld [vmem:[%s588 + $0x92] sm:$0xff]
        %v4780 = vld [vmem:[%s588 + $0x9a] sm:$0xff]
        %v4781 = vld [vmem:[%s588 + $0xaa] sm:$0xff]
        %v4782 = vld [vmem:[%s588 + $0xb2] sm:$0xff]
        %v4783 = vld [vmem:[%s588 + $0xc2] sm:$0xff]
        %v4784 = vld [vmem:[%s588 + $0xca] sm:$0xff]
        %v4785 = vld [vmem:[%s588 + $0xda] sm:$0xff]
        %v4786 = vld [vmem:[%s588 + $0xe2] sm:$0xff]
        %v4787 = vld [vmem:[%s588 + $0xf2] sm:$0xff]
        %v4788 = vld [vmem:[%s588 + $0xfa] sm:$0xff]
        %v4789 = vld [vmem:[%s588 + $0x10a] sm:$0xff]
        %v4790 = vld [vmem:[%s588 + $0x112] sm:$0xff]
        %v4791 = vld [vmem:[%s588 + $0x122] sm:$0xff]
        %v4792 = vld [vmem:[%s588 + $0x12a] sm:$0xff]
        %v4793 = vld [vmem:[%s588 + $0x13a] sm:$0xff]
        %v4794 = vld [vmem:[%s588 + $0x142] sm:$0xff]
        %v4795 = vld [vmem:[%s588 + $0x152] sm:$0xff]
        %v4796 = vld [vmem:[%s588 + $0x15a] sm:$0xff]
        %v4797 = vld [vmem:[%s588 + $0x16a] sm:$0xff]
        %v4798 = vld [vmem:[%s588 + $0x172] sm:$0xff]
        %v4799 = vpack.c.bf16 %v4768, %v4767
        %v4800 = vpack.c.bf16 %v4770, %v4769
        %v4801 = vpack.c.bf16 %v4772, %v4771
        %v4802 = vpack.c.bf16 %v4774, %v4773
        %v4803 = vpack.c.bf16 %v4776, %v4775
        %v4804 = vpack.c.bf16 %v4778, %v4777
        %v4805 = vpack.c.bf16 %v4780, %v4779
        %v4806 = vpack.c.bf16 %v4782, %v4781
        %v4807 = vpack.c.bf16 %v4784, %v4783
        %v4808 = vpack.c.bf16 %v4786, %v4785
        %v4809 = vpack.c.bf16 %v4788, %v4787
        %v4810 = vpack.c.bf16 %v4790, %v4789
        %v4811 = vpack.c.bf16 %v4792, %v4791
        %v4812 = vpack.c.bf16 %v4794, %v4793
        %v4813 = vpack.c.bf16 %v4796, %v4795
        %v4814 = vpack.c.bf16 %v4798, %v4797
        %s4815 = scalar_lea.vmem %s3, 40
        %v4816 = vld [vmem:[%s4815] sm:$0xf]
        %v4817 = vld [vmem:[%s4815 + $0x4] sm:$0xf]
        %v4820 = vunpack.c.l.b16 %v4816
        %v4821 = vunpack.c.l.b16 %v4817
        %v4822 = vpack.c.b16 %v4821, %v4820
        %v4825 = vsel %vm454, %v4799, 0
        %v4828 = vsel %vm454, %v4800, 0
        %v4831 = vsel %vm454, %v4801, 0
        %v4834 = vsel %vm454, %v4802, 0
        %v4837 = vsel %vm454, %v4803, 0
        %v4840 = vsel %vm454, %v4804, 0
        %v4843 = vsel %vm454, %v4805, 0
        %v4846 = vsel %vm454, %v4806, 0
        %v4849 = vsel %vm454, %v4807, 0
        %v4852 = vsel %vm454, %v4808, 0
        %v4855 = vsel %vm454, %v4809, 0
        %v4858 = vsel %vm454, %v4810, 0
        %v4861 = vsel %vm454, %v4811, 0
        %v4864 = vsel %vm454, %v4812, 0
        %v4867 = vsel %vm454, %v4813, 0
        %v4870 = vsel %vm454, %v4814, 0
        %4872 = vmatprep.subr.bf16.mxu0 0
        %4873 = vmatpush1.bf16.msra.mxu0 %v4822
        %4874 = vmatprep.subr.bf16.mxu0 0
        %4875 = vmatpush1.bf16.msra.mxu0 0
        %4876 = vmatprep.subr.bf16.mxu0 0
        %4877 = vmatpush1.bf16.msra.mxu0 0
        %4878 = vmatprep.subr.bf16.mxu0 0
        %4879 = vmatpush1.bf16.msra.mxu0 0
        %4880 = vmatprep.subr.bf16.mxu0 0
        %4881 = vmatpush1.bf16.msra.mxu0 0
        %4882 = vmatprep.subr.bf16.mxu0 0
        %4883 = vmatpush1.bf16.msra.mxu0 0
        %4884 = vmatprep.subr.bf16.mxu0 0
        %4885 = vmatpush1.bf16.msra.mxu0 0
        %4886 = vmatprep.subr.bf16.mxu0 0
        %4887 = vmatpush1.bf16.msra.mxu0 0
        %4888 = vmatprep.subr.bf16.mxu0 0
        %4889 = vmatpush1.bf16.msra.mxu0 0
        %4890 = vmatprep.subr.bf16.mxu0 0
        %4891 = vmatpush1.bf16.msra.mxu0 0
        %4892 = vmatprep.subr.bf16.mxu0 0
        %4893 = vmatpush1.bf16.msra.mxu0 0
        %4894 = vmatprep.subr.bf16.mxu0 0
        %4895 = vmatpush1.bf16.msra.mxu0 0
        %4896 = vmatprep.subr.bf16.mxu0 0
        %4897 = vmatpush1.bf16.msra.mxu0 0
        %4898 = vmatprep.subr.bf16.mxu0 0
        %4899 = vmatpush1.bf16.msra.mxu0 0
        %4900 = vmatprep.subr.bf16.mxu0 0
        %4901 = vmatpush1.bf16.msra.mxu0 0
        %4902 = vmatprep.subr.bf16.mxu0 0
        %4903 = vmatpush1.bf16.msra.mxu0 0
        %4904 = vmatprep.mubr.bf16.mxu0 0
        %4905 = vmatmul.mubr.bf16.gmra.mrb[0].mxu0 %v4825
        %v4906 = vpop.f32.mrb[0].mxu0
        %v4907 = vadd.f32 0.0, %v4906
        %v4908 = vpop.f32.mrb[0].mxu0
        %v4909 = vpop.f32.mrb[0].mxu0
        %v4910 = vadd.f32 0.0, %v4909
        %v4911 = vpop.f32.mrb[0].mxu0
        %4912 = vmatprep.mubr.bf16.mxu0 0
        %4913 = vmatmul.mubr.bf16.gmra.mrb[0].mxu0 %v4828
        %v4914 = vpop.f32.mrb[0].mxu0
        %v4915 = vadd.f32 0.0, %v4914
        %v4916 = vpop.f32.mrb[0].mxu0
        %v4917 = vpop.f32.mrb[0].mxu0
        %v4918 = vadd.f32 0.0, %v4917
        %v4919 = vpop.f32.mrb[0].mxu0
        %4920 = vmatprep.mubr.bf16.mxu0 0
        %4921 = vmatmul.mubr.bf16.gmra.mrb[0].mxu0 %v4831
        %v4922 = vpop.f32.mrb[0].mxu0
        %v4923 = vadd.f32 0.0, %v4922
        %v4924 = vpop.f32.mrb[0].mxu0
        %v4925 = vpop.f32.mrb[0].mxu0
        %v4926 = vadd.f32 0.0, %v4925
        %v4927 = vpop.f32.mrb[0].mxu0
        %4928 = vmatprep.mubr.bf16.mxu0 0
        %4929 = vmatmul.mubr.bf16.gmra.mrb[0].mxu0 %v4834
        %v4930 = vpop.f32.mrb[0].mxu0
        %v4931 = vadd.f32 0.0, %v4930
        %v4932 = vpop.f32.mrb[0].mxu0
        %v4933 = vpop.f32.mrb[0].mxu0
        %v4934 = vadd.f32 0.0, %v4933
        %v4935 = vpop.f32.mrb[0].mxu0
        %4936 = vmatprep.mubr.bf16.mxu0 0
        %4937 = vmatmul.mubr.bf16.gmra.mrb[0].mxu0 %v4837
        %v4938 = vpop.f32.mrb[0].mxu0
        %v4939 = vadd.f32 0.0, %v4938
        %v4940 = vpop.f32.mrb[0].mxu0
        %v4941 = vpop.f32.mrb[0].mxu0
        %v4942 = vadd.f32 0.0, %v4941
        %v4943 = vpop.f32.mrb[0].mxu0
        %4944 = vmatprep.mubr.bf16.mxu0 0
        %4945 = vmatmul.mubr.bf16.gmra.mrb[0].mxu0 %v4840
        %v4946 = vpop.f32.mrb[0].mxu0
        %v4947 = vadd.f32 0.0, %v4946
        %v4948 = vpop.f32.mrb[0].mxu0
        %v4949 = vpop.f32.mrb[0].mxu0
        %v4950 = vadd.f32 0.0, %v4949
        %v4951 = vpop.f32.mrb[0].mxu0
        %4952 = vmatprep.mubr.bf16.mxu0 0
        %4953 = vmatmul.mubr.bf16.gmra.mrb[0].mxu0 %v4843
        %v4954 = vpop.f32.mrb[0].mxu0
        %v4955 = vadd.f32 0.0, %v4954
        %v4956 = vpop.f32.mrb[0].mxu0
        %v4957 = vpop.f32.mrb[0].mxu0
        %v4958 = vadd.f32 0.0, %v4957
        %v4959 = vpop.f32.mrb[0].mxu0
        %4960 = vmatprep.mubr.bf16.mxu0 0
        %4961 = vmatmul.mubr.bf16.gmra.mrb[0].mxu0 %v4846
        %v4962 = vpop.f32.mrb[0].mxu0
        %v4963 = vadd.f32 0.0, %v4962
        %v4964 = vpop.f32.mrb[0].mxu0
        %v4965 = vpop.f32.mrb[0].mxu0
        %v4966 = vadd.f32 0.0, %v4965
        %v4967 = vpop.f32.mrb[0].mxu0
        %4968 = vmatprep.mubr.bf16.mxu0 0
        %4969 = vmatmul.mubr.bf16.gmra.mrb[0].mxu0 %v4849
        %v4970 = vpop.f32.mrb[0].mxu0
        %v4971 = vadd.f32 0.0, %v4970
        %v4972 = vpop.f32.mrb[0].mxu0
        %v4973 = vpop.f32.mrb[0].mxu0
        %v4974 = vadd.f32 0.0, %v4973
        %v4975 = vpop.f32.mrb[0].mxu0
        %4976 = vmatprep.mubr.bf16.mxu0 0
        %4977 = vmatmul.mubr.bf16.gmra.mrb[0].mxu0 %v4852
        %v4978 = vpop.f32.mrb[0].mxu0
        %v4979 = vadd.f32 0.0, %v4978
        %v4980 = vpop.f32.mrb[0].mxu0
        %v4981 = vpop.f32.mrb[0].mxu0
        %v4982 = vadd.f32 0.0, %v4981
        %v4983 = vpop.f32.mrb[0].mxu0
        %4984 = vmatprep.mubr.bf16.mxu0 0
        %4985 = vmatmul.mubr.bf16.gmra.mrb[0].mxu0 %v4855
        %v4986 = vpop.f32.mrb[0].mxu0
        %v4987 = vadd.f32 0.0, %v4986
        %v4988 = vpop.f32.mrb[0].mxu0
        %v4989 = vpop.f32.mrb[0].mxu0
        %v4990 = vadd.f32 0.0, %v4989
        %v4991 = vpop.f32.mrb[0].mxu0
        %4992 = vmatprep.mubr.bf16.mxu0 0
        %4993 = vmatmul.mubr.bf16.gmra.mrb[0].mxu0 %v4858
        %v4994 = vpop.f32.mrb[0].mxu0
        %v4995 = vadd.f32 0.0, %v4994
        %v4996 = vpop.f32.mrb[0].mxu0
        %v4997 = vpop.f32.mrb[0].mxu0
        %v4998 = vadd.f32 0.0, %v4997
        %v4999 = vpop.f32.mrb[0].mxu0
        %5000 = vmatprep.mubr.bf16.mxu0 0
        %5001 = vmatmul.mubr.bf16.gmra.mrb[0].mxu0 %v4861
        %v5002 = vpop.f32.mrb[0].mxu0
        %v5003 = vadd.f32 0.0, %v5002
        %v5004 = vpop.f32.mrb[0].mxu0
        %v5005 = vpop.f32.mrb[0].mxu0
        %v5006 = vadd.f32 0.0, %v5005
        %v5007 = vpop.f32.mrb[0].mxu0
        %5008 = vmatprep.mubr.bf16.mxu0 0
        %5009 = vmatmul.mubr.bf16.gmra.mrb[0].mxu0 %v4864
        %v5010 = vpop.f32.mrb[0].mxu0
        %v5011 = vadd.f32 0.0, %v5010
        %v5012 = vpop.f32.mrb[0].mxu0
        %v5013 = vpop.f32.mrb[0].mxu0
        %v5014 = vadd.f32 0.0, %v5013
        %v5015 = vpop.f32.mrb[0].mxu0
        %5016 = vmatprep.mubr.bf16.mxu0 0
        %5017 = vmatmul.mubr.bf16.gmra.mrb[0].mxu0 %v4867
        %v5018 = vpop.f32.mrb[0].mxu0
        %v5019 = vadd.f32 0.0, %v5018
        %v5020 = vpop.f32.mrb[0].mxu0
        %v5021 = vpop.f32.mrb[0].mxu0
        %v5022 = vadd.f32 0.0, %v5021
        %v5023 = vpop.f32.mrb[0].mxu0
        %5024 = vmatprep.mubr.bf16.mxu0 0
        %5025 = vmatmul.mubr.bf16.gmra.mrb[0].mxu0 %v4870
        %v5026 = vpop.f32.mrb[0].mxu0
        %v5027 = vadd.f32 0.0, %v5026
        %v5028 = vpop.f32.mrb[0].mxu0
        %v5029 = vpop.f32.mrb[0].mxu0
        %v5030 = vadd.f32 0.0, %v5029
        %v5031 = vpop.f32.mrb[0].mxu0
        %5032 = vdwg.mxu0
        %v5033 = vadd.f32 %v4735, %v4907
        %v5034 = vadd.f32 %v4736, %v4910
        %v5035 = vadd.f32 %v4737, %v4915
        %v5036 = vadd.f32 %v4738, %v4918
        %v5037 = vadd.f32 %v4739, %v4923
        %v5038 = vadd.f32 %v4740, %v4926
        %v5039 = vadd.f32 %v4741, %v4931
        %v5040 = vadd.f32 %v4742, %v4934
        %v5041 = vadd.f32 %v4743, %v4939
        %v5042 = vadd.f32 %v4744, %v4942
        %v5043 = vadd.f32 %v4745, %v4947
        %v5044 = vadd.f32 %v4746, %v4950
        %v5045 = vadd.f32 %v4747, %v4955
        %v5046 = vadd.f32 %v4748, %v4958
        %v5047 = vadd.f32 %v4749, %v4963
        %v5048 = vadd.f32 %v4750, %v4966
        %v5049 = vadd.f32 %v4751, %v4971
        %v5050 = vadd.f32 %v4752, %v4974
        %v5051 = vadd.f32 %v4753, %v4979
        %v5052 = vadd.f32 %v4754, %v4982
        %v5053 = vadd.f32 %v4755, %v4987
        %v5054 = vadd.f32 %v4756, %v4990
        %v5055 = vadd.f32 %v4757, %v4995
        %v5056 = vadd.f32 %v4758, %v4998
        %v5057 = vadd.f32 %v4759, %v5003
        %v5058 = vadd.f32 %v4760, %v5006
        %v5059 = vadd.f32 %v4761, %v5011
        %v5060 = vadd.f32 %v4762, %v5014
        %v5061 = vadd.f32 %v4763, %v5019
        %v5062 = vadd.f32 %v4764, %v5022
        %v5063 = vadd.f32 %v4765, %v5027
        %v5064 = vadd.f32 %v4766, %v5030
        %v5065 = vld [vmem:[%s2344] sm:$0xff]
        %v5066 = vld [vmem:[%s2344 + $0x8] sm:$0xff]
        %v5067 = vld [vmem:[%s2344 + $0x18] sm:$0xff]
        %v5068 = vld [vmem:[%s2344 + $0x20] sm:$0xff]
        %v5069 = vld [vmem:[%s2344 + $0x30] sm:$0xff]
        %v5070 = vld [vmem:[%s2344 + $0x38] sm:$0xff]
        %v5071 = vld [vmem:[%s2344 + $0x48] sm:$0xff]
        %v5072 = vld [vmem:[%s2344 + $0x50] sm:$0xff]
        %v5073 = vld [vmem:[%s2344 + $0x60] sm:$0xff]
        %v5074 = vld [vmem:[%s2344 + $0x68] sm:$0xff]
        %v5075 = vld [vmem:[%s2344 + $0x78] sm:$0xff]
        %v5076 = vld [vmem:[%s2344 + $0x80] sm:$0xff]
        %v5077 = vld [vmem:[%s2344 + $0x90] sm:$0xff]
        %v5078 = vld [vmem:[%s2344 + $0x98] sm:$0xff]
        %v5079 = vld [vmem:[%s2344 + $0xa8] sm:$0xff]
        %v5080 = vld [vmem:[%s2344 + $0xb0] sm:$0xff]
        %v5081 = vld [vmem:[%s2344 + $0xc0] sm:$0xff]
        %v5082 = vld [vmem:[%s2344 + $0xc8] sm:$0xff]
        %v5083 = vld [vmem:[%s2344 + $0xd8] sm:$0xff]
        %v5084 = vld [vmem:[%s2344 + $0xe0] sm:$0xff]
        %v5085 = vld [vmem:[%s2344 + $0xf0] sm:$0xff]
        %v5086 = vld [vmem:[%s2344 + $0xf8] sm:$0xff]
        %v5087 = vld [vmem:[%s2344 + $0x108] sm:$0xff]
        %v5088 = vld [vmem:[%s2344 + $0x110] sm:$0xff]
        %v5089 = vld [vmem:[%s2344 + $0x120] sm:$0xff]
        %v5090 = vld [vmem:[%s2344 + $0x128] sm:$0xff]
        %v5091 = vld [vmem:[%s2344 + $0x138] sm:$0xff]
        %v5092 = vld [vmem:[%s2344 + $0x140] sm:$0xff]
        %v5093 = vld [vmem:[%s2344 + $0x150] sm:$0xff]
        %v5094 = vld [vmem:[%s2344 + $0x158] sm:$0xff]
        %v5095 = vld [vmem:[%s2344 + $0x168] sm:$0xff]
        %v5096 = vld [vmem:[%s2344 + $0x170] sm:$0xff]
        %v5097 = vpack.c.bf16 %v5066, %v5065
        %v5098 = vpack.c.bf16 %v5068, %v5067
        %v5099 = vpack.c.bf16 %v5070, %v5069
        %v5100 = vpack.c.bf16 %v5072, %v5071
        %v5101 = vpack.c.bf16 %v5074, %v5073
        %v5102 = vpack.c.bf16 %v5076, %v5075
        %v5103 = vpack.c.bf16 %v5078, %v5077
        %v5104 = vpack.c.bf16 %v5080, %v5079
        %v5105 = vpack.c.bf16 %v5082, %v5081
        %v5106 = vpack.c.bf16 %v5084, %v5083
        %v5107 = vpack.c.bf16 %v5086, %v5085
        %v5108 = vpack.c.bf16 %v5088, %v5087
        %v5109 = vpack.c.bf16 %v5090, %v5089
        %v5110 = vpack.c.bf16 %v5092, %v5091
        %v5111 = vpack.c.bf16 %v5094, %v5093
        %v5112 = vpack.c.bf16 %v5096, %v5095
        %s5113 = scalar_lea.vmem %s3, 48
        %v5114 = vld [vmem:[%s5113] sm:$0xf]
        %v5115 = vld [vmem:[%s5113 + $0x4] sm:$0xf]
        %v5118 = vunpack.c.l.b16 %v5114
        %v5119 = vunpack.c.l.b16 %v5115
        %v5120 = vpack.c.b16 %v5119, %v5118
        %v5123 = vsel %vm454, %v5097, 0
        %v5126 = vsel %vm454, %v5098, 0
        %v5129 = vsel %vm454, %v5099, 0
        %v5132 = vsel %vm454, %v5100, 0
        %v5135 = vsel %vm454, %v5101, 0
        %v5138 = vsel %vm454, %v5102, 0
        %v5141 = vsel %vm454, %v5103, 0
        %v5144 = vsel %vm454, %v5104, 0
        %v5147 = vsel %vm454, %v5105, 0
        %v5150 = vsel %vm454, %v5106, 0
        %v5153 = vsel %vm454, %v5107, 0
        %v5156 = vsel %vm454, %v5108, 0
        %v5159 = vsel %vm454, %v5109, 0
        %v5162 = vsel %vm454, %v5110, 0
        %v5165 = vsel %vm454, %v5111, 0
        %v5168 = vsel %vm454, %v5112, 0
        %5170 = vmatprep.subr.bf16.mxu0 0
        %5171 = vmatpush1.bf16.msra.mxu0 %v5120
        %5172 = vmatprep.subr.bf16.mxu0 0
        %5173 = vmatpush1.bf16.msra.mxu0 0
        %5174 = vmatprep.subr.bf16.mxu0 0
        %5175 = vmatpush1.bf16.msra.mxu0 0
        %5176 = vmatprep.subr.bf16.mxu0 0
        %5177 = vmatpush1.bf16.msra.mxu0 0
        %5178 = vmatprep.subr.bf16.mxu0 0
        %5179 = vmatpush1.bf16.msra.mxu0 0
        %5180 = vmatprep.subr.bf16.mxu0 0
        %5181 = vmatpush1.bf16.msra.mxu0 0
        %5182 = vmatprep.subr.bf16.mxu0 0
        %5183 = vmatpush1.bf16.msra.mxu0 0
        %5184 = vmatprep.subr.bf16.mxu0 0
        %5185 = vmatpush1.bf16.msra.mxu0 0
        %5186 = vmatprep.subr.bf16.mxu0 0
        %5187 = vmatpush1.bf16.msra.mxu0 0
        %5188 = vmatprep.subr.bf16.mxu0 0
        %5189 = vmatpush1.bf16.msra.mxu0 0
        %5190 = vmatprep.subr.bf16.mxu0 0
        %5191 = vmatpush1.bf16.msra.mxu0 0
        %5192 = vmatprep.subr.bf16.mxu0 0
        %5193 = vmatpush1.bf16.msra.mxu0 0
        %5194 = vmatprep.subr.bf16.mxu0 0
        %5195 = vmatpush1.bf16.msra.mxu0 0
        %5196 = vmatprep.subr.bf16.mxu0 0
        %5197 = vmatpush1.bf16.msra.mxu0 0
        %5198 = vmatprep.subr.bf16.mxu0 0
        %5199 = vmatpush1.bf16.msra.mxu0 0
        %5200 = vmatprep.subr.bf16.mxu0 0
        %5201 = vmatpush1.bf16.msra.mxu0 0
        %5202 = vmatprep.mubr.bf16.mxu0 0
        %5203 = vmatmul.mubr.bf16.gmra.mrb[0].mxu0 %v5123
        %v5204 = vpop.f32.mrb[0].mxu0
        %v5205 = vadd.f32 0.0, %v5204
        %v5206 = vpop.f32.mrb[0].mxu0
        %v5207 = vpop.f32.mrb[0].mxu0
        %v5208 = vadd.f32 0.0, %v5207
        %v5209 = vpop.f32.mrb[0].mxu0
        %5210 = vmatprep.mubr.bf16.mxu0 0
        %5211 = vmatmul.mubr.bf16.gmra.mrb[0].mxu0 %v5126
        %v5212 = vpop.f32.mrb[0].mxu0
        %v5213 = vadd.f32 0.0, %v5212
        %v5214 = vpop.f32.mrb[0].mxu0
        %v5215 = vpop.f32.mrb[0].mxu0
        %v5216 = vadd.f32 0.0, %v5215
        %v5217 = vpop.f32.mrb[0].mxu0
        %5218 = vmatprep.mubr.bf16.mxu0 0
        %5219 = vmatmul.mubr.bf16.gmra.mrb[0].mxu0 %v5129
        %v5220 = vpop.f32.mrb[0].mxu0
        %v5221 = vadd.f32 0.0, %v5220
        %v5222 = vpop.f32.mrb[0].mxu0
        %v5223 = vpop.f32.mrb[0].mxu0
        %v5224 = vadd.f32 0.0, %v5223
        %v5225 = vpop.f32.mrb[0].mxu0
        %5226 = vmatprep.mubr.bf16.mxu0 0
        %5227 = vmatmul.mubr.bf16.gmra.mrb[0].mxu0 %v5132
        %v5228 = vpop.f32.mrb[0].mxu0
        %v5229 = vadd.f32 0.0, %v5228
        %v5230 = vpop.f32.mrb[0].mxu0
        %v5231 = vpop.f32.mrb[0].mxu0
        %v5232 = vadd.f32 0.0, %v5231
        %v5233 = vpop.f32.mrb[0].mxu0
        %5234 = vmatprep.mubr.bf16.mxu0 0
        %5235 = vmatmul.mubr.bf16.gmra.mrb[0].mxu0 %v5135
        %v5236 = vpop.f32.mrb[0].mxu0
        %v5237 = vadd.f32 0.0, %v5236
        %v5238 = vpop.f32.mrb[0].mxu0
        %v5239 = vpop.f32.mrb[0].mxu0
        %v5240 = vadd.f32 0.0, %v5239
        %v5241 = vpop.f32.mrb[0].mxu0
        %5242 = vmatprep.mubr.bf16.mxu0 0
        %5243 = vmatmul.mubr.bf16.gmra.mrb[0].mxu0 %v5138
        %v5244 = vpop.f32.mrb[0].mxu0
        %v5245 = vadd.f32 0.0, %v5244
        %v5246 = vpop.f32.mrb[0].mxu0
        %v5247 = vpop.f32.mrb[0].mxu0
        %v5248 = vadd.f32 0.0, %v5247
        %v5249 = vpop.f32.mrb[0].mxu0
        %5250 = vmatprep.mubr.bf16.mxu0 0
        %5251 = vmatmul.mubr.bf16.gmra.mrb[0].mxu0 %v5141
        %v5252 = vpop.f32.mrb[0].mxu0
        %v5253 = vadd.f32 0.0, %v5252
        %v5254 = vpop.f32.mrb[0].mxu0
        %v5255 = vpop.f32.mrb[0].mxu0
        %v5256 = vadd.f32 0.0, %v5255
        %v5257 = vpop.f32.mrb[0].mxu0
        %5258 = vmatprep.mubr.bf16.mxu0 0
        %5259 = vmatmul.mubr.bf16.gmra.mrb[0].mxu0 %v5144
        %v5260 = vpop.f32.mrb[0].mxu0
        %v5261 = vadd.f32 0.0, %v5260
        %v5262 = vpop.f32.mrb[0].mxu0
        %v5263 = vpop.f32.mrb[0].mxu0
        %v5264 = vadd.f32 0.0, %v5263
        %v5265 = vpop.f32.mrb[0].mxu0
        %5266 = vmatprep.mubr.bf16.mxu0 0
        %5267 = vmatmul.mubr.bf16.gmra.mrb[0].mxu0 %v5147
        %v5268 = vpop.f32.mrb[0].mxu0
        %v5269 = vadd.f32 0.0, %v5268
        %v5270 = vpop.f32.mrb[0].mxu0
        %v5271 = vpop.f32.mrb[0].mxu0
        %v5272 = vadd.f32 0.0, %v5271
        %v5273 = vpop.f32.mrb[0].mxu0
        %5274 = vmatprep.mubr.bf16.mxu0 0
        %5275 = vmatmul.mubr.bf16.gmra.mrb[0].mxu0 %v5150
        %v5276 = vpop.f32.mrb[0].mxu0
        %v5277 = vadd.f32 0.0, %v5276
        %v5278 = vpop.f32.mrb[0].mxu0
        %v5279 = vpop.f32.mrb[0].mxu0
        %v5280 = vadd.f32 0.0, %v5279
        %v5281 = vpop.f32.mrb[0].mxu0
        %5282 = vmatprep.mubr.bf16.mxu0 0
        %5283 = vmatmul.mubr.bf16.gmra.mrb[0].mxu0 %v5153
        %v5284 = vpop.f32.mrb[0].mxu0
        %v5285 = vadd.f32 0.0, %v5284
        %v5286 = vpop.f32.mrb[0].mxu0
        %v5287 = vpop.f32.mrb[0].mxu0
        %v5288 = vadd.f32 0.0, %v5287
        %v5289 = vpop.f32.mrb[0].mxu0
        %5290 = vmatprep.mubr.bf16.mxu0 0
        %5291 = vmatmul.mubr.bf16.gmra.mrb[0].mxu0 %v5156
        %v5292 = vpop.f32.mrb[0].mxu0
        %v5293 = vadd.f32 0.0, %v5292
        %v5294 = vpop.f32.mrb[0].mxu0
        %v5295 = vpop.f32.mrb[0].mxu0
        %v5296 = vadd.f32 0.0, %v5295
        %v5297 = vpop.f32.mrb[0].mxu0
        %5298 = vmatprep.mubr.bf16.mxu0 0
        %5299 = vmatmul.mubr.bf16.gmra.mrb[0].mxu0 %v5159
        %v5300 = vpop.f32.mrb[0].mxu0
        %v5301 = vadd.f32 0.0, %v5300
        %v5302 = vpop.f32.mrb[0].mxu0
        %v5303 = vpop.f32.mrb[0].mxu0
        %v5304 = vadd.f32 0.0, %v5303
        %v5305 = vpop.f32.mrb[0].mxu0
        %5306 = vmatprep.mubr.bf16.mxu0 0
        %5307 = vmatmul.mubr.bf16.gmra.mrb[0].mxu0 %v5162
        %v5308 = vpop.f32.mrb[0].mxu0
        %v5309 = vadd.f32 0.0, %v5308
        %v5310 = vpop.f32.mrb[0].mxu0
        %v5311 = vpop.f32.mrb[0].mxu0
        %v5312 = vadd.f32 0.0, %v5311
        %v5313 = vpop.f32.mrb[0].mxu0
        %5314 = vmatprep.mubr.bf16.mxu0 0
        %5315 = vmatmul.mubr.bf16.gmra.mrb[0].mxu0 %v5165
        %v5316 = vpop.f32.mrb[0].mxu0
        %v5317 = vadd.f32 0.0, %v5316
        %v5318 = vpop.f32.mrb[0].mxu0
        %v5319 = vpop.f32.mrb[0].mxu0
        %v5320 = vadd.f32 0.0, %v5319
        %v5321 = vpop.f32.mrb[0].mxu0
        %5322 = vmatprep.mubr.bf16.mxu0 0
        %5323 = vmatmul.mubr.bf16.gmra.mrb[0].mxu0 %v5168
        %v5324 = vpop.f32.mrb[0].mxu0
        %v5325 = vadd.f32 0.0, %v5324
        %v5326 = vpop.f32.mrb[0].mxu0
        %v5327 = vpop.f32.mrb[0].mxu0
        %v5328 = vadd.f32 0.0, %v5327
        %v5329 = vpop.f32.mrb[0].mxu0
        %5330 = vdwg.mxu0
        %v5331 = vadd.f32 %v5033, %v5205
        %v5332 = vadd.f32 %v5034, %v5208
        %v5333 = vadd.f32 %v5035, %v5213
        %v5334 = vadd.f32 %v5036, %v5216
        %v5335 = vadd.f32 %v5037, %v5221
        %v5336 = vadd.f32 %v5038, %v5224
        %v5337 = vadd.f32 %v5039, %v5229
        %v5338 = vadd.f32 %v5040, %v5232
        %v5339 = vadd.f32 %v5041, %v5237
        %v5340 = vadd.f32 %v5042, %v5240
        %v5341 = vadd.f32 %v5043, %v5245
        %v5342 = vadd.f32 %v5044, %v5248
        %v5343 = vadd.f32 %v5045, %v5253
        %v5344 = vadd.f32 %v5046, %v5256
        %v5345 = vadd.f32 %v5047, %v5261
        %v5346 = vadd.f32 %v5048, %v5264
        %v5347 = vadd.f32 %v5049, %v5269
        %v5348 = vadd.f32 %v5050, %v5272
        %v5349 = vadd.f32 %v5051, %v5277
        %v5350 = vadd.f32 %v5052, %v5280
        %v5351 = vadd.f32 %v5053, %v5285
        %v5352 = vadd.f32 %v5054, %v5288
        %v5353 = vadd.f32 %v5055, %v5293
        %v5354 = vadd.f32 %v5056, %v5296
        %v5355 = vadd.f32 %v5057, %v5301
        %v5356 = vadd.f32 %v5058, %v5304
        %v5357 = vadd.f32 %v5059, %v5309
        %v5358 = vadd.f32 %v5060, %v5312
        %v5359 = vadd.f32 %v5061, %v5317
        %v5360 = vadd.f32 %v5062, %v5320
        %v5361 = vadd.f32 %v5063, %v5325
        %v5362 = vadd.f32 %v5064, %v5328
        %v5363 = vld [vmem:[%s2344 + $0x1] sm:$0xff]
        %v5364 = vld [vmem:[%s2344 + $0x9] sm:$0xff]
        %v5365 = vld [vmem:[%s2344 + $0x19] sm:$0xff]
        %v5366 = vld [vmem:[%s2344 + $0x21] sm:$0xff]
        %v5367 = vld [vmem:[%s2344 + $0x31] sm:$0xff]
        %v5368 = vld [vmem:[%s2344 + $0x39] sm:$0xff]
        %v5369 = vld [vmem:[%s2344 + $0x49] sm:$0xff]
        %v5370 = vld [vmem:[%s2344 + $0x51] sm:$0xff]
        %v5371 = vld [vmem:[%s2344 + $0x61] sm:$0xff]
        %v5372 = vld [vmem:[%s2344 + $0x69] sm:$0xff]
        %v5373 = vld [vmem:[%s2344 + $0x79] sm:$0xff]
        %v5374 = vld [vmem:[%s2344 + $0x81] sm:$0xff]
        %v5375 = vld [vmem:[%s2344 + $0x91] sm:$0xff]
        %v5376 = vld [vmem:[%s2344 + $0x99] sm:$0xff]
        %v5377 = vld [vmem:[%s2344 + $0xa9] sm:$0xff]
        %v5378 = vld [vmem:[%s2344 + $0xb1] sm:$0xff]
        %v5379 = vld [vmem:[%s2344 + $0xc1] sm:$0xff]
        %v5380 = vld [vmem:[%s2344 + $0xc9] sm:$0xff]
        %v5381 = vld [vmem:[%s2344 + $0xd9] sm:$0xff]
        %v5382 = vld [vmem:[%s2344 + $0xe1] sm:$0xff]
        %v5383 = vld [vmem:[%s2344 + $0xf1] sm:$0xff]
        %v5384 = vld [vmem:[%s2344 + $0xf9] sm:$0xff]
        %v5385 = vld [vmem:[%s2344 + $0x109] sm:$0xff]
        %v5386 = vld [vmem:[%s2344 + $0x111] sm:$0xff]
        %v5387 = vld [vmem:[%s2344 + $0x121] sm:$0xff]
        %v5388 = vld [vmem:[%s2344 + $0x129] sm:$0xff]
        %v5389 = vld [vmem:[%s2344 + $0x139] sm:$0xff]
        %v5390 = vld [vmem:[%s2344 + $0x141] sm:$0xff]
        %v5391 = vld [vmem:[%s2344 + $0x151] sm:$0xff]
        %v5392 = vld [vmem:[%s2344 + $0x159] sm:$0xff]
        %v5393 = vld [vmem:[%s2344 + $0x169] sm:$0xff]
        %v5394 = vld [vmem:[%s2344 + $0x171] sm:$0xff]
        %v5395 = vpack.c.bf16 %v5364, %v5363
        %v5396 = vpack.c.bf16 %v5366, %v5365
        %v5397 = vpack.c.bf16 %v5368, %v5367
        %v5398 = vpack.c.bf16 %v5370, %v5369
        %v5399 = vpack.c.bf16 %v5372, %v5371
        %v5400 = vpack.c.bf16 %v5374, %v5373
        %v5401 = vpack.c.bf16 %v5376, %v5375
        %v5402 = vpack.c.bf16 %v5378, %v5377
        %v5403 = vpack.c.bf16 %v5380, %v5379
        %v5404 = vpack.c.bf16 %v5382, %v5381
        %v5405 = vpack.c.bf16 %v5384, %v5383
        %v5406 = vpack.c.bf16 %v5386, %v5385
        %v5407 = vpack.c.bf16 %v5388, %v5387
        %v5408 = vpack.c.bf16 %v5390, %v5389
        %v5409 = vpack.c.bf16 %v5392, %v5391
        %v5410 = vpack.c.bf16 %v5394, %v5393
        %s5411 = scalar_lea.vmem %s3, 56
        %v5412 = vld [vmem:[%s5411] sm:$0xf]
        %v5413 = vld [vmem:[%s5411 + $0x4] sm:$0xf]
        %v5416 = vunpack.c.l.b16 %v5412
        %v5417 = vunpack.c.l.b16 %v5413
        %v5418 = vpack.c.b16 %v5417, %v5416
        %v5421 = vsel %vm454, %v5395, 0
        %v5424 = vsel %vm454, %v5396, 0
        %v5427 = vsel %vm454, %v5397, 0
        %v5430 = vsel %vm454, %v5398, 0
        %v5433 = vsel %vm454, %v5399, 0
        %v5436 = vsel %vm454, %v5400, 0
        %v5439 = vsel %vm454, %v5401, 0
        %v5442 = vsel %vm454, %v5402, 0
        %v5445 = vsel %vm454, %v5403, 0
        %v5448 = vsel %vm454, %v5404, 0
        %v5451 = vsel %vm454, %v5405, 0
        %v5454 = vsel %vm454, %v5406, 0
        %v5457 = vsel %vm454, %v5407, 0
        %v5460 = vsel %vm454, %v5408, 0
        %v5463 = vsel %vm454, %v5409, 0
        %v5466 = vsel %vm454, %v5410, 0
        %5468 = vmatprep.subr.bf16.mxu0 0
        %5469 = vmatpush1.bf16.msra.mxu0 %v5418
        %5470 = vmatprep.subr.bf16.mxu0 0
        %5471 = vmatpush1.bf16.msra.mxu0 0
        %5472 = vmatprep.subr.bf16.mxu0 0
        %5473 = vmatpush1.bf16.msra.mxu0 0
        %5474 = vmatprep.subr.bf16.mxu0 0
        %5475 = vmatpush1.bf16.msra.mxu0 0
        %5476 = vmatprep.subr.bf16.mxu0 0
        %5477 = vmatpush1.bf16.msra.mxu0 0
        %5478 = vmatprep.subr.bf16.mxu0 0
        %5479 = vmatpush1.bf16.msra.mxu0 0
        %5480 = vmatprep.subr.bf16.mxu0 0
        %5481 = vmatpush1.bf16.msra.mxu0 0
        %5482 = vmatprep.subr.bf16.mxu0 0
        %5483 = vmatpush1.bf16.msra.mxu0 0
        %5484 = vmatprep.subr.bf16.mxu0 0
        %5485 = vmatpush1.bf16.msra.mxu0 0
        %5486 = vmatprep.subr.bf16.mxu0 0
        %5487 = vmatpush1.bf16.msra.mxu0 0
        %5488 = vmatprep.subr.bf16.mxu0 0
        %5489 = vmatpush1.bf16.msra.mxu0 0
        %5490 = vmatprep.subr.bf16.mxu0 0
        %5491 = vmatpush1.bf16.msra.mxu0 0
        %5492 = vmatprep.subr.bf16.mxu0 0
        %5493 = vmatpush1.bf16.msra.mxu0 0
        %5494 = vmatprep.subr.bf16.mxu0 0
        %5495 = vmatpush1.bf16.msra.mxu0 0
        %5496 = vmatprep.subr.bf16.mxu0 0
        %5497 = vmatpush1.bf16.msra.mxu0 0
        %5498 = vmatprep.subr.bf16.mxu0 0
        %5499 = vmatpush1.bf16.msra.mxu0 0
        %5500 = vmatprep.mubr.bf16.mxu0 0
        %5501 = vmatmul.mubr.bf16.gmra.mrb[0].mxu0 %v5421
        %v5502 = vpop.f32.mrb[0].mxu0
        %v5503 = vadd.f32 0.0, %v5502
        %v5504 = vpop.f32.mrb[0].mxu0
        %v5505 = vpop.f32.mrb[0].mxu0
        %v5506 = vadd.f32 0.0, %v5505
        %v5507 = vpop.f32.mrb[0].mxu0
        %5508 = vmatprep.mubr.bf16.mxu0 0
        %5509 = vmatmul.mubr.bf16.gmra.mrb[0].mxu0 %v5424
        %v5510 = vpop.f32.mrb[0].mxu0
        %v5511 = vadd.f32 0.0, %v5510
        %v5512 = vpop.f32.mrb[0].mxu0
        %v5513 = vpop.f32.mrb[0].mxu0
        %v5514 = vadd.f32 0.0, %v5513
        %v5515 = vpop.f32.mrb[0].mxu0
        %5516 = vmatprep.mubr.bf16.mxu0 0
        %5517 = vmatmul.mubr.bf16.gmra.mrb[0].mxu0 %v5427
        %v5518 = vpop.f32.mrb[0].mxu0
        %v5519 = vadd.f32 0.0, %v5518
        %v5520 = vpop.f32.mrb[0].mxu0
        %v5521 = vpop.f32.mrb[0].mxu0
        %v5522 = vadd.f32 0.0, %v5521
        %v5523 = vpop.f32.mrb[0].mxu0
        %5524 = vmatprep.mubr.bf16.mxu0 0
        %5525 = vmatmul.mubr.bf16.gmra.mrb[0].mxu0 %v5430
        %v5526 = vpop.f32.mrb[0].mxu0
        %v5527 = vadd.f32 0.0, %v5526
        %v5528 = vpop.f32.mrb[0].mxu0
        %v5529 = vpop.f32.mrb[0].mxu0
        %v5530 = vadd.f32 0.0, %v5529
        %v5531 = vpop.f32.mrb[0].mxu0
        %5532 = vmatprep.mubr.bf16.mxu0 0
        %5533 = vmatmul.mubr.bf16.gmra.mrb[0].mxu0 %v5433
        %v5534 = vpop.f32.mrb[0].mxu0
        %v5535 = vadd.f32 0.0, %v5534
        %v5536 = vpop.f32.mrb[0].mxu0
        %v5537 = vpop.f32.mrb[0].mxu0
        %v5538 = vadd.f32 0.0, %v5537
        %v5539 = vpop.f32.mrb[0].mxu0
        %5540 = vmatprep.mubr.bf16.mxu0 0
        %5541 = vmatmul.mubr.bf16.gmra.mrb[0].mxu0 %v5436
        %v5542 = vpop.f32.mrb[0].mxu0
        %v5543 = vadd.f32 0.0, %v5542
        %v5544 = vpop.f32.mrb[0].mxu0
        %v5545 = vpop.f32.mrb[0].mxu0
        %v5546 = vadd.f32 0.0, %v5545
        %v5547 = vpop.f32.mrb[0].mxu0
        %5548 = vmatprep.mubr.bf16.mxu0 0
        %5549 = vmatmul.mubr.bf16.gmra.mrb[0].mxu0 %v5439
        %v5550 = vpop.f32.mrb[0].mxu0
        %v5551 = vadd.f32 0.0, %v5550
        %v5552 = vpop.f32.mrb[0].mxu0
        %v5553 = vpop.f32.mrb[0].mxu0
        %v5554 = vadd.f32 0.0, %v5553
        %v5555 = vpop.f32.mrb[0].mxu0
        %5556 = vmatprep.mubr.bf16.mxu0 0
        %5557 = vmatmul.mubr.bf16.gmra.mrb[0].mxu0 %v5442
        %v5558 = vpop.f32.mrb[0].mxu0
        %v5559 = vadd.f32 0.0, %v5558
        %v5560 = vpop.f32.mrb[0].mxu0
        %v5561 = vpop.f32.mrb[0].mxu0
        %v5562 = vadd.f32 0.0, %v5561
        %v5563 = vpop.f32.mrb[0].mxu0
        %5564 = vmatprep.mubr.bf16.mxu0 0
        %5565 = vmatmul.mubr.bf16.gmra.mrb[0].mxu0 %v5445
        %v5566 = vpop.f32.mrb[0].mxu0
        %v5567 = vadd.f32 0.0, %v5566
        %v5568 = vpop.f32.mrb[0].mxu0
        %v5569 = vpop.f32.mrb[0].mxu0
        %v5570 = vadd.f32 0.0, %v5569
        %v5571 = vpop.f32.mrb[0].mxu0
        %5572 = vmatprep.mubr.bf16.mxu0 0
        %5573 = vmatmul.mubr.bf16.gmra.mrb[0].mxu0 %v5448
        %v5574 = vpop.f32.mrb[0].mxu0
        %v5575 = vadd.f32 0.0, %v5574
        %v5576 = vpop.f32.mrb[0].mxu0
        %v5577 = vpop.f32.mrb[0].mxu0
        %v5578 = vadd.f32 0.0, %v5577
        %v5579 = vpop.f32.mrb[0].mxu0
        %5580 = vmatprep.mubr.bf16.mxu0 0
        %5581 = vmatmul.mubr.bf16.gmra.mrb[0].mxu0 %v5451
        %v5582 = vpop.f32.mrb[0].mxu0
        %v5583 = vadd.f32 0.0, %v5582
        %v5584 = vpop.f32.mrb[0].mxu0
        %v5585 = vpop.f32.mrb[0].mxu0
        %v5586 = vadd.f32 0.0, %v5585
        %v5587 = vpop.f32.mrb[0].mxu0
        %5588 = vmatprep.mubr.bf16.mxu0 0
        %5589 = vmatmul.mubr.bf16.gmra.mrb[0].mxu0 %v5454
        %v5590 = vpop.f32.mrb[0].mxu0
        %v5591 = vadd.f32 0.0, %v5590
        %v5592 = vpop.f32.mrb[0].mxu0
        %v5593 = vpop.f32.mrb[0].mxu0
        %v5594 = vadd.f32 0.0, %v5593
        %v5595 = vpop.f32.mrb[0].mxu0
        %5596 = vmatprep.mubr.bf16.mxu0 0
        %5597 = vmatmul.mubr.bf16.gmra.mrb[0].mxu0 %v5457
        %v5598 = vpop.f32.mrb[0].mxu0
        %v5599 = vadd.f32 0.0, %v5598
        %v5600 = vpop.f32.mrb[0].mxu0
        %v5601 = vpop.f32.mrb[0].mxu0
        %v5602 = vadd.f32 0.0, %v5601
        %v5603 = vpop.f32.mrb[0].mxu0
        %5604 = vmatprep.mubr.bf16.mxu0 0
        %5605 = vmatmul.mubr.bf16.gmra.mrb[0].mxu0 %v5460
        %v5606 = vpop.f32.mrb[0].mxu0
        %v5607 = vadd.f32 0.0, %v5606
        %v5608 = vpop.f32.mrb[0].mxu0
        %v5609 = vpop.f32.mrb[0].mxu0
        %v5610 = vadd.f32 0.0, %v5609
        %v5611 = vpop.f32.mrb[0].mxu0
        %5612 = vmatprep.mubr.bf16.mxu0 0
        %5613 = vmatmul.mubr.bf16.gmra.mrb[0].mxu0 %v5463
        %v5614 = vpop.f32.mrb[0].mxu0
        %v5615 = vadd.f32 0.0, %v5614
        %v5616 = vpop.f32.mrb[0].mxu0
        %v5617 = vpop.f32.mrb[0].mxu0
        %v5618 = vadd.f32 0.0, %v5617
        %v5619 = vpop.f32.mrb[0].mxu0
        %5620 = vmatprep.mubr.bf16.mxu0 0
        %5621 = vmatmul.mubr.bf16.gmra.mrb[0].mxu0 %v5466
        %v5622 = vpop.f32.mrb[0].mxu0
        %v5623 = vadd.f32 0.0, %v5622
        %v5624 = vpop.f32.mrb[0].mxu0
        %v5625 = vpop.f32.mrb[0].mxu0
        %v5626 = vadd.f32 0.0, %v5625
        %v5627 = vpop.f32.mrb[0].mxu0
        %5628 = vdwg.mxu0
        %v5629 = vadd.f32 %v5331, %v5503
        %v5630 = vadd.f32 %v5332, %v5506
        %v5631 = vadd.f32 %v5333, %v5511
        %v5632 = vadd.f32 %v5334, %v5514
        %v5633 = vadd.f32 %v5335, %v5519
        %v5634 = vadd.f32 %v5336, %v5522
        %v5635 = vadd.f32 %v5337, %v5527
        %v5636 = vadd.f32 %v5338, %v5530
        %v5637 = vadd.f32 %v5339, %v5535
        %v5638 = vadd.f32 %v5340, %v5538
        %v5639 = vadd.f32 %v5341, %v5543
        %v5640 = vadd.f32 %v5342, %v5546
        %v5641 = vadd.f32 %v5343, %v5551
        %v5642 = vadd.f32 %v5344, %v5554
        %v5643 = vadd.f32 %v5345, %v5559
        %v5644 = vadd.f32 %v5346, %v5562
        %v5645 = vadd.f32 %v5347, %v5567
        %v5646 = vadd.f32 %v5348, %v5570
        %v5647 = vadd.f32 %v5349, %v5575
        %v5648 = vadd.f32 %v5350, %v5578
        %v5649 = vadd.f32 %v5351, %v5583
        %v5650 = vadd.f32 %v5352, %v5586
        %v5651 = vadd.f32 %v5353, %v5591
        %v5652 = vadd.f32 %v5354, %v5594
        %v5653 = vadd.f32 %v5355, %v5599
        %v5654 = vadd.f32 %v5356, %v5602
        %v5655 = vadd.f32 %v5357, %v5607
        %v5656 = vadd.f32 %v5358, %v5610
        %v5657 = vadd.f32 %v5359, %v5615
        %v5658 = vadd.f32 %v5360, %v5618
        %v5659 = vadd.f32 %v5361, %v5623
        %v5660 = vadd.f32 %v5362, %v5626
        %v5661 = vld [vmem:[%s2344 + $0x2] sm:$0xff]
        %v5662 = vld [vmem:[%s2344 + $0xa] sm:$0xff]
        %v5663 = vld [vmem:[%s2344 + $0x1a] sm:$0xff]
        %v5664 = vld [vmem:[%s2344 + $0x22] sm:$0xff]
        %v5665 = vld [vmem:[%s2344 + $0x32] sm:$0xff]
        %v5666 = vld [vmem:[%s2344 + $0x3a] sm:$0xff]
        %v5667 = vld [vmem:[%s2344 + $0x4a] sm:$0xff]
        %v5668 = vld [vmem:[%s2344 + $0x52] sm:$0xff]
        %v5669 = vld [vmem:[%s2344 + $0x62] sm:$0xff]
        %v5670 = vld [vmem:[%s2344 + $0x6a] sm:$0xff]
        %v5671 = vld [vmem:[%s2344 + $0x7a] sm:$0xff]
        %v5672 = vld [vmem:[%s2344 + $0x82] sm:$0xff]
        %v5673 = vld [vmem:[%s2344 + $0x92] sm:$0xff]
        %v5674 = vld [vmem:[%s2344 + $0x9a] sm:$0xff]
        %v5675 = vld [vmem:[%s2344 + $0xaa] sm:$0xff]
        %v5676 = vld [vmem:[%s2344 + $0xb2] sm:$0xff]
        %v5677 = vld [vmem:[%s2344 + $0xc2] sm:$0xff]
        %v5678 = vld [vmem:[%s2344 + $0xca] sm:$0xff]
        %v5679 = vld [vmem:[%s2344 + $0xda] sm:$0xff]
        %v5680 = vld [vmem:[%s2344 + $0xe2] sm:$0xff]
        %v5681 = vld [vmem:[%s2344 + $0xf2] sm:$0xff]
        %v5682 = vld [vmem:[%s2344 + $0xfa] sm:$0xff]
        %v5683 = vld [vmem:[%s2344 + $0x10a] sm:$0xff]
        %v5684 = vld [vmem:[%s2344 + $0x112] sm:$0xff]
        %v5685 = vld [vmem:[%s2344 + $0x122] sm:$0xff]
        %v5686 = vld [vmem:[%s2344 + $0x12a] sm:$0xff]
        %v5687 = vld [vmem:[%s2344 + $0x13a] sm:$0xff]
        %v5688 = vld [vmem:[%s2344 + $0x142] sm:$0xff]
        %v5689 = vld [vmem:[%s2344 + $0x152] sm:$0xff]
        %v5690 = vld [vmem:[%s2344 + $0x15a] sm:$0xff]
        %v5691 = vld [vmem:[%s2344 + $0x16a] sm:$0xff]
        %v5692 = vld [vmem:[%s2344 + $0x172] sm:$0xff]
        %v5693 = vpack.c.bf16 %v5662, %v5661
        %v5694 = vpack.c.bf16 %v5664, %v5663
        %v5695 = vpack.c.bf16 %v5666, %v5665
        %v5696 = vpack.c.bf16 %v5668, %v5667
        %v5697 = vpack.c.bf16 %v5670, %v5669
        %v5698 = vpack.c.bf16 %v5672, %v5671
        %v5699 = vpack.c.bf16 %v5674, %v5673
        %v5700 = vpack.c.bf16 %v5676, %v5675
        %v5701 = vpack.c.bf16 %v5678, %v5677
        %v5702 = vpack.c.bf16 %v5680, %v5679
        %v5703 = vpack.c.bf16 %v5682, %v5681
        %v5704 = vpack.c.bf16 %v5684, %v5683
        %v5705 = vpack.c.bf16 %v5686, %v5685
        %v5706 = vpack.c.bf16 %v5688, %v5687
        %v5707 = vpack.c.bf16 %v5690, %v5689
        %v5708 = vpack.c.bf16 %v5692, %v5691
        %s5709 = scalar_lea.vmem %s3, 64
        %v5710 = vld [vmem:[%s5709] sm:$0xf]
        %v5711 = vld [vmem:[%s5709 + $0x4] sm:$0xf]
        %v5714 = vunpack.c.l.b16 %v5710
        %v5715 = vunpack.c.l.b16 %v5711
        %v5716 = vpack.c.b16 %v5715, %v5714
        %v5719 = vsel %vm454, %v5693, 0
        %v5722 = vsel %vm454, %v5694, 0
        %v5725 = vsel %vm454, %v5695, 0
        %v5728 = vsel %vm454, %v5696, 0
        %v5731 = vsel %vm454, %v5697, 0
        %v5734 = vsel %vm454, %v5698, 0
        %v5737 = vsel %vm454, %v5699, 0
        %v5740 = vsel %vm454, %v5700, 0
        %v5743 = vsel %vm454, %v5701, 0
        %v5746 = vsel %vm454, %v5702, 0
        %v5749 = vsel %vm454, %v5703, 0
        %v5752 = vsel %vm454, %v5704, 0
        %v5755 = vsel %vm454, %v5705, 0
        %v5758 = vsel %vm454, %v5706, 0
        %v5761 = vsel %vm454, %v5707, 0
        %v5764 = vsel %vm454, %v5708, 0
        %5766 = vmatprep.subr.bf16.mxu0 0
        %5767 = vmatpush1.bf16.msra.mxu0 %v5716
        %5768 = vmatprep.subr.bf16.mxu0 0
        %5769 = vmatpush1.bf16.msra.mxu0 0
        %5770 = vmatprep.subr.bf16.mxu0 0
        %5771 = vmatpush1.bf16.msra.mxu0 0
        %5772 = vmatprep.subr.bf16.mxu0 0
        %5773 = vmatpush1.bf16.msra.mxu0 0
        %5774 = vmatprep.subr.bf16.mxu0 0
        %5775 = vmatpush1.bf16.msra.mxu0 0
        %5776 = vmatprep.subr.bf16.mxu0 0
        %5777 = vmatpush1.bf16.msra.mxu0 0
        %5778 = vmatprep.subr.bf16.mxu0 0
        %5779 = vmatpush1.bf16.msra.mxu0 0
        %5780 = vmatprep.subr.bf16.mxu0 0
        %5781 = vmatpush1.bf16.msra.mxu0 0
        %5782 = vmatprep.subr.bf16.mxu0 0
        %5783 = vmatpush1.bf16.msra.mxu0 0
        %5784 = vmatprep.subr.bf16.mxu0 0
        %5785 = vmatpush1.bf16.msra.mxu0 0
        %5786 = vmatprep.subr.bf16.mxu0 0
        %5787 = vmatpush1.bf16.msra.mxu0 0
        %5788 = vmatprep.subr.bf16.mxu0 0
        %5789 = vmatpush1.bf16.msra.mxu0 0
        %5790 = vmatprep.subr.bf16.mxu0 0
        %5791 = vmatpush1.bf16.msra.mxu0 0
        %5792 = vmatprep.subr.bf16.mxu0 0
        %5793 = vmatpush1.bf16.msra.mxu0 0
        %5794 = vmatprep.subr.bf16.mxu0 0
        %5795 = vmatpush1.bf16.msra.mxu0 0
        %5796 = vmatprep.subr.bf16.mxu0 0
        %5797 = vmatpush1.bf16.msra.mxu0 0
        %5798 = vmatprep.mubr.bf16.mxu0 0
        %5799 = vmatmul.mubr.bf16.gmra.mrb[0].mxu0 %v5719
        %v5800 = vpop.f32.mrb[0].mxu0
        %v5801 = vadd.f32 0.0, %v5800
        %v5802 = vpop.f32.mrb[0].mxu0
        %v5803 = vpop.f32.mrb[0].mxu0
        %v5804 = vadd.f32 0.0, %v5803
        %v5805 = vpop.f32.mrb[0].mxu0
        %5806 = vmatprep.mubr.bf16.mxu0 0
        %5807 = vmatmul.mubr.bf16.gmra.mrb[0].mxu0 %v5722
        %v5808 = vpop.f32.mrb[0].mxu0
        %v5809 = vadd.f32 0.0, %v5808
        %v5810 = vpop.f32.mrb[0].mxu0
        %v5811 = vpop.f32.mrb[0].mxu0
        %v5812 = vadd.f32 0.0, %v5811
        %v5813 = vpop.f32.mrb[0].mxu0
        %5814 = vmatprep.mubr.bf16.mxu0 0
        %5815 = vmatmul.mubr.bf16.gmra.mrb[0].mxu0 %v5725
        %v5816 = vpop.f32.mrb[0].mxu0
        %v5817 = vadd.f32 0.0, %v5816
        %v5818 = vpop.f32.mrb[0].mxu0
        %v5819 = vpop.f32.mrb[0].mxu0
        %v5820 = vadd.f32 0.0, %v5819
        %v5821 = vpop.f32.mrb[0].mxu0
        %5822 = vmatprep.mubr.bf16.mxu0 0
        %5823 = vmatmul.mubr.bf16.gmra.mrb[0].mxu0 %v5728
        %v5824 = vpop.f32.mrb[0].mxu0
        %v5825 = vadd.f32 0.0, %v5824
        %v5826 = vpop.f32.mrb[0].mxu0
        %v5827 = vpop.f32.mrb[0].mxu0
        %v5828 = vadd.f32 0.0, %v5827
        %v5829 = vpop.f32.mrb[0].mxu0
        %5830 = vmatprep.mubr.bf16.mxu0 0
        %5831 = vmatmul.mubr.bf16.gmra.mrb[0].mxu0 %v5731
        %v5832 = vpop.f32.mrb[0].mxu0
        %v5833 = vadd.f32 0.0, %v5832
        %v5834 = vpop.f32.mrb[0].mxu0
        %v5835 = vpop.f32.mrb[0].mxu0
        %v5836 = vadd.f32 0.0, %v5835
        %v5837 = vpop.f32.mrb[0].mxu0
        %5838 = vmatprep.mubr.bf16.mxu0 0
        %5839 = vmatmul.mubr.bf16.gmra.mrb[0].mxu0 %v5734
        %v5840 = vpop.f32.mrb[0].mxu0
        %v5841 = vadd.f32 0.0, %v5840
        %v5842 = vpop.f32.mrb[0].mxu0
        %v5843 = vpop.f32.mrb[0].mxu0
        %v5844 = vadd.f32 0.0, %v5843
        %v5845 = vpop.f32.mrb[0].mxu0
        %5846 = vmatprep.mubr.bf16.mxu0 0
        %5847 = vmatmul.mubr.bf16.gmra.mrb[0].mxu0 %v5737
        %v5848 = vpop.f32.mrb[0].mxu0
        %v5849 = vadd.f32 0.0, %v5848
        %v5850 = vpop.f32.mrb[0].mxu0
        %v5851 = vpop.f32.mrb[0].mxu0
        %v5852 = vadd.f32 0.0, %v5851
        %v5853 = vpop.f32.mrb[0].mxu0
        %5854 = vmatprep.mubr.bf16.mxu0 0
        %5855 = vmatmul.mubr.bf16.gmra.mrb[0].mxu0 %v5740
        %v5856 = vpop.f32.mrb[0].mxu0
        %v5857 = vadd.f32 0.0, %v5856
        %v5858 = vpop.f32.mrb[0].mxu0
        %v5859 = vpop.f32.mrb[0].mxu0
        %v5860 = vadd.f32 0.0, %v5859
        %v5861 = vpop.f32.mrb[0].mxu0
        %5862 = vmatprep.mubr.bf16.mxu0 0
        %5863 = vmatmul.mubr.bf16.gmra.mrb[0].mxu0 %v5743
        %v5864 = vpop.f32.mrb[0].mxu0
        %v5865 = vadd.f32 0.0, %v5864
        %v5866 = vpop.f32.mrb[0].mxu0
        %v5867 = vpop.f32.mrb[0].mxu0
        %v5868 = vadd.f32 0.0, %v5867
        %v5869 = vpop.f32.mrb[0].mxu0
        %5870 = vmatprep.mubr.bf16.mxu0 0
        %5871 = vmatmul.mubr.bf16.gmra.mrb[0].mxu0 %v5746
        %v5872 = vpop.f32.mrb[0].mxu0
        %v5873 = vadd.f32 0.0, %v5872
        %v5874 = vpop.f32.mrb[0].mxu0
        %v5875 = vpop.f32.mrb[0].mxu0
        %v5876 = vadd.f32 0.0, %v5875
        %v5877 = vpop.f32.mrb[0].mxu0
        %5878 = vmatprep.mubr.bf16.mxu0 0
        %5879 = vmatmul.mubr.bf16.gmra.mrb[0].mxu0 %v5749
        %v5880 = vpop.f32.mrb[0].mxu0
        %v5881 = vadd.f32 0.0, %v5880
        %v5882 = vpop.f32.mrb[0].mxu0
        %v5883 = vpop.f32.mrb[0].mxu0
        %v5884 = vadd.f32 0.0, %v5883
        %v5885 = vpop.f32.mrb[0].mxu0
        %5886 = vmatprep.mubr.bf16.mxu0 0
        %5887 = vmatmul.mubr.bf16.gmra.mrb[0].mxu0 %v5752
        %v5888 = vpop.f32.mrb[0].mxu0
        %v5889 = vadd.f32 0.0, %v5888
        %v5890 = vpop.f32.mrb[0].mxu0
        %v5891 = vpop.f32.mrb[0].mxu0
        %v5892 = vadd.f32 0.0, %v5891
        %v5893 = vpop.f32.mrb[0].mxu0
        %5894 = vmatprep.mubr.bf16.mxu0 0
        %5895 = vmatmul.mubr.bf16.gmra.mrb[0].mxu0 %v5755
        %v5896 = vpop.f32.mrb[0].mxu0
        %v5897 = vadd.f32 0.0, %v5896
        %v5898 = vpop.f32.mrb[0].mxu0
        %v5899 = vpop.f32.mrb[0].mxu0
        %v5900 = vadd.f32 0.0, %v5899
        %v5901 = vpop.f32.mrb[0].mxu0
        %5902 = vmatprep.mubr.bf16.mxu0 0
        %5903 = vmatmul.mubr.bf16.gmra.mrb[0].mxu0 %v5758
        %v5904 = vpop.f32.mrb[0].mxu0
        %v5905 = vadd.f32 0.0, %v5904
        %v5906 = vpop.f32.mrb[0].mxu0
        %v5907 = vpop.f32.mrb[0].mxu0
        %v5908 = vadd.f32 0.0, %v5907
        %v5909 = vpop.f32.mrb[0].mxu0
        %5910 = vmatprep.mubr.bf16.mxu0 0
        %5911 = vmatmul.mubr.bf16.gmra.mrb[0].mxu0 %v5761
        %v5912 = vpop.f32.mrb[0].mxu0
        %v5913 = vadd.f32 0.0, %v5912
        %v5914 = vpop.f32.mrb[0].mxu0
        %v5915 = vpop.f32.mrb[0].mxu0
        %v5916 = vadd.f32 0.0, %v5915
        %v5917 = vpop.f32.mrb[0].mxu0
        %5918 = vmatprep.mubr.bf16.mxu0 0
        %5919 = vmatmul.mubr.bf16.gmra.mrb[0].mxu0 %v5764
        %v5920 = vpop.f32.mrb[0].mxu0
        %v5921 = vadd.f32 0.0, %v5920
        %v5922 = vpop.f32.mrb[0].mxu0
        %v5923 = vpop.f32.mrb[0].mxu0
        %v5924 = vadd.f32 0.0, %v5923
        %v5925 = vpop.f32.mrb[0].mxu0
        %5926 = vdwg.mxu0
        %v5927 = vadd.f32 %v5629, %v5801
        %v5928 = vadd.f32 %v5630, %v5804
        %v5929 = vadd.f32 %v5631, %v5809
        %v5930 = vadd.f32 %v5632, %v5812
        %v5931 = vadd.f32 %v5633, %v5817
        %v5932 = vadd.f32 %v5634, %v5820
        %v5933 = vadd.f32 %v5635, %v5825
        %v5934 = vadd.f32 %v5636, %v5828
        %v5935 = vadd.f32 %v5637, %v5833
        %v5936 = vadd.f32 %v5638, %v5836
        %v5937 = vadd.f32 %v5639, %v5841
        %v5938 = vadd.f32 %v5640, %v5844
        %v5939 = vadd.f32 %v5641, %v5849
        %v5940 = vadd.f32 %v5642, %v5852
        %v5941 = vadd.f32 %v5643, %v5857
        %v5942 = vadd.f32 %v5644, %v5860
        %v5943 = vadd.f32 %v5645, %v5865
        %v5944 = vadd.f32 %v5646, %v5868
        %v5945 = vadd.f32 %v5647, %v5873
        %v5946 = vadd.f32 %v5648, %v5876
        %v5947 = vadd.f32 %v5649, %v5881
        %v5948 = vadd.f32 %v5650, %v5884
        %v5949 = vadd.f32 %v5651, %v5889
        %v5950 = vadd.f32 %v5652, %v5892
        %v5951 = vadd.f32 %v5653, %v5897
        %v5952 = vadd.f32 %v5654, %v5900
        %v5953 = vadd.f32 %v5655, %v5905
        %v5954 = vadd.f32 %v5656, %v5908
        %v5955 = vadd.f32 %v5657, %v5913
        %v5956 = vadd.f32 %v5658, %v5916
        %v5957 = vadd.f32 %v5659, %v5921
        %v5958 = vadd.f32 %v5660, %v5924
        %v5959 = vld [vmem:[%s4] sm:$0x1]
        %v5961 = vlaneseq
        %v5962 = vshrl.u32 %v5961, 7
        %v5963 = vsub.s32 0, %v5962
        %v5964 = vrot.slane %v5959, %v5963
        %v5966 = vadd.f32 %v5927, %v5964
        %v5967 = vadd.f32 %v5928, %v5964
        %v5968 = vadd.f32 %v5929, %v5964
        %v5969 = vadd.f32 %v5930, %v5964
        %v5970 = vadd.f32 %v5931, %v5964
        %v5971 = vadd.f32 %v5932, %v5964
        %v5972 = vadd.f32 %v5933, %v5964
        %v5973 = vadd.f32 %v5934, %v5964
        %v5974 = vadd.f32 %v5935, %v5964
        %v5975 = vadd.f32 %v5936, %v5964
        %v5976 = vadd.f32 %v5937, %v5964
        %v5977 = vadd.f32 %v5938, %v5964
        %v5978 = vadd.f32 %v5939, %v5964
        %v5979 = vadd.f32 %v5940, %v5964
        %v5980 = vadd.f32 %v5941, %v5964
        %v5981 = vadd.f32 %v5942, %v5964
        %v5982 = vadd.f32 %v5943, %v5964
        %v5983 = vadd.f32 %v5944, %v5964
        %v5984 = vadd.f32 %v5945, %v5964
        %v5985 = vadd.f32 %v5946, %v5964
        %v5986 = vadd.f32 %v5947, %v5964
        %v5987 = vadd.f32 %v5948, %v5964
        %v5988 = vadd.f32 %v5949, %v5964
        %v5989 = vadd.f32 %v5950, %v5964
        %v5990 = vadd.f32 %v5951, %v5964
        %v5991 = vadd.f32 %v5952, %v5964
        %v5992 = vadd.f32 %v5953, %v5964
        %v5993 = vadd.f32 %v5954, %v5964
        %v5994 = vadd.f32 %v5955, %v5964
        %v5995 = vadd.f32 %v5956, %v5964
        %v5996 = vadd.f32 %v5957, %v5964
        %v5997 = vadd.f32 %v5958, %v5964
        %v5998 = vsel %vm454, %v5966, -inf
        %5999 = vmax.xlane.f32.xlu0 %v5998
        %v6000 = vpop.xlane.xlu0 %5999
        %v6001 = vsel %vm454, %v5967, -inf
        %6002 = vmax.xlane.f32.xlu0 %v6001
        %v6003 = vpop.xlane.xlu0 %6002
        %v6004 = vsel %vm454, %v5968, -inf
        %6005 = vmax.xlane.f32.xlu0 %v6004
        %v6006 = vpop.xlane.xlu0 %6005
        %v6007 = vsel %vm454, %v5969, -inf
        %6008 = vmax.xlane.f32.xlu0 %v6007
        %v6009 = vpop.xlane.xlu0 %6008
        %v6010 = vsel %vm454, %v5970, -inf
        %6011 = vmax.xlane.f32.xlu0 %v6010
        %v6012 = vpop.xlane.xlu0 %6011
        %v6013 = vsel %vm454, %v5971, -inf
        %6014 = vmax.xlane.f32.xlu0 %v6013
        %v6015 = vpop.xlane.xlu0 %6014
        %v6016 = vsel %vm454, %v5972, -inf
        %6017 = vmax.xlane.f32.xlu0 %v6016
        %v6018 = vpop.xlane.xlu0 %6017
        %v6019 = vsel %vm454, %v5973, -inf
        %6020 = vmax.xlane.f32.xlu0 %v6019
        %v6021 = vpop.xlane.xlu0 %6020
        %v6022 = vsel %vm454, %v5974, -inf
        %6023 = vmax.xlane.f32.xlu0 %v6022
        %v6024 = vpop.xlane.xlu0 %6023
        %v6025 = vsel %vm454, %v5975, -inf
        %6026 = vmax.xlane.f32.xlu0 %v6025
        %v6027 = vpop.xlane.xlu0 %6026
        %v6028 = vsel %vm454, %v5976, -inf
        %6029 = vmax.xlane.f32.xlu0 %v6028
        %v6030 = vpop.xlane.xlu0 %6029
        %v6031 = vsel %vm454, %v5977, -inf
        %6032 = vmax.xlane.f32.xlu0 %v6031
        %v6033 = vpop.xlane.xlu0 %6032
        %v6034 = vsel %vm454, %v5978, -inf
        %6035 = vmax.xlane.f32.xlu0 %v6034
        %v6036 = vpop.xlane.xlu0 %6035
        %v6037 = vsel %vm454, %v5979, -inf
        %6038 = vmax.xlane.f32.xlu0 %v6037
        %v6039 = vpop.xlane.xlu0 %6038
        %v6040 = vsel %vm454, %v5980, -inf
        %6041 = vmax.xlane.f32.xlu0 %v6040
        %v6042 = vpop.xlane.xlu0 %6041
        %v6043 = vsel %vm454, %v5981, -inf
        %6044 = vmax.xlane.f32.xlu0 %v6043
        %v6045 = vpop.xlane.xlu0 %6044
        %v6046 = vsel %vm454, %v5982, -inf
        %6047 = vmax.xlane.f32.xlu0 %v6046
        %v6048 = vpop.xlane.xlu0 %6047
        %v6049 = vsel %vm454, %v5983, -inf
        %6050 = vmax.xlane.f32.xlu0 %v6049
        %v6051 = vpop.xlane.xlu0 %6050
        %v6052 = vsel %vm454, %v5984, -inf
        %6053 = vmax.xlane.f32.xlu0 %v6052
        %v6054 = vpop.xlane.xlu0 %6053
        %v6055 = vsel %vm454, %v5985, -inf
        %6056 = vmax.xlane.f32.xlu0 %v6055
        %v6057 = vpop.xlane.xlu0 %6056
        %v6058 = vsel %vm454, %v5986, -inf
        %6059 = vmax.xlane.f32.xlu0 %v6058
        %v6060 = vpop.xlane.xlu0 %6059
        %v6061 = vsel %vm454, %v5987, -inf
        %6062 = vmax.xlane.f32.xlu0 %v6061
        %v6063 = vpop.xlane.xlu0 %6062
        %v6064 = vsel %vm454, %v5988, -inf
        %6065 = vmax.xlane.f32.xlu0 %v6064
        %v6066 = vpop.xlane.xlu0 %6065
        %v6067 = vsel %vm454, %v5989, -inf
        %6068 = vmax.xlane.f32.xlu0 %v6067
        %v6069 = vpop.xlane.xlu0 %6068
        %v6070 = vsel %vm454, %v5990, -inf
        %6071 = vmax.xlane.f32.xlu0 %v6070
        %v6072 = vpop.xlane.xlu0 %6071
        %v6073 = vsel %vm454, %v5991, -inf
        %6074 = vmax.xlane.f32.xlu0 %v6073
        %v6075 = vpop.xlane.xlu0 %6074
        %v6076 = vsel %vm454, %v5992, -inf
        %6077 = vmax.xlane.f32.xlu0 %v6076
        %v6078 = vpop.xlane.xlu0 %6077
        %v6079 = vsel %vm454, %v5993, -inf
        %6080 = vmax.xlane.f32.xlu0 %v6079
        %v6081 = vpop.xlane.xlu0 %6080
        %v6082 = vsel %vm454, %v5994, -inf
        %6083 = vmax.xlane.f32.xlu0 %v6082
        %v6084 = vpop.xlane.xlu0 %6083
        %v6085 = vsel %vm454, %v5995, -inf
        %6086 = vmax.xlane.f32.xlu0 %v6085
        %v6087 = vpop.xlane.xlu0 %6086
        %v6088 = vsel %vm454, %v5996, -inf
        %6089 = vmax.xlane.f32.xlu0 %v6088
        %v6090 = vpop.xlane.xlu0 %6089
        %v6091 = vsel %vm454, %v5997, -inf
        %6092 = vmax.xlane.f32.xlu0 %v6091
        %v6093 = vpop.xlane.xlu0 %6092
        %v6094 = vsel %vm454, %v5966, 0.0
        %6095 = vadd.xlane.f32.xlu0 %v6094
        %v6096 = vpop.xlane.xlu0 %6095
        %v6097 = vsel %vm454, %v5967, 0.0
        %6098 = vadd.xlane.f32.xlu0 %v6097
        %v6099 = vpop.xlane.xlu0 %6098
        %v6100 = vsel %vm454, %v5968, 0.0
        %6101 = vadd.xlane.f32.xlu0 %v6100
        %v6102 = vpop.xlane.xlu0 %6101
        %v6103 = vsel %vm454, %v5969, 0.0
        %6104 = vadd.xlane.f32.xlu0 %v6103
        %v6105 = vpop.xlane.xlu0 %6104
        %v6106 = vsel %vm454, %v5970, 0.0
        %6107 = vadd.xlane.f32.xlu0 %v6106
        %v6108 = vpop.xlane.xlu0 %6107
        %v6109 = vsel %vm454, %v5971, 0.0
        %6110 = vadd.xlane.f32.xlu0 %v6109
        %v6111 = vpop.xlane.xlu0 %6110
        %v6112 = vsel %vm454, %v5972, 0.0
        %6113 = vadd.xlane.f32.xlu0 %v6112
        %v6114 = vpop.xlane.xlu0 %6113
        %v6115 = vsel %vm454, %v5973, 0.0
        %6116 = vadd.xlane.f32.xlu0 %v6115
        %v6117 = vpop.xlane.xlu0 %6116
        %v6118 = vsel %vm454, %v5974, 0.0
        %6119 = vadd.xlane.f32.xlu0 %v6118
        %v6120 = vpop.xlane.xlu0 %6119
        %v6121 = vsel %vm454, %v5975, 0.0
        %6122 = vadd.xlane.f32.xlu0 %v6121
        %v6123 = vpop.xlane.xlu0 %6122
        %v6124 = vsel %vm454, %v5976, 0.0
        %6125 = vadd.xlane.f32.xlu0 %v6124
        %v6126 = vpop.xlane.xlu0 %6125
        %v6127 = vsel %vm454, %v5977, 0.0
        %6128 = vadd.xlane.f32.xlu0 %v6127
        %v6129 = vpop.xlane.xlu0 %6128
        %v6130 = vsel %vm454, %v5978, 0.0
        %6131 = vadd.xlane.f32.xlu0 %v6130
        %v6132 = vpop.xlane.xlu0 %6131
        %v6133 = vsel %vm454, %v5979, 0.0
        %6134 = vadd.xlane.f32.xlu0 %v6133
        %v6135 = vpop.xlane.xlu0 %6134
        %v6136 = vsel %vm454, %v5980, 0.0
        %6137 = vadd.xlane.f32.xlu0 %v6136
        %v6138 = vpop.xlane.xlu0 %6137
        %v6139 = vsel %vm454, %v5981, 0.0
        %6140 = vadd.xlane.f32.xlu0 %v6139
        %v6141 = vpop.xlane.xlu0 %6140
        %v6142 = vsel %vm454, %v5982, 0.0
        %6143 = vadd.xlane.f32.xlu0 %v6142
        %v6144 = vpop.xlane.xlu0 %6143
        %v6145 = vsel %vm454, %v5983, 0.0
        %6146 = vadd.xlane.f32.xlu0 %v6145
        %v6147 = vpop.xlane.xlu0 %6146
        %v6148 = vsel %vm454, %v5984, 0.0
        %6149 = vadd.xlane.f32.xlu0 %v6148
        %v6150 = vpop.xlane.xlu0 %6149
        %v6151 = vsel %vm454, %v5985, 0.0
        %6152 = vadd.xlane.f32.xlu0 %v6151
        %v6153 = vpop.xlane.xlu0 %6152
        %v6154 = vsel %vm454, %v5986, 0.0
        %6155 = vadd.xlane.f32.xlu0 %v6154
        %v6156 = vpop.xlane.xlu0 %6155
        %v6157 = vsel %vm454, %v5987, 0.0
        %6158 = vadd.xlane.f32.xlu0 %v6157
        %v6159 = vpop.xlane.xlu0 %6158
        %v6160 = vsel %vm454, %v5988, 0.0
        %6161 = vadd.xlane.f32.xlu0 %v6160
        %v6162 = vpop.xlane.xlu0 %6161
        %v6163 = vsel %vm454, %v5989, 0.0
        %6164 = vadd.xlane.f32.xlu0 %v6163
        %v6165 = vpop.xlane.xlu0 %6164
        %v6166 = vsel %vm454, %v5990, 0.0
        %6167 = vadd.xlane.f32.xlu0 %v6166
        %v6168 = vpop.xlane.xlu0 %6167
        %v6169 = vsel %vm454, %v5991, 0.0
        %6170 = vadd.xlane.f32.xlu0 %v6169
        %v6171 = vpop.xlane.xlu0 %6170
        %v6172 = vsel %vm454, %v5992, 0.0
        %6173 = vadd.xlane.f32.xlu0 %v6172
        %v6174 = vpop.xlane.xlu0 %6173
        %v6175 = vsel %vm454, %v5993, 0.0
        %6176 = vadd.xlane.f32.xlu0 %v6175
        %v6177 = vpop.xlane.xlu0 %6176
        %v6178 = vsel %vm454, %v5994, 0.0
        %6179 = vadd.xlane.f32.xlu0 %v6178
        %v6180 = vpop.xlane.xlu0 %6179
        %v6181 = vsel %vm454, %v5995, 0.0
        %6182 = vadd.xlane.f32.xlu0 %v6181
        %v6183 = vpop.xlane.xlu0 %6182
        %v6184 = vsel %vm454, %v5996, 0.0
        %6185 = vadd.xlane.f32.xlu0 %v6184
        %v6186 = vpop.xlane.xlu0 %6185
        %v6187 = vsel %vm454, %v5997, 0.0
        %6188 = vadd.xlane.f32.xlu0 %v6187
        %v6189 = vpop.xlane.xlu0 %6188
        %v6190 = vrcp.pop 16.0
        %v6191 = vmul.f32 %v6096, %v6190
        %v6192 = vmul.f32 %v6099, %v6190
        %v6193 = vmul.f32 %v6102, %v6190
        %v6194 = vmul.f32 %v6105, %v6190
        %v6195 = vmul.f32 %v6108, %v6190
        %v6196 = vmul.f32 %v6111, %v6190
        %v6197 = vmul.f32 %v6114, %v6190
        %v6198 = vmul.f32 %v6117, %v6190
        %v6199 = vmul.f32 %v6120, %v6190
        %v6200 = vmul.f32 %v6123, %v6190
        %v6201 = vmul.f32 %v6126, %v6190
        %v6202 = vmul.f32 %v6129, %v6190
        %v6203 = vmul.f32 %v6132, %v6190
        %v6204 = vmul.f32 %v6135, %v6190
        %v6205 = vmul.f32 %v6138, %v6190
        %v6206 = vmul.f32 %v6141, %v6190
        %v6207 = vmul.f32 %v6144, %v6190
        %v6208 = vmul.f32 %v6147, %v6190
        %v6209 = vmul.f32 %v6150, %v6190
        %v6210 = vmul.f32 %v6153, %v6190
        %v6211 = vmul.f32 %v6156, %v6190
        %v6212 = vmul.f32 %v6159, %v6190
        %v6213 = vmul.f32 %v6162, %v6190
        %v6214 = vmul.f32 %v6165, %v6190
        %v6215 = vmul.f32 %v6168, %v6190
        %v6216 = vmul.f32 %v6171, %v6190
        %v6217 = vmul.f32 %v6174, %v6190
        %v6218 = vmul.f32 %v6177, %v6190
        %v6219 = vmul.f32 %v6180, %v6190
        %v6220 = vmul.f32 %v6183, %v6190
        %v6221 = vmul.f32 %v6186, %v6190
        %v6222 = vmul.f32 %v6189, %v6190
        %vm6223 = vcmask 7168
        %v6224 = vsel %vm6223, %v6000, %v6191
        %v6225 = vsel %vm6223, %v6003, %v6192
        %v6226 = vsel %vm6223, %v6006, %v6193
        %v6227 = vsel %vm6223, %v6009, %v6194
        %v6228 = vsel %vm6223, %v6012, %v6195
        %v6229 = vsel %vm6223, %v6015, %v6196
        %v6230 = vsel %vm6223, %v6018, %v6197
        %v6231 = vsel %vm6223, %v6021, %v6198
        %v6232 = vsel %vm6223, %v6024, %v6199
        %v6233 = vsel %vm6223, %v6027, %v6200
        %v6234 = vsel %vm6223, %v6030, %v6201
        %v6235 = vsel %vm6223, %v6033, %v6202
        %v6236 = vsel %vm6223, %v6036, %v6203
        %v6237 = vsel %vm6223, %v6039, %v6204
        %v6238 = vsel %vm6223, %v6042, %v6205
        %v6239 = vsel %vm6223, %v6045, %v6206
        %v6240 = vsel %vm6223, %v6048, %v6207
        %v6241 = vsel %vm6223, %v6051, %v6208
        %v6242 = vsel %vm6223, %v6054, %v6209
        %v6243 = vsel %vm6223, %v6057, %v6210
        %v6244 = vsel %vm6223, %v6060, %v6211
        %v6245 = vsel %vm6223, %v6063, %v6212
        %v6246 = vsel %vm6223, %v6066, %v6213
        %v6247 = vsel %vm6223, %v6069, %v6214
        %v6248 = vsel %vm6223, %v6072, %v6215
        %v6249 = vsel %vm6223, %v6075, %v6216
        %v6250 = vsel %vm6223, %v6078, %v6217
        %v6251 = vsel %vm6223, %v6081, %v6218
        %v6252 = vsel %vm6223, %v6084, %v6219
        %v6253 = vsel %vm6223, %v6087, %v6220
        %v6254 = vsel %vm6223, %v6090, %v6221
        %v6255 = vsel %vm6223, %v6093, %v6222
        %s6256 = scalar_lea.vmem [#allocation3], 24
        %6257 = vst.msk [vmem:[%s6256 + $0x1] sm:$0xff] %vm500, %v6224
        %6258 = vst.msk [vmem:[%s6256 + $0x9] sm:$0xff] %vm500, %v6225
        %6259 = vst.msk [vmem:[%s6256 + $0x19] sm:$0xff] %vm500, %v6226
        %6260 = vst.msk [vmem:[%s6256 + $0x21] sm:$0xff] %vm500, %v6227
        %6261 = vst.msk [vmem:[%s6256 + $0x31] sm:$0xff] %vm500, %v6228
        %6262 = vst.msk [vmem:[%s6256 + $0x39] sm:$0xff] %vm500, %v6229
        %6263 = vst.msk [vmem:[%s6256 + $0x49] sm:$0xff] %vm500, %v6230
        %6264 = vst.msk [vmem:[%s6256 + $0x51] sm:$0xff] %vm500, %v6231
        %6265 = vst.msk [vmem:[%s6256 + $0x61] sm:$0xff] %vm500, %v6232
        %6266 = vst.msk [vmem:[%s6256 + $0x69] sm:$0xff] %vm500, %v6233
        %6267 = vst.msk [vmem:[%s6256 + $0x79] sm:$0xff] %vm500, %v6234
        %6268 = vst.msk [vmem:[%s6256 + $0x81] sm:$0xff] %vm500, %v6235
        %6269 = vst.msk [vmem:[%s6256 + $0x91] sm:$0xff] %vm500, %v6236
        %6270 = vst.msk [vmem:[%s6256 + $0x99] sm:$0xff] %vm500, %v6237
        %6271 = vst.msk [vmem:[%s6256 + $0xa9] sm:$0xff] %vm500, %v6238
        %6272 = vst.msk [vmem:[%s6256 + $0xb1] sm:$0xff] %vm500, %v6239
        %6273 = vst.msk [vmem:[%s6256 + $0xc1] sm:$0xff] %vm500, %v6240
        %6274 = vst.msk [vmem:[%s6256 + $0xc9] sm:$0xff] %vm500, %v6241
        %6275 = vst.msk [vmem:[%s6256 + $0xd9] sm:$0xff] %vm500, %v6242
        %6276 = vst.msk [vmem:[%s6256 + $0xe1] sm:$0xff] %vm500, %v6243
        %6277 = vst.msk [vmem:[%s6256 + $0xf1] sm:$0xff] %vm500, %v6244
        %6278 = vst.msk [vmem:[%s6256 + $0xf9] sm:$0xff] %vm500, %v6245
        %6279 = vst.msk [vmem:[%s6256 + $0x109] sm:$0xff] %vm500, %v6246
        %6280 = vst.msk [vmem:[%s6256 + $0x111] sm:$0xff] %vm500, %v6247
        %6281 = vst.msk [vmem:[%s6256 + $0x121] sm:$0xff] %vm500, %v6248
        %6282 = vst.msk [vmem:[%s6256 + $0x129] sm:$0xff] %vm500, %v6249
        %6283 = vst.msk [vmem:[%s6256 + $0x139] sm:$0xff] %vm500, %v6250
        %6284 = vst.msk [vmem:[%s6256 + $0x141] sm:$0xff] %vm500, %v6251
        %6285 = vst.msk [vmem:[%s6256 + $0x151] sm:$0xff] %vm500, %v6252
        %6286 = vst.msk [vmem:[%s6256 + $0x159] sm:$0xff] %vm500, %v6253
        %6287 = vst.msk [vmem:[%s6256 + $0x169] sm:$0xff] %vm500, %v6254
        %6288 = vst.msk [vmem:[%s6256 + $0x171] sm:$0xff] %vm500, %v6255
        %v6289 = vld [vmem:[#allocation3] sm:$0xff]
        %v6290 = vld [vmem:[#allocation3 + $0x8] sm:$0xff]
        %v6291 = vld [vmem:[#allocation3 + $0x18] sm:$0xff]
        %v6292 = vld [vmem:[#allocation3 + $0x20] sm:$0xff]
        %v6293 = vld [vmem:[#allocation3 + $0x30] sm:$0xff]
        %v6294 = vld [vmem:[#allocation3 + $0x38] sm:$0xff]
        %v6295 = vld [vmem:[#allocation3 + $0x48] sm:$0xff]
        %v6296 = vld [vmem:[#allocation3 + $0x50] sm:$0xff]
        %v6297 = vld [vmem:[#allocation3 + $0x60] sm:$0xff]
        %v6298 = vld [vmem:[#allocation3 + $0x68] sm:$0xff]
        %v6299 = vld [vmem:[#allocation3 + $0x78] sm:$0xff]
        %v6300 = vld [vmem:[#allocation3 + $0x80] sm:$0xff]
        %v6301 = vld [vmem:[#allocation3 + $0x90] sm:$0xff]
        %v6302 = vld [vmem:[#allocation3 + $0x98] sm:$0xff]
        %v6303 = vld [vmem:[#allocation3 + $0xa8] sm:$0xff]
        %v6304 = vld [vmem:[#allocation3 + $0xb0] sm:$0xff]
        %v6305 = vld [vmem:[#allocation3 + $0xc0] sm:$0xff]
        %v6306 = vld [vmem:[#allocation3 + $0xc8] sm:$0xff]
        %v6307 = vld [vmem:[#allocation3 + $0xd8] sm:$0xff]
        %v6308 = vld [vmem:[#allocation3 + $0xe0] sm:$0xff]
        %v6309 = vld [vmem:[#allocation3 + $0xf0] sm:$0xff]
        %v6310 = vld [vmem:[#allocation3 + $0xf8] sm:$0xff]
        %v6311 = vld [vmem:[#allocation3 + $0x108] sm:$0xff]
        %v6312 = vld [vmem:[#allocation3 + $0x110] sm:$0xff]
        %v6313 = vld [vmem:[#allocation3 + $0x120] sm:$0xff]
        %v6314 = vld [vmem:[#allocation3 + $0x128] sm:$0xff]
        %v6315 = vld [vmem:[#allocation3 + $0x138] sm:$0xff]
        %v6316 = vld [vmem:[#allocation3 + $0x140] sm:$0xff]
        %v6317 = vld [vmem:[#allocation3 + $0x150] sm:$0xff]
        %v6318 = vld [vmem:[#allocation3 + $0x158] sm:$0xff]
        %v6319 = vld [vmem:[#allocation3 + $0x168] sm:$0xff]
        %v6320 = vld [vmem:[#allocation3 + $0x170] sm:$0xff]
        %s6321 = sld [smem:[#allocation4]]
        %v6322 = vstv %s6321
        %v6323 = vmul.f32 %v6289, %v6322
        %v6324 = vmul.f32 %v6290, %v6322
        %v6325 = vmul.f32 %v6291, %v6322
        %v6326 = vmul.f32 %v6292, %v6322
        %v6327 = vmul.f32 %v6293, %v6322
        %v6328 = vmul.f32 %v6294, %v6322
        %v6329 = vmul.f32 %v6295, %v6322
        %v6330 = vmul.f32 %v6296, %v6322
        %v6331 = vmul.f32 %v6297, %v6322
        %v6332 = vmul.f32 %v6298, %v6322
        %v6333 = vmul.f32 %v6299, %v6322
        %v6334 = vmul.f32 %v6300, %v6322
        %v6335 = vmul.f32 %v6301, %v6322
        %v6336 = vmul.f32 %v6302, %v6322
        %v6337 = vmul.f32 %v6303, %v6322
        %v6338 = vmul.f32 %v6304, %v6322
        %v6339 = vmul.f32 %v6305, %v6322
        %v6340 = vmul.f32 %v6306, %v6322
        %v6341 = vmul.f32 %v6307, %v6322
        %v6342 = vmul.f32 %v6308, %v6322
        %v6343 = vmul.f32 %v6309, %v6322
        %v6344 = vmul.f32 %v6310, %v6322
        %v6345 = vmul.f32 %v6311, %v6322
        %v6346 = vmul.f32 %v6312, %v6322
        %v6347 = vmul.f32 %v6313, %v6322
        %v6348 = vmul.f32 %v6314, %v6322
        %v6349 = vmul.f32 %v6315, %v6322
        %v6350 = vmul.f32 %v6316, %v6322
        %v6351 = vmul.f32 %v6317, %v6322
        %v6352 = vmul.f32 %v6318, %v6322
        %v6353 = vmul.f32 %v6319, %v6322
        %v6354 = vmul.f32 %v6320, %v6322
        %v6355 = vadd.f32 %v6323, 0.0
        %v6356 = vadd.f32 %v6324, 0.0
        %v6357 = vadd.f32 %v6325, 0.0
        %v6358 = vadd.f32 %v6326, 0.0
        %v6359 = vadd.f32 %v6327, 0.0
        %v6360 = vadd.f32 %v6328, 0.0
        %v6361 = vadd.f32 %v6329, 0.0
        %v6362 = vadd.f32 %v6330, 0.0
        %v6363 = vadd.f32 %v6331, 0.0
        %v6364 = vadd.f32 %v6332, 0.0
        %v6365 = vadd.f32 %v6333, 0.0
        %v6366 = vadd.f32 %v6334, 0.0
        %v6367 = vadd.f32 %v6335, 0.0
        %v6368 = vadd.f32 %v6336, 0.0
        %v6369 = vadd.f32 %v6337, 0.0
        %v6370 = vadd.f32 %v6338, 0.0
        %v6371 = vadd.f32 %v6339, 0.0
        %v6372 = vadd.f32 %v6340, 0.0
        %v6373 = vadd.f32 %v6341, 0.0
        %v6374 = vadd.f32 %v6342, 0.0
        %v6375 = vadd.f32 %v6343, 0.0
        %v6376 = vadd.f32 %v6344, 0.0
        %v6377 = vadd.f32 %v6345, 0.0
        %v6378 = vadd.f32 %v6346, 0.0
        %v6379 = vadd.f32 %v6347, 0.0
        %v6380 = vadd.f32 %v6348, 0.0
        %v6381 = vadd.f32 %v6349, 0.0
        %v6382 = vadd.f32 %v6350, 0.0
        %v6383 = vadd.f32 %v6351, 0.0
        %v6384 = vadd.f32 %v6352, 0.0
        %v6385 = vadd.f32 %v6353, 0.0
        %v6386 = vadd.f32 %v6354, 0.0
        %s6387 = sld [smem:[#allocation4 + $0x1]]
        %v6388 = vstv %s6387
        %v6389 = vmul.f32 %v6289, %v6388
        %v6390 = vmul.f32 %v6290, %v6388
        %v6391 = vmul.f32 %v6291, %v6388
        %v6392 = vmul.f32 %v6292, %v6388
        %v6393 = vmul.f32 %v6293, %v6388
        %v6394 = vmul.f32 %v6294, %v6388
        %v6395 = vmul.f32 %v6295, %v6388
        %v6396 = vmul.f32 %v6296, %v6388
        %v6397 = vmul.f32 %v6297, %v6388
        %v6398 = vmul.f32 %v6298, %v6388
        %v6399 = vmul.f32 %v6299, %v6388
        %v6400 = vmul.f32 %v6300, %v6388
        %v6401 = vmul.f32 %v6301, %v6388
        %v6402 = vmul.f32 %v6302, %v6388
        %v6403 = vmul.f32 %v6303, %v6388
        %v6404 = vmul.f32 %v6304, %v6388
        %v6405 = vmul.f32 %v6305, %v6388
        %v6406 = vmul.f32 %v6306, %v6388
        %v6407 = vmul.f32 %v6307, %v6388
        %v6408 = vmul.f32 %v6308, %v6388
        %v6409 = vmul.f32 %v6309, %v6388
        %v6410 = vmul.f32 %v6310, %v6388
        %v6411 = vmul.f32 %v6311, %v6388
        %v6412 = vmul.f32 %v6312, %v6388
        %v6413 = vmul.f32 %v6313, %v6388
        %v6414 = vmul.f32 %v6314, %v6388
        %v6415 = vmul.f32 %v6315, %v6388
        %v6416 = vmul.f32 %v6316, %v6388
        %v6417 = vmul.f32 %v6317, %v6388
        %v6418 = vmul.f32 %v6318, %v6388
        %v6419 = vmul.f32 %v6319, %v6388
        %v6420 = vmul.f32 %v6320, %v6388
        %6453 = vrot.lane.b32.xlu0 %v6389, 127
        %v6454 = vpop.permute.xlu0 %6453
        %6455 = vrot.lane.b32.xlu0 %v6390, 127
        %v6456 = vpop.permute.xlu0 %6455
        %6457 = vrot.lane.b32.xlu0 %v6391, 127
        %v6458 = vpop.permute.xlu0 %6457
        %6459 = vrot.lane.b32.xlu0 %v6392, 127
        %v6460 = vpop.permute.xlu0 %6459
        %6461 = vrot.lane.b32.xlu0 %v6393, 127
        %v6462 = vpop.permute.xlu0 %6461
        %6463 = vrot.lane.b32.xlu0 %v6394, 127
        %v6464 = vpop.permute.xlu0 %6463
        %6465 = vrot.lane.b32.xlu0 %v6395, 127
        %v6466 = vpop.permute.xlu0 %6465
        %6467 = vrot.lane.b32.xlu0 %v6396, 127
        %v6468 = vpop.permute.xlu0 %6467
        %6469 = vrot.lane.b32.xlu0 %v6397, 127
        %v6470 = vpop.permute.xlu0 %6469
        %6471 = vrot.lane.b32.xlu0 %v6398, 127
        %v6472 = vpop.permute.xlu0 %6471
        %6473 = vrot.lane.b32.xlu0 %v6399, 127
        %v6474 = vpop.permute.xlu0 %6473
        %6475 = vrot.lane.b32.xlu0 %v6400, 127
        %v6476 = vpop.permute.xlu0 %6475
        %6477 = vrot.lane.b32.xlu0 %v6401, 127
        %v6478 = vpop.permute.xlu0 %6477
        %6479 = vrot.lane.b32.xlu0 %v6402, 127
        %v6480 = vpop.permute.xlu0 %6479
        %6481 = vrot.lane.b32.xlu0 %v6403, 127
        %v6482 = vpop.permute.xlu0 %6481
        %6483 = vrot.lane.b32.xlu0 %v6404, 127
        %v6484 = vpop.permute.xlu0 %6483
        %6485 = vrot.lane.b32.xlu0 %v6405, 127
        %v6486 = vpop.permute.xlu0 %6485
        %6487 = vrot.lane.b32.xlu0 %v6406, 127
        %v6488 = vpop.permute.xlu0 %6487
        %6489 = vrot.lane.b32.xlu0 %v6407, 127
        %v6490 = vpop.permute.xlu0 %6489
        %6491 = vrot.lane.b32.xlu0 %v6408, 127
        %v6492 = vpop.permute.xlu0 %6491
        %6493 = vrot.lane.b32.xlu0 %v6409, 127
        %v6494 = vpop.permute.xlu0 %6493
        %6495 = vrot.lane.b32.xlu0 %v6410, 127
        %v6496 = vpop.permute.xlu0 %6495
        %6497 = vrot.lane.b32.xlu0 %v6411, 127
        %v6498 = vpop.permute.xlu0 %6497
        %6499 = vrot.lane.b32.xlu0 %v6412, 127
        %v6500 = vpop.permute.xlu0 %6499
        %6501 = vrot.lane.b32.xlu0 %v6413, 127
        %v6502 = vpop.permute.xlu0 %6501
        %6503 = vrot.lane.b32.xlu0 %v6414, 127
        %v6504 = vpop.permute.xlu0 %6503
        %6505 = vrot.lane.b32.xlu0 %v6415, 127
        %v6506 = vpop.permute.xlu0 %6505
        %6507 = vrot.lane.b32.xlu0 %v6416, 127
        %v6508 = vpop.permute.xlu0 %6507
        %6509 = vrot.lane.b32.xlu0 %v6417, 127
        %v6510 = vpop.permute.xlu0 %6509
        %6511 = vrot.lane.b32.xlu0 %v6418, 127
        %v6512 = vpop.permute.xlu0 %6511
        %6513 = vrot.lane.b32.xlu0 %v6419, 127
        %v6514 = vpop.permute.xlu0 %6513
        %6515 = vrot.lane.b32.xlu0 %v6420, 127
        %v6516 = vpop.permute.xlu0 %6515
        %v6549 = vadd.f32 %v6355, %v6454
        %v6550 = vadd.f32 %v6356, %v6456
        %v6551 = vadd.f32 %v6357, %v6458
        %v6552 = vadd.f32 %v6358, %v6460
        %v6553 = vadd.f32 %v6359, %v6462
        %v6554 = vadd.f32 %v6360, %v6464
        %v6555 = vadd.f32 %v6361, %v6466
        %v6556 = vadd.f32 %v6362, %v6468
        %v6557 = vadd.f32 %v6363, %v6470
        %v6558 = vadd.f32 %v6364, %v6472
        %v6559 = vadd.f32 %v6365, %v6474
        %v6560 = vadd.f32 %v6366, %v6476
        %v6561 = vadd.f32 %v6367, %v6478
        %v6562 = vadd.f32 %v6368, %v6480
        %v6563 = vadd.f32 %v6369, %v6482
        %v6564 = vadd.f32 %v6370, %v6484
        %v6565 = vadd.f32 %v6371, %v6486
        %v6566 = vadd.f32 %v6372, %v6488
        %v6567 = vadd.f32 %v6373, %v6490
        %v6568 = vadd.f32 %v6374, %v6492
        %v6569 = vadd.f32 %v6375, %v6494
        %v6570 = vadd.f32 %v6376, %v6496
        %v6571 = vadd.f32 %v6377, %v6498
        %v6572 = vadd.f32 %v6378, %v6500
        %v6573 = vadd.f32 %v6379, %v6502
        %v6574 = vadd.f32 %v6380, %v6504
        %v6575 = vadd.f32 %v6381, %v6506
        %v6576 = vadd.f32 %v6382, %v6508
        %v6577 = vadd.f32 %v6383, %v6510
        %v6578 = vadd.f32 %v6384, %v6512
        %v6579 = vadd.f32 %v6385, %v6514
        %v6580 = vadd.f32 %v6386, %v6516
        %v6581 = vld [vmem:[#allocation3 + $0x1] sm:$0xff]
        %v6582 = vld [vmem:[#allocation3 + $0x9] sm:$0xff]
        %v6583 = vld [vmem:[#allocation3 + $0x19] sm:$0xff]
        %v6584 = vld [vmem:[#allocation3 + $0x21] sm:$0xff]
        %v6585 = vld [vmem:[#allocation3 + $0x31] sm:$0xff]
        %v6586 = vld [vmem:[#allocation3 + $0x39] sm:$0xff]
        %v6587 = vld [vmem:[#allocation3 + $0x49] sm:$0xff]
        %v6588 = vld [vmem:[#allocation3 + $0x51] sm:$0xff]
        %v6589 = vld [vmem:[#allocation3 + $0x61] sm:$0xff]
        %v6590 = vld [vmem:[#allocation3 + $0x69] sm:$0xff]
        %v6591 = vld [vmem:[#allocation3 + $0x79] sm:$0xff]
        %v6592 = vld [vmem:[#allocation3 + $0x81] sm:$0xff]
        %v6593 = vld [vmem:[#allocation3 + $0x91] sm:$0xff]
        %v6594 = vld [vmem:[#allocation3 + $0x99] sm:$0xff]
        %v6595 = vld [vmem:[#allocation3 + $0xa9] sm:$0xff]
        %v6596 = vld [vmem:[#allocation3 + $0xb1] sm:$0xff]
        %v6597 = vld [vmem:[#allocation3 + $0xc1] sm:$0xff]
        %v6598 = vld [vmem:[#allocation3 + $0xc9] sm:$0xff]
        %v6599 = vld [vmem:[#allocation3 + $0xd9] sm:$0xff]
        %v6600 = vld [vmem:[#allocation3 + $0xe1] sm:$0xff]
        %v6601 = vld [vmem:[#allocation3 + $0xf1] sm:$0xff]
        %v6602 = vld [vmem:[#allocation3 + $0xf9] sm:$0xff]
        %v6603 = vld [vmem:[#allocation3 + $0x109] sm:$0xff]
        %v6604 = vld [vmem:[#allocation3 + $0x111] sm:$0xff]
        %v6605 = vld [vmem:[#allocation3 + $0x121] sm:$0xff]
        %v6606 = vld [vmem:[#allocation3 + $0x129] sm:$0xff]
        %v6607 = vld [vmem:[#allocation3 + $0x139] sm:$0xff]
        %v6608 = vld [vmem:[#allocation3 + $0x141] sm:$0xff]
        %v6609 = vld [vmem:[#allocation3 + $0x151] sm:$0xff]
        %v6610 = vld [vmem:[#allocation3 + $0x159] sm:$0xff]
        %v6611 = vld [vmem:[#allocation3 + $0x169] sm:$0xff]
        %v6612 = vld [vmem:[#allocation3 + $0x171] sm:$0xff]
        %s6613 = sld [smem:[#allocation4 + $0x2]]
        %v6614 = vstv %s6613
        %v6615 = vmul.f32 %v6581, %v6614
        %v6616 = vmul.f32 %v6582, %v6614
        %v6617 = vmul.f32 %v6583, %v6614
        %v6618 = vmul.f32 %v6584, %v6614
        %v6619 = vmul.f32 %v6585, %v6614
        %v6620 = vmul.f32 %v6586, %v6614
        %v6621 = vmul.f32 %v6587, %v6614
        %v6622 = vmul.f32 %v6588, %v6614
        %v6623 = vmul.f32 %v6589, %v6614
        %v6624 = vmul.f32 %v6590, %v6614
        %v6625 = vmul.f32 %v6591, %v6614
        %v6626 = vmul.f32 %v6592, %v6614
        %v6627 = vmul.f32 %v6593, %v6614
        %v6628 = vmul.f32 %v6594, %v6614
        %v6629 = vmul.f32 %v6595, %v6614
        %v6630 = vmul.f32 %v6596, %v6614
        %v6631 = vmul.f32 %v6597, %v6614
        %v6632 = vmul.f32 %v6598, %v6614
        %v6633 = vmul.f32 %v6599, %v6614
        %v6634 = vmul.f32 %v6600, %v6614
        %v6635 = vmul.f32 %v6601, %v6614
        %v6636 = vmul.f32 %v6602, %v6614
        %v6637 = vmul.f32 %v6603, %v6614
        %v6638 = vmul.f32 %v6604, %v6614
        %v6639 = vmul.f32 %v6605, %v6614
        %v6640 = vmul.f32 %v6606, %v6614
        %v6641 = vmul.f32 %v6607, %v6614
        %v6642 = vmul.f32 %v6608, %v6614
        %v6643 = vmul.f32 %v6609, %v6614
        %v6644 = vmul.f32 %v6610, %v6614
        %v6645 = vmul.f32 %v6611, %v6614
        %v6646 = vmul.f32 %v6612, %v6614
        %v6647 = vadd.f32 %v6549, %v6615
        %v6648 = vadd.f32 %v6550, %v6616
        %v6649 = vadd.f32 %v6551, %v6617
        %v6650 = vadd.f32 %v6552, %v6618
        %v6651 = vadd.f32 %v6553, %v6619
        %v6652 = vadd.f32 %v6554, %v6620
        %v6653 = vadd.f32 %v6555, %v6621
        %v6654 = vadd.f32 %v6556, %v6622
        %v6655 = vadd.f32 %v6557, %v6623
        %v6656 = vadd.f32 %v6558, %v6624
        %v6657 = vadd.f32 %v6559, %v6625
        %v6658 = vadd.f32 %v6560, %v6626
        %v6659 = vadd.f32 %v6561, %v6627
        %v6660 = vadd.f32 %v6562, %v6628
        %v6661 = vadd.f32 %v6563, %v6629
        %v6662 = vadd.f32 %v6564, %v6630
        %v6663 = vadd.f32 %v6565, %v6631
        %v6664 = vadd.f32 %v6566, %v6632
        %v6665 = vadd.f32 %v6567, %v6633
        %v6666 = vadd.f32 %v6568, %v6634
        %v6667 = vadd.f32 %v6569, %v6635
        %v6668 = vadd.f32 %v6570, %v6636
        %v6669 = vadd.f32 %v6571, %v6637
        %v6670 = vadd.f32 %v6572, %v6638
        %v6671 = vadd.f32 %v6573, %v6639
        %v6672 = vadd.f32 %v6574, %v6640
        %v6673 = vadd.f32 %v6575, %v6641
        %v6674 = vadd.f32 %v6576, %v6642
        %v6675 = vadd.f32 %v6577, %v6643
        %v6676 = vadd.f32 %v6578, %v6644
        %v6677 = vadd.f32 %v6579, %v6645
        %v6678 = vadd.f32 %v6580, %v6646
        %s6679 = sld [smem:[#allocation4 + $0x3]]
        %v6680 = vstv %s6679
        %v6681 = vmul.f32 %v6581, %v6680
        %v6682 = vmul.f32 %v6582, %v6680
        %v6683 = vmul.f32 %v6583, %v6680
        %v6684 = vmul.f32 %v6584, %v6680
        %v6685 = vmul.f32 %v6585, %v6680
        %v6686 = vmul.f32 %v6586, %v6680
        %v6687 = vmul.f32 %v6587, %v6680
        %v6688 = vmul.f32 %v6588, %v6680
        %v6689 = vmul.f32 %v6589, %v6680
        %v6690 = vmul.f32 %v6590, %v6680
        %v6691 = vmul.f32 %v6591, %v6680
        %v6692 = vmul.f32 %v6592, %v6680
        %v6693 = vmul.f32 %v6593, %v6680
        %v6694 = vmul.f32 %v6594, %v6680
        %v6695 = vmul.f32 %v6595, %v6680
        %v6696 = vmul.f32 %v6596, %v6680
        %v6697 = vmul.f32 %v6597, %v6680
        %v6698 = vmul.f32 %v6598, %v6680
        %v6699 = vmul.f32 %v6599, %v6680
        %v6700 = vmul.f32 %v6600, %v6680
        %v6701 = vmul.f32 %v6601, %v6680
        %v6702 = vmul.f32 %v6602, %v6680
        %v6703 = vmul.f32 %v6603, %v6680
        %v6704 = vmul.f32 %v6604, %v6680
        %v6705 = vmul.f32 %v6605, %v6680
        %v6706 = vmul.f32 %v6606, %v6680
        %v6707 = vmul.f32 %v6607, %v6680
        %v6708 = vmul.f32 %v6608, %v6680
        %v6709 = vmul.f32 %v6609, %v6680
        %v6710 = vmul.f32 %v6610, %v6680
        %v6711 = vmul.f32 %v6611, %v6680
        %v6712 = vmul.f32 %v6612, %v6680
        %6745 = vrot.lane.b32.xlu0 %v6681, 127
        %v6746 = vpop.permute.xlu0 %6745
        %6747 = vrot.lane.b32.xlu0 %v6682, 127
        %v6748 = vpop.permute.xlu0 %6747
        %6749 = vrot.lane.b32.xlu0 %v6683, 127
        %v6750 = vpop.permute.xlu0 %6749
        %6751 = vrot.lane.b32.xlu0 %v6684, 127
        %v6752 = vpop.permute.xlu0 %6751
        %6753 = vrot.lane.b32.xlu0 %v6685, 127
        %v6754 = vpop.permute.xlu0 %6753
        %6755 = vrot.lane.b32.xlu0 %v6686, 127
        %v6756 = vpop.permute.xlu0 %6755
        %6757 = vrot.lane.b32.xlu0 %v6687, 127
        %v6758 = vpop.permute.xlu0 %6757
        %6759 = vrot.lane.b32.xlu0 %v6688, 127
        %v6760 = vpop.permute.xlu0 %6759
        %6761 = vrot.lane.b32.xlu0 %v6689, 127
        %v6762 = vpop.permute.xlu0 %6761
        %6763 = vrot.lane.b32.xlu0 %v6690, 127
        %v6764 = vpop.permute.xlu0 %6763
        %6765 = vrot.lane.b32.xlu0 %v6691, 127
        %v6766 = vpop.permute.xlu0 %6765
        %6767 = vrot.lane.b32.xlu0 %v6692, 127
        %v6768 = vpop.permute.xlu0 %6767
        %6769 = vrot.lane.b32.xlu0 %v6693, 127
        %v6770 = vpop.permute.xlu0 %6769
        %6771 = vrot.lane.b32.xlu0 %v6694, 127
        %v6772 = vpop.permute.xlu0 %6771
        %6773 = vrot.lane.b32.xlu0 %v6695, 127
        %v6774 = vpop.permute.xlu0 %6773
        %6775 = vrot.lane.b32.xlu0 %v6696, 127
        %v6776 = vpop.permute.xlu0 %6775
        %6777 = vrot.lane.b32.xlu0 %v6697, 127
        %v6778 = vpop.permute.xlu0 %6777
        %6779 = vrot.lane.b32.xlu0 %v6698, 127
        %v6780 = vpop.permute.xlu0 %6779
        %6781 = vrot.lane.b32.xlu0 %v6699, 127
        %v6782 = vpop.permute.xlu0 %6781
        %6783 = vrot.lane.b32.xlu0 %v6700, 127
        %v6784 = vpop.permute.xlu0 %6783
        %6785 = vrot.lane.b32.xlu0 %v6701, 127
        %v6786 = vpop.permute.xlu0 %6785
        %6787 = vrot.lane.b32.xlu0 %v6702, 127
        %v6788 = vpop.permute.xlu0 %6787
        %6789 = vrot.lane.b32.xlu0 %v6703, 127
        %v6790 = vpop.permute.xlu0 %6789
        %6791 = vrot.lane.b32.xlu0 %v6704, 127
        %v6792 = vpop.permute.xlu0 %6791
        %6793 = vrot.lane.b32.xlu0 %v6705, 127
        %v6794 = vpop.permute.xlu0 %6793
        %6795 = vrot.lane.b32.xlu0 %v6706, 127
        %v6796 = vpop.permute.xlu0 %6795
        %6797 = vrot.lane.b32.xlu0 %v6707, 127
        %v6798 = vpop.permute.xlu0 %6797
        %6799 = vrot.lane.b32.xlu0 %v6708, 127
        %v6800 = vpop.permute.xlu0 %6799
        %6801 = vrot.lane.b32.xlu0 %v6709, 127
        %v6802 = vpop.permute.xlu0 %6801
        %6803 = vrot.lane.b32.xlu0 %v6710, 127
        %v6804 = vpop.permute.xlu0 %6803
        %6805 = vrot.lane.b32.xlu0 %v6711, 127
        %v6806 = vpop.permute.xlu0 %6805
        %6807 = vrot.lane.b32.xlu0 %v6712, 127
        %v6808 = vpop.permute.xlu0 %6807
        %v6841 = vadd.f32 %v6647, %v6746
        %v6842 = vadd.f32 %v6648, %v6748
        %v6843 = vadd.f32 %v6649, %v6750
        %v6844 = vadd.f32 %v6650, %v6752
        %v6845 = vadd.f32 %v6651, %v6754
        %v6846 = vadd.f32 %v6652, %v6756
        %v6847 = vadd.f32 %v6653, %v6758
        %v6848 = vadd.f32 %v6654, %v6760
        %v6849 = vadd.f32 %v6655, %v6762
        %v6850 = vadd.f32 %v6656, %v6764
        %v6851 = vadd.f32 %v6657, %v6766
        %v6852 = vadd.f32 %v6658, %v6768
        %v6853 = vadd.f32 %v6659, %v6770
        %v6854 = vadd.f32 %v6660, %v6772
        %v6855 = vadd.f32 %v6661, %v6774
        %v6856 = vadd.f32 %v6662, %v6776
        %v6857 = vadd.f32 %v6663, %v6778
        %v6858 = vadd.f32 %v6664, %v6780
        %v6859 = vadd.f32 %v6665, %v6782
        %v6860 = vadd.f32 %v6666, %v6784
        %v6861 = vadd.f32 %v6667, %v6786
        %v6862 = vadd.f32 %v6668, %v6788
        %v6863 = vadd.f32 %v6669, %v6790
        %v6864 = vadd.f32 %v6670, %v6792
        %v6865 = vadd.f32 %v6671, %v6794
        %v6866 = vadd.f32 %v6672, %v6796
        %v6867 = vadd.f32 %v6673, %v6798
        %v6868 = vadd.f32 %v6674, %v6800
        %v6869 = vadd.f32 %v6675, %v6802
        %v6870 = vadd.f32 %v6676, %v6804
        %v6871 = vadd.f32 %v6677, %v6806
        %v6872 = vadd.f32 %v6678, %v6808
        %v6873 = vld [vmem:[#allocation3 + $0x2] sm:$0xff]
        %v6874 = vld [vmem:[#allocation3 + $0xa] sm:$0xff]
        %v6875 = vld [vmem:[#allocation3 + $0x1a] sm:$0xff]
        %v6876 = vld [vmem:[#allocation3 + $0x22] sm:$0xff]
        %v6877 = vld [vmem:[#allocation3 + $0x32] sm:$0xff]
        %v6878 = vld [vmem:[#allocation3 + $0x3a] sm:$0xff]
        %v6879 = vld [vmem:[#allocation3 + $0x4a] sm:$0xff]
        %v6880 = vld [vmem:[#allocation3 + $0x52] sm:$0xff]
        %v6881 = vld [vmem:[#allocation3 + $0x62] sm:$0xff]
        %v6882 = vld [vmem:[#allocation3 + $0x6a] sm:$0xff]
        %v6883 = vld [vmem:[#allocation3 + $0x7a] sm:$0xff]
        %v6884 = vld [vmem:[#allocation3 + $0x82] sm:$0xff]
        %v6885 = vld [vmem:[#allocation3 + $0x92] sm:$0xff]
        %v6886 = vld [vmem:[#allocation3 + $0x9a] sm:$0xff]
        %v6887 = vld [vmem:[#allocation3 + $0xaa] sm:$0xff]
        %v6888 = vld [vmem:[#allocation3 + $0xb2] sm:$0xff]
        %v6889 = vld [vmem:[#allocation3 + $0xc2] sm:$0xff]
        %v6890 = vld [vmem:[#allocation3 + $0xca] sm:$0xff]
        %v6891 = vld [vmem:[#allocation3 + $0xda] sm:$0xff]
        %v6892 = vld [vmem:[#allocation3 + $0xe2] sm:$0xff]
        %v6893 = vld [vmem:[#allocation3 + $0xf2] sm:$0xff]
        %v6894 = vld [vmem:[#allocation3 + $0xfa] sm:$0xff]
        %v6895 = vld [vmem:[#allocation3 + $0x10a] sm:$0xff]
        %v6896 = vld [vmem:[#allocation3 + $0x112] sm:$0xff]
        %v6897 = vld [vmem:[#allocation3 + $0x122] sm:$0xff]
        %v6898 = vld [vmem:[#allocation3 + $0x12a] sm:$0xff]
        %v6899 = vld [vmem:[#allocation3 + $0x13a] sm:$0xff]
        %v6900 = vld [vmem:[#allocation3 + $0x142] sm:$0xff]
        %v6901 = vld [vmem:[#allocation3 + $0x152] sm:$0xff]
        %v6902 = vld [vmem:[#allocation3 + $0x15a] sm:$0xff]
        %v6903 = vld [vmem:[#allocation3 + $0x16a] sm:$0xff]
        %v6904 = vld [vmem:[#allocation3 + $0x172] sm:$0xff]
        %s6905 = sld [smem:[#allocation4 + $0x4]]
        %v6906 = vstv %s6905
        %v6907 = vmul.f32 %v6873, %v6906
        %v6908 = vmul.f32 %v6874, %v6906
        %v6909 = vmul.f32 %v6875, %v6906
        %v6910 = vmul.f32 %v6876, %v6906
        %v6911 = vmul.f32 %v6877, %v6906
        %v6912 = vmul.f32 %v6878, %v6906
        %v6913 = vmul.f32 %v6879, %v6906
        %v6914 = vmul.f32 %v6880, %v6906
        %v6915 = vmul.f32 %v6881, %v6906
        %v6916 = vmul.f32 %v6882, %v6906
        %v6917 = vmul.f32 %v6883, %v6906
        %v6918 = vmul.f32 %v6884, %v6906
        %v6919 = vmul.f32 %v6885, %v6906
        %v6920 = vmul.f32 %v6886, %v6906
        %v6921 = vmul.f32 %v6887, %v6906
        %v6922 = vmul.f32 %v6888, %v6906
        %v6923 = vmul.f32 %v6889, %v6906
        %v6924 = vmul.f32 %v6890, %v6906
        %v6925 = vmul.f32 %v6891, %v6906
        %v6926 = vmul.f32 %v6892, %v6906
        %v6927 = vmul.f32 %v6893, %v6906
        %v6928 = vmul.f32 %v6894, %v6906
        %v6929 = vmul.f32 %v6895, %v6906
        %v6930 = vmul.f32 %v6896, %v6906
        %v6931 = vmul.f32 %v6897, %v6906
        %v6932 = vmul.f32 %v6898, %v6906
        %v6933 = vmul.f32 %v6899, %v6906
        %v6934 = vmul.f32 %v6900, %v6906
        %v6935 = vmul.f32 %v6901, %v6906
        %v6936 = vmul.f32 %v6902, %v6906
        %v6937 = vmul.f32 %v6903, %v6906
        %v6938 = vmul.f32 %v6904, %v6906
        %v6939 = vadd.f32 %v6841, %v6907
        %v6940 = vadd.f32 %v6842, %v6908
        %v6941 = vadd.f32 %v6843, %v6909
        %v6942 = vadd.f32 %v6844, %v6910
        %v6943 = vadd.f32 %v6845, %v6911
        %v6944 = vadd.f32 %v6846, %v6912
        %v6945 = vadd.f32 %v6847, %v6913
        %v6946 = vadd.f32 %v6848, %v6914
        %v6947 = vadd.f32 %v6849, %v6915
        %v6948 = vadd.f32 %v6850, %v6916
        %v6949 = vadd.f32 %v6851, %v6917
        %v6950 = vadd.f32 %v6852, %v6918
        %v6951 = vadd.f32 %v6853, %v6919
        %v6952 = vadd.f32 %v6854, %v6920
        %v6953 = vadd.f32 %v6855, %v6921
        %v6954 = vadd.f32 %v6856, %v6922
        %v6955 = vadd.f32 %v6857, %v6923
        %v6956 = vadd.f32 %v6858, %v6924
        %v6957 = vadd.f32 %v6859, %v6925
        %v6958 = vadd.f32 %v6860, %v6926
        %v6959 = vadd.f32 %v6861, %v6927
        %v6960 = vadd.f32 %v6862, %v6928
        %v6961 = vadd.f32 %v6863, %v6929
        %v6962 = vadd.f32 %v6864, %v6930
        %v6963 = vadd.f32 %v6865, %v6931
        %v6964 = vadd.f32 %v6866, %v6932
        %v6965 = vadd.f32 %v6867, %v6933
        %v6966 = vadd.f32 %v6868, %v6934
        %v6967 = vadd.f32 %v6869, %v6935
        %v6968 = vadd.f32 %v6870, %v6936
        %v6969 = vadd.f32 %v6871, %v6937
        %v6970 = vadd.f32 %v6872, %v6938
        %s6971 = sld [smem:[#allocation4 + $0x5]]
        %v6972 = vstv %s6971
        %v6973 = vmul.f32 %v6873, %v6972
        %v6974 = vmul.f32 %v6874, %v6972
        %v6975 = vmul.f32 %v6875, %v6972
        %v6976 = vmul.f32 %v6876, %v6972
        %v6977 = vmul.f32 %v6877, %v6972
        %v6978 = vmul.f32 %v6878, %v6972
        %v6979 = vmul.f32 %v6879, %v6972
        %v6980 = vmul.f32 %v6880, %v6972
        %v6981 = vmul.f32 %v6881, %v6972
        %v6982 = vmul.f32 %v6882, %v6972
        %v6983 = vmul.f32 %v6883, %v6972
        %v6984 = vmul.f32 %v6884, %v6972
        %v6985 = vmul.f32 %v6885, %v6972
        %v6986 = vmul.f32 %v6886, %v6972
        %v6987 = vmul.f32 %v6887, %v6972
        %v6988 = vmul.f32 %v6888, %v6972
        %v6989 = vmul.f32 %v6889, %v6972
        %v6990 = vmul.f32 %v6890, %v6972
        %v6991 = vmul.f32 %v6891, %v6972
        %v6992 = vmul.f32 %v6892, %v6972
        %v6993 = vmul.f32 %v6893, %v6972
        %v6994 = vmul.f32 %v6894, %v6972
        %v6995 = vmul.f32 %v6895, %v6972
        %v6996 = vmul.f32 %v6896, %v6972
        %v6997 = vmul.f32 %v6897, %v6972
        %v6998 = vmul.f32 %v6898, %v6972
        %v6999 = vmul.f32 %v6899, %v6972
        %v7000 = vmul.f32 %v6900, %v6972
        %v7001 = vmul.f32 %v6901, %v6972
        %v7002 = vmul.f32 %v6902, %v6972
        %v7003 = vmul.f32 %v6903, %v6972
        %v7004 = vmul.f32 %v6904, %v6972
        %7037 = vrot.lane.b32.xlu0 %v6973, 127
        %v7038 = vpop.permute.xlu0 %7037
        %7039 = vrot.lane.b32.xlu0 %v6974, 127
        %v7040 = vpop.permute.xlu0 %7039
        %7041 = vrot.lane.b32.xlu0 %v6975, 127
        %v7042 = vpop.permute.xlu0 %7041
        %7043 = vrot.lane.b32.xlu0 %v6976, 127
        %v7044 = vpop.permute.xlu0 %7043
        %7045 = vrot.lane.b32.xlu0 %v6977, 127
        %v7046 = vpop.permute.xlu0 %7045
        %7047 = vrot.lane.b32.xlu0 %v6978, 127
        %v7048 = vpop.permute.xlu0 %7047
        %7049 = vrot.lane.b32.xlu0 %v6979, 127
        %v7050 = vpop.permute.xlu0 %7049
        %7051 = vrot.lane.b32.xlu0 %v6980, 127
        %v7052 = vpop.permute.xlu0 %7051
        %7053 = vrot.lane.b32.xlu0 %v6981, 127
        %v7054 = vpop.permute.xlu0 %7053
        %7055 = vrot.lane.b32.xlu0 %v6982, 127
        %v7056 = vpop.permute.xlu0 %7055
        %7057 = vrot.lane.b32.xlu0 %v6983, 127
        %v7058 = vpop.permute.xlu0 %7057
        %7059 = vrot.lane.b32.xlu0 %v6984, 127
        %v7060 = vpop.permute.xlu0 %7059
        %7061 = vrot.lane.b32.xlu0 %v6985, 127
        %v7062 = vpop.permute.xlu0 %7061
        %7063 = vrot.lane.b32.xlu0 %v6986, 127
        %v7064 = vpop.permute.xlu0 %7063
        %7065 = vrot.lane.b32.xlu0 %v6987, 127
        %v7066 = vpop.permute.xlu0 %7065
        %7067 = vrot.lane.b32.xlu0 %v6988, 127
        %v7068 = vpop.permute.xlu0 %7067
        %7069 = vrot.lane.b32.xlu0 %v6989, 127
        %v7070 = vpop.permute.xlu0 %7069
        %7071 = vrot.lane.b32.xlu0 %v6990, 127
        %v7072 = vpop.permute.xlu0 %7071
        %7073 = vrot.lane.b32.xlu0 %v6991, 127
        %v7074 = vpop.permute.xlu0 %7073
        %7075 = vrot.lane.b32.xlu0 %v6992, 127
        %v7076 = vpop.permute.xlu0 %7075
        %7077 = vrot.lane.b32.xlu0 %v6993, 127
        %v7078 = vpop.permute.xlu0 %7077
        %7079 = vrot.lane.b32.xlu0 %v6994, 127
        %v7080 = vpop.permute.xlu0 %7079
        %7081 = vrot.lane.b32.xlu0 %v6995, 127
        %v7082 = vpop.permute.xlu0 %7081
        %7083 = vrot.lane.b32.xlu0 %v6996, 127
        %v7084 = vpop.permute.xlu0 %7083
        %7085 = vrot.lane.b32.xlu0 %v6997, 127
        %v7086 = vpop.permute.xlu0 %7085
        %7087 = vrot.lane.b32.xlu0 %v6998, 127
        %v7088 = vpop.permute.xlu0 %7087
        %7089 = vrot.lane.b32.xlu0 %v6999, 127
        %v7090 = vpop.permute.xlu0 %7089
        %7091 = vrot.lane.b32.xlu0 %v7000, 127
        %v7092 = vpop.permute.xlu0 %7091
        %7093 = vrot.lane.b32.xlu0 %v7001, 127
        %v7094 = vpop.permute.xlu0 %7093
        %7095 = vrot.lane.b32.xlu0 %v7002, 127
        %v7096 = vpop.permute.xlu0 %7095
        %7097 = vrot.lane.b32.xlu0 %v7003, 127
        %v7098 = vpop.permute.xlu0 %7097
        %7099 = vrot.lane.b32.xlu0 %v7004, 127
        %v7100 = vpop.permute.xlu0 %7099
        %v7133 = vadd.f32 %v6939, %v7038
        %v7134 = vadd.f32 %v6940, %v7040
        %v7135 = vadd.f32 %v6941, %v7042
        %v7136 = vadd.f32 %v6942, %v7044
        %v7137 = vadd.f32 %v6943, %v7046
        %v7138 = vadd.f32 %v6944, %v7048
        %v7139 = vadd.f32 %v6945, %v7050
        %v7140 = vadd.f32 %v6946, %v7052
        %v7141 = vadd.f32 %v6947, %v7054
        %v7142 = vadd.f32 %v6948, %v7056
        %v7143 = vadd.f32 %v6949, %v7058
        %v7144 = vadd.f32 %v6950, %v7060
        %v7145 = vadd.f32 %v6951, %v7062
        %v7146 = vadd.f32 %v6952, %v7064
        %v7147 = vadd.f32 %v6953, %v7066
        %v7148 = vadd.f32 %v6954, %v7068
        %v7149 = vadd.f32 %v6955, %v7070
        %v7150 = vadd.f32 %v6956, %v7072
        %v7151 = vadd.f32 %v6957, %v7074
        %v7152 = vadd.f32 %v6958, %v7076
        %v7153 = vadd.f32 %v6959, %v7078
        %v7154 = vadd.f32 %v6960, %v7080
        %v7155 = vadd.f32 %v6961, %v7082
        %v7156 = vadd.f32 %v6962, %v7084
        %v7157 = vadd.f32 %v6963, %v7086
        %v7158 = vadd.f32 %v6964, %v7088
        %v7159 = vadd.f32 %v6965, %v7090
        %v7160 = vadd.f32 %v6966, %v7092
        %v7161 = vadd.f32 %v6967, %v7094
        %v7162 = vadd.f32 %v6968, %v7096
        %v7163 = vadd.f32 %v6969, %v7098
        %v7164 = vadd.f32 %v6970, %v7100
        %v7165 = vld [vmem:[%s6256] sm:$0xff]
        %v7166 = vld [vmem:[%s6256 + $0x8] sm:$0xff]
        %v7167 = vld [vmem:[%s6256 + $0x18] sm:$0xff]
        %v7168 = vld [vmem:[%s6256 + $0x20] sm:$0xff]
        %v7169 = vld [vmem:[%s6256 + $0x30] sm:$0xff]
        %v7170 = vld [vmem:[%s6256 + $0x38] sm:$0xff]
        %v7171 = vld [vmem:[%s6256 + $0x48] sm:$0xff]
        %v7172 = vld [vmem:[%s6256 + $0x50] sm:$0xff]
        %v7173 = vld [vmem:[%s6256 + $0x60] sm:$0xff]
        %v7174 = vld [vmem:[%s6256 + $0x68] sm:$0xff]
        %v7175 = vld [vmem:[%s6256 + $0x78] sm:$0xff]
        %v7176 = vld [vmem:[%s6256 + $0x80] sm:$0xff]
        %v7177 = vld [vmem:[%s6256 + $0x90] sm:$0xff]
        %v7178 = vld [vmem:[%s6256 + $0x98] sm:$0xff]
        %v7179 = vld [vmem:[%s6256 + $0xa8] sm:$0xff]
        %v7180 = vld [vmem:[%s6256 + $0xb0] sm:$0xff]
        %v7181 = vld [vmem:[%s6256 + $0xc0] sm:$0xff]
        %v7182 = vld [vmem:[%s6256 + $0xc8] sm:$0xff]
        %v7183 = vld [vmem:[%s6256 + $0xd8] sm:$0xff]
        %v7184 = vld [vmem:[%s6256 + $0xe0] sm:$0xff]
        %v7185 = vld [vmem:[%s6256 + $0xf0] sm:$0xff]
        %v7186 = vld [vmem:[%s6256 + $0xf8] sm:$0xff]
        %v7187 = vld [vmem:[%s6256 + $0x108] sm:$0xff]
        %v7188 = vld [vmem:[%s6256 + $0x110] sm:$0xff]
        %v7189 = vld [vmem:[%s6256 + $0x120] sm:$0xff]
        %v7190 = vld [vmem:[%s6256 + $0x128] sm:$0xff]
        %v7191 = vld [vmem:[%s6256 + $0x138] sm:$0xff]
        %v7192 = vld [vmem:[%s6256 + $0x140] sm:$0xff]
        %v7193 = vld [vmem:[%s6256 + $0x150] sm:$0xff]
        %v7194 = vld [vmem:[%s6256 + $0x158] sm:$0xff]
        %v7195 = vld [vmem:[%s6256 + $0x168] sm:$0xff]
        %v7196 = vld [vmem:[%s6256 + $0x170] sm:$0xff]
        %s7197 = sld [smem:[#allocation4 + $0x6]]
        %v7198 = vstv %s7197
        %v7199 = vmul.f32 %v7165, %v7198
        %v7200 = vmul.f32 %v7166, %v7198
        %v7201 = vmul.f32 %v7167, %v7198
        %v7202 = vmul.f32 %v7168, %v7198
        %v7203 = vmul.f32 %v7169, %v7198
        %v7204 = vmul.f32 %v7170, %v7198
        %v7205 = vmul.f32 %v7171, %v7198
        %v7206 = vmul.f32 %v7172, %v7198
        %v7207 = vmul.f32 %v7173, %v7198
        %v7208 = vmul.f32 %v7174, %v7198
        %v7209 = vmul.f32 %v7175, %v7198
        %v7210 = vmul.f32 %v7176, %v7198
        %v7211 = vmul.f32 %v7177, %v7198
        %v7212 = vmul.f32 %v7178, %v7198
        %v7213 = vmul.f32 %v7179, %v7198
        %v7214 = vmul.f32 %v7180, %v7198
        %v7215 = vmul.f32 %v7181, %v7198
        %v7216 = vmul.f32 %v7182, %v7198
        %v7217 = vmul.f32 %v7183, %v7198
        %v7218 = vmul.f32 %v7184, %v7198
        %v7219 = vmul.f32 %v7185, %v7198
        %v7220 = vmul.f32 %v7186, %v7198
        %v7221 = vmul.f32 %v7187, %v7198
        %v7222 = vmul.f32 %v7188, %v7198
        %v7223 = vmul.f32 %v7189, %v7198
        %v7224 = vmul.f32 %v7190, %v7198
        %v7225 = vmul.f32 %v7191, %v7198
        %v7226 = vmul.f32 %v7192, %v7198
        %v7227 = vmul.f32 %v7193, %v7198
        %v7228 = vmul.f32 %v7194, %v7198
        %v7229 = vmul.f32 %v7195, %v7198
        %v7230 = vmul.f32 %v7196, %v7198
        %v7231 = vadd.f32 %v7133, %v7199
        %v7232 = vadd.f32 %v7134, %v7200
        %v7233 = vadd.f32 %v7135, %v7201
        %v7234 = vadd.f32 %v7136, %v7202
        %v7235 = vadd.f32 %v7137, %v7203
        %v7236 = vadd.f32 %v7138, %v7204
        %v7237 = vadd.f32 %v7139, %v7205
        %v7238 = vadd.f32 %v7140, %v7206
        %v7239 = vadd.f32 %v7141, %v7207
        %v7240 = vadd.f32 %v7142, %v7208
        %v7241 = vadd.f32 %v7143, %v7209
        %v7242 = vadd.f32 %v7144, %v7210
        %v7243 = vadd.f32 %v7145, %v7211
        %v7244 = vadd.f32 %v7146, %v7212
        %v7245 = vadd.f32 %v7147, %v7213
        %v7246 = vadd.f32 %v7148, %v7214
        %v7247 = vadd.f32 %v7149, %v7215
        %v7248 = vadd.f32 %v7150, %v7216
        %v7249 = vadd.f32 %v7151, %v7217
        %v7250 = vadd.f32 %v7152, %v7218
        %v7251 = vadd.f32 %v7153, %v7219
        %v7252 = vadd.f32 %v7154, %v7220
        %v7253 = vadd.f32 %v7155, %v7221
        %v7254 = vadd.f32 %v7156, %v7222
        %v7255 = vadd.f32 %v7157, %v7223
        %v7256 = vadd.f32 %v7158, %v7224
        %v7257 = vadd.f32 %v7159, %v7225
        %v7258 = vadd.f32 %v7160, %v7226
        %v7259 = vadd.f32 %v7161, %v7227
        %v7260 = vadd.f32 %v7162, %v7228
        %v7261 = vadd.f32 %v7163, %v7229
        %v7262 = vadd.f32 %v7164, %v7230
        %s7263 = sld [smem:[#allocation4 + $0x7]]
        %v7264 = vstv %s7263
        %v7265 = vmul.f32 %v7165, %v7264
        %v7266 = vmul.f32 %v7166, %v7264
        %v7267 = vmul.f32 %v7167, %v7264
        %v7268 = vmul.f32 %v7168, %v7264
        %v7269 = vmul.f32 %v7169, %v7264
        %v7270 = vmul.f32 %v7170, %v7264
        %v7271 = vmul.f32 %v7171, %v7264
        %v7272 = vmul.f32 %v7172, %v7264
        %v7273 = vmul.f32 %v7173, %v7264
        %v7274 = vmul.f32 %v7174, %v7264
        %v7275 = vmul.f32 %v7175, %v7264
        %v7276 = vmul.f32 %v7176, %v7264
        %v7277 = vmul.f32 %v7177, %v7264
        %v7278 = vmul.f32 %v7178, %v7264
        %v7279 = vmul.f32 %v7179, %v7264
        %v7280 = vmul.f32 %v7180, %v7264
        %v7281 = vmul.f32 %v7181, %v7264
        %v7282 = vmul.f32 %v7182, %v7264
        %v7283 = vmul.f32 %v7183, %v7264
        %v7284 = vmul.f32 %v7184, %v7264
        %v7285 = vmul.f32 %v7185, %v7264
        %v7286 = vmul.f32 %v7186, %v7264
        %v7287 = vmul.f32 %v7187, %v7264
        %v7288 = vmul.f32 %v7188, %v7264
        %v7289 = vmul.f32 %v7189, %v7264
        %v7290 = vmul.f32 %v7190, %v7264
        %v7291 = vmul.f32 %v7191, %v7264
        %v7292 = vmul.f32 %v7192, %v7264
        %v7293 = vmul.f32 %v7193, %v7264
        %v7294 = vmul.f32 %v7194, %v7264
        %v7295 = vmul.f32 %v7195, %v7264
        %v7296 = vmul.f32 %v7196, %v7264
        %7329 = vrot.lane.b32.xlu0 %v7265, 127
        %v7330 = vpop.permute.xlu0 %7329
        %7331 = vrot.lane.b32.xlu0 %v7266, 127
        %v7332 = vpop.permute.xlu0 %7331
        %7333 = vrot.lane.b32.xlu0 %v7267, 127
        %v7334 = vpop.permute.xlu0 %7333
        %7335 = vrot.lane.b32.xlu0 %v7268, 127
        %v7336 = vpop.permute.xlu0 %7335
        %7337 = vrot.lane.b32.xlu0 %v7269, 127
        %v7338 = vpop.permute.xlu0 %7337
        %7339 = vrot.lane.b32.xlu0 %v7270, 127
        %v7340 = vpop.permute.xlu0 %7339
        %7341 = vrot.lane.b32.xlu0 %v7271, 127
        %v7342 = vpop.permute.xlu0 %7341
        %7343 = vrot.lane.b32.xlu0 %v7272, 127
        %v7344 = vpop.permute.xlu0 %7343
        %7345 = vrot.lane.b32.xlu0 %v7273, 127
        %v7346 = vpop.permute.xlu0 %7345
        %7347 = vrot.lane.b32.xlu0 %v7274, 127
        %v7348 = vpop.permute.xlu0 %7347
        %7349 = vrot.lane.b32.xlu0 %v7275, 127
        %v7350 = vpop.permute.xlu0 %7349
        %7351 = vrot.lane.b32.xlu0 %v7276, 127
        %v7352 = vpop.permute.xlu0 %7351
        %7353 = vrot.lane.b32.xlu0 %v7277, 127
        %v7354 = vpop.permute.xlu0 %7353
        %7355 = vrot.lane.b32.xlu0 %v7278, 127
        %v7356 = vpop.permute.xlu0 %7355
        %7357 = vrot.lane.b32.xlu0 %v7279, 127
        %v7358 = vpop.permute.xlu0 %7357
        %7359 = vrot.lane.b32.xlu0 %v7280, 127
        %v7360 = vpop.permute.xlu0 %7359
        %7361 = vrot.lane.b32.xlu0 %v7281, 127
        %v7362 = vpop.permute.xlu0 %7361
        %7363 = vrot.lane.b32.xlu0 %v7282, 127
        %v7364 = vpop.permute.xlu0 %7363
        %7365 = vrot.lane.b32.xlu0 %v7283, 127
        %v7366 = vpop.permute.xlu0 %7365
        %7367 = vrot.lane.b32.xlu0 %v7284, 127
        %v7368 = vpop.permute.xlu0 %7367
        %7369 = vrot.lane.b32.xlu0 %v7285, 127
        %v7370 = vpop.permute.xlu0 %7369
        %7371 = vrot.lane.b32.xlu0 %v7286, 127
        %v7372 = vpop.permute.xlu0 %7371
        %7373 = vrot.lane.b32.xlu0 %v7287, 127
        %v7374 = vpop.permute.xlu0 %7373
        %7375 = vrot.lane.b32.xlu0 %v7288, 127
        %v7376 = vpop.permute.xlu0 %7375
        %7377 = vrot.lane.b32.xlu0 %v7289, 127
        %v7378 = vpop.permute.xlu0 %7377
        %7379 = vrot.lane.b32.xlu0 %v7290, 127
        %v7380 = vpop.permute.xlu0 %7379
        %7381 = vrot.lane.b32.xlu0 %v7291, 127
        %v7382 = vpop.permute.xlu0 %7381
        %7383 = vrot.lane.b32.xlu0 %v7292, 127
        %v7384 = vpop.permute.xlu0 %7383
        %7385 = vrot.lane.b32.xlu0 %v7293, 127
        %v7386 = vpop.permute.xlu0 %7385
        %7387 = vrot.lane.b32.xlu0 %v7294, 127
        %v7388 = vpop.permute.xlu0 %7387
        %7389 = vrot.lane.b32.xlu0 %v7295, 127
        %v7390 = vpop.permute.xlu0 %7389
        %7391 = vrot.lane.b32.xlu0 %v7296, 127
        %v7392 = vpop.permute.xlu0 %7391
        %v7425 = vadd.f32 %v7231, %v7330
        %v7426 = vadd.f32 %v7232, %v7332
        %v7427 = vadd.f32 %v7233, %v7334
        %v7428 = vadd.f32 %v7234, %v7336
        %v7429 = vadd.f32 %v7235, %v7338
        %v7430 = vadd.f32 %v7236, %v7340
        %v7431 = vadd.f32 %v7237, %v7342
        %v7432 = vadd.f32 %v7238, %v7344
        %v7433 = vadd.f32 %v7239, %v7346
        %v7434 = vadd.f32 %v7240, %v7348
        %v7435 = vadd.f32 %v7241, %v7350
        %v7436 = vadd.f32 %v7242, %v7352
        %v7437 = vadd.f32 %v7243, %v7354
        %v7438 = vadd.f32 %v7244, %v7356
        %v7439 = vadd.f32 %v7245, %v7358
        %v7440 = vadd.f32 %v7246, %v7360
        %v7441 = vadd.f32 %v7247, %v7362
        %v7442 = vadd.f32 %v7248, %v7364
        %v7443 = vadd.f32 %v7249, %v7366
        %v7444 = vadd.f32 %v7250, %v7368
        %v7445 = vadd.f32 %v7251, %v7370
        %v7446 = vadd.f32 %v7252, %v7372
        %v7447 = vadd.f32 %v7253, %v7374
        %v7448 = vadd.f32 %v7254, %v7376
        %v7449 = vadd.f32 %v7255, %v7378
        %v7450 = vadd.f32 %v7256, %v7380
        %v7451 = vadd.f32 %v7257, %v7382
        %v7452 = vadd.f32 %v7258, %v7384
        %v7453 = vadd.f32 %v7259, %v7386
        %v7454 = vadd.f32 %v7260, %v7388
        %v7455 = vadd.f32 %v7261, %v7390
        %v7456 = vadd.f32 %v7262, %v7392
        %v7457 = vld [vmem:[%s6256 + $0x1] sm:$0xff]
        %v7458 = vld [vmem:[%s6256 + $0x9] sm:$0xff]
        %v7459 = vld [vmem:[%s6256 + $0x19] sm:$0xff]
        %v7460 = vld [vmem:[%s6256 + $0x21] sm:$0xff]
        %v7461 = vld [vmem:[%s6256 + $0x31] sm:$0xff]
        %v7462 = vld [vmem:[%s6256 + $0x39] sm:$0xff]
        %v7463 = vld [vmem:[%s6256 + $0x49] sm:$0xff]
        %v7464 = vld [vmem:[%s6256 + $0x51] sm:$0xff]
        %v7465 = vld [vmem:[%s6256 + $0x61] sm:$0xff]
        %v7466 = vld [vmem:[%s6256 + $0x69] sm:$0xff]
        %v7467 = vld [vmem:[%s6256 + $0x79] sm:$0xff]
        %v7468 = vld [vmem:[%s6256 + $0x81] sm:$0xff]
        %v7469 = vld [vmem:[%s6256 + $0x91] sm:$0xff]
        %v7470 = vld [vmem:[%s6256 + $0x99] sm:$0xff]
        %v7471 = vld [vmem:[%s6256 + $0xa9] sm:$0xff]
        %v7472 = vld [vmem:[%s6256 + $0xb1] sm:$0xff]
        %v7473 = vld [vmem:[%s6256 + $0xc1] sm:$0xff]
        %v7474 = vld [vmem:[%s6256 + $0xc9] sm:$0xff]
        %v7475 = vld [vmem:[%s6256 + $0xd9] sm:$0xff]
        %v7476 = vld [vmem:[%s6256 + $0xe1] sm:$0xff]
        %v7477 = vld [vmem:[%s6256 + $0xf1] sm:$0xff]
        %v7478 = vld [vmem:[%s6256 + $0xf9] sm:$0xff]
        %v7479 = vld [vmem:[%s6256 + $0x109] sm:$0xff]
        %v7480 = vld [vmem:[%s6256 + $0x111] sm:$0xff]
        %v7481 = vld [vmem:[%s6256 + $0x121] sm:$0xff]
        %v7482 = vld [vmem:[%s6256 + $0x129] sm:$0xff]
        %v7483 = vld [vmem:[%s6256 + $0x139] sm:$0xff]
        %v7484 = vld [vmem:[%s6256 + $0x141] sm:$0xff]
        %v7485 = vld [vmem:[%s6256 + $0x151] sm:$0xff]
        %v7486 = vld [vmem:[%s6256 + $0x159] sm:$0xff]
        %v7487 = vld [vmem:[%s6256 + $0x169] sm:$0xff]
        %v7488 = vld [vmem:[%s6256 + $0x171] sm:$0xff]
        %s7489 = sld [smem:[#allocation4 + $0x8]]
        %v7490 = vstv %s7489
        %v7491 = vmul.f32 %v7457, %v7490
        %v7492 = vmul.f32 %v7458, %v7490
        %v7493 = vmul.f32 %v7459, %v7490
        %v7494 = vmul.f32 %v7460, %v7490
        %v7495 = vmul.f32 %v7461, %v7490
        %v7496 = vmul.f32 %v7462, %v7490
        %v7497 = vmul.f32 %v7463, %v7490
        %v7498 = vmul.f32 %v7464, %v7490
        %v7499 = vmul.f32 %v7465, %v7490
        %v7500 = vmul.f32 %v7466, %v7490
        %v7501 = vmul.f32 %v7467, %v7490
        %v7502 = vmul.f32 %v7468, %v7490
        %v7503 = vmul.f32 %v7469, %v7490
        %v7504 = vmul.f32 %v7470, %v7490
        %v7505 = vmul.f32 %v7471, %v7490
        %v7506 = vmul.f32 %v7472, %v7490
        %v7507 = vmul.f32 %v7473, %v7490
        %v7508 = vmul.f32 %v7474, %v7490
        %v7509 = vmul.f32 %v7475, %v7490
        %v7510 = vmul.f32 %v7476, %v7490
        %v7511 = vmul.f32 %v7477, %v7490
        %v7512 = vmul.f32 %v7478, %v7490
        %v7513 = vmul.f32 %v7479, %v7490
        %v7514 = vmul.f32 %v7480, %v7490
        %v7515 = vmul.f32 %v7481, %v7490
        %v7516 = vmul.f32 %v7482, %v7490
        %v7517 = vmul.f32 %v7483, %v7490
        %v7518 = vmul.f32 %v7484, %v7490
        %v7519 = vmul.f32 %v7485, %v7490
        %v7520 = vmul.f32 %v7486, %v7490
        %v7521 = vmul.f32 %v7487, %v7490
        %v7522 = vmul.f32 %v7488, %v7490
        %v7523 = vadd.f32 %v7425, %v7491
        %v7524 = vadd.f32 %v7426, %v7492
        %v7525 = vadd.f32 %v7427, %v7493
        %v7526 = vadd.f32 %v7428, %v7494
        %v7527 = vadd.f32 %v7429, %v7495
        %v7528 = vadd.f32 %v7430, %v7496
        %v7529 = vadd.f32 %v7431, %v7497
        %v7530 = vadd.f32 %v7432, %v7498
        %v7531 = vadd.f32 %v7433, %v7499
        %v7532 = vadd.f32 %v7434, %v7500
        %v7533 = vadd.f32 %v7435, %v7501
        %v7534 = vadd.f32 %v7436, %v7502
        %v7535 = vadd.f32 %v7437, %v7503
        %v7536 = vadd.f32 %v7438, %v7504
        %v7537 = vadd.f32 %v7439, %v7505
        %v7538 = vadd.f32 %v7440, %v7506
        %v7539 = vadd.f32 %v7441, %v7507
        %v7540 = vadd.f32 %v7442, %v7508
        %v7541 = vadd.f32 %v7443, %v7509
        %v7542 = vadd.f32 %v7444, %v7510
        %v7543 = vadd.f32 %v7445, %v7511
        %v7544 = vadd.f32 %v7446, %v7512
        %v7545 = vadd.f32 %v7447, %v7513
        %v7546 = vadd.f32 %v7448, %v7514
        %v7547 = vadd.f32 %v7449, %v7515
        %v7548 = vadd.f32 %v7450, %v7516
        %v7549 = vadd.f32 %v7451, %v7517
        %v7550 = vadd.f32 %v7452, %v7518
        %v7551 = vadd.f32 %v7453, %v7519
        %v7552 = vadd.f32 %v7454, %v7520
        %v7553 = vadd.f32 %v7455, %v7521
        %v7554 = vadd.f32 %v7456, %v7522
        %s7555 = sld [smem:[#allocation4 + $0x9]]
        %v7556 = vstv %s7555
        %v7557 = vmul.f32 %v7457, %v7556
        %v7558 = vmul.f32 %v7458, %v7556
        %v7559 = vmul.f32 %v7459, %v7556
        %v7560 = vmul.f32 %v7460, %v7556
        %v7561 = vmul.f32 %v7461, %v7556
        %v7562 = vmul.f32 %v7462, %v7556
        %v7563 = vmul.f32 %v7463, %v7556
        %v7564 = vmul.f32 %v7464, %v7556
        %v7565 = vmul.f32 %v7465, %v7556
        %v7566 = vmul.f32 %v7466, %v7556
        %v7567 = vmul.f32 %v7467, %v7556
        %v7568 = vmul.f32 %v7468, %v7556
        %v7569 = vmul.f32 %v7469, %v7556
        %v7570 = vmul.f32 %v7470, %v7556
        %v7571 = vmul.f32 %v7471, %v7556
        %v7572 = vmul.f32 %v7472, %v7556
        %v7573 = vmul.f32 %v7473, %v7556
        %v7574 = vmul.f32 %v7474, %v7556
        %v7575 = vmul.f32 %v7475, %v7556
        %v7576 = vmul.f32 %v7476, %v7556
        %v7577 = vmul.f32 %v7477, %v7556
        %v7578 = vmul.f32 %v7478, %v7556
        %v7579 = vmul.f32 %v7479, %v7556
        %v7580 = vmul.f32 %v7480, %v7556
        %v7581 = vmul.f32 %v7481, %v7556
        %v7582 = vmul.f32 %v7482, %v7556
        %v7583 = vmul.f32 %v7483, %v7556
        %v7584 = vmul.f32 %v7484, %v7556
        %v7585 = vmul.f32 %v7485, %v7556
        %v7586 = vmul.f32 %v7486, %v7556
        %v7587 = vmul.f32 %v7487, %v7556
        %v7588 = vmul.f32 %v7488, %v7556
        %7621 = vrot.lane.b32.xlu0 %v7557, 127
        %v7622 = vpop.permute.xlu0 %7621
        %7623 = vrot.lane.b32.xlu0 %v7558, 127
        %v7624 = vpop.permute.xlu0 %7623
        %7625 = vrot.lane.b32.xlu0 %v7559, 127
        %v7626 = vpop.permute.xlu0 %7625
        %7627 = vrot.lane.b32.xlu0 %v7560, 127
        %v7628 = vpop.permute.xlu0 %7627
        %7629 = vrot.lane.b32.xlu0 %v7561, 127
        %v7630 = vpop.permute.xlu0 %7629
        %7631 = vrot.lane.b32.xlu0 %v7562, 127
        %v7632 = vpop.permute.xlu0 %7631
        %7633 = vrot.lane.b32.xlu0 %v7563, 127
        %v7634 = vpop.permute.xlu0 %7633
        %7635 = vrot.lane.b32.xlu0 %v7564, 127
        %v7636 = vpop.permute.xlu0 %7635
        %7637 = vrot.lane.b32.xlu0 %v7565, 127
        %v7638 = vpop.permute.xlu0 %7637
        %7639 = vrot.lane.b32.xlu0 %v7566, 127
        %v7640 = vpop.permute.xlu0 %7639
        %7641 = vrot.lane.b32.xlu0 %v7567, 127
        %v7642 = vpop.permute.xlu0 %7641
        %7643 = vrot.lane.b32.xlu0 %v7568, 127
        %v7644 = vpop.permute.xlu0 %7643
        %7645 = vrot.lane.b32.xlu0 %v7569, 127
        %v7646 = vpop.permute.xlu0 %7645
        %7647 = vrot.lane.b32.xlu0 %v7570, 127
        %v7648 = vpop.permute.xlu0 %7647
        %7649 = vrot.lane.b32.xlu0 %v7571, 127
        %v7650 = vpop.permute.xlu0 %7649
        %7651 = vrot.lane.b32.xlu0 %v7572, 127
        %v7652 = vpop.permute.xlu0 %7651
        %7653 = vrot.lane.b32.xlu0 %v7573, 127
        %v7654 = vpop.permute.xlu0 %7653
        %7655 = vrot.lane.b32.xlu0 %v7574, 127
        %v7656 = vpop.permute.xlu0 %7655
        %7657 = vrot.lane.b32.xlu0 %v7575, 127
        %v7658 = vpop.permute.xlu0 %7657
        %7659 = vrot.lane.b32.xlu0 %v7576, 127
        %v7660 = vpop.permute.xlu0 %7659
        %7661 = vrot.lane.b32.xlu0 %v7577, 127
        %v7662 = vpop.permute.xlu0 %7661
        %7663 = vrot.lane.b32.xlu0 %v7578, 127
        %v7664 = vpop.permute.xlu0 %7663
        %7665 = vrot.lane.b32.xlu0 %v7579, 127
        %v7666 = vpop.permute.xlu0 %7665
        %7667 = vrot.lane.b32.xlu0 %v7580, 127
        %v7668 = vpop.permute.xlu0 %7667
        %7669 = vrot.lane.b32.xlu0 %v7581, 127
        %v7670 = vpop.permute.xlu0 %7669
        %7671 = vrot.lane.b32.xlu0 %v7582, 127
        %v7672 = vpop.permute.xlu0 %7671
        %7673 = vrot.lane.b32.xlu0 %v7583, 127
        %v7674 = vpop.permute.xlu0 %7673
        %7675 = vrot.lane.b32.xlu0 %v7584, 127
        %v7676 = vpop.permute.xlu0 %7675
        %7677 = vrot.lane.b32.xlu0 %v7585, 127
        %v7678 = vpop.permute.xlu0 %7677
        %7679 = vrot.lane.b32.xlu0 %v7586, 127
        %v7680 = vpop.permute.xlu0 %7679
        %7681 = vrot.lane.b32.xlu0 %v7587, 127
        %v7682 = vpop.permute.xlu0 %7681
        %7683 = vrot.lane.b32.xlu0 %v7588, 127
        %v7684 = vpop.permute.xlu0 %7683
        %v7717 = vadd.f32 %v7523, %v7622
        %v7718 = vadd.f32 %v7524, %v7624
        %v7719 = vadd.f32 %v7525, %v7626
        %v7720 = vadd.f32 %v7526, %v7628
        %v7721 = vadd.f32 %v7527, %v7630
        %v7722 = vadd.f32 %v7528, %v7632
        %v7723 = vadd.f32 %v7529, %v7634
        %v7724 = vadd.f32 %v7530, %v7636
        %v7725 = vadd.f32 %v7531, %v7638
        %v7726 = vadd.f32 %v7532, %v7640
        %v7727 = vadd.f32 %v7533, %v7642
        %v7728 = vadd.f32 %v7534, %v7644
        %v7729 = vadd.f32 %v7535, %v7646
        %v7730 = vadd.f32 %v7536, %v7648
        %v7731 = vadd.f32 %v7537, %v7650
        %v7732 = vadd.f32 %v7538, %v7652
        %v7733 = vadd.f32 %v7539, %v7654
        %v7734 = vadd.f32 %v7540, %v7656
        %v7735 = vadd.f32 %v7541, %v7658
        %v7736 = vadd.f32 %v7542, %v7660
        %v7737 = vadd.f32 %v7543, %v7662
        %v7738 = vadd.f32 %v7544, %v7664
        %v7739 = vadd.f32 %v7545, %v7666
        %v7740 = vadd.f32 %v7546, %v7668
        %v7741 = vadd.f32 %v7547, %v7670
        %v7742 = vadd.f32 %v7548, %v7672
        %v7743 = vadd.f32 %v7549, %v7674
        %v7744 = vadd.f32 %v7550, %v7676
        %v7745 = vadd.f32 %v7551, %v7678
        %v7746 = vadd.f32 %v7552, %v7680
        %v7747 = vadd.f32 %v7553, %v7682
        %v7748 = vadd.f32 %v7554, %v7684
        %v7749 = vld [vmem:[%s6256 + $0x2] sm:$0xff]
        %v7750 = vld [vmem:[%s6256 + $0xa] sm:$0xff]
        %v7751 = vld [vmem:[%s6256 + $0x1a] sm:$0xff]
        %v7752 = vld [vmem:[%s6256 + $0x22] sm:$0xff]
        %v7753 = vld [vmem:[%s6256 + $0x32] sm:$0xff]
        %v7754 = vld [vmem:[%s6256 + $0x3a] sm:$0xff]
        %v7755 = vld [vmem:[%s6256 + $0x4a] sm:$0xff]
        %v7756 = vld [vmem:[%s6256 + $0x52] sm:$0xff]
        %v7757 = vld [vmem:[%s6256 + $0x62] sm:$0xff]
        %v7758 = vld [vmem:[%s6256 + $0x6a] sm:$0xff]
        %v7759 = vld [vmem:[%s6256 + $0x7a] sm:$0xff]
        %v7760 = vld [vmem:[%s6256 + $0x82] sm:$0xff]
        %v7761 = vld [vmem:[%s6256 + $0x92] sm:$0xff]
        %v7762 = vld [vmem:[%s6256 + $0x9a] sm:$0xff]
        %v7763 = vld [vmem:[%s6256 + $0xaa] sm:$0xff]
        %v7764 = vld [vmem:[%s6256 + $0xb2] sm:$0xff]
        %v7765 = vld [vmem:[%s6256 + $0xc2] sm:$0xff]
        %v7766 = vld [vmem:[%s6256 + $0xca] sm:$0xff]
        %v7767 = vld [vmem:[%s6256 + $0xda] sm:$0xff]
        %v7768 = vld [vmem:[%s6256 + $0xe2] sm:$0xff]
        %v7769 = vld [vmem:[%s6256 + $0xf2] sm:$0xff]
        %v7770 = vld [vmem:[%s6256 + $0xfa] sm:$0xff]
        %v7771 = vld [vmem:[%s6256 + $0x10a] sm:$0xff]
        %v7772 = vld [vmem:[%s6256 + $0x112] sm:$0xff]
        %v7773 = vld [vmem:[%s6256 + $0x122] sm:$0xff]
        %v7774 = vld [vmem:[%s6256 + $0x12a] sm:$0xff]
        %v7775 = vld [vmem:[%s6256 + $0x13a] sm:$0xff]
        %v7776 = vld [vmem:[%s6256 + $0x142] sm:$0xff]
        %v7777 = vld [vmem:[%s6256 + $0x152] sm:$0xff]
        %v7778 = vld [vmem:[%s6256 + $0x15a] sm:$0xff]
        %v7779 = vld [vmem:[%s6256 + $0x16a] sm:$0xff]
        %v7780 = vld [vmem:[%s6256 + $0x172] sm:$0xff]
        %s7781 = sld [smem:[#allocation4 + $0xa]]
        %v7782 = vstv %s7781
        %v7783 = vmul.f32 %v7749, %v7782
        %v7784 = vmul.f32 %v7750, %v7782
        %v7785 = vmul.f32 %v7751, %v7782
        %v7786 = vmul.f32 %v7752, %v7782
        %v7787 = vmul.f32 %v7753, %v7782
        %v7788 = vmul.f32 %v7754, %v7782
        %v7789 = vmul.f32 %v7755, %v7782
        %v7790 = vmul.f32 %v7756, %v7782
        %v7791 = vmul.f32 %v7757, %v7782
        %v7792 = vmul.f32 %v7758, %v7782
        %v7793 = vmul.f32 %v7759, %v7782
        %v7794 = vmul.f32 %v7760, %v7782
        %v7795 = vmul.f32 %v7761, %v7782
        %v7796 = vmul.f32 %v7762, %v7782
        %v7797 = vmul.f32 %v7763, %v7782
        %v7798 = vmul.f32 %v7764, %v7782
        %v7799 = vmul.f32 %v7765, %v7782
        %v7800 = vmul.f32 %v7766, %v7782
        %v7801 = vmul.f32 %v7767, %v7782
        %v7802 = vmul.f32 %v7768, %v7782
        %v7803 = vmul.f32 %v7769, %v7782
        %v7804 = vmul.f32 %v7770, %v7782
        %v7805 = vmul.f32 %v7771, %v7782
        %v7806 = vmul.f32 %v7772, %v7782
        %v7807 = vmul.f32 %v7773, %v7782
        %v7808 = vmul.f32 %v7774, %v7782
        %v7809 = vmul.f32 %v7775, %v7782
        %v7810 = vmul.f32 %v7776, %v7782
        %v7811 = vmul.f32 %v7777, %v7782
        %v7812 = vmul.f32 %v7778, %v7782
        %v7813 = vmul.f32 %v7779, %v7782
        %v7814 = vmul.f32 %v7780, %v7782
        %v7815 = vadd.f32 %v7717, %v7783
        %v7816 = vadd.f32 %v7718, %v7784
        %v7817 = vadd.f32 %v7719, %v7785
        %v7818 = vadd.f32 %v7720, %v7786
        %v7819 = vadd.f32 %v7721, %v7787
        %v7820 = vadd.f32 %v7722, %v7788
        %v7821 = vadd.f32 %v7723, %v7789
        %v7822 = vadd.f32 %v7724, %v7790
        %v7823 = vadd.f32 %v7725, %v7791
        %v7824 = vadd.f32 %v7726, %v7792
        %v7825 = vadd.f32 %v7727, %v7793
        %v7826 = vadd.f32 %v7728, %v7794
        %v7827 = vadd.f32 %v7729, %v7795
        %v7828 = vadd.f32 %v7730, %v7796
        %v7829 = vadd.f32 %v7731, %v7797
        %v7830 = vadd.f32 %v7732, %v7798
        %v7831 = vadd.f32 %v7733, %v7799
        %v7832 = vadd.f32 %v7734, %v7800
        %v7833 = vadd.f32 %v7735, %v7801
        %v7834 = vadd.f32 %v7736, %v7802
        %v7835 = vadd.f32 %v7737, %v7803
        %v7836 = vadd.f32 %v7738, %v7804
        %v7837 = vadd.f32 %v7739, %v7805
        %v7838 = vadd.f32 %v7740, %v7806
        %v7839 = vadd.f32 %v7741, %v7807
        %v7840 = vadd.f32 %v7742, %v7808
        %v7841 = vadd.f32 %v7743, %v7809
        %v7842 = vadd.f32 %v7744, %v7810
        %v7843 = vadd.f32 %v7745, %v7811
        %v7844 = vadd.f32 %v7746, %v7812
        %v7845 = vadd.f32 %v7747, %v7813
        %v7846 = vadd.f32 %v7748, %v7814
        %s7847 = sld [smem:[#allocation4 + $0xb]]
        %v7848 = vstv %s7847
        %v7849 = vmul.f32 %v7749, %v7848
        %v7850 = vmul.f32 %v7750, %v7848
        %v7851 = vmul.f32 %v7751, %v7848
        %v7852 = vmul.f32 %v7752, %v7848
        %v7853 = vmul.f32 %v7753, %v7848
        %v7854 = vmul.f32 %v7754, %v7848
        %v7855 = vmul.f32 %v7755, %v7848
        %v7856 = vmul.f32 %v7756, %v7848
        %v7857 = vmul.f32 %v7757, %v7848
        %v7858 = vmul.f32 %v7758, %v7848
        %v7859 = vmul.f32 %v7759, %v7848
        %v7860 = vmul.f32 %v7760, %v7848
        %v7861 = vmul.f32 %v7761, %v7848
        %v7862 = vmul.f32 %v7762, %v7848
        %v7863 = vmul.f32 %v7763, %v7848
        %v7864 = vmul.f32 %v7764, %v7848
        %v7865 = vmul.f32 %v7765, %v7848
        %v7866 = vmul.f32 %v7766, %v7848
        %v7867 = vmul.f32 %v7767, %v7848
        %v7868 = vmul.f32 %v7768, %v7848
        %v7869 = vmul.f32 %v7769, %v7848
        %v7870 = vmul.f32 %v7770, %v7848
        %v7871 = vmul.f32 %v7771, %v7848
        %v7872 = vmul.f32 %v7772, %v7848
        %v7873 = vmul.f32 %v7773, %v7848
        %v7874 = vmul.f32 %v7774, %v7848
        %v7875 = vmul.f32 %v7775, %v7848
        %v7876 = vmul.f32 %v7776, %v7848
        %v7877 = vmul.f32 %v7777, %v7848
        %v7878 = vmul.f32 %v7778, %v7848
        %v7879 = vmul.f32 %v7779, %v7848
        %v7880 = vmul.f32 %v7780, %v7848
        %7913 = vrot.lane.b32.xlu0 %v7849, 127
        %v7914 = vpop.permute.xlu0 %7913
        %7915 = vrot.lane.b32.xlu0 %v7850, 127
        %v7916 = vpop.permute.xlu0 %7915
        %7917 = vrot.lane.b32.xlu0 %v7851, 127
        %v7918 = vpop.permute.xlu0 %7917
        %7919 = vrot.lane.b32.xlu0 %v7852, 127
        %v7920 = vpop.permute.xlu0 %7919
        %7921 = vrot.lane.b32.xlu0 %v7853, 127
        %v7922 = vpop.permute.xlu0 %7921
        %7923 = vrot.lane.b32.xlu0 %v7854, 127
        %v7924 = vpop.permute.xlu0 %7923
        %7925 = vrot.lane.b32.xlu0 %v7855, 127
        %v7926 = vpop.permute.xlu0 %7925
        %7927 = vrot.lane.b32.xlu0 %v7856, 127
        %v7928 = vpop.permute.xlu0 %7927
        %7929 = vrot.lane.b32.xlu0 %v7857, 127
        %v7930 = vpop.permute.xlu0 %7929
        %7931 = vrot.lane.b32.xlu0 %v7858, 127
        %v7932 = vpop.permute.xlu0 %7931
        %7933 = vrot.lane.b32.xlu0 %v7859, 127
        %v7934 = vpop.permute.xlu0 %7933
        %7935 = vrot.lane.b32.xlu0 %v7860, 127
        %v7936 = vpop.permute.xlu0 %7935
        %7937 = vrot.lane.b32.xlu0 %v7861, 127
        %v7938 = vpop.permute.xlu0 %7937
        %7939 = vrot.lane.b32.xlu0 %v7862, 127
        %v7940 = vpop.permute.xlu0 %7939
        %7941 = vrot.lane.b32.xlu0 %v7863, 127
        %v7942 = vpop.permute.xlu0 %7941
        %7943 = vrot.lane.b32.xlu0 %v7864, 127
        %v7944 = vpop.permute.xlu0 %7943
        %7945 = vrot.lane.b32.xlu0 %v7865, 127
        %v7946 = vpop.permute.xlu0 %7945
        %7947 = vrot.lane.b32.xlu0 %v7866, 127
        %v7948 = vpop.permute.xlu0 %7947
        %7949 = vrot.lane.b32.xlu0 %v7867, 127
        %v7950 = vpop.permute.xlu0 %7949
        %7951 = vrot.lane.b32.xlu0 %v7868, 127
        %v7952 = vpop.permute.xlu0 %7951
        %7953 = vrot.lane.b32.xlu0 %v7869, 127
        %v7954 = vpop.permute.xlu0 %7953
        %7955 = vrot.lane.b32.xlu0 %v7870, 127
        %v7956 = vpop.permute.xlu0 %7955
        %7957 = vrot.lane.b32.xlu0 %v7871, 127
        %v7958 = vpop.permute.xlu0 %7957
        %7959 = vrot.lane.b32.xlu0 %v7872, 127
        %v7960 = vpop.permute.xlu0 %7959
        %7961 = vrot.lane.b32.xlu0 %v7873, 127
        %v7962 = vpop.permute.xlu0 %7961
        %7963 = vrot.lane.b32.xlu0 %v7874, 127
        %v7964 = vpop.permute.xlu0 %7963
        %7965 = vrot.lane.b32.xlu0 %v7875, 127
        %v7966 = vpop.permute.xlu0 %7965
        %7967 = vrot.lane.b32.xlu0 %v7876, 127
        %v7968 = vpop.permute.xlu0 %7967
        %7969 = vrot.lane.b32.xlu0 %v7877, 127
        %v7970 = vpop.permute.xlu0 %7969
        %7971 = vrot.lane.b32.xlu0 %v7878, 127
        %v7972 = vpop.permute.xlu0 %7971
        %7973 = vrot.lane.b32.xlu0 %v7879, 127
        %v7974 = vpop.permute.xlu0 %7973
        %7975 = vrot.lane.b32.xlu0 %v7880, 127
        %v7976 = vpop.permute.xlu0 %7975
        %v8009 = vadd.f32 %v7815, %v7914
        %v8010 = vadd.f32 %v7816, %v7916
        %v8011 = vadd.f32 %v7817, %v7918
        %v8012 = vadd.f32 %v7818, %v7920
        %v8013 = vadd.f32 %v7819, %v7922
        %v8014 = vadd.f32 %v7820, %v7924
        %v8015 = vadd.f32 %v7821, %v7926
        %v8016 = vadd.f32 %v7822, %v7928
        %v8017 = vadd.f32 %v7823, %v7930
        %v8018 = vadd.f32 %v7824, %v7932
        %v8019 = vadd.f32 %v7825, %v7934
        %v8020 = vadd.f32 %v7826, %v7936
        %v8021 = vadd.f32 %v7827, %v7938
        %v8022 = vadd.f32 %v7828, %v7940
        %v8023 = vadd.f32 %v7829, %v7942
        %v8024 = vadd.f32 %v7830, %v7944
        %v8025 = vadd.f32 %v7831, %v7946
        %v8026 = vadd.f32 %v7832, %v7948
        %v8027 = vadd.f32 %v7833, %v7950
        %v8028 = vadd.f32 %v7834, %v7952
        %v8029 = vadd.f32 %v7835, %v7954
        %v8030 = vadd.f32 %v7836, %v7956
        %v8031 = vadd.f32 %v7837, %v7958
        %v8032 = vadd.f32 %v7838, %v7960
        %v8033 = vadd.f32 %v7839, %v7962
        %v8034 = vadd.f32 %v7840, %v7964
        %v8035 = vadd.f32 %v7841, %v7966
        %v8036 = vadd.f32 %v7842, %v7968
        %v8037 = vadd.f32 %v7843, %v7970
        %v8038 = vadd.f32 %v7844, %v7972
        %v8039 = vadd.f32 %v7845, %v7974
        %v8040 = vadd.f32 %v7846, %v7976
        %s8041 = scalar_lea.vmem [#allocation3], 48
        %v8042 = vld [vmem:[%s8041] sm:$0xff]
        %v8043 = vld [vmem:[%s8041 + $0x8] sm:$0xff]
        %v8044 = vld [vmem:[%s8041 + $0x18] sm:$0xff]
        %v8045 = vld [vmem:[%s8041 + $0x20] sm:$0xff]
        %v8046 = vld [vmem:[%s8041 + $0x30] sm:$0xff]
        %v8047 = vld [vmem:[%s8041 + $0x38] sm:$0xff]
        %v8048 = vld [vmem:[%s8041 + $0x48] sm:$0xff]
        %v8049 = vld [vmem:[%s8041 + $0x50] sm:$0xff]
        %v8050 = vld [vmem:[%s8041 + $0x60] sm:$0xff]
        %v8051 = vld [vmem:[%s8041 + $0x68] sm:$0xff]
        %v8052 = vld [vmem:[%s8041 + $0x78] sm:$0xff]
        %v8053 = vld [vmem:[%s8041 + $0x80] sm:$0xff]
        %v8054 = vld [vmem:[%s8041 + $0x90] sm:$0xff]
        %v8055 = vld [vmem:[%s8041 + $0x98] sm:$0xff]
        %v8056 = vld [vmem:[%s8041 + $0xa8] sm:$0xff]
        %v8057 = vld [vmem:[%s8041 + $0xb0] sm:$0xff]
        %v8058 = vld [vmem:[%s8041 + $0xc0] sm:$0xff]
        %v8059 = vld [vmem:[%s8041 + $0xc8] sm:$0xff]
        %v8060 = vld [vmem:[%s8041 + $0xd8] sm:$0xff]
        %v8061 = vld [vmem:[%s8041 + $0xe0] sm:$0xff]
        %v8062 = vld [vmem:[%s8041 + $0xf0] sm:$0xff]
        %v8063 = vld [vmem:[%s8041 + $0xf8] sm:$0xff]
        %v8064 = vld [vmem:[%s8041 + $0x108] sm:$0xff]
        %v8065 = vld [vmem:[%s8041 + $0x110] sm:$0xff]
        %v8066 = vld [vmem:[%s8041 + $0x120] sm:$0xff]
        %v8067 = vld [vmem:[%s8041 + $0x128] sm:$0xff]
        %v8068 = vld [vmem:[%s8041 + $0x138] sm:$0xff]
        %v8069 = vld [vmem:[%s8041 + $0x140] sm:$0xff]
        %v8070 = vld [vmem:[%s8041 + $0x150] sm:$0xff]
        %v8071 = vld [vmem:[%s8041 + $0x158] sm:$0xff]
        %v8072 = vld [vmem:[%s8041 + $0x168] sm:$0xff]
        %v8073 = vld [vmem:[%s8041 + $0x170] sm:$0xff]
        %s8074 = sld [smem:[#allocation4 + $0xc]]
        %v8075 = vstv %s8074
        %v8076 = vmul.f32 %v8042, %v8075
        %v8077 = vmul.f32 %v8043, %v8075
        %v8078 = vmul.f32 %v8044, %v8075
        %v8079 = vmul.f32 %v8045, %v8075
        %v8080 = vmul.f32 %v8046, %v8075
        %v8081 = vmul.f32 %v8047, %v8075
        %v8082 = vmul.f32 %v8048, %v8075
        %v8083 = vmul.f32 %v8049, %v8075
        %v8084 = vmul.f32 %v8050, %v8075
        %v8085 = vmul.f32 %v8051, %v8075
        %v8086 = vmul.f32 %v8052, %v8075
        %v8087 = vmul.f32 %v8053, %v8075
        %v8088 = vmul.f32 %v8054, %v8075
        %v8089 = vmul.f32 %v8055, %v8075
        %v8090 = vmul.f32 %v8056, %v8075
        %v8091 = vmul.f32 %v8057, %v8075
        %v8092 = vmul.f32 %v8058, %v8075
        %v8093 = vmul.f32 %v8059, %v8075
        %v8094 = vmul.f32 %v8060, %v8075
        %v8095 = vmul.f32 %v8061, %v8075
        %v8096 = vmul.f32 %v8062, %v8075
        %v8097 = vmul.f32 %v8063, %v8075
        %v8098 = vmul.f32 %v8064, %v8075
        %v8099 = vmul.f32 %v8065, %v8075
        %v8100 = vmul.f32 %v8066, %v8075
        %v8101 = vmul.f32 %v8067, %v8075
        %v8102 = vmul.f32 %v8068, %v8075
        %v8103 = vmul.f32 %v8069, %v8075
        %v8104 = vmul.f32 %v8070, %v8075
        %v8105 = vmul.f32 %v8071, %v8075
        %v8106 = vmul.f32 %v8072, %v8075
        %v8107 = vmul.f32 %v8073, %v8075
        %v8108 = vadd.f32 %v8009, %v8076
        %v8109 = vadd.f32 %v8010, %v8077
        %v8110 = vadd.f32 %v8011, %v8078
        %v8111 = vadd.f32 %v8012, %v8079
        %v8112 = vadd.f32 %v8013, %v8080
        %v8113 = vadd.f32 %v8014, %v8081
        %v8114 = vadd.f32 %v8015, %v8082
        %v8115 = vadd.f32 %v8016, %v8083
        %v8116 = vadd.f32 %v8017, %v8084
        %v8117 = vadd.f32 %v8018, %v8085
        %v8118 = vadd.f32 %v8019, %v8086
        %v8119 = vadd.f32 %v8020, %v8087
        %v8120 = vadd.f32 %v8021, %v8088
        %v8121 = vadd.f32 %v8022, %v8089
        %v8122 = vadd.f32 %v8023, %v8090
        %v8123 = vadd.f32 %v8024, %v8091
        %v8124 = vadd.f32 %v8025, %v8092
        %v8125 = vadd.f32 %v8026, %v8093
        %v8126 = vadd.f32 %v8027, %v8094
        %v8127 = vadd.f32 %v8028, %v8095
        %v8128 = vadd.f32 %v8029, %v8096
        %v8129 = vadd.f32 %v8030, %v8097
        %v8130 = vadd.f32 %v8031, %v8098
        %v8131 = vadd.f32 %v8032, %v8099
        %v8132 = vadd.f32 %v8033, %v8100
        %v8133 = vadd.f32 %v8034, %v8101
        %v8134 = vadd.f32 %v8035, %v8102
        %v8135 = vadd.f32 %v8036, %v8103
        %v8136 = vadd.f32 %v8037, %v8104
        %v8137 = vadd.f32 %v8038, %v8105
        %v8138 = vadd.f32 %v8039, %v8106
        %v8139 = vadd.f32 %v8040, %v8107
        %s8140 = sld [smem:[#allocation4 + $0xd]]
        %v8141 = vstv %s8140
        %v8142 = vmul.f32 %v8042, %v8141
        %v8143 = vmul.f32 %v8043, %v8141
        %v8144 = vmul.f32 %v8044, %v8141
        %v8145 = vmul.f32 %v8045, %v8141
        %v8146 = vmul.f32 %v8046, %v8141
        %v8147 = vmul.f32 %v8047, %v8141
        %v8148 = vmul.f32 %v8048, %v8141
        %v8149 = vmul.f32 %v8049, %v8141
        %v8150 = vmul.f32 %v8050, %v8141
        %v8151 = vmul.f32 %v8051, %v8141
        %v8152 = vmul.f32 %v8052, %v8141
        %v8153 = vmul.f32 %v8053, %v8141
        %v8154 = vmul.f32 %v8054, %v8141
        %v8155 = vmul.f32 %v8055, %v8141
        %v8156 = vmul.f32 %v8056, %v8141
        %v8157 = vmul.f32 %v8057, %v8141
        %v8158 = vmul.f32 %v8058, %v8141
        %v8159 = vmul.f32 %v8059, %v8141
        %v8160 = vmul.f32 %v8060, %v8141
        %v8161 = vmul.f32 %v8061, %v8141
        %v8162 = vmul.f32 %v8062, %v8141
        %v8163 = vmul.f32 %v8063, %v8141
        %v8164 = vmul.f32 %v8064, %v8141
        %v8165 = vmul.f32 %v8065, %v8141
        %v8166 = vmul.f32 %v8066, %v8141
        %v8167 = vmul.f32 %v8067, %v8141
        %v8168 = vmul.f32 %v8068, %v8141
        %v8169 = vmul.f32 %v8069, %v8141
        %v8170 = vmul.f32 %v8070, %v8141
        %v8171 = vmul.f32 %v8071, %v8141
        %v8172 = vmul.f32 %v8072, %v8141
        %v8173 = vmul.f32 %v8073, %v8141
        %8206 = vrot.lane.b32.xlu0 %v8142, 127
        %v8207 = vpop.permute.xlu0 %8206
        %8208 = vrot.lane.b32.xlu0 %v8143, 127
        %v8209 = vpop.permute.xlu0 %8208
        %8210 = vrot.lane.b32.xlu0 %v8144, 127
        %v8211 = vpop.permute.xlu0 %8210
        %8212 = vrot.lane.b32.xlu0 %v8145, 127
        %v8213 = vpop.permute.xlu0 %8212
        %8214 = vrot.lane.b32.xlu0 %v8146, 127
        %v8215 = vpop.permute.xlu0 %8214
        %8216 = vrot.lane.b32.xlu0 %v8147, 127
        %v8217 = vpop.permute.xlu0 %8216
        %8218 = vrot.lane.b32.xlu0 %v8148, 127
        %v8219 = vpop.permute.xlu0 %8218
        %8220 = vrot.lane.b32.xlu0 %v8149, 127
        %v8221 = vpop.permute.xlu0 %8220
        %8222 = vrot.lane.b32.xlu0 %v8150, 127
        %v8223 = vpop.permute.xlu0 %8222
        %8224 = vrot.lane.b32.xlu0 %v8151, 127
        %v8225 = vpop.permute.xlu0 %8224
        %8226 = vrot.lane.b32.xlu0 %v8152, 127
        %v8227 = vpop.permute.xlu0 %8226
        %8228 = vrot.lane.b32.xlu0 %v8153, 127
        %v8229 = vpop.permute.xlu0 %8228
        %8230 = vrot.lane.b32.xlu0 %v8154, 127
        %v8231 = vpop.permute.xlu0 %8230
        %8232 = vrot.lane.b32.xlu0 %v8155, 127
        %v8233 = vpop.permute.xlu0 %8232
        %8234 = vrot.lane.b32.xlu0 %v8156, 127
        %v8235 = vpop.permute.xlu0 %8234
        %8236 = vrot.lane.b32.xlu0 %v8157, 127
        %v8237 = vpop.permute.xlu0 %8236
        %8238 = vrot.lane.b32.xlu0 %v8158, 127
        %v8239 = vpop.permute.xlu0 %8238
        %8240 = vrot.lane.b32.xlu0 %v8159, 127
        %v8241 = vpop.permute.xlu0 %8240
        %8242 = vrot.lane.b32.xlu0 %v8160, 127
        %v8243 = vpop.permute.xlu0 %8242
        %8244 = vrot.lane.b32.xlu0 %v8161, 127
        %v8245 = vpop.permute.xlu0 %8244
        %8246 = vrot.lane.b32.xlu0 %v8162, 127
        %v8247 = vpop.permute.xlu0 %8246
        %8248 = vrot.lane.b32.xlu0 %v8163, 127
        %v8249 = vpop.permute.xlu0 %8248
        %8250 = vrot.lane.b32.xlu0 %v8164, 127
        %v8251 = vpop.permute.xlu0 %8250
        %8252 = vrot.lane.b32.xlu0 %v8165, 127
        %v8253 = vpop.permute.xlu0 %8252
        %8254 = vrot.lane.b32.xlu0 %v8166, 127
        %v8255 = vpop.permute.xlu0 %8254
        %8256 = vrot.lane.b32.xlu0 %v8167, 127
        %v8257 = vpop.permute.xlu0 %8256
        %8258 = vrot.lane.b32.xlu0 %v8168, 127
        %v8259 = vpop.permute.xlu0 %8258
        %8260 = vrot.lane.b32.xlu0 %v8169, 127
        %v8261 = vpop.permute.xlu0 %8260
        %8262 = vrot.lane.b32.xlu0 %v8170, 127
        %v8263 = vpop.permute.xlu0 %8262
        %8264 = vrot.lane.b32.xlu0 %v8171, 127
        %v8265 = vpop.permute.xlu0 %8264
        %8266 = vrot.lane.b32.xlu0 %v8172, 127
        %v8267 = vpop.permute.xlu0 %8266
        %8268 = vrot.lane.b32.xlu0 %v8173, 127
        %v8269 = vpop.permute.xlu0 %8268
        %v8302 = vadd.f32 %v8108, %v8207
        %v8303 = vadd.f32 %v8109, %v8209
        %v8304 = vadd.f32 %v8110, %v8211
        %v8305 = vadd.f32 %v8111, %v8213
        %v8306 = vadd.f32 %v8112, %v8215
        %v8307 = vadd.f32 %v8113, %v8217
        %v8308 = vadd.f32 %v8114, %v8219
        %v8309 = vadd.f32 %v8115, %v8221
        %v8310 = vadd.f32 %v8116, %v8223
        %v8311 = vadd.f32 %v8117, %v8225
        %v8312 = vadd.f32 %v8118, %v8227
        %v8313 = vadd.f32 %v8119, %v8229
        %v8314 = vadd.f32 %v8120, %v8231
        %v8315 = vadd.f32 %v8121, %v8233
        %v8316 = vadd.f32 %v8122, %v8235
        %v8317 = vadd.f32 %v8123, %v8237
        %v8318 = vadd.f32 %v8124, %v8239
        %v8319 = vadd.f32 %v8125, %v8241
        %v8320 = vadd.f32 %v8126, %v8243
        %v8321 = vadd.f32 %v8127, %v8245
        %v8322 = vadd.f32 %v8128, %v8247
        %v8323 = vadd.f32 %v8129, %v8249
        %v8324 = vadd.f32 %v8130, %v8251
        %v8325 = vadd.f32 %v8131, %v8253
        %v8326 = vadd.f32 %v8132, %v8255
        %v8327 = vadd.f32 %v8133, %v8257
        %v8328 = vadd.f32 %v8134, %v8259
        %v8329 = vadd.f32 %v8135, %v8261
        %v8330 = vadd.f32 %v8136, %v8263
        %v8331 = vadd.f32 %v8137, %v8265
        %v8332 = vadd.f32 %v8138, %v8267
        %v8333 = vadd.f32 %v8139, %v8269
        %v8334 = vld [vmem:[%s8041 + $0x1] sm:$0xff]
        %v8335 = vld [vmem:[%s8041 + $0x9] sm:$0xff]
        %v8336 = vld [vmem:[%s8041 + $0x19] sm:$0xff]
        %v8337 = vld [vmem:[%s8041 + $0x21] sm:$0xff]
        %v8338 = vld [vmem:[%s8041 + $0x31] sm:$0xff]
        %v8339 = vld [vmem:[%s8041 + $0x39] sm:$0xff]
        %v8340 = vld [vmem:[%s8041 + $0x49] sm:$0xff]
        %v8341 = vld [vmem:[%s8041 + $0x51] sm:$0xff]
        %v8342 = vld [vmem:[%s8041 + $0x61] sm:$0xff]
        %v8343 = vld [vmem:[%s8041 + $0x69] sm:$0xff]
        %v8344 = vld [vmem:[%s8041 + $0x79] sm:$0xff]
        %v8345 = vld [vmem:[%s8041 + $0x81] sm:$0xff]
        %v8346 = vld [vmem:[%s8041 + $0x91] sm:$0xff]
        %v8347 = vld [vmem:[%s8041 + $0x99] sm:$0xff]
        %v8348 = vld [vmem:[%s8041 + $0xa9] sm:$0xff]
        %v8349 = vld [vmem:[%s8041 + $0xb1] sm:$0xff]
        %v8350 = vld [vmem:[%s8041 + $0xc1] sm:$0xff]
        %v8351 = vld [vmem:[%s8041 + $0xc9] sm:$0xff]
        %v8352 = vld [vmem:[%s8041 + $0xd9] sm:$0xff]
        %v8353 = vld [vmem:[%s8041 + $0xe1] sm:$0xff]
        %v8354 = vld [vmem:[%s8041 + $0xf1] sm:$0xff]
        %v8355 = vld [vmem:[%s8041 + $0xf9] sm:$0xff]
        %v8356 = vld [vmem:[%s8041 + $0x109] sm:$0xff]
        %v8357 = vld [vmem:[%s8041 + $0x111] sm:$0xff]
        %v8358 = vld [vmem:[%s8041 + $0x121] sm:$0xff]
        %v8359 = vld [vmem:[%s8041 + $0x129] sm:$0xff]
        %v8360 = vld [vmem:[%s8041 + $0x139] sm:$0xff]
        %v8361 = vld [vmem:[%s8041 + $0x141] sm:$0xff]
        %v8362 = vld [vmem:[%s8041 + $0x151] sm:$0xff]
        %v8363 = vld [vmem:[%s8041 + $0x159] sm:$0xff]
        %v8364 = vld [vmem:[%s8041 + $0x169] sm:$0xff]
        %v8365 = vld [vmem:[%s8041 + $0x171] sm:$0xff]
        %s8366 = sld [smem:[#allocation4 + $0xe]]
        %v8367 = vstv %s8366
        %v8368 = vmul.f32 %v8334, %v8367
        %v8369 = vmul.f32 %v8335, %v8367
        %v8370 = vmul.f32 %v8336, %v8367
        %v8371 = vmul.f32 %v8337, %v8367
        %v8372 = vmul.f32 %v8338, %v8367
        %v8373 = vmul.f32 %v8339, %v8367
        %v8374 = vmul.f32 %v8340, %v8367
        %v8375 = vmul.f32 %v8341, %v8367
        %v8376 = vmul.f32 %v8342, %v8367
        %v8377 = vmul.f32 %v8343, %v8367
        %v8378 = vmul.f32 %v8344, %v8367
        %v8379 = vmul.f32 %v8345, %v8367
        %v8380 = vmul.f32 %v8346, %v8367
        %v8381 = vmul.f32 %v8347, %v8367
        %v8382 = vmul.f32 %v8348, %v8367
        %v8383 = vmul.f32 %v8349, %v8367
        %v8384 = vmul.f32 %v8350, %v8367
        %v8385 = vmul.f32 %v8351, %v8367
        %v8386 = vmul.f32 %v8352, %v8367
        %v8387 = vmul.f32 %v8353, %v8367
        %v8388 = vmul.f32 %v8354, %v8367
        %v8389 = vmul.f32 %v8355, %v8367
        %v8390 = vmul.f32 %v8356, %v8367
        %v8391 = vmul.f32 %v8357, %v8367
        %v8392 = vmul.f32 %v8358, %v8367
        %v8393 = vmul.f32 %v8359, %v8367
        %v8394 = vmul.f32 %v8360, %v8367
        %v8395 = vmul.f32 %v8361, %v8367
        %v8396 = vmul.f32 %v8362, %v8367
        %v8397 = vmul.f32 %v8363, %v8367
        %v8398 = vmul.f32 %v8364, %v8367
        %v8399 = vmul.f32 %v8365, %v8367
        %v8400 = vadd.f32 %v8302, %v8368
        %v8401 = vadd.f32 %v8303, %v8369
        %v8402 = vadd.f32 %v8304, %v8370
        %v8403 = vadd.f32 %v8305, %v8371
        %v8404 = vadd.f32 %v8306, %v8372
        %v8405 = vadd.f32 %v8307, %v8373
        %v8406 = vadd.f32 %v8308, %v8374
        %v8407 = vadd.f32 %v8309, %v8375
        %v8408 = vadd.f32 %v8310, %v8376
        %v8409 = vadd.f32 %v8311, %v8377
        %v8410 = vadd.f32 %v8312, %v8378
        %v8411 = vadd.f32 %v8313, %v8379
        %v8412 = vadd.f32 %v8314, %v8380
        %v8413 = vadd.f32 %v8315, %v8381
        %v8414 = vadd.f32 %v8316, %v8382
        %v8415 = vadd.f32 %v8317, %v8383
        %v8416 = vadd.f32 %v8318, %v8384
        %v8417 = vadd.f32 %v8319, %v8385
        %v8418 = vadd.f32 %v8320, %v8386
        %v8419 = vadd.f32 %v8321, %v8387
        %v8420 = vadd.f32 %v8322, %v8388
        %v8421 = vadd.f32 %v8323, %v8389
        %v8422 = vadd.f32 %v8324, %v8390
        %v8423 = vadd.f32 %v8325, %v8391
        %v8424 = vadd.f32 %v8326, %v8392
        %v8425 = vadd.f32 %v8327, %v8393
        %v8426 = vadd.f32 %v8328, %v8394
        %v8427 = vadd.f32 %v8329, %v8395
        %v8428 = vadd.f32 %v8330, %v8396
        %v8429 = vadd.f32 %v8331, %v8397
        %v8430 = vadd.f32 %v8332, %v8398
        %v8431 = vadd.f32 %v8333, %v8399
        %s8432 = sld [smem:[#allocation4 + $0xf]]
        %v8433 = vstv %s8432
        %v8434 = vmul.f32 %v8334, %v8433
        %v8435 = vmul.f32 %v8335, %v8433
        %v8436 = vmul.f32 %v8336, %v8433
        %v8437 = vmul.f32 %v8337, %v8433
        %v8438 = vmul.f32 %v8338, %v8433
        %v8439 = vmul.f32 %v8339, %v8433
        %v8440 = vmul.f32 %v8340, %v8433
        %v8441 = vmul.f32 %v8341, %v8433
        %v8442 = vmul.f32 %v8342, %v8433
        %v8443 = vmul.f32 %v8343, %v8433
        %v8444 = vmul.f32 %v8344, %v8433
        %v8445 = vmul.f32 %v8345, %v8433
        %v8446 = vmul.f32 %v8346, %v8433
        %v8447 = vmul.f32 %v8347, %v8433
        %v8448 = vmul.f32 %v8348, %v8433
        %v8449 = vmul.f32 %v8349, %v8433
        %v8450 = vmul.f32 %v8350, %v8433
        %v8451 = vmul.f32 %v8351, %v8433
        %v8452 = vmul.f32 %v8352, %v8433
        %v8453 = vmul.f32 %v8353, %v8433
        %v8454 = vmul.f32 %v8354, %v8433
        %v8455 = vmul.f32 %v8355, %v8433
        %v8456 = vmul.f32 %v8356, %v8433
        %v8457 = vmul.f32 %v8357, %v8433
        %v8458 = vmul.f32 %v8358, %v8433
        %v8459 = vmul.f32 %v8359, %v8433
        %v8460 = vmul.f32 %v8360, %v8433
        %v8461 = vmul.f32 %v8361, %v8433
        %v8462 = vmul.f32 %v8362, %v8433
        %v8463 = vmul.f32 %v8363, %v8433
        %v8464 = vmul.f32 %v8364, %v8433
        %v8465 = vmul.f32 %v8365, %v8433
        %8498 = vrot.lane.b32.xlu0 %v8434, 127
        %v8499 = vpop.permute.xlu0 %8498
        %8500 = vrot.lane.b32.xlu0 %v8435, 127
        %v8501 = vpop.permute.xlu0 %8500
        %8502 = vrot.lane.b32.xlu0 %v8436, 127
        %v8503 = vpop.permute.xlu0 %8502
        %8504 = vrot.lane.b32.xlu0 %v8437, 127
        %v8505 = vpop.permute.xlu0 %8504
        %8506 = vrot.lane.b32.xlu0 %v8438, 127
        %v8507 = vpop.permute.xlu0 %8506
        %8508 = vrot.lane.b32.xlu0 %v8439, 127
        %v8509 = vpop.permute.xlu0 %8508
        %8510 = vrot.lane.b32.xlu0 %v8440, 127
        %v8511 = vpop.permute.xlu0 %8510
        %8512 = vrot.lane.b32.xlu0 %v8441, 127
        %v8513 = vpop.permute.xlu0 %8512
        %8514 = vrot.lane.b32.xlu0 %v8442, 127
        %v8515 = vpop.permute.xlu0 %8514
        %8516 = vrot.lane.b32.xlu0 %v8443, 127
        %v8517 = vpop.permute.xlu0 %8516
        %8518 = vrot.lane.b32.xlu0 %v8444, 127
        %v8519 = vpop.permute.xlu0 %8518
        %8520 = vrot.lane.b32.xlu0 %v8445, 127
        %v8521 = vpop.permute.xlu0 %8520
        %8522 = vrot.lane.b32.xlu0 %v8446, 127
        %v8523 = vpop.permute.xlu0 %8522
        %8524 = vrot.lane.b32.xlu0 %v8447, 127
        %v8525 = vpop.permute.xlu0 %8524
        %8526 = vrot.lane.b32.xlu0 %v8448, 127
        %v8527 = vpop.permute.xlu0 %8526
        %8528 = vrot.lane.b32.xlu0 %v8449, 127
        %v8529 = vpop.permute.xlu0 %8528
        %8530 = vrot.lane.b32.xlu0 %v8450, 127
        %v8531 = vpop.permute.xlu0 %8530
        %8532 = vrot.lane.b32.xlu0 %v8451, 127
        %v8533 = vpop.permute.xlu0 %8532
        %8534 = vrot.lane.b32.xlu0 %v8452, 127
        %v8535 = vpop.permute.xlu0 %8534
        %8536 = vrot.lane.b32.xlu0 %v8453, 127
        %v8537 = vpop.permute.xlu0 %8536
        %8538 = vrot.lane.b32.xlu0 %v8454, 127
        %v8539 = vpop.permute.xlu0 %8538
        %8540 = vrot.lane.b32.xlu0 %v8455, 127
        %v8541 = vpop.permute.xlu0 %8540
        %8542 = vrot.lane.b32.xlu0 %v8456, 127
        %v8543 = vpop.permute.xlu0 %8542
        %8544 = vrot.lane.b32.xlu0 %v8457, 127
        %v8545 = vpop.permute.xlu0 %8544
        %8546 = vrot.lane.b32.xlu0 %v8458, 127
        %v8547 = vpop.permute.xlu0 %8546
        %8548 = vrot.lane.b32.xlu0 %v8459, 127
        %v8549 = vpop.permute.xlu0 %8548
        %8550 = vrot.lane.b32.xlu0 %v8460, 127
        %v8551 = vpop.permute.xlu0 %8550
        %8552 = vrot.lane.b32.xlu0 %v8461, 127
        %v8553 = vpop.permute.xlu0 %8552
        %8554 = vrot.lane.b32.xlu0 %v8462, 127
        %v8555 = vpop.permute.xlu0 %8554
        %8556 = vrot.lane.b32.xlu0 %v8463, 127
        %v8557 = vpop.permute.xlu0 %8556
        %8558 = vrot.lane.b32.xlu0 %v8464, 127
        %v8559 = vpop.permute.xlu0 %8558
        %8560 = vrot.lane.b32.xlu0 %v8465, 127
        %v8561 = vpop.permute.xlu0 %8560
        %v8594 = vadd.f32 %v8400, %v8499
        %v8595 = vadd.f32 %v8401, %v8501
        %v8596 = vadd.f32 %v8402, %v8503
        %v8597 = vadd.f32 %v8403, %v8505
        %v8598 = vadd.f32 %v8404, %v8507
        %v8599 = vadd.f32 %v8405, %v8509
        %v8600 = vadd.f32 %v8406, %v8511
        %v8601 = vadd.f32 %v8407, %v8513
        %v8602 = vadd.f32 %v8408, %v8515
        %v8603 = vadd.f32 %v8409, %v8517
        %v8604 = vadd.f32 %v8410, %v8519
        %v8605 = vadd.f32 %v8411, %v8521
        %v8606 = vadd.f32 %v8412, %v8523
        %v8607 = vadd.f32 %v8413, %v8525
        %v8608 = vadd.f32 %v8414, %v8527
        %v8609 = vadd.f32 %v8415, %v8529
        %v8610 = vadd.f32 %v8416, %v8531
        %v8611 = vadd.f32 %v8417, %v8533
        %v8612 = vadd.f32 %v8418, %v8535
        %v8613 = vadd.f32 %v8419, %v8537
        %v8614 = vadd.f32 %v8420, %v8539
        %v8615 = vadd.f32 %v8421, %v8541
        %v8616 = vadd.f32 %v8422, %v8543
        %v8617 = vadd.f32 %v8423, %v8545
        %v8618 = vadd.f32 %v8424, %v8547
        %v8619 = vadd.f32 %v8425, %v8549
        %v8620 = vadd.f32 %v8426, %v8551
        %v8621 = vadd.f32 %v8427, %v8553
        %v8622 = vadd.f32 %v8428, %v8555
        %v8623 = vadd.f32 %v8429, %v8557
        %v8624 = vadd.f32 %v8430, %v8559
        %v8625 = vadd.f32 %v8431, %v8561
        %v8626 = vld [vmem:[%s8041 + $0x2] sm:$0xff]
        %v8627 = vld [vmem:[%s8041 + $0xa] sm:$0xff]
        %v8628 = vld [vmem:[%s8041 + $0x1a] sm:$0xff]
        %v8629 = vld [vmem:[%s8041 + $0x22] sm:$0xff]
        %v8630 = vld [vmem:[%s8041 + $0x32] sm:$0xff]
        %v8631 = vld [vmem:[%s8041 + $0x3a] sm:$0xff]
        %v8632 = vld [vmem:[%s8041 + $0x4a] sm:$0xff]
        %v8633 = vld [vmem:[%s8041 + $0x52] sm:$0xff]
        %v8634 = vld [vmem:[%s8041 + $0x62] sm:$0xff]
        %v8635 = vld [vmem:[%s8041 + $0x6a] sm:$0xff]
        %v8636 = vld [vmem:[%s8041 + $0x7a] sm:$0xff]
        %v8637 = vld [vmem:[%s8041 + $0x82] sm:$0xff]
        %v8638 = vld [vmem:[%s8041 + $0x92] sm:$0xff]
        %v8639 = vld [vmem:[%s8041 + $0x9a] sm:$0xff]
        %v8640 = vld [vmem:[%s8041 + $0xaa] sm:$0xff]
        %v8641 = vld [vmem:[%s8041 + $0xb2] sm:$0xff]
        %v8642 = vld [vmem:[%s8041 + $0xc2] sm:$0xff]
        %v8643 = vld [vmem:[%s8041 + $0xca] sm:$0xff]
        %v8644 = vld [vmem:[%s8041 + $0xda] sm:$0xff]
        %v8645 = vld [vmem:[%s8041 + $0xe2] sm:$0xff]
        %v8646 = vld [vmem:[%s8041 + $0xf2] sm:$0xff]
        %v8647 = vld [vmem:[%s8041 + $0xfa] sm:$0xff]
        %v8648 = vld [vmem:[%s8041 + $0x10a] sm:$0xff]
        %v8649 = vld [vmem:[%s8041 + $0x112] sm:$0xff]
        %v8650 = vld [vmem:[%s8041 + $0x122] sm:$0xff]
        %v8651 = vld [vmem:[%s8041 + $0x12a] sm:$0xff]
        %v8652 = vld [vmem:[%s8041 + $0x13a] sm:$0xff]
        %v8653 = vld [vmem:[%s8041 + $0x142] sm:$0xff]
        %v8654 = vld [vmem:[%s8041 + $0x152] sm:$0xff]
        %v8655 = vld [vmem:[%s8041 + $0x15a] sm:$0xff]
        %v8656 = vld [vmem:[%s8041 + $0x16a] sm:$0xff]
        %v8657 = vld [vmem:[%s8041 + $0x172] sm:$0xff]
        %s8658 = sld [smem:[#allocation4 + $0x10]]
        %v8659 = vstv %s8658
        %v8660 = vmul.f32 %v8626, %v8659
        %v8661 = vmul.f32 %v8627, %v8659
        %v8662 = vmul.f32 %v8628, %v8659
        %v8663 = vmul.f32 %v8629, %v8659
        %v8664 = vmul.f32 %v8630, %v8659
        %v8665 = vmul.f32 %v8631, %v8659
        %v8666 = vmul.f32 %v8632, %v8659
        %v8667 = vmul.f32 %v8633, %v8659
        %v8668 = vmul.f32 %v8634, %v8659
        %v8669 = vmul.f32 %v8635, %v8659
        %v8670 = vmul.f32 %v8636, %v8659
        %v8671 = vmul.f32 %v8637, %v8659
        %v8672 = vmul.f32 %v8638, %v8659
        %v8673 = vmul.f32 %v8639, %v8659
        %v8674 = vmul.f32 %v8640, %v8659
        %v8675 = vmul.f32 %v8641, %v8659
        %v8676 = vmul.f32 %v8642, %v8659
        %v8677 = vmul.f32 %v8643, %v8659
        %v8678 = vmul.f32 %v8644, %v8659
        %v8679 = vmul.f32 %v8645, %v8659
        %v8680 = vmul.f32 %v8646, %v8659
        %v8681 = vmul.f32 %v8647, %v8659
        %v8682 = vmul.f32 %v8648, %v8659
        %v8683 = vmul.f32 %v8649, %v8659
        %v8684 = vmul.f32 %v8650, %v8659
        %v8685 = vmul.f32 %v8651, %v8659
        %v8686 = vmul.f32 %v8652, %v8659
        %v8687 = vmul.f32 %v8653, %v8659
        %v8688 = vmul.f32 %v8654, %v8659
        %v8689 = vmul.f32 %v8655, %v8659
        %v8690 = vmul.f32 %v8656, %v8659
        %v8691 = vmul.f32 %v8657, %v8659
        %v8692 = vadd.f32 %v8594, %v8660
        %v8693 = vadd.f32 %v8595, %v8661
        %v8694 = vadd.f32 %v8596, %v8662
        %v8695 = vadd.f32 %v8597, %v8663
        %v8696 = vadd.f32 %v8598, %v8664
        %v8697 = vadd.f32 %v8599, %v8665
        %v8698 = vadd.f32 %v8600, %v8666
        %v8699 = vadd.f32 %v8601, %v8667
        %v8700 = vadd.f32 %v8602, %v8668
        %v8701 = vadd.f32 %v8603, %v8669
        %v8702 = vadd.f32 %v8604, %v8670
        %v8703 = vadd.f32 %v8605, %v8671
        %v8704 = vadd.f32 %v8606, %v8672
        %v8705 = vadd.f32 %v8607, %v8673
        %v8706 = vadd.f32 %v8608, %v8674
        %v8707 = vadd.f32 %v8609, %v8675
        %v8708 = vadd.f32 %v8610, %v8676
        %v8709 = vadd.f32 %v8611, %v8677
        %v8710 = vadd.f32 %v8612, %v8678
        %v8711 = vadd.f32 %v8613, %v8679
        %v8712 = vadd.f32 %v8614, %v8680
        %v8713 = vadd.f32 %v8615, %v8681
        %v8714 = vadd.f32 %v8616, %v8682
        %v8715 = vadd.f32 %v8617, %v8683
        %v8716 = vadd.f32 %v8618, %v8684
        %v8717 = vadd.f32 %v8619, %v8685
        %v8718 = vadd.f32 %v8620, %v8686
        %v8719 = vadd.f32 %v8621, %v8687
        %v8720 = vadd.f32 %v8622, %v8688
        %v8721 = vadd.f32 %v8623, %v8689
        %v8722 = vadd.f32 %v8624, %v8690
        %v8723 = vadd.f32 %v8625, %v8691
        %s8724 = sld [smem:[#allocation4 + $0x11]]
        %v8725 = vstv %s8724
        %v8726 = vmul.f32 %v8626, %v8725
        %v8727 = vmul.f32 %v8627, %v8725
        %v8728 = vmul.f32 %v8628, %v8725
        %v8729 = vmul.f32 %v8629, %v8725
        %v8730 = vmul.f32 %v8630, %v8725
        %v8731 = vmul.f32 %v8631, %v8725
        %v8732 = vmul.f32 %v8632, %v8725
        %v8733 = vmul.f32 %v8633, %v8725
        %v8734 = vmul.f32 %v8634, %v8725
        %v8735 = vmul.f32 %v8635, %v8725
        %v8736 = vmul.f32 %v8636, %v8725
        %v8737 = vmul.f32 %v8637, %v8725
        %v8738 = vmul.f32 %v8638, %v8725
        %v8739 = vmul.f32 %v8639, %v8725
        %v8740 = vmul.f32 %v8640, %v8725
        %v8741 = vmul.f32 %v8641, %v8725
        %v8742 = vmul.f32 %v8642, %v8725
        %v8743 = vmul.f32 %v8643, %v8725
        %v8744 = vmul.f32 %v8644, %v8725
        %v8745 = vmul.f32 %v8645, %v8725
        %v8746 = vmul.f32 %v8646, %v8725
        %v8747 = vmul.f32 %v8647, %v8725
        %v8748 = vmul.f32 %v8648, %v8725
        %v8749 = vmul.f32 %v8649, %v8725
        %v8750 = vmul.f32 %v8650, %v8725
        %v8751 = vmul.f32 %v8651, %v8725
        %v8752 = vmul.f32 %v8652, %v8725
        %v8753 = vmul.f32 %v8653, %v8725
        %v8754 = vmul.f32 %v8654, %v8725
        %v8755 = vmul.f32 %v8655, %v8725
        %v8756 = vmul.f32 %v8656, %v8725
        %v8757 = vmul.f32 %v8657, %v8725
        %8790 = vrot.lane.b32.xlu0 %v8726, 127
        %v8791 = vpop.permute.xlu0 %8790
        %8792 = vrot.lane.b32.xlu0 %v8727, 127
        %v8793 = vpop.permute.xlu0 %8792
        %8794 = vrot.lane.b32.xlu0 %v8728, 127
        %v8795 = vpop.permute.xlu0 %8794
        %8796 = vrot.lane.b32.xlu0 %v8729, 127
        %v8797 = vpop.permute.xlu0 %8796
        %8798 = vrot.lane.b32.xlu0 %v8730, 127
        %v8799 = vpop.permute.xlu0 %8798
        %8800 = vrot.lane.b32.xlu0 %v8731, 127
        %v8801 = vpop.permute.xlu0 %8800
        %8802 = vrot.lane.b32.xlu0 %v8732, 127
        %v8803 = vpop.permute.xlu0 %8802
        %8804 = vrot.lane.b32.xlu0 %v8733, 127
        %v8805 = vpop.permute.xlu0 %8804
        %8806 = vrot.lane.b32.xlu0 %v8734, 127
        %v8807 = vpop.permute.xlu0 %8806
        %8808 = vrot.lane.b32.xlu0 %v8735, 127
        %v8809 = vpop.permute.xlu0 %8808
        %8810 = vrot.lane.b32.xlu0 %v8736, 127
        %v8811 = vpop.permute.xlu0 %8810
        %8812 = vrot.lane.b32.xlu0 %v8737, 127
        %v8813 = vpop.permute.xlu0 %8812
        %8814 = vrot.lane.b32.xlu0 %v8738, 127
        %v8815 = vpop.permute.xlu0 %8814
        %8816 = vrot.lane.b32.xlu0 %v8739, 127
        %v8817 = vpop.permute.xlu0 %8816
        %8818 = vrot.lane.b32.xlu0 %v8740, 127
        %v8819 = vpop.permute.xlu0 %8818
        %8820 = vrot.lane.b32.xlu0 %v8741, 127
        %v8821 = vpop.permute.xlu0 %8820
        %8822 = vrot.lane.b32.xlu0 %v8742, 127
        %v8823 = vpop.permute.xlu0 %8822
        %8824 = vrot.lane.b32.xlu0 %v8743, 127
        %v8825 = vpop.permute.xlu0 %8824
        %8826 = vrot.lane.b32.xlu0 %v8744, 127
        %v8827 = vpop.permute.xlu0 %8826
        %8828 = vrot.lane.b32.xlu0 %v8745, 127
        %v8829 = vpop.permute.xlu0 %8828
        %8830 = vrot.lane.b32.xlu0 %v8746, 127
        %v8831 = vpop.permute.xlu0 %8830
        %8832 = vrot.lane.b32.xlu0 %v8747, 127
        %v8833 = vpop.permute.xlu0 %8832
        %8834 = vrot.lane.b32.xlu0 %v8748, 127
        %v8835 = vpop.permute.xlu0 %8834
        %8836 = vrot.lane.b32.xlu0 %v8749, 127
        %v8837 = vpop.permute.xlu0 %8836
        %8838 = vrot.lane.b32.xlu0 %v8750, 127
        %v8839 = vpop.permute.xlu0 %8838
        %8840 = vrot.lane.b32.xlu0 %v8751, 127
        %v8841 = vpop.permute.xlu0 %8840
        %8842 = vrot.lane.b32.xlu0 %v8752, 127
        %v8843 = vpop.permute.xlu0 %8842
        %8844 = vrot.lane.b32.xlu0 %v8753, 127
        %v8845 = vpop.permute.xlu0 %8844
        %8846 = vrot.lane.b32.xlu0 %v8754, 127
        %v8847 = vpop.permute.xlu0 %8846
        %8848 = vrot.lane.b32.xlu0 %v8755, 127
        %v8849 = vpop.permute.xlu0 %8848
        %8850 = vrot.lane.b32.xlu0 %v8756, 127
        %v8851 = vpop.permute.xlu0 %8850
        %8852 = vrot.lane.b32.xlu0 %v8757, 127
        %v8853 = vpop.permute.xlu0 %8852
        %v8886 = vadd.f32 %v8692, %v8791
        %v8887 = vadd.f32 %v8693, %v8793
        %v8888 = vadd.f32 %v8694, %v8795
        %v8889 = vadd.f32 %v8695, %v8797
        %v8890 = vadd.f32 %v8696, %v8799
        %v8891 = vadd.f32 %v8697, %v8801
        %v8892 = vadd.f32 %v8698, %v8803
        %v8893 = vadd.f32 %v8699, %v8805
        %v8894 = vadd.f32 %v8700, %v8807
        %v8895 = vadd.f32 %v8701, %v8809
        %v8896 = vadd.f32 %v8702, %v8811
        %v8897 = vadd.f32 %v8703, %v8813
        %v8898 = vadd.f32 %v8704, %v8815
        %v8899 = vadd.f32 %v8705, %v8817
        %v8900 = vadd.f32 %v8706, %v8819
        %v8901 = vadd.f32 %v8707, %v8821
        %v8902 = vadd.f32 %v8708, %v8823
        %v8903 = vadd.f32 %v8709, %v8825
        %v8904 = vadd.f32 %v8710, %v8827
        %v8905 = vadd.f32 %v8711, %v8829
        %v8906 = vadd.f32 %v8712, %v8831
        %v8907 = vadd.f32 %v8713, %v8833
        %v8908 = vadd.f32 %v8714, %v8835
        %v8909 = vadd.f32 %v8715, %v8837
        %v8910 = vadd.f32 %v8716, %v8839
        %v8911 = vadd.f32 %v8717, %v8841
        %v8912 = vadd.f32 %v8718, %v8843
        %v8913 = vadd.f32 %v8719, %v8845
        %v8914 = vadd.f32 %v8720, %v8847
        %v8915 = vadd.f32 %v8721, %v8849
        %v8916 = vadd.f32 %v8722, %v8851
        %v8917 = vadd.f32 %v8723, %v8853
        %v8918 = vxor.u32 %v8886, 2147483648
        %v8919 = vxor.u32 %v8887, 2147483648
        %v8920 = vxor.u32 %v8888, 2147483648
        %v8921 = vxor.u32 %v8889, 2147483648
        %v8922 = vxor.u32 %v8890, 2147483648
        %v8923 = vxor.u32 %v8891, 2147483648
        %v8924 = vxor.u32 %v8892, 2147483648
        %v8925 = vxor.u32 %v8893, 2147483648
        %v8926 = vxor.u32 %v8894, 2147483648
        %v8927 = vxor.u32 %v8895, 2147483648
        %v8928 = vxor.u32 %v8896, 2147483648
        %v8929 = vxor.u32 %v8897, 2147483648
        %v8930 = vxor.u32 %v8898, 2147483648
        %v8931 = vxor.u32 %v8899, 2147483648
        %v8932 = vxor.u32 %v8900, 2147483648
        %v8933 = vxor.u32 %v8901, 2147483648
        %v8934 = vxor.u32 %v8902, 2147483648
        %v8935 = vxor.u32 %v8903, 2147483648
        %v8936 = vxor.u32 %v8904, 2147483648
        %v8937 = vxor.u32 %v8905, 2147483648
        %v8938 = vxor.u32 %v8906, 2147483648
        %v8939 = vxor.u32 %v8907, 2147483648
        %v8940 = vxor.u32 %v8908, 2147483648
        %v8941 = vxor.u32 %v8909, 2147483648
        %v8942 = vxor.u32 %v8910, 2147483648
        %v8943 = vxor.u32 %v8911, 2147483648
        %v8944 = vxor.u32 %v8912, 2147483648
        %v8945 = vxor.u32 %v8913, 2147483648
        %v8946 = vxor.u32 %v8914, 2147483648
        %v8947 = vxor.u32 %v8915, 2147483648
        %v8948 = vxor.u32 %v8916, 2147483648
        %v8949 = vxor.u32 %v8917, 2147483648
        %v8950 = vmul.f32 %v8918, 1.442695
        %v8951 = vpow.pop %v8950
        %v8952 = vmul.f32 %v8919, 1.442695
        %v8953 = vpow.pop %v8952
        %v8954 = vmul.f32 %v8920, 1.442695
        %v8955 = vpow.pop %v8954
        %v8956 = vmul.f32 %v8921, 1.442695
        %v8957 = vpow.pop %v8956
        %v8958 = vmul.f32 %v8922, 1.442695
        %v8959 = vpow.pop %v8958
        %v8960 = vmul.f32 %v8923, 1.442695
        %v8961 = vpow.pop %v8960
        %v8962 = vmul.f32 %v8924, 1.442695
        %v8963 = vpow.pop %v8962
        %v8964 = vmul.f32 %v8925, 1.442695
        %v8965 = vpow.pop %v8964
        %v8966 = vmul.f32 %v8926, 1.442695
        %v8967 = vpow.pop %v8966
        %v8968 = vmul.f32 %v8927, 1.442695
        %v8969 = vpow.pop %v8968
        %v8970 = vmul.f32 %v8928, 1.442695
        %v8971 = vpow.pop %v8970
        %v8972 = vmul.f32 %v8929, 1.442695
        %v8973 = vpow.pop %v8972
        %v8974 = vmul.f32 %v8930, 1.442695
        %v8975 = vpow.pop %v8974
        %v8976 = vmul.f32 %v8931, 1.442695
        %v8977 = vpow.pop %v8976
        %v8978 = vmul.f32 %v8932, 1.442695
        %v8979 = vpow.pop %v8978
        %v8980 = vmul.f32 %v8933, 1.442695
        %v8981 = vpow.pop %v8980
        %v8982 = vmul.f32 %v8934, 1.442695
        %v8983 = vpow.pop %v8982
        %v8984 = vmul.f32 %v8935, 1.442695
        %v8985 = vpow.pop %v8984
        %v8986 = vmul.f32 %v8936, 1.442695
        %v8987 = vpow.pop %v8986
        %v8988 = vmul.f32 %v8937, 1.442695
        %v8989 = vpow.pop %v8988
        %v8990 = vmul.f32 %v8938, 1.442695
        %v8991 = vpow.pop %v8990
        %v8992 = vmul.f32 %v8939, 1.442695
        %v8993 = vpow.pop %v8992
        %v8994 = vmul.f32 %v8940, 1.442695
        %v8995 = vpow.pop %v8994
        %v8996 = vmul.f32 %v8941, 1.442695
        %v8997 = vpow.pop %v8996
        %v8998 = vmul.f32 %v8942, 1.442695
        %v8999 = vpow.pop %v8998
        %v9000 = vmul.f32 %v8943, 1.442695
        %v9001 = vpow.pop %v9000
        %v9002 = vmul.f32 %v8944, 1.442695
        %v9003 = vpow.pop %v9002
        %v9004 = vmul.f32 %v8945, 1.442695
        %v9005 = vpow.pop %v9004
        %v9006 = vmul.f32 %v8946, 1.442695
        %v9007 = vpow.pop %v9006
        %v9008 = vmul.f32 %v8947, 1.442695
        %v9009 = vpow.pop %v9008
        %v9010 = vmul.f32 %v8948, 1.442695
        %v9011 = vpow.pop %v9010
        %v9012 = vmul.f32 %v8949, 1.442695
        %v9013 = vpow.pop %v9012
        %v9014 = vadd.f32 %v8951, 1.0
        %v9015 = vadd.f32 %v8953, 1.0
        %v9016 = vadd.f32 %v8955, 1.0
        %v9017 = vadd.f32 %v8957, 1.0
        %v9018 = vadd.f32 %v8959, 1.0
        %v9019 = vadd.f32 %v8961, 1.0
        %v9020 = vadd.f32 %v8963, 1.0
        %v9021 = vadd.f32 %v8965, 1.0
        %v9022 = vadd.f32 %v8967, 1.0
        %v9023 = vadd.f32 %v8969, 1.0
        %v9024 = vadd.f32 %v8971, 1.0
        %v9025 = vadd.f32 %v8973, 1.0
        %v9026 = vadd.f32 %v8975, 1.0
        %v9027 = vadd.f32 %v8977, 1.0
        %v9028 = vadd.f32 %v8979, 1.0
        %v9029 = vadd.f32 %v8981, 1.0
        %v9030 = vadd.f32 %v8983, 1.0
        %v9031 = vadd.f32 %v8985, 1.0
        %v9032 = vadd.f32 %v8987, 1.0
        %v9033 = vadd.f32 %v8989, 1.0
        %v9034 = vadd.f32 %v8991, 1.0
        %v9035 = vadd.f32 %v8993, 1.0
        %v9036 = vadd.f32 %v8995, 1.0
        %v9037 = vadd.f32 %v8997, 1.0
        %v9038 = vadd.f32 %v8999, 1.0
        %v9039 = vadd.f32 %v9001, 1.0
        %v9040 = vadd.f32 %v9003, 1.0
        %v9041 = vadd.f32 %v9005, 1.0
        %v9042 = vadd.f32 %v9007, 1.0
        %v9043 = vadd.f32 %v9009, 1.0
        %v9044 = vadd.f32 %v9011, 1.0
        %v9045 = vadd.f32 %v9013, 1.0
        %v9046 = vrcp.pop %v9014
        %v9047 = vmul.f32 1.0, %v9046
        %v9048 = vrcp.pop %v9015
        %v9049 = vmul.f32 1.0, %v9048
        %v9050 = vrcp.pop %v9016
        %v9051 = vmul.f32 1.0, %v9050
        %v9052 = vrcp.pop %v9017
        %v9053 = vmul.f32 1.0, %v9052
        %v9054 = vrcp.pop %v9018
        %v9055 = vmul.f32 1.0, %v9054
        %v9056 = vrcp.pop %v9019
        %v9057 = vmul.f32 1.0, %v9056
        %v9058 = vrcp.pop %v9020
        %v9059 = vmul.f32 1.0, %v9058
        %v9060 = vrcp.pop %v9021
        %v9061 = vmul.f32 1.0, %v9060
        %v9062 = vrcp.pop %v9022
        %v9063 = vmul.f32 1.0, %v9062
        %v9064 = vrcp.pop %v9023
        %v9065 = vmul.f32 1.0, %v9064
        %v9066 = vrcp.pop %v9024
        %v9067 = vmul.f32 1.0, %v9066
        %v9068 = vrcp.pop %v9025
        %v9069 = vmul.f32 1.0, %v9068
        %v9070 = vrcp.pop %v9026
        %v9071 = vmul.f32 1.0, %v9070
        %v9072 = vrcp.pop %v9027
        %v9073 = vmul.f32 1.0, %v9072
        %v9074 = vrcp.pop %v9028
        %v9075 = vmul.f32 1.0, %v9074
        %v9076 = vrcp.pop %v9029
        %v9077 = vmul.f32 1.0, %v9076
        %v9078 = vrcp.pop %v9030
        %v9079 = vmul.f32 1.0, %v9078
        %v9080 = vrcp.pop %v9031
        %v9081 = vmul.f32 1.0, %v9080
        %v9082 = vrcp.pop %v9032
        %v9083 = vmul.f32 1.0, %v9082
        %v9084 = vrcp.pop %v9033
        %v9085 = vmul.f32 1.0, %v9084
        %v9086 = vrcp.pop %v9034
        %v9087 = vmul.f32 1.0, %v9086
        %v9088 = vrcp.pop %v9035
        %v9089 = vmul.f32 1.0, %v9088
        %v9090 = vrcp.pop %v9036
        %v9091 = vmul.f32 1.0, %v9090
        %v9092 = vrcp.pop %v9037
        %v9093 = vmul.f32 1.0, %v9092
        %v9094 = vrcp.pop %v9038
        %v9095 = vmul.f32 1.0, %v9094
        %v9096 = vrcp.pop %v9039
        %v9097 = vmul.f32 1.0, %v9096
        %v9098 = vrcp.pop %v9040
        %v9099 = vmul.f32 1.0, %v9098
        %v9100 = vrcp.pop %v9041
        %v9101 = vmul.f32 1.0, %v9100
        %v9102 = vrcp.pop %v9042
        %v9103 = vmul.f32 1.0, %v9102
        %v9104 = vrcp.pop %v9043
        %v9105 = vmul.f32 1.0, %v9104
        %v9106 = vrcp.pop %v9044
        %v9107 = vmul.f32 1.0, %v9106
        %v9108 = vrcp.pop %v9045
        %v9109 = vmul.f32 1.0, %v9108
        %9111 = vset.pattern.permute.xlu0 0
        %9112 = vperm.xlu0 %9111, %v9047
        %v9113 = vpop.permute.xlu0 %9112
        %9116 = vset.pattern.permute.xlu0 0
        %9117 = vperm.xlu0 %9116, %v9049
        %v9118 = vpop.permute.xlu0 %9117
        %9121 = vset.pattern.permute.xlu0 0
        %9122 = vperm.xlu0 %9121, %v9051
        %v9123 = vpop.permute.xlu0 %9122
        %9126 = vset.pattern.permute.xlu0 0
        %9127 = vperm.xlu0 %9126, %v9053
        %v9128 = vpop.permute.xlu0 %9127
        %9131 = vset.pattern.permute.xlu0 0
        %9132 = vperm.xlu0 %9131, %v9055
        %v9133 = vpop.permute.xlu0 %9132
        %9136 = vset.pattern.permute.xlu0 0
        %9137 = vperm.xlu0 %9136, %v9057
        %v9138 = vpop.permute.xlu0 %9137
        %9141 = vset.pattern.permute.xlu0 0
        %9142 = vperm.xlu0 %9141, %v9059
        %v9143 = vpop.permute.xlu0 %9142
        %9146 = vset.pattern.permute.xlu0 0
        %9147 = vperm.xlu0 %9146, %v9061
        %v9148 = vpop.permute.xlu0 %9147
        %9151 = vset.pattern.permute.xlu0 0
        %9152 = vperm.xlu0 %9151, %v9063
        %v9153 = vpop.permute.xlu0 %9152
        %9156 = vset.pattern.permute.xlu0 0
        %9157 = vperm.xlu0 %9156, %v9065
        %v9158 = vpop.permute.xlu0 %9157
        %9161 = vset.pattern.permute.xlu0 0
        %9162 = vperm.xlu0 %9161, %v9067
        %v9163 = vpop.permute.xlu0 %9162
        %9166 = vset.pattern.permute.xlu0 0
        %9167 = vperm.xlu0 %9166, %v9069
        %v9168 = vpop.permute.xlu0 %9167
        %9171 = vset.pattern.permute.xlu0 0
        %9172 = vperm.xlu0 %9171, %v9071
        %v9173 = vpop.permute.xlu0 %9172
        %9176 = vset.pattern.permute.xlu0 0
        %9177 = vperm.xlu0 %9176, %v9073
        %v9178 = vpop.permute.xlu0 %9177
        %9181 = vset.pattern.permute.xlu0 0
        %9182 = vperm.xlu0 %9181, %v9075
        %v9183 = vpop.permute.xlu0 %9182
        %9186 = vset.pattern.permute.xlu0 0
        %9187 = vperm.xlu0 %9186, %v9077
        %v9188 = vpop.permute.xlu0 %9187
        %9191 = vset.pattern.permute.xlu0 0
        %9192 = vperm.xlu0 %9191, %v9079
        %v9193 = vpop.permute.xlu0 %9192
        %9196 = vset.pattern.permute.xlu0 0
        %9197 = vperm.xlu0 %9196, %v9081
        %v9198 = vpop.permute.xlu0 %9197
        %9201 = vset.pattern.permute.xlu0 0
        %9202 = vperm.xlu0 %9201, %v9083
        %v9203 = vpop.permute.xlu0 %9202
        %9206 = vset.pattern.permute.xlu0 0
        %9207 = vperm.xlu0 %9206, %v9085
        %v9208 = vpop.permute.xlu0 %9207
        %9211 = vset.pattern.permute.xlu0 0
        %9212 = vperm.xlu0 %9211, %v9087
        %v9213 = vpop.permute.xlu0 %9212
        %9216 = vset.pattern.permute.xlu0 0
        %9217 = vperm.xlu0 %9216, %v9089
        %v9218 = vpop.permute.xlu0 %9217
        %9221 = vset.pattern.permute.xlu0 0
        %9222 = vperm.xlu0 %9221, %v9091
        %v9223 = vpop.permute.xlu0 %9222
        %9226 = vset.pattern.permute.xlu0 0
        %9227 = vperm.xlu0 %9226, %v9093
        %v9228 = vpop.permute.xlu0 %9227
        %9231 = vset.pattern.permute.xlu0 0
        %9232 = vperm.xlu0 %9231, %v9095
        %v9233 = vpop.permute.xlu0 %9232
        %9236 = vset.pattern.permute.xlu0 0
        %9237 = vperm.xlu0 %9236, %v9097
        %v9238 = vpop.permute.xlu0 %9237
        %9241 = vset.pattern.permute.xlu0 0
        %9242 = vperm.xlu0 %9241, %v9099
        %v9243 = vpop.permute.xlu0 %9242
        %9246 = vset.pattern.permute.xlu0 0
        %9247 = vperm.xlu0 %9246, %v9101
        %v9248 = vpop.permute.xlu0 %9247
        %9251 = vset.pattern.permute.xlu0 0
        %9252 = vperm.xlu0 %9251, %v9103
        %v9253 = vpop.permute.xlu0 %9252
        %9256 = vset.pattern.permute.xlu0 0
        %9257 = vperm.xlu0 %9256, %v9105
        %v9258 = vpop.permute.xlu0 %9257
        %9261 = vset.pattern.permute.xlu0 0
        %9262 = vperm.xlu0 %9261, %v9107
        %v9263 = vpop.permute.xlu0 %9262
        %9266 = vset.pattern.permute.xlu0 0
        %9267 = vperm.xlu0 %9266, %v9109
        %v9268 = vpop.permute.xlu0 %9267
        %v9270 = vmul.f32 %v5966, %v9113
        %v9271 = vmul.f32 %v5967, %v9118
        %v9272 = vmul.f32 %v5968, %v9123
        %v9273 = vmul.f32 %v5969, %v9128
        %v9274 = vmul.f32 %v5970, %v9133
        %v9275 = vmul.f32 %v5971, %v9138
        %v9276 = vmul.f32 %v5972, %v9143
        %v9277 = vmul.f32 %v5973, %v9148
        %v9278 = vmul.f32 %v5974, %v9153
        %v9279 = vmul.f32 %v5975, %v9158
        %v9280 = vmul.f32 %v5976, %v9163
        %v9281 = vmul.f32 %v5977, %v9168
        %v9282 = vmul.f32 %v5978, %v9173
        %v9283 = vmul.f32 %v5979, %v9178
        %v9284 = vmul.f32 %v5980, %v9183
        %v9285 = vmul.f32 %v5981, %v9188
        %v9286 = vmul.f32 %v5982, %v9193
        %v9287 = vmul.f32 %v5983, %v9198
        %v9288 = vmul.f32 %v5984, %v9203
        %v9289 = vmul.f32 %v5985, %v9208
        %v9290 = vmul.f32 %v5986, %v9213
        %v9291 = vmul.f32 %v5987, %v9218
        %v9292 = vmul.f32 %v5988, %v9223
        %v9293 = vmul.f32 %v5989, %v9228
        %v9294 = vmul.f32 %v5990, %v9233
        %v9295 = vmul.f32 %v5991, %v9238
        %v9296 = vmul.f32 %v5992, %v9243
        %v9297 = vmul.f32 %v5993, %v9248
        %v9298 = vmul.f32 %v5994, %v9253
        %v9299 = vmul.f32 %v5995, %v9258
        %v9300 = vmul.f32 %v5996, %v9263
        %v9301 = vmul.f32 %v5997, %v9268
        %v9302 = vadd.f32 %v6094, %v6097
        %v9303 = vadd.f32 %v9302, %v6100
        %v9304 = vadd.f32 %v9303, %v6103
        %v9305 = vadd.f32 %v9304, %v6106
        %v9306 = vadd.f32 %v9305, %v6109
        %v9307 = vadd.f32 %v9306, %v6112
        %v9308 = vadd.f32 %v9307, %v6115
        %v9309 = vadd.f32 %v9308, %v6118
        %v9310 = vadd.f32 %v9309, %v6121
        %v9311 = vadd.f32 %v9310, %v6124
        %v9312 = vadd.f32 %v9311, %v6127
        %v9313 = vadd.f32 %v9312, %v6130
        %v9314 = vadd.f32 %v9313, %v6133
        %v9315 = vadd.f32 %v9314, %v6136
        %v9316 = vadd.f32 %v9315, %v6139
        %v9317 = vadd.f32 %v9316, %v6142
        %v9318 = vadd.f32 %v9317, %v6145
        %v9319 = vadd.f32 %v9318, %v6148
        %v9320 = vadd.f32 %v9319, %v6151
        %v9321 = vadd.f32 %v9320, %v6154
        %v9322 = vadd.f32 %v9321, %v6157
        %v9323 = vadd.f32 %v9322, %v6160
        %v9324 = vadd.f32 %v9323, %v6163
        %v9325 = vadd.f32 %v9324, %v6166
        %v9326 = vadd.f32 %v9325, %v6169
        %v9327 = vadd.f32 %v9326, %v6172
        %v9328 = vadd.f32 %v9327, %v6175
        %v9329 = vadd.f32 %v9328, %v6178
        %v9330 = vadd.f32 %v9329, %v6181
        %v9331 = vadd.f32 %v9330, %v6184
        %v9332 = vadd.f32 %v9331, %v6187
        %v9333 = vrot.slane %v9332, 4
        %v9334 = vadd.f32 %v9332, %v9333
        %v9335 = vrot.slane %v9334, 2
        %v9336 = vadd.f32 %v9334, %v9335
        %v9337 = vrot.slane %v9336, 1
        %v9338 = vadd.f32 %v9336, %v9337
        %v9339 = vrcp.pop 256.0
        %v9340 = vmul.f32 %v9338, %v9339
        %v9341 = vpack.c.bf16 %v9340, %v9340
        %v9342 = vld [vmem:[%s6] sm:$0xf]
        %v9343 = vld [vmem:[%s6 + $0x4] sm:$0xf]
        %v9344 = vld [vmem:[%s7] sm:$0x1]
        %v9347 = vunpack.c.l.b16 %v9342
        %v9348 = vunpack.c.l.b16 %v9343
        %v9349 = vpack.c.b16 %v9348, %v9347
        %v9352 = vsel %vm454, %v9341, 0
        %9354 = vmatprep.subr.bf16.mxu0 0
        %9355 = vmatpush1.bf16.msra.mxu0 %v9349
        %9356 = vmatprep.subr.bf16.mxu0 0
        %9357 = vmatpush1.bf16.msra.mxu0 0
        %9358 = vmatprep.subr.bf16.mxu0 0
        %9359 = vmatpush1.bf16.msra.mxu0 0
        %9360 = vmatprep.subr.bf16.mxu0 0
        %9361 = vmatpush1.bf16.msra.mxu0 0
        %9362 = vmatprep.subr.bf16.mxu0 0
        %9363 = vmatpush1.bf16.msra.mxu0 0
        %9364 = vmatprep.subr.bf16.mxu0 0
        %9365 = vmatpush1.bf16.msra.mxu0 0
        %9366 = vmatprep.subr.bf16.mxu0 0
        %9367 = vmatpush1.bf16.msra.mxu0 0
        %9368 = vmatprep.subr.bf16.mxu0 0
        %9369 = vmatpush1.bf16.msra.mxu0 0
        %9370 = vmatprep.subr.bf16.mxu0 0
        %9371 = vmatpush1.bf16.msra.mxu0 0
        %9372 = vmatprep.subr.bf16.mxu0 0
        %9373 = vmatpush1.bf16.msra.mxu0 0
        %9374 = vmatprep.subr.bf16.mxu0 0
        %9375 = vmatpush1.bf16.msra.mxu0 0
        %9376 = vmatprep.subr.bf16.mxu0 0
        %9377 = vmatpush1.bf16.msra.mxu0 0
        %9378 = vmatprep.subr.bf16.mxu0 0
        %9379 = vmatpush1.bf16.msra.mxu0 0
        %9380 = vmatprep.subr.bf16.mxu0 0
        %9381 = vmatpush1.bf16.msra.mxu0 0
        %9382 = vmatprep.subr.bf16.mxu0 0
        %9383 = vmatpush1.bf16.msra.mxu0 0
        %9384 = vmatprep.subr.bf16.mxu0 0
        %9385 = vmatpush1.bf16.msra.mxu0 0
        %9386 = vmatprep.mubr.bf16.mxu0 0
        %9387 = vmatmul.mubr.bf16.gmra.mrb[0].mxu0 %v9352
        %v9388 = vpop.f32.mrb[0].mxu0
        %v9389 = vadd.f32 %v9344, %v9388
        %v9390 = vpop.f32.mrb[0].mxu0
        %v9391 = vpop.f32.mrb[0].mxu0
        %v9392 = vpop.f32.mrb[0].mxu0
        %9393 = vdwg.mxu0
        %v9394 = vmax.f32 %v9389, 0.0
        %v9395 = vpack.c.bf16 %v9394, %v9394
        %v9396 = vld [vmem:[%s8] sm:$0x3]
        %v9397 = vld [vmem:[%s9] sm:$0x1]
        %vm9398 = vcmask 31744
        %v9400 = vsel %vm9398, %v9395, 0
        %vm9402 = vcmask 1041408
        %v9404 = vsel %vm9402, %v9396, 0
        %9406 = vmatprep.subr.bf16.mxu0 0
        %9407 = vmatpush1.bf16.msra.mxu0 %v9404
        %9408 = vmatprep.subr.bf16.mxu0 0
        %9409 = vmatpush1.bf16.msra.mxu0 0
        %9410 = vmatprep.subr.bf16.mxu0 0
        %9411 = vmatpush1.bf16.msra.mxu0 0
        %9412 = vmatprep.subr.bf16.mxu0 0
        %9413 = vmatpush1.bf16.msra.mxu0 0
        %9414 = vmatprep.subr.bf16.mxu0 0
        %9415 = vmatpush1.bf16.msra.mxu0 0
        %9416 = vmatprep.subr.bf16.mxu0 0
        %9417 = vmatpush1.bf16.msra.mxu0 0
        %9418 = vmatprep.subr.bf16.mxu0 0
        %9419 = vmatpush1.bf16.msra.mxu0 0
        %9420 = vmatprep.subr.bf16.mxu0 0
        %9421 = vmatpush1.bf16.msra.mxu0 0
        %9422 = vmatprep.subr.bf16.mxu0 0
        %9423 = vmatpush1.bf16.msra.mxu0 0
        %9424 = vmatprep.subr.bf16.mxu0 0
        %9425 = vmatpush1.bf16.msra.mxu0 0
        %9426 = vmatprep.subr.bf16.mxu0 0
        %9427 = vmatpush1.bf16.msra.mxu0 0
        %9428 = vmatprep.subr.bf16.mxu0 0
        %9429 = vmatpush1.bf16.msra.mxu0 0
        %9430 = vmatprep.subr.bf16.mxu0 0
        %9431 = vmatpush1.bf16.msra.mxu0 0
        %9432 = vmatprep.subr.bf16.mxu0 0
        %9433 = vmatpush1.bf16.msra.mxu0 0
        %9434 = vmatprep.subr.bf16.mxu0 0
        %9435 = vmatpush1.bf16.msra.mxu0 0
        %9436 = vmatprep.subr.bf16.mxu0 0
        %9437 = vmatpush1.bf16.msra.mxu0 0
        %9438 = vmatprep.mubr.bf16.mxu0 0
        %9439 = vmatmul.mubr.bf16.gmra.mrb[0].mxu0 %v9400
        %v9440 = vpop.f32.mrb[0].mxu0
        %v9441 = vadd.f32 %v9397, %v9440
        %v9442 = vpop.f32.mrb[0].mxu0
        %v9443 = vpop.f32.mrb[0].mxu0
        %v9444 = vpop.f32.mrb[0].mxu0
        %9445 = vdwg.mxu0
        %v9446 = vxor.u32 %v9441, 2147483648
        %v9447 = vmul.f32 %v9446, 1.442695
        %v9448 = vpow.pop %v9447
        %v9449 = vadd.f32 %v9448, 1.0
        %v9450 = vrcp.pop %v9449
        %v9451 = vmul.f32 1.0, %v9450
        %v9452 = vlaneseq
        %v9453 = vshrl.u32 %v9452, 7
        %v9454 = vsub.s32 0, %v9453
        %v9455 = vrot.slane %v9451, %v9454
        %v9456 = vmul.f32 %v5966, %v9455
        %v9457 = vmul.f32 %v5967, %v9455
        %v9458 = vmul.f32 %v5968, %v9455
        %v9459 = vmul.f32 %v5969, %v9455
        %v9460 = vmul.f32 %v5970, %v9455
        %v9461 = vmul.f32 %v5971, %v9455
        %v9462 = vmul.f32 %v5972, %v9455
        %v9463 = vmul.f32 %v5973, %v9455
        %v9464 = vmul.f32 %v5974, %v9455
        %v9465 = vmul.f32 %v5975, %v9455
        %v9466 = vmul.f32 %v5976, %v9455
        %v9467 = vmul.f32 %v5977, %v9455
        %v9468 = vmul.f32 %v5978, %v9455
        %v9469 = vmul.f32 %v5979, %v9455
        %v9470 = vmul.f32 %v5980, %v9455
        %v9471 = vmul.f32 %v5981, %v9455
        %v9472 = vmul.f32 %v5982, %v9455
        %v9473 = vmul.f32 %v5983, %v9455
        %v9474 = vmul.f32 %v5984, %v9455
        %v9475 = vmul.f32 %v5985, %v9455
        %v9476 = vmul.f32 %v5986, %v9455
        %v9477 = vmul.f32 %v5987, %v9455
        %v9478 = vmul.f32 %v5988, %v9455
        %v9479 = vmul.f32 %v5989, %v9455
        %v9480 = vmul.f32 %v5990, %v9455
        %v9481 = vmul.f32 %v5991, %v9455
        %v9482 = vmul.f32 %v5992, %v9455
        %v9483 = vmul.f32 %v5993, %v9455
        %v9484 = vmul.f32 %v5994, %v9455
        %v9485 = vmul.f32 %v5995, %v9455
        %v9486 = vmul.f32 %v5996, %v9455
        %v9487 = vmul.f32 %v5997, %v9455
        %v9488 = vpack.c.bf16 %v9271, %v9270
        %v9489 = vpack.c.bf16 %v9273, %v9272
        %v9490 = vpack.c.bf16 %v9275, %v9274
        %v9491 = vpack.c.bf16 %v9277, %v9276
        %v9492 = vpack.c.bf16 %v9279, %v9278
        %v9493 = vpack.c.bf16 %v9281, %v9280
        %v9494 = vpack.c.bf16 %v9283, %v9282
        %v9495 = vpack.c.bf16 %v9285, %v9284
        %v9496 = vpack.c.bf16 %v9287, %v9286
        %v9497 = vpack.c.bf16 %v9289, %v9288
        %v9498 = vpack.c.bf16 %v9291, %v9290
        %v9499 = vpack.c.bf16 %v9293, %v9292
        %v9500 = vpack.c.bf16 %v9295, %v9294
        %v9501 = vpack.c.bf16 %v9297, %v9296
        %v9502 = vpack.c.bf16 %v9299, %v9298
        %v9503 = vpack.c.bf16 %v9301, %v9300
        %v9504 = vld [vmem:[%s10] sm:$0xf]
        %v9505 = vld [vmem:[%s10 + $0x4] sm:$0xf]
        %v9506 = vpack.c.bf16 %v9457, %v9456
        %v9507 = vpack.c.bf16 %v9459, %v9458
        %v9508 = vpack.c.bf16 %v9461, %v9460
        %v9509 = vpack.c.bf16 %v9463, %v9462
        %v9510 = vpack.c.bf16 %v9465, %v9464
        %v9511 = vpack.c.bf16 %v9467, %v9466
        %v9512 = vpack.c.bf16 %v9469, %v9468
        %v9513 = vpack.c.bf16 %v9471, %v9470
        %v9514 = vpack.c.bf16 %v9473, %v9472
        %v9515 = vpack.c.bf16 %v9475, %v9474
        %v9516 = vpack.c.bf16 %v9477, %v9476
        %v9517 = vpack.c.bf16 %v9479, %v9478
        %v9518 = vpack.c.bf16 %v9481, %v9480
        %v9519 = vpack.c.bf16 %v9483, %v9482
        %v9520 = vpack.c.bf16 %v9485, %v9484
        %v9521 = vpack.c.bf16 %v9487, %v9486
        %v9522 = vld [vmem:[%s11] sm:$0xf]
        %v9523 = vld [vmem:[%s11 + $0x4] sm:$0xf]
        %v9526 = vunpack.c.l.b16 %v9522
        %v9527 = vunpack.c.l.b16 %v9523
        %v9528 = vpack.c.b16 %v9527, %v9526
        %v9531 = vsel %vm454, %v9506, 0
        %v9534 = vsel %vm454, %v9507, 0
        %v9537 = vsel %vm454, %v9508, 0
        %v9540 = vsel %vm454, %v9509, 0
        %v9543 = vsel %vm454, %v9510, 0
        %v9546 = vsel %vm454, %v9511, 0
        %v9549 = vsel %vm454, %v9512, 0
        %v9552 = vsel %vm454, %v9513, 0
        %v9555 = vsel %vm454, %v9514, 0
        %v9558 = vsel %vm454, %v9515, 0
        %v9561 = vsel %vm454, %v9516, 0
        %v9564 = vsel %vm454, %v9517, 0
        %v9567 = vsel %vm454, %v9518, 0
        %v9570 = vsel %vm454, %v9519, 0
        %v9573 = vsel %vm454, %v9520, 0
        %v9576 = vsel %vm454, %v9521, 0
        %9578 = vmatprep.subr.bf16.mxu0 0
        %9579 = vmatpush1.bf16.msra.mxu0 %v9528
        %9580 = vmatprep.subr.bf16.mxu0 0
        %9581 = vmatpush1.bf16.msra.mxu0 0
        %9582 = vmatprep.subr.bf16.mxu0 0
        %9583 = vmatpush1.bf16.msra.mxu0 0
        %9584 = vmatprep.subr.bf16.mxu0 0
        %9585 = vmatpush1.bf16.msra.mxu0 0
        %9586 = vmatprep.subr.bf16.mxu0 0
        %9587 = vmatpush1.bf16.msra.mxu0 0
        %9588 = vmatprep.subr.bf16.mxu0 0
        %9589 = vmatpush1.bf16.msra.mxu0 0
        %9590 = vmatprep.subr.bf16.mxu0 0
        %9591 = vmatpush1.bf16.msra.mxu0 0
        %9592 = vmatprep.subr.bf16.mxu0 0
        %9593 = vmatpush1.bf16.msra.mxu0 0
        %9594 = vmatprep.subr.bf16.mxu0 0
        %9595 = vmatpush1.bf16.msra.mxu0 0
        %9596 = vmatprep.subr.bf16.mxu0 0
        %9597 = vmatpush1.bf16.msra.mxu0 0
        %9598 = vmatprep.subr.bf16.mxu0 0
        %9599 = vmatpush1.bf16.msra.mxu0 0
        %9600 = vmatprep.subr.bf16.mxu0 0
        %9601 = vmatpush1.bf16.msra.mxu0 0
        %9602 = vmatprep.subr.bf16.mxu0 0
        %9603 = vmatpush1.bf16.msra.mxu0 0
        %9604 = vmatprep.subr.bf16.mxu0 0
        %9605 = vmatpush1.bf16.msra.mxu0 0
        %9606 = vmatprep.subr.bf16.mxu0 0
        %9607 = vmatpush1.bf16.msra.mxu0 0
        %9608 = vmatprep.subr.bf16.mxu0 0
        %9609 = vmatpush1.bf16.msra.mxu0 0
        %9610 = vmatprep.mubr.bf16.mxu0 0
        %9611 = vmatmul.mubr.bf16.gmra.mrb[0].mxu0 %v9531
        %v9612 = vpop.f32.mrb[0].mxu0
        %v9613 = vadd.f32 0.0, %v9612
        %v9614 = vpop.f32.mrb[0].mxu0
        %v9615 = vpop.f32.mrb[0].mxu0
        %v9616 = vadd.f32 0.0, %v9615
        %v9617 = vpop.f32.mrb[0].mxu0
        %9618 = vmatprep.mubr.bf16.mxu0 0
        %9619 = vmatmul.mubr.bf16.gmra.mrb[0].mxu0 %v9534
        %v9620 = vpop.f32.mrb[0].mxu0
        %v9621 = vadd.f32 0.0, %v9620
        %v9622 = vpop.f32.mrb[0].mxu0
        %v9623 = vpop.f32.mrb[0].mxu0
        %v9624 = vadd.f32 0.0, %v9623
        %v9625 = vpop.f32.mrb[0].mxu0
        %9626 = vmatprep.mubr.bf16.mxu0 0
        %9627 = vmatmul.mubr.bf16.gmra.mrb[0].mxu0 %v9537
        %v9628 = vpop.f32.mrb[0].mxu0
        %v9629 = vadd.f32 0.0, %v9628
        %v9630 = vpop.f32.mrb[0].mxu0
        %v9631 = vpop.f32.mrb[0].mxu0
        %v9632 = vadd.f32 0.0, %v9631
        %v9633 = vpop.f32.mrb[0].mxu0
        %9634 = vmatprep.mubr.bf16.mxu0 0
        %9635 = vmatmul.mubr.bf16.gmra.mrb[0].mxu0 %v9540
        %v9636 = vpop.f32.mrb[0].mxu0
        %v9637 = vadd.f32 0.0, %v9636
        %v9638 = vpop.f32.mrb[0].mxu0
        %v9639 = vpop.f32.mrb[0].mxu0
        %v9640 = vadd.f32 0.0, %v9639
        %v9641 = vpop.f32.mrb[0].mxu0
        %9642 = vmatprep.mubr.bf16.mxu0 0
        %9643 = vmatmul.mubr.bf16.gmra.mrb[0].mxu0 %v9543
        %v9644 = vpop.f32.mrb[0].mxu0
        %v9645 = vadd.f32 0.0, %v9644
        %v9646 = vpop.f32.mrb[0].mxu0
        %v9647 = vpop.f32.mrb[0].mxu0
        %v9648 = vadd.f32 0.0, %v9647
        %v9649 = vpop.f32.mrb[0].mxu0
        %9650 = vmatprep.mubr.bf16.mxu0 0
        %9651 = vmatmul.mubr.bf16.gmra.mrb[0].mxu0 %v9546
        %v9652 = vpop.f32.mrb[0].mxu0
        %v9653 = vadd.f32 0.0, %v9652
        %v9654 = vpop.f32.mrb[0].mxu0
        %v9655 = vpop.f32.mrb[0].mxu0
        %v9656 = vadd.f32 0.0, %v9655
        %v9657 = vpop.f32.mrb[0].mxu0
        %9658 = vmatprep.mubr.bf16.mxu0 0
        %9659 = vmatmul.mubr.bf16.gmra.mrb[0].mxu0 %v9549
        %v9660 = vpop.f32.mrb[0].mxu0
        %v9661 = vadd.f32 0.0, %v9660
        %v9662 = vpop.f32.mrb[0].mxu0
        %v9663 = vpop.f32.mrb[0].mxu0
        %v9664 = vadd.f32 0.0, %v9663
        %v9665 = vpop.f32.mrb[0].mxu0
        %9666 = vmatprep.mubr.bf16.mxu0 0
        %9667 = vmatmul.mubr.bf16.gmra.mrb[0].mxu0 %v9552
        %v9668 = vpop.f32.mrb[0].mxu0
        %v9669 = vadd.f32 0.0, %v9668
        %v9670 = vpop.f32.mrb[0].mxu0
        %v9671 = vpop.f32.mrb[0].mxu0
        %v9672 = vadd.f32 0.0, %v9671
        %v9673 = vpop.f32.mrb[0].mxu0
        %9674 = vmatprep.mubr.bf16.mxu0 0
        %9675 = vmatmul.mubr.bf16.gmra.mrb[0].mxu0 %v9555
        %v9676 = vpop.f32.mrb[0].mxu0
        %v9677 = vadd.f32 0.0, %v9676
        %v9678 = vpop.f32.mrb[0].mxu0
        %v9679 = vpop.f32.mrb[0].mxu0
        %v9680 = vadd.f32 0.0, %v9679
        %v9681 = vpop.f32.mrb[0].mxu0
        %9682 = vmatprep.mubr.bf16.mxu0 0
        %9683 = vmatmul.mubr.bf16.gmra.mrb[0].mxu0 %v9558
        %v9684 = vpop.f32.mrb[0].mxu0
        %v9685 = vadd.f32 0.0, %v9684
        %v9686 = vpop.f32.mrb[0].mxu0
        %v9687 = vpop.f32.mrb[0].mxu0
        %v9688 = vadd.f32 0.0, %v9687
        %v9689 = vpop.f32.mrb[0].mxu0
        %9690 = vmatprep.mubr.bf16.mxu0 0
        %9691 = vmatmul.mubr.bf16.gmra.mrb[0].mxu0 %v9561
        %v9692 = vpop.f32.mrb[0].mxu0
        %v9693 = vadd.f32 0.0, %v9692
        %v9694 = vpop.f32.mrb[0].mxu0
        %v9695 = vpop.f32.mrb[0].mxu0
        %v9696 = vadd.f32 0.0, %v9695
        %v9697 = vpop.f32.mrb[0].mxu0
        %9698 = vmatprep.mubr.bf16.mxu0 0
        %9699 = vmatmul.mubr.bf16.gmra.mrb[0].mxu0 %v9564
        %v9700 = vpop.f32.mrb[0].mxu0
        %v9701 = vadd.f32 0.0, %v9700
        %v9702 = vpop.f32.mrb[0].mxu0
        %v9703 = vpop.f32.mrb[0].mxu0
        %v9704 = vadd.f32 0.0, %v9703
        %v9705 = vpop.f32.mrb[0].mxu0
        %9706 = vmatprep.mubr.bf16.mxu0 0
        %9707 = vmatmul.mubr.bf16.gmra.mrb[0].mxu0 %v9567
        %v9708 = vpop.f32.mrb[0].mxu0
        %v9709 = vadd.f32 0.0, %v9708
        %v9710 = vpop.f32.mrb[0].mxu0
        %v9711 = vpop.f32.mrb[0].mxu0
        %v9712 = vadd.f32 0.0, %v9711
        %v9713 = vpop.f32.mrb[0].mxu0
        %9714 = vmatprep.mubr.bf16.mxu0 0
        %9715 = vmatmul.mubr.bf16.gmra.mrb[0].mxu0 %v9570
        %v9716 = vpop.f32.mrb[0].mxu0
        %v9717 = vadd.f32 0.0, %v9716
        %v9718 = vpop.f32.mrb[0].mxu0
        %v9719 = vpop.f32.mrb[0].mxu0
        %v9720 = vadd.f32 0.0, %v9719
        %v9721 = vpop.f32.mrb[0].mxu0
        %9722 = vmatprep.mubr.bf16.mxu0 0
        %9723 = vmatmul.mubr.bf16.gmra.mrb[0].mxu0 %v9573
        %v9724 = vpop.f32.mrb[0].mxu0
        %v9725 = vadd.f32 0.0, %v9724
        %v9726 = vpop.f32.mrb[0].mxu0
        %v9727 = vpop.f32.mrb[0].mxu0
        %v9728 = vadd.f32 0.0, %v9727
        %v9729 = vpop.f32.mrb[0].mxu0
        %9730 = vmatprep.mubr.bf16.mxu0 0
        %9731 = vmatmul.mubr.bf16.gmra.mrb[0].mxu0 %v9576
        %v9732 = vpop.f32.mrb[0].mxu0
        %v9733 = vadd.f32 0.0, %v9732
        %v9734 = vpop.f32.mrb[0].mxu0
        %v9735 = vpop.f32.mrb[0].mxu0
        %v9736 = vadd.f32 0.0, %v9735
        %v9737 = vpop.f32.mrb[0].mxu0
        %9738 = vdwg.mxu0
        %v9741 = vunpack.c.l.b16 %v9504
        %v9742 = vunpack.c.l.b16 %v9505
        %v9743 = vpack.c.b16 %v9742, %v9741
        %v9746 = vsel %vm454, %v9488, 0
        %v9749 = vsel %vm454, %v9489, 0
        %v9752 = vsel %vm454, %v9490, 0
        %v9755 = vsel %vm454, %v9491, 0
        %v9758 = vsel %vm454, %v9492, 0
        %v9761 = vsel %vm454, %v9493, 0
        %v9764 = vsel %vm454, %v9494, 0
        %v9767 = vsel %vm454, %v9495, 0
        %v9770 = vsel %vm454, %v9496, 0
        %v9773 = vsel %vm454, %v9497, 0
        %v9776 = vsel %vm454, %v9498, 0
        %v9779 = vsel %vm454, %v9499, 0
        %v9782 = vsel %vm454, %v9500, 0
        %v9785 = vsel %vm454, %v9501, 0
        %v9788 = vsel %vm454, %v9502, 0
        %v9791 = vsel %vm454, %v9503, 0
        %9793 = vmatprep.subr.bf16.mxu0 0
        %9794 = vmatpush1.bf16.msra.mxu0 %v9743
        %9795 = vmatprep.subr.bf16.mxu0 0
        %9796 = vmatpush1.bf16.msra.mxu0 0
        %9797 = vmatprep.subr.bf16.mxu0 0
        %9798 = vmatpush1.bf16.msra.mxu0 0
        %9799 = vmatprep.subr.bf16.mxu0 0
        %9800 = vmatpush1.bf16.msra.mxu0 0
        %9801 = vmatprep.subr.bf16.mxu0 0
        %9802 = vmatpush1.bf16.msra.mxu0 0
        %9803 = vmatprep.subr.bf16.mxu0 0
        %9804 = vmatpush1.bf16.msra.mxu0 0
        %9805 = vmatprep.subr.bf16.mxu0 0
        %9806 = vmatpush1.bf16.msra.mxu0 0
        %9807 = vmatprep.subr.bf16.mxu0 0
        %9808 = vmatpush1.bf16.msra.mxu0 0
        %9809 = vmatprep.subr.bf16.mxu0 0
        %9810 = vmatpush1.bf16.msra.mxu0 0
        %9811 = vmatprep.subr.bf16.mxu0 0
        %9812 = vmatpush1.bf16.msra.mxu0 0
        %9813 = vmatprep.subr.bf16.mxu0 0
        %9814 = vmatpush1.bf16.msra.mxu0 0
        %9815 = vmatprep.subr.bf16.mxu0 0
        %9816 = vmatpush1.bf16.msra.mxu0 0
        %9817 = vmatprep.subr.bf16.mxu0 0
        %9818 = vmatpush1.bf16.msra.mxu0 0
        %9819 = vmatprep.subr.bf16.mxu0 0
        %9820 = vmatpush1.bf16.msra.mxu0 0
        %9821 = vmatprep.subr.bf16.mxu0 0
        %9822 = vmatpush1.bf16.msra.mxu0 0
        %9823 = vmatprep.subr.bf16.mxu0 0
        %9824 = vmatpush1.bf16.msra.mxu0 0
        %9825 = vmatprep.mubr.bf16.mxu0 0
        %9826 = vmatmul.mubr.bf16.gmra.mrb[0].mxu0 %v9746
        %v9827 = vpop.f32.mrb[0].mxu0
        %v9828 = vadd.f32 %v9613, %v9827
        %v9829 = vpop.f32.mrb[0].mxu0
        %v9830 = vpop.f32.mrb[0].mxu0
        %v9831 = vadd.f32 %v9616, %v9830
        %v9832 = vpop.f32.mrb[0].mxu0
        %9833 = vmatprep.mubr.bf16.mxu0 0
        %9834 = vmatmul.mubr.bf16.gmra.mrb[0].mxu0 %v9749
        %v9835 = vpop.f32.mrb[0].mxu0
        %v9836 = vadd.f32 %v9621, %v9835
        %v9837 = vpop.f32.mrb[0].mxu0
        %v9838 = vpop.f32.mrb[0].mxu0
        %v9839 = vadd.f32 %v9624, %v9838
        %v9840 = vpop.f32.mrb[0].mxu0
        %9841 = vmatprep.mubr.bf16.mxu0 0
        %9842 = vmatmul.mubr.bf16.gmra.mrb[0].mxu0 %v9752
        %v9843 = vpop.f32.mrb[0].mxu0
        %v9844 = vadd.f32 %v9629, %v9843
        %v9845 = vpop.f32.mrb[0].mxu0
        %v9846 = vpop.f32.mrb[0].mxu0
        %v9847 = vadd.f32 %v9632, %v9846
        %v9848 = vpop.f32.mrb[0].mxu0
        %9849 = vmatprep.mubr.bf16.mxu0 0
        %9850 = vmatmul.mubr.bf16.gmra.mrb[0].mxu0 %v9755
        %v9851 = vpop.f32.mrb[0].mxu0
        %v9852 = vadd.f32 %v9637, %v9851
        %v9853 = vpop.f32.mrb[0].mxu0
        %v9854 = vpop.f32.mrb[0].mxu0
        %v9855 = vadd.f32 %v9640, %v9854
        %v9856 = vpop.f32.mrb[0].mxu0
        %9857 = vmatprep.mubr.bf16.mxu0 0
        %9858 = vmatmul.mubr.bf16.gmra.mrb[0].mxu0 %v9758
        %v9859 = vpop.f32.mrb[0].mxu0
        %v9860 = vadd.f32 %v9645, %v9859
        %v9861 = vpop.f32.mrb[0].mxu0
        %v9862 = vpop.f32.mrb[0].mxu0
        %v9863 = vadd.f32 %v9648, %v9862
        %v9864 = vpop.f32.mrb[0].mxu0
        %9865 = vmatprep.mubr.bf16.mxu0 0
        %9866 = vmatmul.mubr.bf16.gmra.mrb[0].mxu0 %v9761
        %v9867 = vpop.f32.mrb[0].mxu0
        %v9868 = vadd.f32 %v9653, %v9867
        %v9869 = vpop.f32.mrb[0].mxu0
        %v9870 = vpop.f32.mrb[0].mxu0
        %v9871 = vadd.f32 %v9656, %v9870
        %v9872 = vpop.f32.mrb[0].mxu0
        %9873 = vmatprep.mubr.bf16.mxu0 0
        %9874 = vmatmul.mubr.bf16.gmra.mrb[0].mxu0 %v9764
        %v9875 = vpop.f32.mrb[0].mxu0
        %v9876 = vadd.f32 %v9661, %v9875
        %v9877 = vpop.f32.mrb[0].mxu0
        %v9878 = vpop.f32.mrb[0].mxu0
        %v9879 = vadd.f32 %v9664, %v9878
        %v9880 = vpop.f32.mrb[0].mxu0
        %9881 = vmatprep.mubr.bf16.mxu0 0
        %9882 = vmatmul.mubr.bf16.gmra.mrb[0].mxu0 %v9767
        %v9883 = vpop.f32.mrb[0].mxu0
        %v9884 = vadd.f32 %v9669, %v9883
        %v9885 = vpop.f32.mrb[0].mxu0
        %v9886 = vpop.f32.mrb[0].mxu0
        %v9887 = vadd.f32 %v9672, %v9886
        %v9888 = vpop.f32.mrb[0].mxu0
        %9889 = vmatprep.mubr.bf16.mxu0 0
        %9890 = vmatmul.mubr.bf16.gmra.mrb[0].mxu0 %v9770
        %v9891 = vpop.f32.mrb[0].mxu0
        %v9892 = vadd.f32 %v9677, %v9891
        %v9893 = vpop.f32.mrb[0].mxu0
        %v9894 = vpop.f32.mrb[0].mxu0
        %v9895 = vadd.f32 %v9680, %v9894
        %v9896 = vpop.f32.mrb[0].mxu0
        %9897 = vmatprep.mubr.bf16.mxu0 0
        %9898 = vmatmul.mubr.bf16.gmra.mrb[0].mxu0 %v9773
        %v9899 = vpop.f32.mrb[0].mxu0
        %v9900 = vadd.f32 %v9685, %v9899
        %v9901 = vpop.f32.mrb[0].mxu0
        %v9902 = vpop.f32.mrb[0].mxu0
        %v9903 = vadd.f32 %v9688, %v9902
        %v9904 = vpop.f32.mrb[0].mxu0
        %9905 = vmatprep.mubr.bf16.mxu0 0
        %9906 = vmatmul.mubr.bf16.gmra.mrb[0].mxu0 %v9776
        %v9907 = vpop.f32.mrb[0].mxu0
        %v9908 = vadd.f32 %v9693, %v9907
        %v9909 = vpop.f32.mrb[0].mxu0
        %v9910 = vpop.f32.mrb[0].mxu0
        %v9911 = vadd.f32 %v9696, %v9910
        %v9912 = vpop.f32.mrb[0].mxu0
        %9913 = vmatprep.mubr.bf16.mxu0 0
        %9914 = vmatmul.mubr.bf16.gmra.mrb[0].mxu0 %v9779
        %v9915 = vpop.f32.mrb[0].mxu0
        %v9916 = vadd.f32 %v9701, %v9915
        %v9917 = vpop.f32.mrb[0].mxu0
        %v9918 = vpop.f32.mrb[0].mxu0
        %v9919 = vadd.f32 %v9704, %v9918
        %v9920 = vpop.f32.mrb[0].mxu0
        %9921 = vmatprep.mubr.bf16.mxu0 0
        %9922 = vmatmul.mubr.bf16.gmra.mrb[0].mxu0 %v9782
        %v9923 = vpop.f32.mrb[0].mxu0
        %v9924 = vadd.f32 %v9709, %v9923
        %v9925 = vpop.f32.mrb[0].mxu0
        %v9926 = vpop.f32.mrb[0].mxu0
        %v9927 = vadd.f32 %v9712, %v9926
        %v9928 = vpop.f32.mrb[0].mxu0
        %9929 = vmatprep.mubr.bf16.mxu0 0
        %9930 = vmatmul.mubr.bf16.gmra.mrb[0].mxu0 %v9785
        %v9931 = vpop.f32.mrb[0].mxu0
        %v9932 = vadd.f32 %v9717, %v9931
        %v9933 = vpop.f32.mrb[0].mxu0
        %v9934 = vpop.f32.mrb[0].mxu0
        %v9935 = vadd.f32 %v9720, %v9934
        %v9936 = vpop.f32.mrb[0].mxu0
        %9937 = vmatprep.mubr.bf16.mxu0 0
        %9938 = vmatmul.mubr.bf16.gmra.mrb[0].mxu0 %v9788
        %v9939 = vpop.f32.mrb[0].mxu0
        %v9940 = vadd.f32 %v9725, %v9939
        %v9941 = vpop.f32.mrb[0].mxu0
        %v9942 = vpop.f32.mrb[0].mxu0
        %v9943 = vadd.f32 %v9728, %v9942
        %v9944 = vpop.f32.mrb[0].mxu0
        %9945 = vmatprep.mubr.bf16.mxu0 0
        %9946 = vmatmul.mubr.bf16.gmra.mrb[0].mxu0 %v9791
        %v9947 = vpop.f32.mrb[0].mxu0
        %v9948 = vadd.f32 %v9733, %v9947
        %v9949 = vpop.f32.mrb[0].mxu0
        %v9950 = vpop.f32.mrb[0].mxu0
        %v9951 = vadd.f32 %v9736, %v9950
        %v9952 = vpop.f32.mrb[0].mxu0
        %9953 = vdwg.mxu0
        %v9954 = vld [vmem:[%s12] sm:$0x1]
        %v9956 = vlaneseq
        %v9957 = vshrl.u32 %v9956, 7
        %v9958 = vsub.s32 0, %v9957
        %v9959 = vrot.slane %v9954, %v9958
        %v9961 = vadd.f32 %v9828, %v9959
        %v9962 = vadd.f32 %v9831, %v9959
        %v9963 = vadd.f32 %v9836, %v9959
        %v9964 = vadd.f32 %v9839, %v9959
        %v9965 = vadd.f32 %v9844, %v9959
        %v9966 = vadd.f32 %v9847, %v9959
        %v9967 = vadd.f32 %v9852, %v9959
        %v9968 = vadd.f32 %v9855, %v9959
        %v9969 = vadd.f32 %v9860, %v9959
        %v9970 = vadd.f32 %v9863, %v9959
        %v9971 = vadd.f32 %v9868, %v9959
        %v9972 = vadd.f32 %v9871, %v9959
        %v9973 = vadd.f32 %v9876, %v9959
        %v9974 = vadd.f32 %v9879, %v9959
        %v9975 = vadd.f32 %v9884, %v9959
        %v9976 = vadd.f32 %v9887, %v9959
        %v9977 = vadd.f32 %v9892, %v9959
        %v9978 = vadd.f32 %v9895, %v9959
        %v9979 = vadd.f32 %v9900, %v9959
        %v9980 = vadd.f32 %v9903, %v9959
        %v9981 = vadd.f32 %v9908, %v9959
        %v9982 = vadd.f32 %v9911, %v9959
        %v9983 = vadd.f32 %v9916, %v9959
        %v9984 = vadd.f32 %v9919, %v9959
        %v9985 = vadd.f32 %v9924, %v9959
        %v9986 = vadd.f32 %v9927, %v9959
        %v9987 = vadd.f32 %v9932, %v9959
        %v9988 = vadd.f32 %v9935, %v9959
        %v9989 = vadd.f32 %v9940, %v9959
        %v9990 = vadd.f32 %v9943, %v9959
        %v9991 = vadd.f32 %v9948, %v9959
        %v9992 = vadd.f32 %v9951, %v9959
        %v9993 = vadd.f32 %v9961, %v556
        %v9994 = vadd.f32 %v9962, %v557
        %v9995 = vadd.f32 %v9963, %v558
        %v9996 = vadd.f32 %v9964, %v559
        %v9997 = vadd.f32 %v9965, %v560
        %v9998 = vadd.f32 %v9966, %v561
        %v9999 = vadd.f32 %v9967, %v562
        %v10000 = vadd.f32 %v9968, %v563
        %v10001 = vadd.f32 %v9969, %v564
        %v10002 = vadd.f32 %v9970, %v565
        %v10003 = vadd.f32 %v9971, %v566
        %v10004 = vadd.f32 %v9972, %v567
        %v10005 = vadd.f32 %v9973, %v568
        %v10006 = vadd.f32 %v9974, %v569
        %v10007 = vadd.f32 %v9975, %v570
        %v10008 = vadd.f32 %v9976, %v571
        %v10009 = vadd.f32 %v9977, %v572
        %v10010 = vadd.f32 %v9978, %v573
        %v10011 = vadd.f32 %v9979, %v574
        %v10012 = vadd.f32 %v9980, %v575
        %v10013 = vadd.f32 %v9981, %v576
        %v10014 = vadd.f32 %v9982, %v577
        %v10015 = vadd.f32 %v9983, %v578
        %v10016 = vadd.f32 %v9984, %v579
        %v10017 = vadd.f32 %v9985, %v580
        %v10018 = vadd.f32 %v9986, %v581
        %v10019 = vadd.f32 %v9987, %v582
        %v10020 = vadd.f32 %v9988, %v583
        %v10021 = vadd.f32 %v9989, %v584
        %v10022 = vadd.f32 %v9990, %v585
        %v10023 = vadd.f32 %v9991, %v586
        %v10024 = vadd.f32 %v9992, %v587
        %10025 = vst.msk [vmem:[%s447] sm:$0xff] %vm454, %v9993
        %10026 = vst.msk [vmem:[%s447 + $0x8] sm:$0xff] %vm454, %v9994
        %10027 = vst.msk [vmem:[%s447 + $0x10] sm:$0xff] %vm454, %v9995
        %10028 = vst.msk [vmem:[%s447 + $0x18] sm:$0xff] %vm454, %v9996
        %10029 = vst.msk [vmem:[%s447 + $0x20] sm:$0xff] %vm454, %v9997
        %10030 = vst.msk [vmem:[%s447 + $0x28] sm:$0xff] %vm454, %v9998
        %10031 = vst.msk [vmem:[%s447 + $0x30] sm:$0xff] %vm454, %v9999
        %10032 = vst.msk [vmem:[%s447 + $0x38] sm:$0xff] %vm454, %v10000
        %10033 = vst.msk [vmem:[%s447 + $0x40] sm:$0xff] %vm454, %v10001
        %10034 = vst.msk [vmem:[%s447 + $0x48] sm:$0xff] %vm454, %v10002
        %10035 = vst.msk [vmem:[%s447 + $0x50] sm:$0xff] %vm454, %v10003
        %10036 = vst.msk [vmem:[%s447 + $0x58] sm:$0xff] %vm454, %v10004
        %10037 = vst.msk [vmem:[%s447 + $0x60] sm:$0xff] %vm454, %v10005
        %10038 = vst.msk [vmem:[%s447 + $0x68] sm:$0xff] %vm454, %v10006
        %10039 = vst.msk [vmem:[%s447 + $0x70] sm:$0xff] %vm454, %v10007
        %10040 = vst.msk [vmem:[%s447 + $0x78] sm:$0xff] %vm454, %v10008
        %10041 = vst.msk [vmem:[%s447 + $0x80] sm:$0xff] %vm454, %v10009
        %10042 = vst.msk [vmem:[%s447 + $0x88] sm:$0xff] %vm454, %v10010
        %10043 = vst.msk [vmem:[%s447 + $0x90] sm:$0xff] %vm454, %v10011
        %10044 = vst.msk [vmem:[%s447 + $0x98] sm:$0xff] %vm454, %v10012
        %10045 = vst.msk [vmem:[%s447 + $0xa0] sm:$0xff] %vm454, %v10013
        %10046 = vst.msk [vmem:[%s447 + $0xa8] sm:$0xff] %vm454, %v10014
        %10047 = vst.msk [vmem:[%s447 + $0xb0] sm:$0xff] %vm454, %v10015
        %10048 = vst.msk [vmem:[%s447 + $0xb8] sm:$0xff] %vm454, %v10016
        %10049 = vst.msk [vmem:[%s447 + $0xc0] sm:$0xff] %vm454, %v10017
        %10050 = vst.msk [vmem:[%s447 + $0xc8] sm:$0xff] %vm454, %v10018
        %10051 = vst.msk [vmem:[%s447 + $0xd0] sm:$0xff] %vm454, %v10019
        %10052 = vst.msk [vmem:[%s447 + $0xd8] sm:$0xff] %vm454, %v10020
        %10053 = vst.msk [vmem:[%s447 + $0xe0] sm:$0xff] %vm454, %v10021
        %10054 = vst.msk [vmem:[%s447 + $0xe8] sm:$0xff] %vm454, %v10022
        %10055 = vst.msk [vmem:[%s447 + $0xf0] sm:$0xff] %vm454, %v10023
        %10056 = vst.msk [vmem:[%s447 + $0xf8] sm:$0xff] %vm454, %v10024
        %s10057 = sand.u32 %s314, 1
        %s10058 = scalar_lea.sflag [#allocation5], %s10057
        %s10059 = sand.u32 %s314, 1
        %s10060 = smul.addr %s10059, 256
        %s10061 = scalar_lea.vmem [#allocation7], %s10060
        // Predicated region
        $region77: #{dab_forward.1} parent=71 // pred_check
          %p10062 = pneg %p324
        $region78: #{dab_forward.1} parent=71 // pred_check_branch
          %10064 = sbr.rel (%p10062) target = $region80
        $region79: #{dab_forward.1} parent=71 // pred_region
          %s10066 = ssub.s32 4096, 4096
          %10067 = vsyncadd %s10058, %s10066
          %s10068 = smul.addr %s28, 32
          %s10069 = smul.addr %s10068, 128
          %s10070 = scalar_lea.hbm %s13, %s10069
          %s10071 = sshll.u32 %s10061, 4
          %s10072 = int_to_ptr.vmem [resolvable:$true] %s10071
          %10077 = dma.vmem_to_hbm [thread:$0]  %s10072, 4096, %s10070, %s10058, 128, 128, 8
        $region80: #{dab_forward.1} parent=71 // pred_fallthru
          _
      $region72: #{dab_forward.1} parent=5 // pred_fallthru
        _
      %p10078 = scmp.le.s32.totalorder 2, %s23
      // Predicated region
      $region81: #{dab_forward.1} parent=5 // pred_check
        %p10079 = pneg %p10078
      $region82: #{dab_forward.1} parent=5 // pred_check_branch
        %10081 = sbr.rel (%p10079) target = $region84
      $region83: #{dab_forward.1} parent=5 // pred_region
        %s10082 = ssub.s32 %s23, 2
        // Predicated region
        $region85: #{dab_forward.1} parent=83 // pred_check
          %p10083 = pneg %p330
        $region86: #{dab_forward.1} parent=83 // pred_check_branch
          %10085 = sbr.rel (%p10083) target = $region88
        $region87: #{dab_forward.1} parent=83 // pred_region
          %s10086 = sand.u32 %s315, 1
          %s10087 = scalar_lea.sflag [#allocation5], %s10086
          %s10088 = sand.u32 %s315, 1
          %s10089 = smul.addr %s10088, 256
          %s10090 = scalar_lea.vmem [#allocation7], %s10089
          %10091 = dma.done %s10087, 4096
        $region88: #{dab_forward.1} parent=83 // pred_fallthru
          _
      $region84: #{dab_forward.1} parent=5 // pred_fallthru
        _
    $region6: #{dab_forward.1} parent=1 // loop_footer
      %s27 = sadd.s32 1, %s23
    $region7: #{dab_forward.1} parent=1 // loop_footer_branch
      %22 = sbr.rel target = $region3
    $region8: #{dab_forward.1} parent=1 // loop_exit
      _
    %10092 = vsyncpa [#allocation5], 1
    %s10093 = scalar_lea.sflag [#allocation5], 1
    %10094 = vsyncpa %s10093, 1
    %10095 = vsyncpa [#allocation6], 1
    %s10096 = scalar_lea.sflag [#allocation6], 1
    %10097 = vsyncpa %s10096, 1

</llo_original>
